<compile_context>
chip_gen: v6e
topology: v6e:2x2x1
jax: 0.10.0
libtpu: 0.0.40
codegen_flags: <defaults>
</compile_context>

<pallas_src>
import math

import jax
import jax.numpy as jnp
from jax import lax
from jax.experimental import pallas as pl
from jax.experimental.pallas import tpu as pltpu

_EPS = 1e-5
_HALO = 16          # halo rows per side; multiple of 8 (f32) and 16 (bf16) tiles
_L = 96             # fixed by AvgPool1d(96) in the reference model


# ---------------------------------------------------------------------------
# In-kernel helpers (traced inside the fused kernel).
# ---------------------------------------------------------------------------
def _bn_train(x):
    """BatchNorm1d built inside forward(): training-mode batch statistics,
    gamma=1, beta=0, biased variance.  x: (M, C) f32, stats over axis 0.
    The row reduction is done on the MXU (ones @ [x | x*x]) so the XLU is not
    the bottleneck."""
    m, c = x.shape
    ones = jnp.ones((1, m), jnp.float32)
    sums = jnp.dot(ones, jnp.concatenate([x, x * x], axis=-1),
                   preferred_element_type=jnp.float32)          # (1, 2C)
    mean = sums[:, :c] * (1.0 / m)
    meansq = sums[:, c:] * (1.0 / m)
    var = jnp.maximum(meansq - mean * mean, 0.0)
    return (x - mean) * lax.rsqrt(var + _EPS)


def _conv_im2col(src_ref, w, b, K, N, L):
    """'same' conv1d as ONE (N*L, K*Cin) x (K*Cin, Cout) bf16 matmul with f32
    accumulation.  src_ref is a zero-haloed (N, L+2*_HALO, Cin) VMEM scratch,
    so the halo rows implement the zero padding.  w: (K*Cin, Cout) bf16 value,
    b: (1, Cout) f32 value."""
    pad = K // 2
    lo = _HALO - pad
    win = src_ref[:, lo:lo + L + K - 1, :]                      # (N, L+K-1, Cin)
    if win.dtype != jnp.bfloat16:
        win = win.astype(jnp.bfloat16)
    cin = win.shape[-1]
    taps = [win[:, k:k + L, :] for k in range(K)]               # K shifted views
    xcat = jnp.concatenate(taps, axis=-1).reshape(N * L, K * cin)
    acc = lax.dot_general(xcat, w,
                          dimension_numbers=(((1,), (0,)), ((), ())),
                          preferred_element_type=jnp.float32)
    return acc + b                                              # (N*L, Cout) f32


# ---------------------------------------------------------------------------
# Fused kernel.  grid=(3,) iterates the three residual blocks; the stem runs
# on step 0 and the pool/fc head on the last step.  Block weights are blocked
# per grid step -> auto-pipelined weight DMA.  All activations stay in VMEM.
# ---------------------------------------------------------------------------
def _net_kernel(
    # inputs ------------------------------------------------------------
    x_taps,                       # (N*L, 7)  f32  stem-conv1 taps (pre-gathered)
    s1w, s1b,                     # (7,64) f32, (1,64) f32
    s2w, s2b,                     # (896,128) bf16 (cin-padded), (1,128) f32
    wblk, bblk,                   # (1,2176,256) bf16, (1,8,256) f32  (this block)
    wc3blk, bc3blk,               # (1,768,128)  bf16, (1,8,128) f32  (this block)
    fc1w, fc1b, fc2w, fc2b,       # fc head, f32
    # output ------------------------------------------------------------
    out_ref,                      # (N, 7) f32
    # VMEM scratch (persists across grid steps) ---------------------------
    buf128,                       # (N, Lp, 128) f32   residual path
    tmp_a, tmp_b,                 # (N, Lp, 256) bf16  block temps
):
    i = pl.program_id(0)
    N, Lp, _ = buf128.shape
    L = Lp - 2 * _HALO
    M = N * L

    # ----- step 0: zero the halos once + stem convs ----------------------
    @pl.when(i == 0)
    def _stem():
        zf = jnp.zeros((N, _HALO, 128), jnp.float32)
        buf128[:, :_HALO, :] = zf
        buf128[:, _HALO + L:, :] = zf
        zb = jnp.zeros((N, _HALO, 256), jnp.bfloat16)
        tmp_a[:, :_HALO, :] = zb
        tmp_a[:, _HALO + L:, :] = zb
        tmp_b[:, :_HALO, :] = zb
        tmp_b[:, _HALO + L:, :] = zb

        # stem conv1 (1->64, k7, p3): taps pre-gathered on the lane axis.
        h = jnp.dot(x_taps[...], s1w[...],
                    preferred_element_type=jnp.float32) + s1b[...]      # (M,64)
        h = jnp.concatenate([h, jnp.zeros((M, 64), jnp.float32)], axis=-1)
        buf128[:, _HALO:_HALO + L, :] = h.reshape(N, L, 128)

        # stem conv2 (64->128, k7, p3) via the 128-lane im2col path
        # (weight rows for the padded channels 64..127 are zero).
        h = _conv_im2col(buf128, s2w[...], s2b[...], 7, N, L)           # (M,128)
        buf128[:, _HALO:_HALO + L, :] = h.reshape(N, L, 128)

    # ----- every step: one residual block (weights pipelined per step) ---
    w12 = wblk.at[0]                       # (2176, 256) bf16 view
    w_c1 = w12[0:896, :]                   # 7*128 x 256
    w_c2 = w12[896:2176, :]                # 5*256 x 256
    bb = bblk.at[0]                        # (8, 256) f32 view
    b_c1 = bb[0:1, :]
    b_c2 = bb[1:2, :]
    w_c3 = wc3blk[0]                       # (768, 128) bf16  (3*256 x 128)
    b_c3 = bc3blk.at[0][0:1, :]            # (1, 128) f32

    h = jnp.maximum(_bn_train(_conv_im2col(buf128, w_c1, b_c1, 7, N, L)), 0.0)
    tmp_a[:, _HALO:_HALO + L, :] = h.astype(jnp.bfloat16).reshape(N, L, 256)
    h = jnp.maximum(_bn_train(_conv_im2col(tmp_a, w_c2, b_c2, 5, N, L)), 0.0)
    tmp_b[:, _HALO:_HALO + L, :] = h.astype(jnp.bfloat16).reshape(N, L, 256)
    h = _bn_train(_conv_im2col(tmp_b, w_c3, b_c3, 3, N, L))             # (M,128)
    res = buf128[:, _HALO:_HALO + L, :].reshape(M, 128)                 # f32
    h = jnp.maximum(h + 0.2 * res, 0.0)
    buf128[:, _HALO:_HALO + L, :] = h.reshape(N, L, 128)

    # ----- last step: AvgPool1d(96) (== per-sample mean over L) + fc head.
    @pl.when(i == pl.num_programs(0) - 1)
    def _head():
        act = buf128[:, _HALO:_HALO + L, :].reshape(M, 128)             # f32
        # Per-sample mean as a (N, M) selection matmul on the MXU.
        row = lax.broadcasted_iota(jnp.int32, (N, M), 0)
        col = lax.broadcasted_iota(jnp.int32, (N, M), 1)
        sel = jnp.logical_and(col >= row * L, col < (row + 1) * L)
        pool = jnp.where(sel, 1.0 / L, 0.0).astype(jnp.float32)
        pooled = jnp.dot(pool, act, preferred_element_type=jnp.float32)  # (N,128)
        hfc = jnp.dot(pooled, fc1w[...],
                      preferred_element_type=jnp.float32) + fc1b[...]
        out_ref[...] = jnp.dot(hfc, fc2w[...],
                               preferred_element_type=jnp.float32) + fc2b[...]


# ---------------------------------------------------------------------------
# Parameter init (PyTorch-style uniform(-1/sqrt(fan_in), +1/sqrt(fan_in))),
# stored PRE-PACKED so the per-call weight DMA is a handful of descriptors:
#   s2_w      : (7*128, 128) bf16, tap-major, cin zero-padded 64->128
#   blk_w256  : (3, 2176, 256) bf16  = [conv1 7*128 rows ; conv2 5*256 rows]
#   blk_b256  : (3, 8, 256)  f32     rows 0/1 = conv1/conv2 bias, rest zero
#   blk_wc3   : (3, 768, 128) bf16   conv3 (3*256 rows)
#   blk_bc3   : (3, 8, 128)  f32     row 0 = conv3 bias
# ---------------------------------------------------------------------------
def _conv_init(key, cin, cout, k):
    kw, kb = jax.random.split(key)
    bound = 1.0 / math.sqrt(cin * k)
    w = jax.random.uniform(kw, (k, cin, cout), jnp.float32, -bound, bound)
    b = jax.random.uniform(kb, (cout,), jnp.float32, -bound, bound)
    return w, b


def _linear_init(key, cin, cout):
    kw, kb = jax.random.split(key)
    bound = 1.0 / math.sqrt(cin)
    w = jax.random.uniform(kw, (cin, cout), jnp.float32, -bound, bound)
    b = jax.random.uniform(kb, (1, cout), jnp.float32, -bound, bound)
    return w, b


def init_params(key):
    ks = jax.random.split(key, 7)
    p = {}
    w1, b1 = _conv_init(ks[0], 1, 64, 7)          # (7,1,64)
    p["s1_w"] = w1.reshape(7, 64)
    p["s1_b"] = b1.reshape(1, 64)
    w2, b2 = _conv_init(ks[1], 64, 128, 7)        # (7,64,128)
    w2 = jnp.pad(w2, ((0, 0), (0, 64), (0, 0)))   # cin 64 -> 128 with zeros
    p["s2_w"] = w2.reshape(7 * 128, 128).astype(jnp.bfloat16)
    p["s2_b"] = b2.reshape(1, 128)

    w256, b256, wc3, bc3 = [], [], [], []
    for blk in range(3):
        k1, k2, k3 = jax.random.split(ks[2 + blk], 3)
        c1w, c1b = _conv_init(k1, 128, 256, 7)
        c2w, c2b = _conv_init(k2, 256, 256, 5)
        c3w, c3b = _conv_init(k3, 256, 128, 3)
        w256.append(jnp.concatenate(
            [c1w.reshape(7 * 128, 256), c2w.reshape(5 * 256, 256)], axis=0))
        b256.append(jnp.concatenate(
            [c1b.reshape(1, 256), c2b.reshape(1, 256),
             jnp.zeros((6, 256), jnp.float32)], axis=0))
        wc3.append(c3w.reshape(3 * 256, 128))
        bc3.append(jnp.concatenate(
            [c3b.reshape(1, 128), jnp.zeros((7, 128), jnp.float32)], axis=0))
    p["blk_w256"] = jnp.stack(w256).astype(jnp.bfloat16)   # (3, 2176, 256)
    p["blk_b256"] = jnp.stack(b256)                        # (3, 8, 256)
    p["blk_wc3"] = jnp.stack(wc3).astype(jnp.bfloat16)     # (3, 768, 128)
    p["blk_bc3"] = jnp.stack(bc3)                          # (3, 8, 128)

    p["fc1_w"], p["fc1_b"] = _linear_init(ks[5], 128, 64)
    p["fc2_w"], p["fc2_b"] = _linear_init(ks[6], 64, 7)
    return p


def _vmem_limit_bytes():
    """Per-generation VMEM limit: ~48 MiB on v7x (64 MiB physical),
    100 MiB on v5e/v6e (128 MiB physical)."""
    try:
        cap = int(pltpu.get_tpu_info().vmem_capacity_bytes)
    except Exception:
        cap = 64 * 1024 * 1024
    return int(max(32 * 1024 * 1024,
                   min(cap - 16 * 1024 * 1024, 100 * 1024 * 1024)))


@jax.jit
def net_forward(x_ncl, params):
    """x_ncl: PyTorch-layout (N, 1, 96) input.  Returns (N, 7).
    Note: N a multiple of 8 best fills MXU M-tiles; N=2 works but pads."""
    N, C, L = x_ncl.shape
    assert C == 1 and L == _L, "Net requires (N, 1, 96) input (AvgPool1d(96))."
    NL = N * L
    Lp = L + 2 * _HALO

    # Pre-gather the 7 taps of the single-channel stem conv (tiny entry-side
    # op) so the kernel never touches a 1-lane activation.
    x = x_ncl[:, 0, :].astype(jnp.float32)
    xp = jnp.pad(x, ((0, 0), (3, 3)))
    x_taps = jnp.stack([xp[:, k:k + L] for k in range(7)],
                       axis=-1).reshape(NL, 7)

    grid_spec = pltpu.PrefetchScalarGridSpec(
        num_scalar_prefetch=0,
        grid=(3,),                                   # one step per residual block
        in_specs=[
            pl.BlockSpec((NL, 7), lambda i: (0, 0)),         # x_taps (resident)
            pl.BlockSpec((7, 64), lambda i: (0, 0)),         # stem conv1 w
            pl.BlockSpec((1, 64), lambda i: (0, 0)),         # stem conv1 b
            pl.BlockSpec((896, 128), lambda i: (0, 0)),      # stem conv2 w
            pl.BlockSpec((1, 128), lambda i: (0, 0)),        # stem conv2 b
            pl.BlockSpec((1, 2176, 256), lambda i: (i, 0, 0)),  # block w (pipelined)
            pl.BlockSpec((1, 8, 256), lambda i: (i, 0, 0)),     # block b
            pl.BlockSpec((1, 768, 128), lambda i: (i, 0, 0)),   # block conv3 w
            pl.BlockSpec((1, 8, 128), lambda i: (i, 0, 0)),     # block conv3 b
            pl.BlockSpec((128, 64), lambda i: (0, 0)),       # fc1 w
            pl.BlockSpec((1, 64), lambda i: (0, 0)),         # fc1 b
            pl.BlockSpec((64, 7), lambda i: (0, 0)),         # fc2 w
            pl.BlockSpec((1, 7), lambda i: (0, 0)),          # fc2 b
        ],
        out_specs=pl.BlockSpec((N, 7), lambda i: (0, 0)),
        scratch_shapes=[
            pltpu.VMEM((N, Lp, 128), jnp.float32),    # residual path (f32)
            pltpu.VMEM((N, Lp, 256), jnp.bfloat16),   # block temp a
            pltpu.VMEM((N, Lp, 256), jnp.bfloat16),   # block temp b
        ],
    )

    return pl.pallas_call(
        _net_kernel,
        out_shape=jax.ShapeDtypeStruct((N, 7), jnp.float32),
        grid_spec=grid_spec,
        compiler_params=pltpu.CompilerParams(
            dimension_semantics=("arbitrary",),
            vmem_limit_bytes=_vmem_limit_bytes()),
    )(x_taps,
      params["s1_w"], params["s1_b"], params["s2_w"], params["s2_b"],
      params["blk_w256"], params["blk_b256"],
      params["blk_wc3"], params["blk_bc3"],
      params["fc1_w"], params["fc1_b"], params["fc2_w"], params["fc2_b"])


if __name__ == "__main__":
    key = jax.random.PRNGKey(0)
    pkey, xkey = jax.random.split(key)
    params = init_params(pkey)

    # L must be 96 so AvgPool1d(96) yields a length-1 output (view(-1,128)).
    N, L = 2, 96
    x = jax.random.normal(xkey, (N, 1, L), jnp.float32)   # PyTorch NCL input

    out = net_forward(x, params)
    out = jax.block_until_ready(out)
    assert out.shape == (N, 7), out.shape
    assert bool(jnp.all(jnp.isfinite(out)))
    print("KERNEL_OK")
</pallas_src>

<mosaic_0001>
module attributes {stable_mosaic.version = 11 : i64} {
  func.func @_net_kernel(%arg0: i32, %arg1: memref<192x7xf32, #tpu.memory_space<vmem>>, %arg2: memref<7x64xf32, #tpu.memory_space<vmem>>, %arg3: memref<1x64xf32, #tpu.memory_space<vmem>>, %arg4: memref<896x128xbf16, #tpu.memory_space<vmem>>, %arg5: memref<1x128xf32, #tpu.memory_space<vmem>>, %arg6: memref<1x2176x256xbf16, #tpu.memory_space<vmem>>, %arg7: memref<1x8x256xf32, #tpu.memory_space<vmem>>, %arg8: memref<1x768x128xbf16, #tpu.memory_space<vmem>>, %arg9: memref<1x8x128xf32, #tpu.memory_space<vmem>>, %arg10: memref<128x64xf32, #tpu.memory_space<vmem>>, %arg11: memref<1x64xf32, #tpu.memory_space<vmem>>, %arg12: memref<64x7xf32, #tpu.memory_space<vmem>>, %arg13: memref<1x7xf32, #tpu.memory_space<vmem>>, %arg14: memref<2x7xf32, #tpu.memory_space<vmem>>, %arg15: memref<2x128x128xf32, #tpu.memory_space<vmem>>, %arg16: memref<2x128x256xbf16, #tpu.memory_space<vmem>>, %arg17: memref<2x128x256xbf16, #tpu.memory_space<vmem>>) attributes {dimension_semantics = [#tpu.dimension_semantics<arbitrary>], iteration_bounds = array<i64: 3>, scalar_prefetch = 0 : i64, scratch_operands = 3 : i64, tpu.core_type = #tpu.core_type<tc>, window_params = [{pipeline_mode = #tpu.pipeline_mode<synchronous>, transform_indices = @transform_0, window_bounds = array<i64: 192, 7>}, {pipeline_mode = #tpu.pipeline_mode<synchronous>, transform_indices = @transform_1, window_bounds = array<i64: 7, 64>}, {pipeline_mode = #tpu.pipeline_mode<synchronous>, transform_indices = @transform_2, window_bounds = array<i64: 1, 64>}, {pipeline_mode = #tpu.pipeline_mode<synchronous>, transform_indices = @transform_3, window_bounds = array<i64: 896, 128>}, {pipeline_mode = #tpu.pipeline_mode<synchronous>, transform_indices = @transform_4, window_bounds = array<i64: 1, 128>}, {transform_indices = @transform_5, window_bounds = array<i64: 1, 2176, 256>}, {transform_indices = @transform_6, window_bounds = array<i64: 1, 8, 256>}, {transform_indices = @transform_7, window_bounds = array<i64: 1, 768, 128>}, {transform_indices = @transform_8, window_bounds = array<i64: 1, 8, 128>}, {pipeline_mode = #tpu.pipeline_mode<synchronous>, transform_indices = @transform_9, window_bounds = array<i64: 128, 64>}, {pipeline_mode = #tpu.pipeline_mode<synchronous>, transform_indices = @transform_10, window_bounds = array<i64: 1, 64>}, {pipeline_mode = #tpu.pipeline_mode<synchronous>, transform_indices = @transform_11, window_bounds = array<i64: 64, 7>}, {pipeline_mode = #tpu.pipeline_mode<synchronous>, transform_indices = @transform_12, window_bounds = array<i64: 1, 7>}, {pipeline_mode = #tpu.pipeline_mode<synchronous>, transform_indices = @transform_13, window_bounds = array<i64: 2, 7>}]} {
    %c0_i32 = arith.constant 0 : i32
    %0 = arith.cmpi eq, %arg0, %c0_i32 : i32
    %1 = arith.extui %0 : i1 to i32
    %c0_i32_0 = arith.constant 0 : i32
    %2 = arith.cmpi ne, %1, %c0_i32_0 : i32
    scf.if %2 {
      %cst_68 = arith.constant 0.000000e+00 : f32
      %139 = vector.broadcast %cst_68 : f32 to vector<2x16x128xf32>
      %c0_69 = arith.constant 0 : index
      %c0_70 = arith.constant 0 : index
      %c0_71 = arith.constant 0 : index
      %140 = vector.load %arg15[%c0_69, %c0_70, %c0_71] : memref<2x128x128xf32, #tpu.memory_space<vmem>>, vector<2x16x128xf32>
      tpu.vector_store %arg15[%c0_69, %c0_70, %c0_71], %139 {strides = array<i32>} : memref<2x128x128xf32, #tpu.memory_space<vmem>>, vector<2x16x128xf32>,
      %c0_72 = arith.constant 0 : index
      %c112 = arith.constant 112 : index
      %c0_73 = arith.constant 0 : index
      %141 = vector.load %arg15[%c0_72, %c112, %c0_73] : memref<2x128x128xf32, #tpu.memory_space<vmem>>, vector<2x16x128xf32>
      tpu.vector_store %arg15[%c0_72, %c112, %c0_73], %139 {strides = array<i32>} : memref<2x128x128xf32, #tpu.memory_space<vmem>>, vector<2x16x128xf32>,
      %cst_74 = arith.constant 0.000000e+00 : bf16
      %142 = vector.broadcast %cst_74 : bf16 to vector<2x16x256xbf16>
      %c0_75 = arith.constant 0 : index
      %c0_76 = arith.constant 0 : index
      %c0_77 = arith.constant 0 : index
      %143 = vector.load %arg16[%c0_75, %c0_76, %c0_77] : memref<2x128x256xbf16, #tpu.memory_space<vmem>>, vector<2x16x256xbf16>
      tpu.vector_store %arg16[%c0_75, %c0_76, %c0_77], %142 {strides = array<i32>} : memref<2x128x256xbf16, #tpu.memory_space<vmem>>, vector<2x16x256xbf16>,
      %c0_78 = arith.constant 0 : index
      %c112_79 = arith.constant 112 : index
      %c0_80 = arith.constant 0 : index
      %144 = vector.load %arg16[%c0_78, %c112_79, %c0_80] : memref<2x128x256xbf16, #tpu.memory_space<vmem>>, vector<2x16x256xbf16>
      tpu.vector_store %arg16[%c0_78, %c112_79, %c0_80], %142 {strides = array<i32>} : memref<2x128x256xbf16, #tpu.memory_space<vmem>>, vector<2x16x256xbf16>,
      %c0_81 = arith.constant 0 : index
      %c0_82 = arith.constant 0 : index
      %c0_83 = arith.constant 0 : index
      %145 = vector.load %arg17[%c0_81, %c0_82, %c0_83] : memref<2x128x256xbf16, #tpu.memory_space<vmem>>, vector<2x16x256xbf16>
      tpu.vector_store %arg17[%c0_81, %c0_82, %c0_83], %142 {strides = array<i32>} : memref<2x128x256xbf16, #tpu.memory_space<vmem>>, vector<2x16x256xbf16>,
      %c0_84 = arith.constant 0 : index
      %c112_85 = arith.constant 112 : index
      %c0_86 = arith.constant 0 : index
      %146 = vector.load %arg17[%c0_84, %c112_85, %c0_86] : memref<2x128x256xbf16, #tpu.memory_space<vmem>>, vector<2x16x256xbf16>
      tpu.vector_store %arg17[%c0_84, %c112_85, %c0_86], %142 {strides = array<i32>} : memref<2x128x256xbf16, #tpu.memory_space<vmem>>, vector<2x16x256xbf16>,
      %c0_87 = arith.constant 0 : index
      %c0_88 = arith.constant 0 : index
      %147 = vector.load %arg1[%c0_87, %c0_88] : memref<192x7xf32, #tpu.memory_space<vmem>>, vector<192x7xf32>
      %c0_89 = arith.constant 0 : index
      %c0_90 = arith.constant 0 : index
      %148 = vector.load %arg2[%c0_89, %c0_90] : memref<7x64xf32, #tpu.memory_space<vmem>>, vector<7x64xf32>
      %cst_91 = arith.constant dense<0.000000e+00> : vector<192x64xf32>
      %149 = tpu.matmul %147, %148, %cst_91 {dimension_numbers = #tpu.dot_dimension_numbers<[1], [0], [0], [1], [0, 0, 1, 1], [], []>} : vector<192x7xf32>, vector<7x64xf32>, vector<192x64xf32> -> vector<192x64xf32>
      %c0_92 = arith.constant 0 : index
      %c0_93 = arith.constant 0 : index
      %150 = vector.load %arg3[%c0_92, %c0_93] : memref<1x64xf32, #tpu.memory_space<vmem>>, vector<1x64xf32>
      %151 = vector.broadcast %150 : vector<1x64xf32> to vector<192x64xf32>
      %152 = arith.addf %149, %151 : vector<192x64xf32>
      %cst_94 = arith.constant 0.000000e+00 : f32
      %153 = vector.broadcast %cst_94 : f32 to vector<192x64xf32>
      %154 = tpu.concatenate %152, %153 in 1 : vector<192x64xf32>, vector<192x64xf32> -> vector<192x128xf32>
      %155 = vector.shape_cast %154 : vector<192x128xf32> to vector<2x96x128xf32>
      %c0_95 = arith.constant 0 : index
      %c16_96 = arith.constant 16 : index
      %c0_97 = arith.constant 0 : index
      %156 = vector.load %arg15[%c0_95, %c16_96, %c0_97] : memref<2x128x128xf32, #tpu.memory_space<vmem>>, vector<2x96x128xf32>
      tpu.vector_store %arg15[%c0_95, %c16_96, %c0_97], %155 {strides = array<i32>} : memref<2x128x128xf32, #tpu.memory_space<vmem>>, vector<2x96x128xf32>,
      %c0_98 = arith.constant 0 : index
      %c0_99 = arith.constant 0 : index
      %157 = vector.load %arg4[%c0_98, %c0_99] : memref<896x128xbf16, #tpu.memory_space<vmem>>, vector<896x128xbf16>
      %c0_100 = arith.constant 0 : index
      %c0_101 = arith.constant 0 : index
      %158 = vector.load %arg5[%c0_100, %c0_101] : memref<1x128xf32, #tpu.memory_space<vmem>>, vector<1x128xf32>
      %c0_102 = arith.constant 0 : index
      %c13_103 = arith.constant 13 : index
      %c0_104 = arith.constant 0 : index
      %159 = vector.load %arg15[%c0_102, %c13_103, %c0_104] : memref<2x128x128xf32, #tpu.memory_space<vmem>>, vector<2x102x128xf32>
      %160 = arith.truncf %159 : vector<2x102x128xf32> to vector<2x102x128xbf16>
      %161 = vector.extract_strided_slice %160 {offsets = [0, 0, 0], sizes = [2, 96, 128], strides = [1, 1, 1]} : vector<2x102x128xbf16> to vector<2x96x128xbf16>
      %162 = vector.extract_strided_slice %160 {offsets = [0, 1, 0], sizes = [2, 96, 128], strides = [1, 1, 1]} : vector<2x102x128xbf16> to vector<2x96x128xbf16>
      %163 = vector.extract_strided_slice %160 {offsets = [0, 2, 0], sizes = [2, 96, 128], strides = [1, 1, 1]} : vector<2x102x128xbf16> to vector<2x96x128xbf16>
      %164 = vector.extract_strided_slice %160 {offsets = [0, 3, 0], sizes = [2, 96, 128], strides = [1, 1, 1]} : vector<2x102x128xbf16> to vector<2x96x128xbf16>
      %165 = vector.extract_strided_slice %160 {offsets = [0, 4, 0], sizes = [2, 96, 128], strides = [1, 1, 1]} : vector<2x102x128xbf16> to vector<2x96x128xbf16>
      %166 = vector.extract_strided_slice %160 {offsets = [0, 5, 0], sizes = [2, 96, 128], strides = [1, 1, 1]} : vector<2x102x128xbf16> to vector<2x96x128xbf16>
      %167 = vector.extract_strided_slice %160 {offsets = [0, 6, 0], sizes = [2, 96, 128], strides = [1, 1, 1]} : vector<2x102x128xbf16> to vector<2x96x128xbf16>
      %168 = tpu.concatenate %161, %162, %163, %164, %165, %166, %167 in 2 : vector<2x96x128xbf16>, vector<2x96x128xbf16>, vector<2x96x128xbf16>, vector<2x96x128xbf16>, vector<2x96x128xbf16>, vector<2x96x128xbf16>, vector<2x96x128xbf16> -> vector<2x96x896xbf16>
      %169 = vector.shape_cast %168 : vector<2x96x896xbf16> to vector<192x896xbf16>
      %cst_105 = arith.constant dense<0.000000e+00> : vector<192x128xf32>
      %170 = tpu.matmul %169, %157, %cst_105 {dimension_numbers = #tpu.dot_dimension_numbers<[1], [0], [0], [1], [0, 0, 1, 1], [], []>} : vector<192x896xbf16>, vector<896x128xbf16>, vector<192x128xf32> -> vector<192x128xf32>
      %171 = vector.broadcast %158 : vector<1x128xf32> to vector<192x128xf32>
      %172 = arith.addf %170, %171 : vector<192x128xf32>
      %173 = vector.shape_cast %172 : vector<192x128xf32> to vector<2x96x128xf32>
      %c0_106 = arith.constant 0 : index
      %c16_107 = arith.constant 16 : index
      %c0_108 = arith.constant 0 : index
      %174 = vector.load %arg15[%c0_106, %c16_107, %c0_108] : memref<2x128x128xf32, #tpu.memory_space<vmem>>, vector<2x96x128xf32>
      tpu.vector_store %arg15[%c0_106, %c16_107, %c0_108], %173 {strides = array<i32>} : memref<2x128x128xf32, #tpu.memory_space<vmem>>, vector<2x96x128xf32>,
    } else {
    }
    %c0_i32_1 = arith.constant 0 : i32
    %c0_i32_2 = arith.constant 0 : i32
    %c0_i32_3 = arith.constant 0 : i32
    %3 = tpu.memref_slice %arg6[%c0_i32_1, %c0_i32_2, %c0_i32_3] : memref<1x2176x256xbf16, #tpu.memory_space<vmem>> -> memref<1x2176x256xbf16, #tpu.memory_space<vmem>>
    %4 = tpu.memref_squeeze %3 : memref<1x2176x256xbf16, #tpu.memory_space<vmem>> -> memref<2176x256xbf16, #tpu.memory_space<vmem>>
    %c0 = arith.constant 0 : index
    %c0_4 = arith.constant 0 : index
    %5 = vector.load %4[%c0, %c0_4] : memref<2176x256xbf16, #tpu.memory_space<vmem>>, vector<896x256xbf16>
    %c0_i32_5 = arith.constant 0 : i32
    %c0_i32_6 = arith.constant 0 : i32
    %c0_i32_7 = arith.constant 0 : i32
    %6 = tpu.memref_slice %arg6[%c0_i32_5, %c0_i32_6, %c0_i32_7] : memref<1x2176x256xbf16, #tpu.memory_space<vmem>> -> memref<1x2176x256xbf16, #tpu.memory_space<vmem>>
    %7 = tpu.memref_squeeze %6 : memref<1x2176x256xbf16, #tpu.memory_space<vmem>> -> memref<2176x256xbf16, #tpu.memory_space<vmem>>
    %c896 = arith.constant 896 : index
    %c0_8 = arith.constant 0 : index
    %8 = vector.load %7[%c896, %c0_8] : memref<2176x256xbf16, #tpu.memory_space<vmem>>, vector<1280x256xbf16>
    %c0_i32_9 = arith.constant 0 : i32
    %c0_i32_10 = arith.constant 0 : i32
    %c0_i32_11 = arith.constant 0 : i32
    %9 = tpu.memref_slice %arg7[%c0_i32_9, %c0_i32_10, %c0_i32_11] : memref<1x8x256xf32, #tpu.memory_space<vmem>> -> memref<1x8x256xf32, #tpu.memory_space<vmem>>
    %10 = tpu.memref_squeeze %9 : memref<1x8x256xf32, #tpu.memory_space<vmem>> -> memref<8x256xf32, #tpu.memory_space<vmem>>
    %c0_12 = arith.constant 0 : index
    %c0_13 = arith.constant 0 : index
    %11 = vector.load %10[%c0_12, %c0_13] : memref<8x256xf32, #tpu.memory_space<vmem>>, vector<1x256xf32>
    %c0_i32_14 = arith.constant 0 : i32
    %c0_i32_15 = arith.constant 0 : i32
    %c0_i32_16 = arith.constant 0 : i32
    %12 = tpu.memref_slice %arg7[%c0_i32_14, %c0_i32_15, %c0_i32_16] : memref<1x8x256xf32, #tpu.memory_space<vmem>> -> memref<1x8x256xf32, #tpu.memory_space<vmem>>
    %13 = tpu.memref_squeeze %12 : memref<1x8x256xf32, #tpu.memory_space<vmem>> -> memref<8x256xf32, #tpu.memory_space<vmem>>
    %c1 = arith.constant 1 : index
    %c0_17 = arith.constant 0 : index
    %14 = vector.load %13[%c1, %c0_17] : memref<8x256xf32, #tpu.memory_space<vmem>>, vector<1x256xf32>
    %c0_18 = arith.constant 0 : index
    %c0_19 = arith.constant 0 : index
    %c0_20 = arith.constant 0 : index
    %15 = vector.load %arg8[%c0_18, %c0_19, %c0_20] : memref<1x768x128xbf16, #tpu.memory_space<vmem>>, vector<1x768x128xbf16>
    %16 = vector.shape_cast %15 : vector<1x768x128xbf16> to vector<768x128xbf16>
    %c0_i32_21 = arith.constant 0 : i32
    %c0_i32_22 = arith.constant 0 : i32
    %c0_i32_23 = arith.constant 0 : i32
    %17 = tpu.memref_slice %arg9[%c0_i32_21, %c0_i32_22, %c0_i32_23] : memref<1x8x128xf32, #tpu.memory_space<vmem>> -> memref<1x8x128xf32, #tpu.memory_space<vmem>>
    %18 = tpu.memref_squeeze %17 : memref<1x8x128xf32, #tpu.memory_space<vmem>> -> memref<8x128xf32, #tpu.memory_space<vmem>>
    %c0_24 = arith.constant 0 : index
    %c0_25 = arith.constant 0 : index
    %19 = vector.load %18[%c0_24, %c0_25] : memref<8x128xf32, #tpu.memory_space<vmem>>, vector<1x128xf32>
    %c0_26 = arith.constant 0 : index
    %c13 = arith.constant 13 : index
    %c0_27 = arith.constant 0 : index
    %20 = vector.load %arg15[%c0_26, %c13, %c0_27] : memref<2x128x128xf32, #tpu.memory_space<vmem>>, vector<2x102x128xf32>
    %21 = arith.truncf %20 : vector<2x102x128xf32> to vector<2x102x128xbf16>
    %22 = vector.extract_strided_slice %21 {offsets = [0, 0, 0], sizes = [2, 96, 128], strides = [1, 1, 1]} : vector<2x102x128xbf16> to vector<2x96x128xbf16>
    %23 = vector.extract_strided_slice %21 {offsets = [0, 1, 0], sizes = [2, 96, 128], strides = [1, 1, 1]} : vector<2x102x128xbf16> to vector<2x96x128xbf16>
    %24 = vector.extract_strided_slice %21 {offsets = [0, 2, 0], sizes = [2, 96, 128], strides = [1, 1, 1]} : vector<2x102x128xbf16> to vector<2x96x128xbf16>
    %25 = vector.extract_strided_slice %21 {offsets = [0, 3, 0], sizes = [2, 96, 128], strides = [1, 1, 1]} : vector<2x102x128xbf16> to vector<2x96x128xbf16>
    %26 = vector.extract_strided_slice %21 {offsets = [0, 4, 0], sizes = [2, 96, 128], strides = [1, 1, 1]} : vector<2x102x128xbf16> to vector<2x96x128xbf16>
    %27 = vector.extract_strided_slice %21 {offsets = [0, 5, 0], sizes = [2, 96, 128], strides = [1, 1, 1]} : vector<2x102x128xbf16> to vector<2x96x128xbf16>
    %28 = vector.extract_strided_slice %21 {offsets = [0, 6, 0], sizes = [2, 96, 128], strides = [1, 1, 1]} : vector<2x102x128xbf16> to vector<2x96x128xbf16>
    %29 = tpu.concatenate %22, %23, %24, %25, %26, %27, %28 in 2 : vector<2x96x128xbf16>, vector<2x96x128xbf16>, vector<2x96x128xbf16>, vector<2x96x128xbf16>, vector<2x96x128xbf16>, vector<2x96x128xbf16>, vector<2x96x128xbf16> -> vector<2x96x896xbf16>
    %30 = vector.shape_cast %29 : vector<2x96x896xbf16> to vector<192x896xbf16>
    %cst = arith.constant dense<0.000000e+00> : vector<192x256xf32>
    %31 = tpu.matmul %30, %5, %cst {dimension_numbers = #tpu.dot_dimension_numbers<[1], [0], [0], [1], [0, 0, 1, 1], [], []>} : vector<192x896xbf16>, vector<896x256xbf16>, vector<192x256xf32> -> vector<192x256xf32>
    %32 = vector.broadcast %11 : vector<1x256xf32> to vector<192x256xf32>
    %33 = arith.addf %31, %32 : vector<192x256xf32>
    %cst_28 = arith.constant 1.000000e+00 : f32
    %34 = vector.broadcast %cst_28 : f32 to vector<1x192xf32>
    %35 = arith.mulf %33, %33 : vector<192x256xf32>
    %36 = tpu.concatenate %33, %35 in 1 : vector<192x256xf32>, vector<192x256xf32> -> vector<192x512xf32>
    %cst_29 = arith.constant dense<0.000000e+00> : vector<1x512xf32>
    %37 = tpu.matmul %34, %36, %cst_29 {dimension_numbers = #tpu.dot_dimension_numbers<[1], [0], [0], [1], [0, 0, 1, 1], [], []>} : vector<1x192xf32>, vector<192x512xf32>, vector<1x512xf32> -> vector<1x512xf32>
    %38 = vector.extract_strided_slice %37 {offsets = [0, 0], sizes = [1, 256], strides = [1, 1]} : vector<1x512xf32> to vector<1x256xf32>
    %cst_30 = arith.constant 0.00520833349 : f32
    %39 = vector.broadcast %cst_30 : f32 to vector<1x256xf32>
    %40 = arith.mulf %38, %39 : vector<1x256xf32>
    %41 = vector.extract_strided_slice %37 {offsets = [0, 256], sizes = [1, 256], strides = [1, 1]} : vector<1x512xf32> to vector<1x256xf32>
    %cst_31 = arith.constant 0.00520833349 : f32
    %42 = vector.broadcast %cst_31 : f32 to vector<1x256xf32>
    %43 = arith.mulf %41, %42 : vector<1x256xf32>
    %44 = arith.mulf %40, %40 : vector<1x256xf32>
    %45 = arith.subf %43, %44 : vector<1x256xf32>
    %cst_32 = arith.constant 0.000000e+00 : f32
    %46 = vector.broadcast %cst_32 : f32 to vector<1x256xf32>
    %47 = arith.maximumf %45, %46 : vector<1x256xf32>
    %48 = vector.broadcast %40 : vector<1x256xf32> to vector<192x256xf32>
    %49 = arith.subf %33, %48 : vector<192x256xf32>
    %cst_33 = arith.constant 9.99999974E-6 : f32
    %50 = vector.broadcast %cst_33 : f32 to vector<1x256xf32>
    %51 = arith.addf %47, %50 : vector<1x256xf32>
    %52 = math.rsqrt %51 : vector<1x256xf32>
    %53 = vector.broadcast %52 : vector<1x256xf32> to vector<192x256xf32>
    %54 = arith.mulf %49, %53 : vector<192x256xf32>
    %cst_34 = arith.constant 0.000000e+00 : f32
    %55 = vector.broadcast %cst_34 : f32 to vector<192x256xf32>
    %56 = arith.maximumf %54, %55 : vector<192x256xf32>
    %57 = arith.truncf %56 : vector<192x256xf32> to vector<192x256xbf16>
    %58 = vector.shape_cast %57 : vector<192x256xbf16> to vector<2x96x256xbf16>
    %c0_35 = arith.constant 0 : index
    %c16 = arith.constant 16 : index
    %c0_36 = arith.constant 0 : index
    %59 = vector.load %arg16[%c0_35, %c16, %c0_36] : memref<2x128x256xbf16, #tpu.memory_space<vmem>>, vector<2x96x256xbf16>
    tpu.vector_store %arg16[%c0_35, %c16, %c0_36], %58 {strides = array<i32>} : memref<2x128x256xbf16, #tpu.memory_space<vmem>>, vector<2x96x256xbf16>,
    %c0_37 = arith.constant 0 : index
    %c14 = arith.constant 14 : index
    %c0_38 = arith.constant 0 : index
    %60 = vector.load %arg16[%c0_37, %c14, %c0_38] : memref<2x128x256xbf16, #tpu.memory_space<vmem>>, vector<2x100x256xbf16>
    %61 = vector.extract_strided_slice %60 {offsets = [0, 0, 0], sizes = [2, 96, 256], strides = [1, 1, 1]} : vector<2x100x256xbf16> to vector<2x96x256xbf16>
    %62 = vector.extract_strided_slice %60 {offsets = [0, 1, 0], sizes = [2, 96, 256], strides = [1, 1, 1]} : vector<2x100x256xbf16> to vector<2x96x256xbf16>
    %63 = vector.extract_strided_slice %60 {offsets = [0, 2, 0], sizes = [2, 96, 256], strides = [1, 1, 1]} : vector<2x100x256xbf16> to vector<2x96x256xbf16>
    %64 = vector.extract_strided_slice %60 {offsets = [0, 3, 0], sizes = [2, 96, 256], strides = [1, 1, 1]} : vector<2x100x256xbf16> to vector<2x96x256xbf16>
    %65 = vector.extract_strided_slice %60 {offsets = [0, 4, 0], sizes = [2, 96, 256], strides = [1, 1, 1]} : vector<2x100x256xbf16> to vector<2x96x256xbf16>
    %66 = tpu.concatenate %61, %62, %63, %64, %65 in 2 : vector<2x96x256xbf16>, vector<2x96x256xbf16>, vector<2x96x256xbf16>, vector<2x96x256xbf16>, vector<2x96x256xbf16> -> vector<2x96x1280xbf16>
    %67 = vector.shape_cast %66 : vector<2x96x1280xbf16> to vector<192x1280xbf16>
    %cst_39 = arith.constant dense<0.000000e+00> : vector<192x256xf32>
    %68 = tpu.matmul %67, %8, %cst_39 {dimension_numbers = #tpu.dot_dimension_numbers<[1], [0], [0], [1], [0, 0, 1, 1], [], []>} : vector<192x1280xbf16>, vector<1280x256xbf16>, vector<192x256xf32> -> vector<192x256xf32>
    %69 = vector.broadcast %14 : vector<1x256xf32> to vector<192x256xf32>
    %70 = arith.addf %68, %69 : vector<192x256xf32>
    %cst_40 = arith.constant 1.000000e+00 : f32
    %71 = vector.broadcast %cst_40 : f32 to vector<1x192xf32>
    %72 = arith.mulf %70, %70 : vector<192x256xf32>
    %73 = tpu.concatenate %70, %72 in 1 : vector<192x256xf32>, vector<192x256xf32> -> vector<192x512xf32>
    %cst_41 = arith.constant dense<0.000000e+00> : vector<1x512xf32>
    %74 = tpu.matmul %71, %73, %cst_41 {dimension_numbers = #tpu.dot_dimension_numbers<[1], [0], [0], [1], [0, 0, 1, 1], [], []>} : vector<1x192xf32>, vector<192x512xf32>, vector<1x512xf32> -> vector<1x512xf32>
    %75 = vector.extract_strided_slice %74 {offsets = [0, 0], sizes = [1, 256], strides = [1, 1]} : vector<1x512xf32> to vector<1x256xf32>
    %cst_42 = arith.constant 0.00520833349 : f32
    %76 = vector.broadcast %cst_42 : f32 to vector<1x256xf32>
    %77 = arith.mulf %75, %76 : vector<1x256xf32>
    %78 = vector.extract_strided_slice %74 {offsets = [0, 256], sizes = [1, 256], strides = [1, 1]} : vector<1x512xf32> to vector<1x256xf32>
    %cst_43 = arith.constant 0.00520833349 : f32
    %79 = vector.broadcast %cst_43 : f32 to vector<1x256xf32>
    %80 = arith.mulf %78, %79 : vector<1x256xf32>
    %81 = arith.mulf %77, %77 : vector<1x256xf32>
    %82 = arith.subf %80, %81 : vector<1x256xf32>
    %cst_44 = arith.constant 0.000000e+00 : f32
    %83 = vector.broadcast %cst_44 : f32 to vector<1x256xf32>
    %84 = arith.maximumf %82, %83 : vector<1x256xf32>
    %85 = vector.broadcast %77 : vector<1x256xf32> to vector<192x256xf32>
    %86 = arith.subf %70, %85 : vector<192x256xf32>
    %cst_45 = arith.constant 9.99999974E-6 : f32
    %87 = vector.broadcast %cst_45 : f32 to vector<1x256xf32>
    %88 = arith.addf %84, %87 : vector<1x256xf32>
    %89 = math.rsqrt %88 : vector<1x256xf32>
    %90 = vector.broadcast %89 : vector<1x256xf32> to vector<192x256xf32>
    %91 = arith.mulf %86, %90 : vector<192x256xf32>
    %cst_46 = arith.constant 0.000000e+00 : f32
    %92 = vector.broadcast %cst_46 : f32 to vector<192x256xf32>
    %93 = arith.maximumf %91, %92 : vector<192x256xf32>
    %94 = arith.truncf %93 : vector<192x256xf32> to vector<192x256xbf16>
    %95 = vector.shape_cast %94 : vector<192x256xbf16> to vector<2x96x256xbf16>
    %c0_47 = arith.constant 0 : index
    %c16_48 = arith.constant 16 : index
    %c0_49 = arith.constant 0 : index
    %96 = vector.load %arg17[%c0_47, %c16_48, %c0_49] : memref<2x128x256xbf16, #tpu.memory_space<vmem>>, vector<2x96x256xbf16>
    tpu.vector_store %arg17[%c0_47, %c16_48, %c0_49], %95 {strides = array<i32>} : memref<2x128x256xbf16, #tpu.memory_space<vmem>>, vector<2x96x256xbf16>,
    %c0_50 = arith.constant 0 : index
    %c15 = arith.constant 15 : index
    %c0_51 = arith.constant 0 : index
    %97 = vector.load %arg17[%c0_50, %c15, %c0_51] : memref<2x128x256xbf16, #tpu.memory_space<vmem>>, vector<2x98x256xbf16>
    %98 = vector.extract_strided_slice %97 {offsets = [0, 0, 0], sizes = [2, 96, 256], strides = [1, 1, 1]} : vector<2x98x256xbf16> to vector<2x96x256xbf16>
    %99 = vector.extract_strided_slice %97 {offsets = [0, 1, 0], sizes = [2, 96, 256], strides = [1, 1, 1]} : vector<2x98x256xbf16> to vector<2x96x256xbf16>
    %100 = vector.extract_strided_slice %97 {offsets = [0, 2, 0], sizes = [2, 96, 256], strides = [1, 1, 1]} : vector<2x98x256xbf16> to vector<2x96x256xbf16>
    %101 = tpu.concatenate %98, %99, %100 in 2 : vector<2x96x256xbf16>, vector<2x96x256xbf16>, vector<2x96x256xbf16> -> vector<2x96x768xbf16>
    %102 = vector.shape_cast %101 : vector<2x96x768xbf16> to vector<192x768xbf16>
    %cst_52 = arith.constant dense<0.000000e+00> : vector<192x128xf32>
    %103 = tpu.matmul %102, %16, %cst_52 {dimension_numbers = #tpu.dot_dimension_numbers<[1], [0], [0], [1], [0, 0, 1, 1], [], []>} : vector<192x768xbf16>, vector<768x128xbf16>, vector<192x128xf32> -> vector<192x128xf32>
    %104 = vector.broadcast %19 : vector<1x128xf32> to vector<192x128xf32>
    %105 = arith.addf %103, %104 : vector<192x128xf32>
    %cst_53 = arith.constant 1.000000e+00 : f32
    %106 = vector.broadcast %cst_53 : f32 to vector<1x192xf32>
    %107 = arith.mulf %105, %105 : vector<192x128xf32>
    %108 = tpu.concatenate %105, %107 in 1 : vector<192x128xf32>, vector<192x128xf32> -> vector<192x256xf32>
    %cst_54 = arith.constant dense<0.000000e+00> : vector<1x256xf32>
    %109 = tpu.matmul %106, %108, %cst_54 {dimension_numbers = #tpu.dot_dimension_numbers<[1], [0], [0], [1], [0, 0, 1, 1], [], []>} : vector<1x192xf32>, vector<192x256xf32>, vector<1x256xf32> -> vector<1x256xf32>
    %110 = vector.extract_strided_slice %109 {offsets = [0, 0], sizes = [1, 128], strides = [1, 1]} : vector<1x256xf32> to vector<1x128xf32>
    %cst_55 = arith.constant 0.00520833349 : f32
    %111 = vector.broadcast %cst_55 : f32 to vector<1x128xf32>
    %112 = arith.mulf %110, %111 : vector<1x128xf32>
    %113 = vector.extract_strided_slice %109 {offsets = [0, 128], sizes = [1, 128], strides = [1, 1]} : vector<1x256xf32> to vector<1x128xf32>
    %cst_56 = arith.constant 0.00520833349 : f32
    %114 = vector.broadcast %cst_56 : f32 to vector<1x128xf32>
    %115 = arith.mulf %113, %114 : vector<1x128xf32>
    %116 = arith.mulf %112, %112 : vector<1x128xf32>
    %117 = arith.subf %115, %116 : vector<1x128xf32>
    %cst_57 = arith.constant 0.000000e+00 : f32
    %118 = vector.broadcast %cst_57 : f32 to vector<1x128xf32>
    %119 = arith.maximumf %117, %118 : vector<1x128xf32>
    %120 = vector.broadcast %112 : vector<1x128xf32> to vector<192x128xf32>
    %121 = arith.subf %105, %120 : vector<192x128xf32>
    %cst_58 = arith.constant 9.99999974E-6 : f32
    %122 = vector.broadcast %cst_58 : f32 to vector<1x128xf32>
    %123 = arith.addf %119, %122 : vector<1x128xf32>
    %124 = math.rsqrt %123 : vector<1x128xf32>
    %125 = vector.broadcast %124 : vector<1x128xf32> to vector<192x128xf32>
    %126 = arith.mulf %121, %125 : vector<192x128xf32>
    %c0_59 = arith.constant 0 : index
    %c16_60 = arith.constant 16 : index
    %c0_61 = arith.constant 0 : index
    %127 = vector.load %arg15[%c0_59, %c16_60, %c0_61] : memref<2x128x128xf32, #tpu.memory_space<vmem>>, vector<2x96x128xf32>
    %128 = vector.shape_cast %127 : vector<2x96x128xf32> to vector<192x128xf32>
    %cst_62 = arith.constant 2.000000e-01 : f32
    %129 = vector.broadcast %cst_62 : f32 to vector<192x128xf32>
    %130 = arith.mulf %129, %128 : vector<192x128xf32>
    %131 = arith.addf %126, %130 : vector<192x128xf32>
    %cst_63 = arith.constant 0.000000e+00 : f32
    %132 = vector.broadcast %cst_63 : f32 to vector<192x128xf32>
    %133 = arith.maximumf %131, %132 : vector<192x128xf32>
    %134 = vector.shape_cast %133 : vector<192x128xf32> to vector<2x96x128xf32>
    %c0_64 = arith.constant 0 : index
    %c16_65 = arith.constant 16 : index
    %c0_66 = arith.constant 0 : index
    %135 = vector.load %arg15[%c0_64, %c16_65, %c0_66] : memref<2x128x128xf32, #tpu.memory_space<vmem>>, vector<2x96x128xf32>
    tpu.vector_store %arg15[%c0_64, %c16_65, %c0_66], %134 {strides = array<i32>} : memref<2x128x128xf32, #tpu.memory_space<vmem>>, vector<2x96x128xf32>,
    %c2_i32 = arith.constant 2 : i32
    %136 = arith.cmpi eq, %arg0, %c2_i32 : i32
    %137 = arith.extui %136 : i1 to i32
    %c0_i32_67 = arith.constant 0 : i32
    %138 = arith.cmpi ne, %137, %c0_i32_67 : i32
    scf.if %138 {
      %c0_68 = arith.constant 0 : index
      %c16_69 = arith.constant 16 : index
      %c0_70 = arith.constant 0 : index
      %139 = vector.load %arg15[%c0_68, %c16_69, %c0_70] : memref<2x128x128xf32, #tpu.memory_space<vmem>>, vector<2x96x128xf32>
      %140 = vector.shape_cast %139 : vector<2x96x128xf32> to vector<192x128xf32>
      %141 = tpu.iota {dimensions = array<i32: 0>} : vector<2x192xi32>
      %142 = tpu.iota {dimensions = array<i32: 1>} : vector<2x192xi32>
      %c96_i32 = arith.constant 96 : i32
      %143 = vector.broadcast %c96_i32 : i32 to vector<2x192xi32>
      %144 = arith.muli %141, %143 : vector<2x192xi32>
      %145 = arith.cmpi sge, %142, %144 : vector<2x192xi32>
      %c1_i32 = arith.constant 1 : i32
      %146 = vector.broadcast %c1_i32 : i32 to vector<2x192xi32>
      %147 = arith.addi %141, %146 : vector<2x192xi32>
      %c96_i32_71 = arith.constant 96 : i32
      %148 = vector.broadcast %c96_i32_71 : i32 to vector<2x192xi32>
      %149 = arith.muli %147, %148 : vector<2x192xi32>
      %150 = arith.cmpi slt, %142, %149 : vector<2x192xi32>
      %151 = arith.andi %145, %150 : vector<2x192xi1>
      %cst_72 = arith.constant 0.010416667 : f32
      %cst_73 = arith.constant 0.000000e+00 : f32
      %152 = vector.broadcast %cst_72 : f32 to vector<2x192xf32>
      %153 = vector.broadcast %cst_73 : f32 to vector<2x192xf32>
      %154 = arith.select %151, %152, %153 : vector<2x192xi1>, vector<2x192xf32>
      %cst_74 = arith.constant dense<0.000000e+00> : vector<2x128xf32>
      %155 = tpu.matmul %154, %140, %cst_74 {dimension_numbers = #tpu.dot_dimension_numbers<[1], [0], [0], [1], [0, 0, 1, 1], [], []>} : vector<2x192xf32>, vector<192x128xf32>, vector<2x128xf32> -> vector<2x128xf32>
      %c0_75 = arith.constant 0 : index
      %c0_76 = arith.constant 0 : index
      %156 = vector.load %arg10[%c0_75, %c0_76] : memref<128x64xf32, #tpu.memory_space<vmem>>, vector<128x64xf32>
      %cst_77 = arith.constant dense<0.000000e+00> : vector<2x64xf32>
      %157 = tpu.matmul %155, %156, %cst_77 {dimension_numbers = #tpu.dot_dimension_numbers<[1], [0], [0], [1], [0, 0, 1, 1], [], []>} : vector<2x128xf32>, vector<128x64xf32>, vector<2x64xf32> -> vector<2x64xf32>
      %c0_78 = arith.constant 0 : index
      %c0_79 = arith.constant 0 : index
      %158 = vector.load %arg11[%c0_78, %c0_79] : memref<1x64xf32, #tpu.memory_space<vmem>>, vector<1x64xf32>
      %159 = vector.broadcast %158 : vector<1x64xf32> to vector<2x64xf32>
      %160 = arith.addf %157, %159 : vector<2x64xf32>
      %c0_80 = arith.constant 0 : index
      %c0_81 = arith.constant 0 : index
      %161 = vector.load %arg12[%c0_80, %c0_81] : memref<64x7xf32, #tpu.memory_space<vmem>>, vector<64x7xf32>
      %cst_82 = arith.constant dense<0.000000e+00> : vector<2x7xf32>
      %162 = tpu.matmul %160, %161, %cst_82 {dimension_numbers = #tpu.dot_dimension_numbers<[1], [0], [0], [1], [0, 0, 1, 1], [], []>} : vector<2x64xf32>, vector<64x7xf32>, vector<2x7xf32> -> vector<2x7xf32>
      %c0_83 = arith.constant 0 : index
      %c0_84 = arith.constant 0 : index
      %163 = vector.load %arg13[%c0_83, %c0_84] : memref<1x7xf32, #tpu.memory_space<vmem>>, vector<1x7xf32>
      %164 = vector.broadcast %163 : vector<1x7xf32> to vector<2x7xf32>
      %165 = arith.addf %162, %164 : vector<2x7xf32>
      %c0_85 = arith.constant 0 : index
      %c0_86 = arith.constant 0 : index
      %166 = vector.load %arg14[%c0_85, %c0_86] : memref<2x7xf32, #tpu.memory_space<vmem>>, vector<2x7xf32>
      tpu.vector_store %arg14[%c0_85, %c0_86], %165 {strides = array<i32>} : memref<2x7xf32, #tpu.memory_space<vmem>>, vector<2x7xf32>,
    } else {
    }
    return
  }
  func.func @transform_0(%arg0: i32) -> (i32, i32) {
    %c0_i32 = arith.constant 0 : i32
    %c0_i32_0 = arith.constant 0 : i32
    %c0_i32_1 = arith.constant 0 : i32
    return %c0_i32, %c0_i32_0 : i32, i32
  }
  func.func @transform_1(%arg0: i32) -> (i32, i32) {
    %c0_i32 = arith.constant 0 : i32
    %c0_i32_0 = arith.constant 0 : i32
    %c0_i32_1 = arith.constant 0 : i32
    return %c0_i32, %c0_i32_0 : i32, i32
  }
  func.func @transform_2(%arg0: i32) -> (i32, i32) {
    %c0_i32 = arith.constant 0 : i32
    %c0_i32_0 = arith.constant 0 : i32
    %c0_i32_1 = arith.constant 0 : i32
    return %c0_i32, %c0_i32_0 : i32, i32
  }
  func.func @transform_3(%arg0: i32) -> (i32, i32) {
    %c0_i32 = arith.constant 0 : i32
    %c0_i32_0 = arith.constant 0 : i32
    %c0_i32_1 = arith.constant 0 : i32
    return %c0_i32, %c0_i32_0 : i32, i32
  }
  func.func @transform_4(%arg0: i32) -> (i32, i32) {
    %c0_i32 = arith.constant 0 : i32
    %c0_i32_0 = arith.constant 0 : i32
    %c0_i32_1 = arith.constant 0 : i32
    return %c0_i32, %c0_i32_0 : i32, i32
  }
  func.func @transform_5(%arg0: i32) -> (i32, i32, i32) {
    %c0_i32 = arith.constant 0 : i32
    %c0_i32_0 = arith.constant 0 : i32
    %c0_i32_1 = arith.constant 0 : i32
    return %arg0, %c0_i32, %c0_i32_0 : i32, i32, i32
  }
  func.func @transform_6(%arg0: i32) -> (i32, i32, i32) {
    %c0_i32 = arith.constant 0 : i32
    %c0_i32_0 = arith.constant 0 : i32
    %c0_i32_1 = arith.constant 0 : i32
    return %arg0, %c0_i32, %c0_i32_0 : i32, i32, i32
  }
  func.func @transform_7(%arg0: i32) -> (i32, i32, i32) {
    %c0_i32 = arith.constant 0 : i32
    %c0_i32_0 = arith.constant 0 : i32
    %c0_i32_1 = arith.constant 0 : i32
    return %arg0, %c0_i32, %c0_i32_0 : i32, i32, i32
  }
  func.func @transform_8(%arg0: i32) -> (i32, i32, i32) {
    %c0_i32 = arith.constant 0 : i32
    %c0_i32_0 = arith.constant 0 : i32
    %c0_i32_1 = arith.constant 0 : i32
    return %arg0, %c0_i32, %c0_i32_0 : i32, i32, i32
  }
  func.func @transform_9(%arg0: i32) -> (i32, i32) {
    %c0_i32 = arith.constant 0 : i32
    %c0_i32_0 = arith.constant 0 : i32
    %c0_i32_1 = arith.constant 0 : i32
    return %c0_i32, %c0_i32_0 : i32, i32
  }
  func.func @transform_10(%arg0: i32) -> (i32, i32) {
    %c0_i32 = arith.constant 0 : i32
    %c0_i32_0 = arith.constant 0 : i32
    %c0_i32_1 = arith.constant 0 : i32
    return %c0_i32, %c0_i32_0 : i32, i32
  }
  func.func @transform_11(%arg0: i32) -> (i32, i32) {
    %c0_i32 = arith.constant 0 : i32
    %c0_i32_0 = arith.constant 0 : i32
    %c0_i32_1 = arith.constant 0 : i32
    return %c0_i32, %c0_i32_0 : i32, i32
  }
  func.func @transform_12(%arg0: i32) -> (i32, i32) {
    %c0_i32 = arith.constant 0 : i32
    %c0_i32_0 = arith.constant 0 : i32
    %c0_i32_1 = arith.constant 0 : i32
    return %c0_i32, %c0_i32_0 : i32, i32
  }
  func.func @transform_13(%arg0: i32) -> (i32, i32) {
    %c0_i32 = arith.constant 0 : i32
    %c0_i32_0 = arith.constant 0 : i32
    %c0_i32_1 = arith.constant 0 : i32
    return %c0_i32, %c0_i32_0 : i32, i32
  }
}

</mosaic_0001>

<llo_original>
// kernel: net_forward.1
$region0: #{net_forward.1}
  #allocation0 [shape = 'u32[]', space=smem, size = 0x4, offset = 0x4, fixed_abs, tag = 'smem constant byte address 0x4 - core index']
  #allocation1 [shape = 'u32[144,128]{1,0:T(1,128)}', space=vmem, size = 0x12000, scoped, tag = 'internal scratch']
  #allocation2 [shape = 'f32[2,128,128]{2,1,0:T(8,128)}', space=vmem, size = 0x20000, scoped, tag = 'scratch operand']
  #allocation3 [shape = 'bf16[2,128,256]{2,1,0:T(8,128)(2,1)}', space=vmem, size = 0x20000, scoped, tag = 'scratch operand']
  #allocation4 [shape = 'bf16[2,128,256]{2,1,0:T(8,128)(2,1)}', space=vmem, size = 0x20000, scoped, tag = 'scratch operand']
  %s0 = inlined_call_operand.vmem [shape: f32[192,7], index: 0, kind: input, shape index: {}]
  %s1 = inlined_call_operand.hbm [shape: f32[7,64], index: 1, kind: input, shape index: {}]
  %s2 = inlined_call_operand.hbm [shape: f32[1,64], index: 2, kind: input, shape index: {}]
  %s3 = inlined_call_operand.hbm [shape: bf16[896,128], index: 3, kind: input, shape index: {}]
  %s4 = inlined_call_operand.hbm [shape: f32[1,128], index: 4, kind: input, shape index: {}]
  %s5 = inlined_call_operand.hbm [shape: bf16[3,2176,256], index: 5, kind: input, shape index: {}]
  %s6 = inlined_call_operand.hbm [shape: f32[3,8,256], index: 6, kind: input, shape index: {}]
  %s7 = inlined_call_operand.hbm [shape: bf16[3,768,128], index: 7, kind: input, shape index: {}]
  %s8 = inlined_call_operand.hbm [shape: f32[3,8,128], index: 8, kind: input, shape index: {}]
  %s9 = inlined_call_operand.vmem [shape: f32[128,64], index: 9, kind: input, shape index: {}]
  %s10 = inlined_call_operand.hbm [shape: f32[1,64], index: 10, kind: input, shape index: {}]
  %s11 = inlined_call_operand.vmem [shape: f32[64,7], index: 11, kind: input, shape index: {}]
  %s12 = inlined_call_operand.hbm [shape: f32[1,7], index: 12, kind: input, shape index: {}]
  %s13 = inlined_call_operand.hbm [shape: f32[2,7], index: 13, kind: output, shape index: {}]
  %s14 = sld [smem:[#allocation0]]
  $region133: #{net_forward.1} parent=0
    _
  %s16 = ssub.s32 1, %s14
  %s17 = scalar_select 0, %s16, %s14
  $region1: #{net_forward.1} parent=0
    #allocation5 [shape = 'u8[4096]{0}', space=vmem, size = 0x1000, scoped, tag = 'input window, operand 1, single buffered']
    #allocation6 [shape = 's32[2]{0}', space=sflag, size = 0x8, scoped, tag = 'scoped memory for net_forward.1']
    #allocation7 [shape = 's32[2]{0}', space=sflag, size = 0x8, scoped, tag = 'scoped memory for net_forward.1']
    #allocation8 [shape = 'u8[512]{0}', space=vmem, size = 0x400, scoped, tag = 'input window, operand 2, single buffered']
    #allocation9 [shape = 's32[1]{0}', space=sflag, size = 0x4, scoped, tag = 'scoped memory for net_forward.1']
    #allocation10 [shape = 'u8[229376]{0}', space=vmem, size = 0x38000, scoped, tag = 'input window, operand 3, single buffered']
    #allocation11 [shape = 'u8[512]{0}', space=vmem, size = 0x400, scoped, tag = 'input window, operand 4, single buffered']
    #allocation12 [shape = 's32[1]{0}', space=sflag, size = 0x4, scoped, tag = 'scoped memory for net_forward.1']
    #allocation13 [shape = 'u8[2228224]{0}', space=vmem, size = 0x220000, scoped, tag = 'input window, operand 5']
    #allocation14 [shape = 'u8[16384]{0}', space=vmem, size = 0x4000, scoped, tag = 'input window, operand 6']
    #allocation15 [shape = 'u8[393216]{0}', space=vmem, size = 0x60000, scoped, tag = 'input window, operand 7']
    #allocation16 [shape = 'u8[8192]{0}', space=vmem, size = 0x2000, scoped, tag = 'input window, operand 8']
    #allocation17 [shape = 'u8[512]{0}', space=vmem, size = 0x400, scoped, tag = 'input window, operand 10, single buffered']
    #allocation18 [shape = 'u8[512]{0}', space=vmem, size = 0x400, scoped, tag = 'input window, operand 12, single buffered']
    #allocation19 [shape = 'u8[1024]{0}', space=vmem, size = 0x400, scoped, tag = 'output window, operand 0, single buffered']
    %18 = vsyncpa [#allocation6], 0
    %19 = vsyncpa [#allocation9], 0
    %20 = vsyncpa [#allocation12], 0
    %21 = vsyncpa [#allocation7], 0
    loop: start=0, step=1, limit=5
    $region2: #{net_forward.1} parent=1 // loop_pre_header
      _
    $region3: #{net_forward.1} parent=1 // loop_header
      %s23 = sphi 0, %s27
      %p24 = scmp.ge.s32.totalorder %s23, 5
      %s31 = sphi 0, %s31
      %s33 = sphi 0, %s31
      %s34 = sphi 0, %s33
      %s48 = sphi 0, %s34
      %s52 = sphi 0, %s52
      %s54 = sphi 0, %s52
      %s55 = sphi 0, %s54
      %s69 = sphi 0, %s55
      %s73 = sphi 0, %s73
      %s75 = sphi 0, %s73
      %s76 = sphi 0, %s75
      %s90 = sphi 0, %s76
      %s94 = sphi 0, %s94
      %s96 = sphi 0, %s94
      %s97 = sphi 0, %s96
      %s111 = sphi 0, %s97
      %s115 = sphi 0, %s115
      %s117 = sphi 0, %s115
      %s118 = sphi 0, %s117
      %s132 = sphi 0, %s118
      %s138 = sphi 0, %s140
      %s141 = sphi 0, %s138
      %s142 = sphi 0, %s141
      %s158 = sphi 0, %s142
      %s164 = sphi 0, %s166
      %s167 = sphi 0, %s164
      %s168 = sphi 0, %s167
      %s184 = sphi 0, %s168
      %s190 = sphi 0, %s192
      %s193 = sphi 0, %s190
      %s194 = sphi 0, %s193
      %s210 = sphi 0, %s194
      %s216 = sphi 0, %s218
      %s219 = sphi 0, %s216
      %s220 = sphi 0, %s219
      %s236 = sphi 0, %s220
      %s240 = sphi 0, %s240
      %s242 = sphi 0, %s240
      %s243 = sphi 0, %s242
      %s257 = sphi 0, %s243
      %s261 = sphi 0, %s261
      %s263 = sphi 0, %s261
      %s264 = sphi 0, %s263
      %s278 = sphi 0, %s264
      %s282 = sphi 0, %s282
      %s284 = sphi 0, %s282
      %s285 = sphi 0, %s284
      %s299 = sphi 0, %s285
      %s303 = sphi 0, %s303
      %s305 = sphi 0, %s303
      %s306 = sphi 0, %s305
      %s320 = sphi 0, %s306
      %s324 = sphi 0, %s324
      %s326 = sphi 0, %s324
      %s327 = sphi 0, %s326
      %s341 = sphi 0, %s327
    $region4: #{net_forward.1} parent=1 // loop_header_branch
      %26 = sbr.rel (%p24) target = $region8
    $region5: #{net_forward.1} parent=1 // loop_body
      %s28 = ssub.s32 %s23, 1
      %s29 = ssub.s32 %s23, 2
      %s30 = sadd.s32 %s23, 1
      %s32 = sadd.s32 %s31, 1
      %p35 = scmp.eq.s32.totalorder %s23, 2
      %p36 = scmp.ne.s32.totalorder %s31, %s33
      %p37 = scmp.eq.s32.totalorder %s23, 0
      %p38 = por %p36, %p37
      %p39 = scmp.ne.s32.totalorder %s31, %s33
      %p40 = scmp.eq.s32.totalorder %s28, 2
      %p41 = por %p39, %p40
      %p42 = scmp.ne.s32.totalorder %s33, %s34
      %p43 = scmp.eq.s32.totalorder %s28, 0
      %p44 = por %p42, %p43
      %p45 = scmp.ne.s32.totalorder %s33, %s34
      %p46 = scmp.eq.s32.totalorder %s29, 2
      %p47 = por %p45, %p46
      %p49 = scmp.ne.s32.totalorder %s34, %s48
      %p50 = scmp.eq.s32.totalorder %s29, 0
      %p51 = por %p49, %p50
      %s53 = sadd.s32 %s52, 1
      %p56 = scmp.eq.s32.totalorder %s23, 2
      %p57 = scmp.ne.s32.totalorder %s52, %s54
      %p58 = scmp.eq.s32.totalorder %s23, 0
      %p59 = por %p57, %p58
      %p60 = scmp.ne.s32.totalorder %s52, %s54
      %p61 = scmp.eq.s32.totalorder %s28, 2
      %p62 = por %p60, %p61
      %p63 = scmp.ne.s32.totalorder %s54, %s55
      %p64 = scmp.eq.s32.totalorder %s28, 0
      %p65 = por %p63, %p64
      %p66 = scmp.ne.s32.totalorder %s54, %s55
      %p67 = scmp.eq.s32.totalorder %s29, 2
      %p68 = por %p66, %p67
      %p70 = scmp.ne.s32.totalorder %s55, %s69
      %p71 = scmp.eq.s32.totalorder %s29, 0
      %p72 = por %p70, %p71
      %s74 = sadd.s32 %s73, 1
      %p77 = scmp.eq.s32.totalorder %s23, 2
      %p78 = scmp.ne.s32.totalorder %s73, %s75
      %p79 = scmp.eq.s32.totalorder %s23, 0
      %p80 = por %p78, %p79
      %p81 = scmp.ne.s32.totalorder %s73, %s75
      %p82 = scmp.eq.s32.totalorder %s28, 2
      %p83 = por %p81, %p82
      %p84 = scmp.ne.s32.totalorder %s75, %s76
      %p85 = scmp.eq.s32.totalorder %s28, 0
      %p86 = por %p84, %p85
      %p87 = scmp.ne.s32.totalorder %s75, %s76
      %p88 = scmp.eq.s32.totalorder %s29, 2
      %p89 = por %p87, %p88
      %p91 = scmp.ne.s32.totalorder %s76, %s90
      %p92 = scmp.eq.s32.totalorder %s29, 0
      %p93 = por %p91, %p92
      %s95 = sadd.s32 %s94, 1
      %p98 = scmp.eq.s32.totalorder %s23, 2
      %p99 = scmp.ne.s32.totalorder %s94, %s96
      %p100 = scmp.eq.s32.totalorder %s23, 0
      %p101 = por %p99, %p100
      %p102 = scmp.ne.s32.totalorder %s94, %s96
      %p103 = scmp.eq.s32.totalorder %s28, 2
      %p104 = por %p102, %p103
      %p105 = scmp.ne.s32.totalorder %s96, %s97
      %p106 = scmp.eq.s32.totalorder %s28, 0
      %p107 = por %p105, %p106
      %p108 = scmp.ne.s32.totalorder %s96, %s97
      %p109 = scmp.eq.s32.totalorder %s29, 2
      %p110 = por %p108, %p109
      %p112 = scmp.ne.s32.totalorder %s97, %s111
      %p113 = scmp.eq.s32.totalorder %s29, 0
      %p114 = por %p112, %p113
      %s116 = sadd.s32 %s115, 1
      %p119 = scmp.eq.s32.totalorder %s23, 2
      %p120 = scmp.ne.s32.totalorder %s115, %s117
      %p121 = scmp.eq.s32.totalorder %s23, 0
      %p122 = por %p120, %p121
      %p123 = scmp.ne.s32.totalorder %s115, %s117
      %p124 = scmp.eq.s32.totalorder %s28, 2
      %p125 = por %p123, %p124
      %p126 = scmp.ne.s32.totalorder %s117, %s118
      %p127 = scmp.eq.s32.totalorder %s28, 0
      %p128 = por %p126, %p127
      %p129 = scmp.ne.s32.totalorder %s117, %s118
      %p130 = scmp.eq.s32.totalorder %s29, 2
      %p131 = por %p129, %p130
      %p133 = scmp.ne.s32.totalorder %s118, %s132
      %p134 = scmp.eq.s32.totalorder %s29, 0
      %p135 = por %p133, %p134
      %s136 = ssub.s32 %s23, %s30
      %p137 = scmp.eq.s32.totalorder %s136, 0
      %s139 = sadd.s32 %s138, 1
      %s140 = scalar_select %p137, %s138, %s139
      %p143 = pneg %p137
      %p144 = scmp.eq.s32.totalorder %s23, 2
      %p145 = por %p143, %p144
      %p146 = scmp.ne.s32.totalorder %s138, %s141
      %p147 = scmp.eq.s32.totalorder %s23, 0
      %p148 = por %p146, %p147
      %p149 = scmp.ne.s32.totalorder %s138, %s141
      %p150 = scmp.eq.s32.totalorder %s28, 2
      %p151 = por %p149, %p150
      %p152 = scmp.ne.s32.totalorder %s141, %s142
      %p153 = scmp.eq.s32.totalorder %s28, 0
      %p154 = por %p152, %p153
      %p155 = scmp.ne.s32.totalorder %s141, %s142
      %p156 = scmp.eq.s32.totalorder %s29, 2
      %p157 = por %p155, %p156
      %p159 = scmp.ne.s32.totalorder %s142, %s158
      %p160 = scmp.eq.s32.totalorder %s29, 0
      %p161 = por %p159, %p160
      %s162 = ssub.s32 %s23, %s30
      %p163 = scmp.eq.s32.totalorder %s162, 0
      %s165 = sadd.s32 %s164, 1
      %s166 = scalar_select %p163, %s164, %s165
      %p169 = pneg %p163
      %p170 = scmp.eq.s32.totalorder %s23, 2
      %p171 = por %p169, %p170
      %p172 = scmp.ne.s32.totalorder %s164, %s167
      %p173 = scmp.eq.s32.totalorder %s23, 0
      %p174 = por %p172, %p173
      %p175 = scmp.ne.s32.totalorder %s164, %s167
      %p176 = scmp.eq.s32.totalorder %s28, 2
      %p177 = por %p175, %p176
      %p178 = scmp.ne.s32.totalorder %s167, %s168
      %p179 = scmp.eq.s32.totalorder %s28, 0
      %p180 = por %p178, %p179
      %p181 = scmp.ne.s32.totalorder %s167, %s168
      %p182 = scmp.eq.s32.totalorder %s29, 2
      %p183 = por %p181, %p182
      %p185 = scmp.ne.s32.totalorder %s168, %s184
      %p186 = scmp.eq.s32.totalorder %s29, 0
      %p187 = por %p185, %p186
      %s188 = ssub.s32 %s23, %s30
      %p189 = scmp.eq.s32.totalorder %s188, 0
      %s191 = sadd.s32 %s190, 1
      %s192 = scalar_select %p189, %s190, %s191
      %p195 = pneg %p189
      %p196 = scmp.eq.s32.totalorder %s23, 2
      %p197 = por %p195, %p196
      %p198 = scmp.ne.s32.totalorder %s190, %s193
      %p199 = scmp.eq.s32.totalorder %s23, 0
      %p200 = por %p198, %p199
      %p201 = scmp.ne.s32.totalorder %s190, %s193
      %p202 = scmp.eq.s32.totalorder %s28, 2
      %p203 = por %p201, %p202
      %p204 = scmp.ne.s32.totalorder %s193, %s194
      %p205 = scmp.eq.s32.totalorder %s28, 0
      %p206 = por %p204, %p205
      %p207 = scmp.ne.s32.totalorder %s193, %s194
      %p208 = scmp.eq.s32.totalorder %s29, 2
      %p209 = por %p207, %p208
      %p211 = scmp.ne.s32.totalorder %s194, %s210
      %p212 = scmp.eq.s32.totalorder %s29, 0
      %p213 = por %p211, %p212
      %s214 = ssub.s32 %s23, %s30
      %p215 = scmp.eq.s32.totalorder %s214, 0
      %s217 = sadd.s32 %s216, 1
      %s218 = scalar_select %p215, %s216, %s217
      %p221 = pneg %p215
      %p222 = scmp.eq.s32.totalorder %s23, 2
      %p223 = por %p221, %p222
      %p224 = scmp.ne.s32.totalorder %s216, %s219
      %p225 = scmp.eq.s32.totalorder %s23, 0
      %p226 = por %p224, %p225
      %p227 = scmp.ne.s32.totalorder %s216, %s219
      %p228 = scmp.eq.s32.totalorder %s28, 2
      %p229 = por %p227, %p228
      %p230 = scmp.ne.s32.totalorder %s219, %s220
      %p231 = scmp.eq.s32.totalorder %s28, 0
      %p232 = por %p230, %p231
      %p233 = scmp.ne.s32.totalorder %s219, %s220
      %p234 = scmp.eq.s32.totalorder %s29, 2
      %p235 = por %p233, %p234
      %p237 = scmp.ne.s32.totalorder %s220, %s236
      %p238 = scmp.eq.s32.totalorder %s29, 0
      %p239 = por %p237, %p238
      %s241 = sadd.s32 %s240, 1
      %p244 = scmp.eq.s32.totalorder %s23, 2
      %p245 = scmp.ne.s32.totalorder %s240, %s242
      %p246 = scmp.eq.s32.totalorder %s23, 0
      %p247 = por %p245, %p246
      %p248 = scmp.ne.s32.totalorder %s240, %s242
      %p249 = scmp.eq.s32.totalorder %s28, 2
      %p250 = por %p248, %p249
      %p251 = scmp.ne.s32.totalorder %s242, %s243
      %p252 = scmp.eq.s32.totalorder %s28, 0
      %p253 = por %p251, %p252
      %p254 = scmp.ne.s32.totalorder %s242, %s243
      %p255 = scmp.eq.s32.totalorder %s29, 2
      %p256 = por %p254, %p255
      %p258 = scmp.ne.s32.totalorder %s243, %s257
      %p259 = scmp.eq.s32.totalorder %s29, 0
      %p260 = por %p258, %p259
      %s262 = sadd.s32 %s261, 1
      %p265 = scmp.eq.s32.totalorder %s23, 2
      %p266 = scmp.ne.s32.totalorder %s261, %s263
      %p267 = scmp.eq.s32.totalorder %s23, 0
      %p268 = por %p266, %p267
      %p269 = scmp.ne.s32.totalorder %s261, %s263
      %p270 = scmp.eq.s32.totalorder %s28, 2
      %p271 = por %p269, %p270
      %p272 = scmp.ne.s32.totalorder %s263, %s264
      %p273 = scmp.eq.s32.totalorder %s28, 0
      %p274 = por %p272, %p273
      %p275 = scmp.ne.s32.totalorder %s263, %s264
      %p276 = scmp.eq.s32.totalorder %s29, 2
      %p277 = por %p275, %p276
      %p279 = scmp.ne.s32.totalorder %s264, %s278
      %p280 = scmp.eq.s32.totalorder %s29, 0
      %p281 = por %p279, %p280
      %s283 = sadd.s32 %s282, 1
      %p286 = scmp.eq.s32.totalorder %s23, 2
      %p287 = scmp.ne.s32.totalorder %s282, %s284
      %p288 = scmp.eq.s32.totalorder %s23, 0
      %p289 = por %p287, %p288
      %p290 = scmp.ne.s32.totalorder %s282, %s284
      %p291 = scmp.eq.s32.totalorder %s28, 2
      %p292 = por %p290, %p291
      %p293 = scmp.ne.s32.totalorder %s284, %s285
      %p294 = scmp.eq.s32.totalorder %s28, 0
      %p295 = por %p293, %p294
      %p296 = scmp.ne.s32.totalorder %s284, %s285
      %p297 = scmp.eq.s32.totalorder %s29, 2
      %p298 = por %p296, %p297
      %p300 = scmp.ne.s32.totalorder %s285, %s299
      %p301 = scmp.eq.s32.totalorder %s29, 0
      %p302 = por %p300, %p301
      %s304 = sadd.s32 %s303, 1
      %p307 = scmp.eq.s32.totalorder %s23, 2
      %p308 = scmp.ne.s32.totalorder %s303, %s305
      %p309 = scmp.eq.s32.totalorder %s23, 0
      %p310 = por %p308, %p309
      %p311 = scmp.ne.s32.totalorder %s303, %s305
      %p312 = scmp.eq.s32.totalorder %s28, 2
      %p313 = por %p311, %p312
      %p314 = scmp.ne.s32.totalorder %s305, %s306
      %p315 = scmp.eq.s32.totalorder %s28, 0
      %p316 = por %p314, %p315
      %p317 = scmp.ne.s32.totalorder %s305, %s306
      %p318 = scmp.eq.s32.totalorder %s29, 2
      %p319 = por %p317, %p318
      %p321 = scmp.ne.s32.totalorder %s306, %s320
      %p322 = scmp.eq.s32.totalorder %s29, 0
      %p323 = por %p321, %p322
      %s325 = sadd.s32 %s324, 1
      %p328 = scmp.eq.s32.totalorder %s23, 2
      %p329 = scmp.ne.s32.totalorder %s324, %s326
      %p330 = scmp.eq.s32.totalorder %s23, 0
      %p331 = por %p329, %p330
      %p332 = scmp.ne.s32.totalorder %s324, %s326
      %p333 = scmp.eq.s32.totalorder %s28, 2
      %p334 = por %p332, %p333
      %p335 = scmp.ne.s32.totalorder %s326, %s327
      %p336 = scmp.eq.s32.totalorder %s28, 0
      %p337 = por %p335, %p336
      %p338 = scmp.ne.s32.totalorder %s326, %s327
      %p339 = scmp.eq.s32.totalorder %s29, 2
      %p340 = por %p338, %p339
      %p342 = scmp.ne.s32.totalorder %s327, %s341
      %p343 = scmp.eq.s32.totalorder %s29, 0
      %p344 = por %p342, %p343
      %p345 = scmp.le.s32.totalorder 1, %s23
      %p346 = scmp.lt.s32.totalorder %s23, 4
      %p347 = pnand %p345, %p346
      %p348 = pneg %p347
      // Predicated region
      $region9: #{net_forward.1} parent=5 // pred_check
        _
      $region10: #{net_forward.1} parent=5 // pred_check_branch
        %350 = sbr.rel (%p347) target = $region12
      $region11: #{net_forward.1} parent=5 // pred_region
        %s351 = ssub.s32 %s23, 1
        // Predicated region
        $region13: #{net_forward.1} parent=11 // pred_check
          %p352 = pneg %p44
        $region14: #{net_forward.1} parent=11 // pred_check_branch
          %354 = sbr.rel (%p352) target = $region16
        $region15: #{net_forward.1} parent=11 // pred_region
          _
        $region16: #{net_forward.1} parent=11 // pred_fallthru
          _
        // Predicated region
        $region17: #{net_forward.1} parent=11 // pred_check
          %p355 = pneg %p65
        $region18: #{net_forward.1} parent=11 // pred_check_branch
          %357 = sbr.rel (%p355) target = $region20
        $region19: #{net_forward.1} parent=11 // pred_region
          %s359 = ssub.s32 128, 128
          %360 = vsyncadd [#allocation6], %s359
          %s362 = sshll.u32 [#allocation5], 4
          %s363 = int_to_ptr.vmem [resolvable:$true] %s362
          %365 = dma.hbm_to_vmem [thread:$0]  %s1, 128, %s363, [#allocation6]
        $region20: #{net_forward.1} parent=11 // pred_fallthru
          _
        // Predicated region
        $region21: #{net_forward.1} parent=11 // pred_check
          %p366 = pneg %p86
        $region22: #{net_forward.1} parent=11 // pred_check_branch
          %368 = sbr.rel (%p366) target = $region24
        $region23: #{net_forward.1} parent=11 // pred_region
          %s370 = ssub.s32 16, 16
          %371 = vsyncadd [#allocation9], %s370
          %s373 = sshll.u32 [#allocation8], 4
          %s374 = int_to_ptr.vmem [resolvable:$true] %s373
          %376 = dma.hbm_to_vmem [thread:$0]  %s2, 16, %s374, [#allocation9]
        $region24: #{net_forward.1} parent=11 // pred_fallthru
          _
        // Predicated region
        $region25: #{net_forward.1} parent=11 // pred_check
          %p377 = pneg %p107
        $region26: #{net_forward.1} parent=11 // pred_check_branch
          %379 = sbr.rel (%p377) target = $region28
        $region27: #{net_forward.1} parent=11 // pred_region
          %s381 = ssub.s32 7168, 7168
          %382 = vsyncadd [#allocation9], %s381
          %s383 = sshll.u32 [#allocation10], 4
          %s384 = int_to_ptr.vmem [resolvable:$true] %s383
          %389 = dma.hbm_to_vmem [thread:$0]  %s3, 7168, %s384, [#allocation9], 64, 64, 4
        $region28: #{net_forward.1} parent=11 // pred_fallthru
          _
        // Predicated region
        $region29: #{net_forward.1} parent=11 // pred_check
          %p390 = pneg %p128
        $region30: #{net_forward.1} parent=11 // pred_check_branch
          %392 = sbr.rel (%p390) target = $region32
        $region31: #{net_forward.1} parent=11 // pred_region
          %s394 = ssub.s32 16, 16
          %395 = vsyncadd [#allocation12], %s394
          %s397 = sshll.u32 [#allocation11], 4
          %s398 = int_to_ptr.vmem [resolvable:$true] %s397
          %400 = dma.hbm_to_vmem [thread:$0]  %s4, 16, %s398, [#allocation12]
        $region32: #{net_forward.1} parent=11 // pred_fallthru
          _
        // Predicated region
        $region33: #{net_forward.1} parent=11 // pred_check
          %p401 = pneg %p253
        $region34: #{net_forward.1} parent=11 // pred_check_branch
          %403 = sbr.rel (%p401) target = $region36
        $region35: #{net_forward.1} parent=11 // pred_region
          _
        $region36: #{net_forward.1} parent=11 // pred_fallthru
          _
        // Predicated region
        $region37: #{net_forward.1} parent=11 // pred_check
          %p404 = pneg %p274
        $region38: #{net_forward.1} parent=11 // pred_check_branch
          %406 = sbr.rel (%p404) target = $region40
        $region39: #{net_forward.1} parent=11 // pred_region
          %s408 = ssub.s32 16, 16
          %409 = vsyncadd [#allocation9], %s408
          %s411 = sshll.u32 [#allocation17], 4
          %s412 = int_to_ptr.vmem [resolvable:$true] %s411
          %414 = dma.hbm_to_vmem [thread:$0]  %s10, 16, %s412, [#allocation9]
        $region40: #{net_forward.1} parent=11 // pred_fallthru
          _
        // Predicated region
        $region41: #{net_forward.1} parent=11 // pred_check
          %p415 = pneg %p295
        $region42: #{net_forward.1} parent=11 // pred_check_branch
          %417 = sbr.rel (%p415) target = $region44
        $region43: #{net_forward.1} parent=11 // pred_region
          _
        $region44: #{net_forward.1} parent=11 // pred_fallthru
          _
        // Predicated region
        $region45: #{net_forward.1} parent=11 // pred_check
          %p418 = pneg %p316
        $region46: #{net_forward.1} parent=11 // pred_check_branch
          %420 = sbr.rel (%p418) target = $region48
        $region47: #{net_forward.1} parent=11 // pred_region
          %s422 = ssub.s32 16, 16
          %423 = vsyncadd [#allocation12], %s422
          %s425 = sshll.u32 [#allocation18], 4
          %s426 = int_to_ptr.vmem [resolvable:$true] %s425
          %428 = dma.hbm_to_vmem [thread:$0]  %s12, 16, %s426, [#allocation12]
        $region48: #{net_forward.1} parent=11 // pred_fallthru
          _
      $region12: #{net_forward.1} parent=5 // pred_fallthru
        _
      %p429 = scmp.lt.s32.totalorder %s23, 3
      // Predicated region
      $region49: #{net_forward.1} parent=5 // pred_check
        %p430 = pneg %p429
      $region50: #{net_forward.1} parent=5 // pred_check_branch
        %432 = sbr.rel (%p430) target = $region52
      $region51: #{net_forward.1} parent=5 // pred_region
        // Predicated region
        $region53: #{net_forward.1} parent=51 // pred_check
          %p433 = pneg %p148
        $region54: #{net_forward.1} parent=51 // pred_check_branch
          %435 = sbr.rel (%p433) target = $region56
        $region55: #{net_forward.1} parent=51 // pred_region
          %s436 = sand.u32 %s23, 1
          %s437 = scalar_lea.sflag [#allocation6], %s436
          %s438 = sand.u32 %s138, 1
          %s439 = smul.addr %s438, 2176
          %s440 = scalar_lea.vmem [#allocation13], %s439
          %s442 = ssub.s32 34816, 34816
          %443 = vsyncadd %s437, %s442
          %s444 = smul.addr %s23, 544
          %s445 = smul.addr %s444, 64
          %s446 = scalar_lea.hbm %s5, %s445
          %s447 = sshll.u32 %s440, 4
          %s448 = int_to_ptr.vmem [resolvable:$true] %s447
          %453 = dma.hbm_to_vmem [thread:$0]  %s446, 34816, %s448, %s437, 128, 128, 8
        $region56: #{net_forward.1} parent=51 // pred_fallthru
          _
        // Predicated region
        $region57: #{net_forward.1} parent=51 // pred_check
          %p454 = pneg %p174
        $region58: #{net_forward.1} parent=51 // pred_check_branch
          %456 = sbr.rel (%p454) target = $region60
        $region59: #{net_forward.1} parent=51 // pred_region
          %s457 = sand.u32 %s23, 1
          %s458 = scalar_lea.sflag [#allocation6], %s457
          %s459 = sand.u32 %s164, 1
          %s460 = smul.addr %s459, 16
          %s461 = scalar_lea.vmem [#allocation14], %s460
          %s463 = ssub.s32 256, 256
          %464 = vsyncadd %s458, %s463
          %s465 = smul.addr %s23, 2
          %s466 = smul.addr %s465, 128
          %s467 = scalar_lea.hbm %s6, %s466
          %s469 = sshll.u32 %s461, 4
          %s470 = int_to_ptr.vmem [resolvable:$true] %s469
          %472 = dma.hbm_to_vmem [thread:$0]  %s467, 256, %s470, %s458
        $region60: #{net_forward.1} parent=51 // pred_fallthru
          _
        // Predicated region
        $region61: #{net_forward.1} parent=51 // pred_check
          %p473 = pneg %p200
        $region62: #{net_forward.1} parent=51 // pred_check_branch
          %475 = sbr.rel (%p473) target = $region64
        $region63: #{net_forward.1} parent=51 // pred_region
          %s476 = sand.u32 %s23, 1
          %s477 = scalar_lea.sflag [#allocation6], %s476
          %s478 = sand.u32 %s190, 1
          %s479 = smul.addr %s478, 384
          %s480 = scalar_lea.vmem [#allocation15], %s479
          %s482 = ssub.s32 6144, 6144
          %483 = vsyncadd %s477, %s482
          %s484 = smul.addr %s23, 96
          %s485 = smul.addr %s484, 64
          %s486 = scalar_lea.hbm %s7, %s485
          %s487 = sshll.u32 %s480, 4
          %s488 = int_to_ptr.vmem [resolvable:$true] %s487
          %493 = dma.hbm_to_vmem [thread:$0]  %s486, 6144, %s488, %s477, 64, 64, 4
        $region64: #{net_forward.1} parent=51 // pred_fallthru
          _
        // Predicated region
        $region65: #{net_forward.1} parent=51 // pred_check
          %p494 = pneg %p226
        $region66: #{net_forward.1} parent=51 // pred_check_branch
          %496 = sbr.rel (%p494) target = $region68
        $region67: #{net_forward.1} parent=51 // pred_region
          %s497 = sand.u32 %s23, 1
          %s498 = scalar_lea.sflag [#allocation6], %s497
          %s499 = sand.u32 %s216, 1
          %s500 = smul.addr %s499, 8
          %s501 = scalar_lea.vmem [#allocation16], %s500
          %s503 = ssub.s32 128, 128
          %504 = vsyncadd %s498, %s503
          %s505 = smul.addr %s23, 128
          %s506 = scalar_lea.hbm %s8, %s505
          %s508 = sshll.u32 %s501, 4
          %s509 = int_to_ptr.vmem [resolvable:$true] %s508
          %511 = dma.hbm_to_vmem [thread:$0]  %s506, 128, %s509, %s498
        $region68: #{net_forward.1} parent=51 // pred_fallthru
          _
      $region52: #{net_forward.1} parent=5 // pred_fallthru
        _
      %p512 = scmp.le.s32.totalorder 1, %s23
      %p513 = scmp.lt.s32.totalorder %s23, 4
      %p514 = pnand %p512, %p513
      %p515 = pneg %p514
      // Predicated region
      $region69: #{net_forward.1} parent=5 // pred_check
        _
      $region70: #{net_forward.1} parent=5 // pred_check_branch
        %517 = sbr.rel (%p514) target = $region72
      $region71: #{net_forward.1} parent=5 // pred_region
        %s518 = ssub.s32 %s23, 1
        // Predicated region
        $region73: #{net_forward.1} parent=71 // pred_check
          %p519 = pneg %p65
        $region74: #{net_forward.1} parent=71 // pred_check_branch
          %521 = sbr.rel (%p519) target = $region76
        $region75: #{net_forward.1} parent=71 // pred_region
          %522 = dma.done [#allocation6], 128
        $region76: #{net_forward.1} parent=71 // pred_fallthru
          _
        // Predicated region
        $region77: #{net_forward.1} parent=71 // pred_check
          %p523 = pneg %p86
        $region78: #{net_forward.1} parent=71 // pred_check_branch
          %525 = sbr.rel (%p523) target = $region80
        $region79: #{net_forward.1} parent=71 // pred_region
          %526 = dma.done [#allocation9], 16
        $region80: #{net_forward.1} parent=71 // pred_fallthru
          _
        // Predicated region
        $region81: #{net_forward.1} parent=71 // pred_check
          %p527 = pneg %p107
        $region82: #{net_forward.1} parent=71 // pred_check_branch
          %529 = sbr.rel (%p527) target = $region84
        $region83: #{net_forward.1} parent=71 // pred_region
          %530 = dma.done [#allocation9], 7168
        $region84: #{net_forward.1} parent=71 // pred_fallthru
          _
        // Predicated region
        $region85: #{net_forward.1} parent=71 // pred_check
          %p531 = pneg %p128
        $region86: #{net_forward.1} parent=71 // pred_check_branch
          %533 = sbr.rel (%p531) target = $region88
        $region87: #{net_forward.1} parent=71 // pred_region
          %534 = dma.done [#allocation12], 16
        $region88: #{net_forward.1} parent=71 // pred_fallthru
          _
        %s535 = sand.u32 %s28, 1
        %s536 = scalar_lea.sflag [#allocation6], %s535
        %s537 = sand.u32 %s141, 1
        %s538 = smul.addr %s537, 2176
        %s539 = scalar_lea.vmem [#allocation13], %s538
        // Predicated region
        $region89: #{net_forward.1} parent=71 // pred_check
          %p540 = pneg %p154
        $region90: #{net_forward.1} parent=71 // pred_check_branch
          %542 = sbr.rel (%p540) target = $region92
        $region91: #{net_forward.1} parent=71 // pred_region
          %543 = dma.done %s536, 34816
        $region92: #{net_forward.1} parent=71 // pred_fallthru
          _
        %s544 = sand.u32 %s28, 1
        %s545 = scalar_lea.sflag [#allocation6], %s544
        %s546 = sand.u32 %s167, 1
        %s547 = smul.addr %s546, 16
        %s548 = scalar_lea.vmem [#allocation14], %s547
        // Predicated region
        $region93: #{net_forward.1} parent=71 // pred_check
          %p549 = pneg %p180
        $region94: #{net_forward.1} parent=71 // pred_check_branch
          %551 = sbr.rel (%p549) target = $region96
        $region95: #{net_forward.1} parent=71 // pred_region
          %552 = dma.done %s545, 256
        $region96: #{net_forward.1} parent=71 // pred_fallthru
          _
        %s553 = sand.u32 %s28, 1
        %s554 = scalar_lea.sflag [#allocation6], %s553
        %s555 = sand.u32 %s193, 1
        %s556 = smul.addr %s555, 384
        %s557 = scalar_lea.vmem [#allocation15], %s556
        // Predicated region
        $region97: #{net_forward.1} parent=71 // pred_check
          %p558 = pneg %p206
        $region98: #{net_forward.1} parent=71 // pred_check_branch
          %560 = sbr.rel (%p558) target = $region100
        $region99: #{net_forward.1} parent=71 // pred_region
          %561 = dma.done %s554, 6144
        $region100: #{net_forward.1} parent=71 // pred_fallthru
          _
        %s562 = sand.u32 %s28, 1
        %s563 = scalar_lea.sflag [#allocation6], %s562
        %s564 = sand.u32 %s219, 1
        %s565 = smul.addr %s564, 8
        %s566 = scalar_lea.vmem [#allocation16], %s565
        // Predicated region
        $region101: #{net_forward.1} parent=71 // pred_check
          %p567 = pneg %p232
        $region102: #{net_forward.1} parent=71 // pred_check_branch
          %569 = sbr.rel (%p567) target = $region104
        $region103: #{net_forward.1} parent=71 // pred_region
          %570 = dma.done %s563, 128
        $region104: #{net_forward.1} parent=71 // pred_fallthru
          _
        // Predicated region
        $region105: #{net_forward.1} parent=71 // pred_check
          %p571 = pneg %p274
        $region106: #{net_forward.1} parent=71 // pred_check_branch
          %573 = sbr.rel (%p571) target = $region108
        $region107: #{net_forward.1} parent=71 // pred_region
          %574 = dma.done [#allocation9], 16
        $region108: #{net_forward.1} parent=71 // pred_fallthru
          _
        // Predicated region
        $region109: #{net_forward.1} parent=71 // pred_check
          %p575 = pneg %p316
        $region110: #{net_forward.1} parent=71 // pred_check_branch
          %577 = sbr.rel (%p575) target = $region112
        $region111: #{net_forward.1} parent=71 // pred_region
          %578 = dma.done [#allocation12], 16
        $region112: #{net_forward.1} parent=71 // pred_fallthru
          _
        %p579 = pneg %p44
        %p580 = pneg %p41
        %p581 = pneg %p65
        %p582 = pneg %p62
        %p583 = pneg %p86
        %p584 = pneg %p83
        %p585 = pneg %p107
        %p586 = pneg %p104
        %p587 = pneg %p128
        %p588 = pneg %p125
        %s589 = sand.u32 %s28, 1
        %s590 = scalar_lea.sflag [#allocation6], %s589
        %s591 = sand.u32 %s141, 1
        %s592 = smul.addr %s591, 2176
        %s593 = scalar_lea.vmem [#allocation13], %s592
        %p594 = pneg %p154
        %p595 = pneg %p151
        %s596 = sand.u32 %s28, 1
        %s597 = scalar_lea.sflag [#allocation6], %s596
        %s598 = sand.u32 %s167, 1
        %s599 = smul.addr %s598, 16
        %s600 = scalar_lea.vmem [#allocation14], %s599
        %p601 = pneg %p180
        %p602 = pneg %p177
        %s603 = sand.u32 %s28, 1
        %s604 = scalar_lea.sflag [#allocation6], %s603
        %s605 = sand.u32 %s193, 1
        %s606 = smul.addr %s605, 384
        %s607 = scalar_lea.vmem [#allocation15], %s606
        %p608 = pneg %p206
        %p609 = pneg %p203
        %s610 = sand.u32 %s28, 1
        %s611 = scalar_lea.sflag [#allocation6], %s610
        %s612 = sand.u32 %s219, 1
        %s613 = smul.addr %s612, 8
        %s614 = scalar_lea.vmem [#allocation16], %s613
        %p615 = pneg %p232
        %p616 = pneg %p229
        %p617 = pneg %p253
        %p618 = pneg %p250
        %p619 = pneg %p274
        %p620 = pneg %p271
        %p621 = pneg %p295
        %p622 = pneg %p292
        %p623 = pneg %p316
        %p624 = pneg %p313
        %p625 = pneg %p337
        %p626 = pneg %p334
        %p628 = scmp.eq.s32.totalorder %s28, 0
        // Predicated region
        $region113: #{net_forward.1} parent=71 // pred_check
          %p629 = pneg %p628
        $region114: #{net_forward.1} parent=71 // pred_check_branch
          %631 = sbr.rel (%p629) target = $region116
        $region115: #{net_forward.1} parent=71 // pred_region
          %632 = vst [vmem:[#allocation2] sm:$0xff] 0.0
          %633 = vst [vmem:[#allocation2 + $0x8] sm:$0xff] 0.0
          %634 = vst [vmem:[#allocation2 + $0x80] sm:$0xff] 0.0
          %635 = vst [vmem:[#allocation2 + $0x88] sm:$0xff] 0.0
          %636 = vst [vmem:[#allocation2 + $0x70] sm:$0xff] 0.0
          %637 = vst [vmem:[#allocation2 + $0x78] sm:$0xff] 0.0
          %638 = vst [vmem:[#allocation2 + $0xf0] sm:$0xff] 0.0
          %639 = vst [vmem:[#allocation2 + $0xf8] sm:$0xff] 0.0
          %640 = vst [vmem:[#allocation3] sm:$0xff] 0
          %641 = vst [vmem:[#allocation3 + $0x8] sm:$0xff] 0
          %642 = vst [vmem:[#allocation3 + $0x80] sm:$0xff] 0
          %643 = vst [vmem:[#allocation3 + $0x88] sm:$0xff] 0
          %644 = vst [vmem:[#allocation3 + $0x70] sm:$0xff] 0
          %645 = vst [vmem:[#allocation3 + $0x78] sm:$0xff] 0
          %646 = vst [vmem:[#allocation3 + $0xf0] sm:$0xff] 0
          %647 = vst [vmem:[#allocation3 + $0xf8] sm:$0xff] 0
          %648 = vst [vmem:[#allocation4] sm:$0xff] 0
          %649 = vst [vmem:[#allocation4 + $0x8] sm:$0xff] 0
          %650 = vst [vmem:[#allocation4 + $0x80] sm:$0xff] 0
          %651 = vst [vmem:[#allocation4 + $0x88] sm:$0xff] 0
          %652 = vst [vmem:[#allocation4 + $0x70] sm:$0xff] 0
          %653 = vst [vmem:[#allocation4 + $0x78] sm:$0xff] 0
          %654 = vst [vmem:[#allocation4 + $0xf0] sm:$0xff] 0
          %655 = vst [vmem:[#allocation4 + $0xf8] sm:$0xff] 0
          %v656 = vld [vmem:[%s0] sm:$0xff]
          %v657 = vld [vmem:[%s0 + $0x8] sm:$0xff]
          %v658 = vld [vmem:[%s0 + $0x10] sm:$0xff]
          %v659 = vld [vmem:[%s0 + $0x18] sm:$0xff]
          %v660 = vld [vmem:[%s0 + $0x20] sm:$0xff]
          %v661 = vld [vmem:[%s0 + $0x28] sm:$0xff]
          %v662 = vld [vmem:[%s0 + $0x30] sm:$0xff]
          %v663 = vld [vmem:[%s0 + $0x38] sm:$0xff]
          %v664 = vld [vmem:[%s0 + $0x40] sm:$0xff]
          %v665 = vld [vmem:[%s0 + $0x48] sm:$0xff]
          %v666 = vld [vmem:[%s0 + $0x50] sm:$0xff]
          %v667 = vld [vmem:[%s0 + $0x58] sm:$0xff]
          %v668 = vld [vmem:[%s0 + $0x60] sm:$0xff]
          %v669 = vld [vmem:[%s0 + $0x68] sm:$0xff]
          %v670 = vld [vmem:[%s0 + $0x70] sm:$0xff]
          %v671 = vld [vmem:[%s0 + $0x78] sm:$0xff]
          %v672 = vld [vmem:[%s0 + $0x80] sm:$0xff]
          %v673 = vld [vmem:[%s0 + $0x88] sm:$0xff]
          %v674 = vld [vmem:[%s0 + $0x90] sm:$0xff]
          %v675 = vld [vmem:[%s0 + $0x98] sm:$0xff]
          %v676 = vld [vmem:[%s0 + $0xa0] sm:$0xff]
          %v677 = vld [vmem:[%s0 + $0xa8] sm:$0xff]
          %v678 = vld [vmem:[%s0 + $0xb0] sm:$0xff]
          %v679 = vld [vmem:[%s0 + $0xb8] sm:$0xff]
          %v680 = vld [vmem:[#allocation5] sm:$0x7f]
          %v681 = vld [vmem:[#allocation8] sm:$0x1]
          %v683 = vlaneseq
          %v684 = vshrl.u32 %v683, 7
          %v685 = vsub.s32 0, %v684
          %v686 = vrot.slane %v681, %v685
          %vm688 = vcmask 56320
          %v690 = vsel %vm688, %v656, 0
          %v693 = vsel %vm688, %v657, 0
          %v696 = vsel %vm688, %v658, 0
          %v699 = vsel %vm688, %v659, 0
          %v702 = vsel %vm688, %v660, 0
          %v705 = vsel %vm688, %v661, 0
          %v708 = vsel %vm688, %v662, 0
          %v711 = vsel %vm688, %v663, 0
          %v714 = vsel %vm688, %v664, 0
          %v717 = vsel %vm688, %v665, 0
          %v720 = vsel %vm688, %v666, 0
          %v723 = vsel %vm688, %v667, 0
          %v726 = vsel %vm688, %v668, 0
          %v729 = vsel %vm688, %v669, 0
          %v732 = vsel %vm688, %v670, 0
          %v735 = vsel %vm688, %v671, 0
          %v738 = vsel %vm688, %v672, 0
          %v741 = vsel %vm688, %v673, 0
          %v744 = vsel %vm688, %v674, 0
          %v747 = vsel %vm688, %v675, 0
          %v750 = vsel %vm688, %v676, 0
          %v753 = vsel %vm688, %v677, 0
          %v756 = vsel %vm688, %v678, 0
          %v759 = vsel %vm688, %v679, 0
          %vm761 = vcmask 1046528
          %v763 = vsel %vm761, %v680, 0
          %765 = vmatprep.subr.mxu0 0.0
          %766 = vmatpush1.msra.mxu0 0.0
          %767 = vmatprep.subr.mxu0 0.0
          %768 = vmatpush1.msra.mxu0 0.0
          %769 = vmatprep.subr.mxu0 0.0
          %770 = vmatpush1.msra.mxu0 0.0
          %771 = vmatprep.subr.mxu0 0.0
          %772 = vmatpush1.msra.mxu0 0.0
          %773 = vmatprep.subr.mxu0 0.0
          %774 = vmatpush1.msra.mxu0 0.0
          %775 = vmatprep.subr.mxu0 0.0
          %776 = vmatpush1.msra.mxu0 0.0
          %777 = vmatprep.subr.mxu0 0.0
          %778 = vmatpush1.msra.mxu0 0.0
          %779 = vmatprep.subr.mxu0 0.0
          %780 = vmatpush1.msra.mxu0 0.0
          %781 = vmatprep.subr.mxu0 0.0
          %782 = vmatpush1.msra.mxu0 0.0
          %783 = vmatprep.subr.mxu0 0.0
          %784 = vmatpush1.msra.mxu0 0.0
          %785 = vmatprep.subr.mxu0 0.0
          %786 = vmatpush1.msra.mxu0 0.0
          %787 = vmatprep.subr.mxu0 0.0
          %788 = vmatpush1.msra.mxu0 0.0
          %789 = vmatprep.subr.mxu0 0.0
          %790 = vmatpush1.msra.mxu0 0.0
          %791 = vmatprep.subr.mxu0 0.0
          %792 = vmatpush1.msra.mxu0 0.0
          %793 = vmatprep.subr.mxu0 0.0
          %794 = vmatpush1.msra.mxu0 0.0
          %795 = vmatprep.subr.mxu0 0.0
          %796 = vmatpush1.msra.mxu0 %v763
          %797 = vmatprep.subr.mxu0 0.0
          %798 = vmatpush2.msra.mxu0 0.0
          %799 = vmatprep.subr.mxu0 0.0
          %800 = vmatpush2.msra.mxu0 0.0
          %801 = vmatprep.subr.mxu0 0.0
          %802 = vmatpush2.msra.mxu0 0.0
          %803 = vmatprep.subr.mxu0 0.0
          %804 = vmatpush2.msra.mxu0 0.0
          %805 = vmatprep.subr.mxu0 0.0
          %806 = vmatpush2.msra.mxu0 0.0
          %807 = vmatprep.subr.mxu0 0.0
          %808 = vmatpush2.msra.mxu0 0.0
          %809 = vmatprep.subr.mxu0 0.0
          %810 = vmatpush2.msra.mxu0 0.0
          %811 = vmatprep.subr.mxu0 0.0
          %812 = vmatpush2.msra.mxu0 0.0
          %813 = vmatprep.subr.mxu0 0.0
          %814 = vmatpush2.msra.mxu0 0.0
          %815 = vmatprep.subr.mxu0 0.0
          %816 = vmatpush2.msra.mxu0 0.0
          %817 = vmatprep.subr.mxu0 0.0
          %818 = vmatpush2.msra.mxu0 0.0
          %819 = vmatprep.subr.mxu0 0.0
          %820 = vmatpush2.msra.mxu0 0.0
          %821 = vmatprep.subr.mxu0 0.0
          %822 = vmatpush2.msra.mxu0 0.0
          %823 = vmatprep.subr.mxu0 0.0
          %824 = vmatpush2.msra.mxu0 0.0
          %825 = vmatprep.subr.mxu0 0.0
          %826 = vmatpush2.msra.mxu0 0.0
          %827 = vmatprep.subr.mxu0 0.0
          %828 = vmatpush2.msra.mxu0 0.0
          %829 = vmatprep.mubr.f32.mxu0 0.0
          %830 = vmatmul.mubr.f32.gmra.mxu0 %v690
          %v831 = vpop.f32.mrf.mxu0
          %v832 = vadd.f32 %v686, %v831
          %v833 = vpop.f32.mrf.mxu0
          %834 = vmatprep.mubr.f32.mxu0 0.0
          %835 = vmatmul.mubr.f32.gmra.mxu0 %v693
          %v836 = vpop.f32.mrf.mxu0
          %v837 = vadd.f32 %v686, %v836
          %v838 = vpop.f32.mrf.mxu0
          %839 = vmatprep.mubr.f32.mxu0 0.0
          %840 = vmatmul.mubr.f32.gmra.mxu0 %v696
          %v841 = vpop.f32.mrf.mxu0
          %v842 = vadd.f32 %v686, %v841
          %v843 = vpop.f32.mrf.mxu0
          %844 = vmatprep.mubr.f32.mxu0 0.0
          %845 = vmatmul.mubr.f32.gmra.mxu0 %v699
          %v846 = vpop.f32.mrf.mxu0
          %v847 = vadd.f32 %v686, %v846
          %v848 = vpop.f32.mrf.mxu0
          %849 = vmatprep.mubr.f32.mxu0 0.0
          %850 = vmatmul.mubr.f32.gmra.mxu0 %v702
          %v851 = vpop.f32.mrf.mxu0
          %v852 = vadd.f32 %v686, %v851
          %v853 = vpop.f32.mrf.mxu0
          %854 = vmatprep.mubr.f32.mxu0 0.0
          %855 = vmatmul.mubr.f32.gmra.mxu0 %v705
          %v856 = vpop.f32.mrf.mxu0
          %v857 = vadd.f32 %v686, %v856
          %v858 = vpop.f32.mrf.mxu0
          %859 = vmatprep.mubr.f32.mxu0 0.0
          %860 = vmatmul.mubr.f32.gmra.mxu0 %v708
          %v861 = vpop.f32.mrf.mxu0
          %v862 = vadd.f32 %v686, %v861
          %v863 = vpop.f32.mrf.mxu0
          %864 = vmatprep.mubr.f32.mxu0 0.0
          %865 = vmatmul.mubr.f32.gmra.mxu0 %v711
          %v866 = vpop.f32.mrf.mxu0
          %v867 = vadd.f32 %v686, %v866
          %v868 = vpop.f32.mrf.mxu0
          %869 = vmatprep.mubr.f32.mxu0 0.0
          %870 = vmatmul.mubr.f32.gmra.mxu0 %v714
          %v871 = vpop.f32.mrf.mxu0
          %v872 = vadd.f32 %v686, %v871
          %v873 = vpop.f32.mrf.mxu0
          %874 = vmatprep.mubr.f32.mxu0 0.0
          %875 = vmatmul.mubr.f32.gmra.mxu0 %v717
          %v876 = vpop.f32.mrf.mxu0
          %v877 = vadd.f32 %v686, %v876
          %v878 = vpop.f32.mrf.mxu0
          %879 = vmatprep.mubr.f32.mxu0 0.0
          %880 = vmatmul.mubr.f32.gmra.mxu0 %v720
          %v881 = vpop.f32.mrf.mxu0
          %v882 = vadd.f32 %v686, %v881
          %v883 = vpop.f32.mrf.mxu0
          %884 = vmatprep.mubr.f32.mxu0 0.0
          %885 = vmatmul.mubr.f32.gmra.mxu0 %v723
          %v886 = vpop.f32.mrf.mxu0
          %v887 = vadd.f32 %v686, %v886
          %v888 = vpop.f32.mrf.mxu0
          %889 = vmatprep.mubr.f32.mxu0 0.0
          %890 = vmatmul.mubr.f32.gmra.mxu0 %v726
          %v891 = vpop.f32.mrf.mxu0
          %v892 = vadd.f32 %v686, %v891
          %v893 = vpop.f32.mrf.mxu0
          %894 = vmatprep.mubr.f32.mxu0 0.0
          %895 = vmatmul.mubr.f32.gmra.mxu0 %v729
          %v896 = vpop.f32.mrf.mxu0
          %v897 = vadd.f32 %v686, %v896
          %v898 = vpop.f32.mrf.mxu0
          %899 = vmatprep.mubr.f32.mxu0 0.0
          %900 = vmatmul.mubr.f32.gmra.mxu0 %v732
          %v901 = vpop.f32.mrf.mxu0
          %v902 = vadd.f32 %v686, %v901
          %v903 = vpop.f32.mrf.mxu0
          %904 = vmatprep.mubr.f32.mxu0 0.0
          %905 = vmatmul.mubr.f32.gmra.mxu0 %v735
          %v906 = vpop.f32.mrf.mxu0
          %v907 = vadd.f32 %v686, %v906
          %v908 = vpop.f32.mrf.mxu0
          %909 = vmatprep.mubr.f32.mxu0 0.0
          %910 = vmatmul.mubr.f32.gmra.mxu0 %v738
          %v911 = vpop.f32.mrf.mxu0
          %v912 = vadd.f32 %v686, %v911
          %v913 = vpop.f32.mrf.mxu0
          %914 = vmatprep.mubr.f32.mxu0 0.0
          %915 = vmatmul.mubr.f32.gmra.mxu0 %v741
          %v916 = vpop.f32.mrf.mxu0
          %v917 = vadd.f32 %v686, %v916
          %v918 = vpop.f32.mrf.mxu0
          %919 = vmatprep.mubr.f32.mxu0 0.0
          %920 = vmatmul.mubr.f32.gmra.mxu0 %v744
          %v921 = vpop.f32.mrf.mxu0
          %v922 = vadd.f32 %v686, %v921
          %v923 = vpop.f32.mrf.mxu0
          %924 = vmatprep.mubr.f32.mxu0 0.0
          %925 = vmatmul.mubr.f32.gmra.mxu0 %v747
          %v926 = vpop.f32.mrf.mxu0
          %v927 = vadd.f32 %v686, %v926
          %v928 = vpop.f32.mrf.mxu0
          %929 = vmatprep.mubr.f32.mxu0 0.0
          %930 = vmatmul.mubr.f32.gmra.mxu0 %v750
          %v931 = vpop.f32.mrf.mxu0
          %v932 = vadd.f32 %v686, %v931
          %v933 = vpop.f32.mrf.mxu0
          %934 = vmatprep.mubr.f32.mxu0 0.0
          %935 = vmatmul.mubr.f32.gmra.mxu0 %v753
          %v936 = vpop.f32.mrf.mxu0
          %v937 = vadd.f32 %v686, %v936
          %v938 = vpop.f32.mrf.mxu0
          %939 = vmatprep.mubr.f32.mxu0 0.0
          %940 = vmatmul.mubr.f32.gmra.mxu0 %v756
          %v941 = vpop.f32.mrf.mxu0
          %v942 = vadd.f32 %v686, %v941
          %v943 = vpop.f32.mrf.mxu0
          %944 = vmatprep.mubr.f32.mxu0 0.0
          %945 = vmatmul.mubr.f32.gmra.mxu0 %v759
          %v946 = vpop.f32.mrf.mxu0
          %v947 = vadd.f32 %v686, %v946
          %v948 = vpop.f32.mrf.mxu0
          %949 = vdwg.mxu0
          %vm950 = vcmask 523264
          %v951 = vsel %vm950, %v832, 0.0
          %v952 = vsel %vm950, %v837, 0.0
          %v953 = vsel %vm950, %v842, 0.0
          %v954 = vsel %vm950, %v847, 0.0
          %v955 = vsel %vm950, %v852, 0.0
          %v956 = vsel %vm950, %v857, 0.0
          %v957 = vsel %vm950, %v862, 0.0
          %v958 = vsel %vm950, %v867, 0.0
          %v959 = vsel %vm950, %v872, 0.0
          %v960 = vsel %vm950, %v877, 0.0
          %v961 = vsel %vm950, %v882, 0.0
          %v962 = vsel %vm950, %v887, 0.0
          %v963 = vsel %vm950, %v892, 0.0
          %v964 = vsel %vm950, %v897, 0.0
          %v965 = vsel %vm950, %v902, 0.0
          %v966 = vsel %vm950, %v907, 0.0
          %v967 = vsel %vm950, %v912, 0.0
          %v968 = vsel %vm950, %v917, 0.0
          %v969 = vsel %vm950, %v922, 0.0
          %v970 = vsel %vm950, %v927, 0.0
          %v971 = vsel %vm950, %v932, 0.0
          %v972 = vsel %vm950, %v937, 0.0
          %v973 = vsel %vm950, %v942, 0.0
          %v974 = vsel %vm950, %v947, 0.0
          %975 = vst [vmem:[#allocation2 + $0x10] sm:$0xff] %v951
          %976 = vst [vmem:[#allocation2 + $0x18] sm:$0xff] %v952
          %977 = vst [vmem:[#allocation2 + $0x20] sm:$0xff] %v953
          %978 = vst [vmem:[#allocation2 + $0x28] sm:$0xff] %v954
          %979 = vst [vmem:[#allocation2 + $0x30] sm:$0xff] %v955
          %980 = vst [vmem:[#allocation2 + $0x38] sm:$0xff] %v956
          %981 = vst [vmem:[#allocation2 + $0x40] sm:$0xff] %v957
          %982 = vst [vmem:[#allocation2 + $0x48] sm:$0xff] %v958
          %983 = vst [vmem:[#allocation2 + $0x50] sm:$0xff] %v959
          %984 = vst [vmem:[#allocation2 + $0x58] sm:$0xff] %v960
          %985 = vst [vmem:[#allocation2 + $0x60] sm:$0xff] %v961
          %986 = vst [vmem:[#allocation2 + $0x68] sm:$0xff] %v962
          %987 = vst [vmem:[#allocation2 + $0x90] sm:$0xff] %v963
          %988 = vst [vmem:[#allocation2 + $0x98] sm:$0xff] %v964
          %989 = vst [vmem:[#allocation2 + $0xa0] sm:$0xff] %v965
          %990 = vst [vmem:[#allocation2 + $0xa8] sm:$0xff] %v966
          %991 = vst [vmem:[#allocation2 + $0xb0] sm:$0xff] %v967
          %992 = vst [vmem:[#allocation2 + $0xb8] sm:$0xff] %v968
          %993 = vst [vmem:[#allocation2 + $0xc0] sm:$0xff] %v969
          %994 = vst [vmem:[#allocation2 + $0xc8] sm:$0xff] %v970
          %995 = vst [vmem:[#allocation2 + $0xd0] sm:$0xff] %v971
          %996 = vst [vmem:[#allocation2 + $0xd8] sm:$0xff] %v972
          %997 = vst [vmem:[#allocation2 + $0xe0] sm:$0xff] %v973
          %998 = vst [vmem:[#allocation2 + $0xe8] sm:$0xff] %v974
          %v999 = vld [vmem:[#allocation10] sm:$0xf]
          %v1000 = vld [vmem:[#allocation10 + $0x4] sm:$0xf]
          %v1001 = vld [vmem:[#allocation10 + $0x8] sm:$0xf]
          %v1002 = vld [vmem:[#allocation10 + $0xc] sm:$0xf]
          %v1003 = vld [vmem:[#allocation10 + $0x10] sm:$0xf]
          %v1004 = vld [vmem:[#allocation10 + $0x14] sm:$0xf]
          %v1005 = vld [vmem:[#allocation10 + $0x18] sm:$0xf]
          %v1006 = vld [vmem:[#allocation10 + $0x1c] sm:$0xf]
          %v1007 = vld [vmem:[#allocation10 + $0x20] sm:$0xf]
          %v1008 = vld [vmem:[#allocation10 + $0x24] sm:$0xf]
          %v1009 = vld [vmem:[#allocation10 + $0x28] sm:$0xf]
          %v1010 = vld [vmem:[#allocation10 + $0x2c] sm:$0xf]
          %v1011 = vld [vmem:[#allocation10 + $0x30] sm:$0xf]
          %v1012 = vld [vmem:[#allocation10 + $0x34] sm:$0xf]
          %v1013 = vld [vmem:[#allocation10 + $0x38] sm:$0xf]
          %v1014 = vld [vmem:[#allocation10 + $0x3c] sm:$0xf]
          %v1015 = vld [vmem:[#allocation10 + $0x40] sm:$0xf]
          %v1016 = vld [vmem:[#allocation10 + $0x44] sm:$0xf]
          %v1017 = vld [vmem:[#allocation10 + $0x48] sm:$0xf]
          %v1018 = vld [vmem:[#allocation10 + $0x4c] sm:$0xf]
          %v1019 = vld [vmem:[#allocation10 + $0x50] sm:$0xf]
          %v1020 = vld [vmem:[#allocation10 + $0x54] sm:$0xf]
          %v1021 = vld [vmem:[#allocation10 + $0x58] sm:$0xf]
          %v1022 = vld [vmem:[#allocation10 + $0x5c] sm:$0xf]
          %v1023 = vld [vmem:[#allocation10 + $0x60] sm:$0xf]
          %v1024 = vld [vmem:[#allocation10 + $0x64] sm:$0xf]
          %v1025 = vld [vmem:[#allocation10 + $0x68] sm:$0xf]
          %v1026 = vld [vmem:[#allocation10 + $0x6c] sm:$0xf]
          %v1027 = vld [vmem:[#allocation10 + $0x70] sm:$0xf]
          %v1028 = vld [vmem:[#allocation10 + $0x74] sm:$0xf]
          %v1029 = vld [vmem:[#allocation10 + $0x78] sm:$0xf]
          %v1030 = vld [vmem:[#allocation10 + $0x7c] sm:$0xf]
          %v1031 = vld [vmem:[#allocation10 + $0x80] sm:$0xf]
          %v1032 = vld [vmem:[#allocation10 + $0x84] sm:$0xf]
          %v1033 = vld [vmem:[#allocation10 + $0x88] sm:$0xf]
          %v1034 = vld [vmem:[#allocation10 + $0x8c] sm:$0xf]
          %v1035 = vld [vmem:[#allocation10 + $0x90] sm:$0xf]
          %v1036 = vld [vmem:[#allocation10 + $0x94] sm:$0xf]
          %v1037 = vld [vmem:[#allocation10 + $0x98] sm:$0xf]
          %v1038 = vld [vmem:[#allocation10 + $0x9c] sm:$0xf]
          %v1039 = vld [vmem:[#allocation10 + $0xa0] sm:$0xf]
          %v1040 = vld [vmem:[#allocation10 + $0xa4] sm:$0xf]
          %v1041 = vld [vmem:[#allocation10 + $0xa8] sm:$0xf]
          %v1042 = vld [vmem:[#allocation10 + $0xac] sm:$0xf]
          %v1043 = vld [vmem:[#allocation10 + $0xb0] sm:$0xf]
          %v1044 = vld [vmem:[#allocation10 + $0xb4] sm:$0xf]
          %v1045 = vld [vmem:[#allocation10 + $0xb8] sm:$0xf]
          %v1046 = vld [vmem:[#allocation10 + $0xbc] sm:$0xf]
          %v1047 = vld [vmem:[#allocation10 + $0xc0] sm:$0xf]
          %v1048 = vld [vmem:[#allocation10 + $0xc4] sm:$0xf]
          %v1049 = vld [vmem:[#allocation10 + $0xc8] sm:$0xf]
          %v1050 = vld [vmem:[#allocation10 + $0xcc] sm:$0xf]
          %v1051 = vld [vmem:[#allocation10 + $0xd0] sm:$0xf]
          %v1052 = vld [vmem:[#allocation10 + $0xd4] sm:$0xf]
          %v1053 = vld [vmem:[#allocation10 + $0xd8] sm:$0xf]
          %v1054 = vld [vmem:[#allocation10 + $0xdc] sm:$0xf]
          %v1055 = vld [vmem:[#allocation10 + $0xe0] sm:$0xf]
          %v1056 = vld [vmem:[#allocation10 + $0xe4] sm:$0xf]
          %v1057 = vld [vmem:[#allocation10 + $0xe8] sm:$0xf]
          %v1058 = vld [vmem:[#allocation10 + $0xec] sm:$0xf]
          %v1059 = vld [vmem:[#allocation10 + $0xf0] sm:$0xf]
          %v1060 = vld [vmem:[#allocation10 + $0xf4] sm:$0xf]
          %v1061 = vld [vmem:[#allocation10 + $0xf8] sm:$0xf]
          %v1062 = vld [vmem:[#allocation10 + $0xfc] sm:$0xf]
          %v1063 = vld [vmem:[#allocation10 + $0x100] sm:$0xf]
          %v1064 = vld [vmem:[#allocation10 + $0x104] sm:$0xf]
          %v1065 = vld [vmem:[#allocation10 + $0x108] sm:$0xf]
          %v1066 = vld [vmem:[#allocation10 + $0x10c] sm:$0xf]
          %v1067 = vld [vmem:[#allocation10 + $0x110] sm:$0xf]
          %v1068 = vld [vmem:[#allocation10 + $0x114] sm:$0xf]
          %v1069 = vld [vmem:[#allocation10 + $0x118] sm:$0xf]
          %v1070 = vld [vmem:[#allocation10 + $0x11c] sm:$0xf]
          %v1071 = vld [vmem:[#allocation10 + $0x120] sm:$0xf]
          %v1072 = vld [vmem:[#allocation10 + $0x124] sm:$0xf]
          %v1073 = vld [vmem:[#allocation10 + $0x128] sm:$0xf]
          %v1074 = vld [vmem:[#allocation10 + $0x12c] sm:$0xf]
          %v1075 = vld [vmem:[#allocation10 + $0x130] sm:$0xf]
          %v1076 = vld [vmem:[#allocation10 + $0x134] sm:$0xf]
          %v1077 = vld [vmem:[#allocation10 + $0x138] sm:$0xf]
          %v1078 = vld [vmem:[#allocation10 + $0x13c] sm:$0xf]
          %v1079 = vld [vmem:[#allocation10 + $0x140] sm:$0xf]
          %v1080 = vld [vmem:[#allocation10 + $0x144] sm:$0xf]
          %v1081 = vld [vmem:[#allocation10 + $0x148] sm:$0xf]
          %v1082 = vld [vmem:[#allocation10 + $0x14c] sm:$0xf]
          %v1083 = vld [vmem:[#allocation10 + $0x150] sm:$0xf]
          %v1084 = vld [vmem:[#allocation10 + $0x154] sm:$0xf]
          %v1085 = vld [vmem:[#allocation10 + $0x158] sm:$0xf]
          %v1086 = vld [vmem:[#allocation10 + $0x15c] sm:$0xf]
          %v1087 = vld [vmem:[#allocation10 + $0x160] sm:$0xf]
          %v1088 = vld [vmem:[#allocation10 + $0x164] sm:$0xf]
          %v1089 = vld [vmem:[#allocation10 + $0x168] sm:$0xf]
          %v1090 = vld [vmem:[#allocation10 + $0x16c] sm:$0xf]
          %v1091 = vld [vmem:[#allocation10 + $0x170] sm:$0xf]
          %v1092 = vld [vmem:[#allocation10 + $0x174] sm:$0xf]
          %v1093 = vld [vmem:[#allocation10 + $0x178] sm:$0xf]
          %v1094 = vld [vmem:[#allocation10 + $0x17c] sm:$0xf]
          %v1095 = vld [vmem:[#allocation10 + $0x180] sm:$0xf]
          %v1096 = vld [vmem:[#allocation10 + $0x184] sm:$0xf]
          %v1097 = vld [vmem:[#allocation10 + $0x188] sm:$0xf]
          %v1098 = vld [vmem:[#allocation10 + $0x18c] sm:$0xf]
          %v1099 = vld [vmem:[#allocation10 + $0x190] sm:$0xf]
          %v1100 = vld [vmem:[#allocation10 + $0x194] sm:$0xf]
          %v1101 = vld [vmem:[#allocation10 + $0x198] sm:$0xf]
          %v1102 = vld [vmem:[#allocation10 + $0x19c] sm:$0xf]
          %v1103 = vld [vmem:[#allocation10 + $0x1a0] sm:$0xf]
          %v1104 = vld [vmem:[#allocation10 + $0x1a4] sm:$0xf]
          %v1105 = vld [vmem:[#allocation10 + $0x1a8] sm:$0xf]
          %v1106 = vld [vmem:[#allocation10 + $0x1ac] sm:$0xf]
          %v1107 = vld [vmem:[#allocation10 + $0x1b0] sm:$0xf]
          %v1108 = vld [vmem:[#allocation10 + $0x1b4] sm:$0xf]
          %v1109 = vld [vmem:[#allocation10 + $0x1b8] sm:$0xf]
          %v1110 = vld [vmem:[#allocation10 + $0x1bc] sm:$0xf]
          %v1111 = vld [vmem:[#allocation11] sm:$0x1]
          %v1112 = vld [vmem:[#allocation2 + $0xd] sm:$0xff]
          %v1113 = vld [vmem:[#allocation2 + $0x15] sm:$0xff]
          %v1114 = vld [vmem:[#allocation2 + $0x1d] sm:$0xff]
          %v1115 = vld [vmem:[#allocation2 + $0x25] sm:$0xff]
          %v1116 = vld [vmem:[#allocation2 + $0x2d] sm:$0xff]
          %v1117 = vld [vmem:[#allocation2 + $0x35] sm:$0xff]
          %v1118 = vld [vmem:[#allocation2 + $0x3d] sm:$0xff]
          %v1119 = vld [vmem:[#allocation2 + $0x45] sm:$0xff]
          %v1120 = vld [vmem:[#allocation2 + $0x4d] sm:$0xff]
          %v1121 = vld [vmem:[#allocation2 + $0x55] sm:$0xff]
          %v1122 = vld [vmem:[#allocation2 + $0x5d] sm:$0xff]
          %v1123 = vld [vmem:[#allocation2 + $0x65] sm:$0xff]
          %v1124 = vld [vmem:[#allocation2 + $0x6d] sm:$0x3f]
          %v1125 = vld [vmem:[#allocation2 + $0x8d] sm:$0xff]
          %v1126 = vld [vmem:[#allocation2 + $0x95] sm:$0xff]
          %v1127 = vld [vmem:[#allocation2 + $0x9d] sm:$0xff]
          %v1128 = vld [vmem:[#allocation2 + $0xa5] sm:$0xff]
          %v1129 = vld [vmem:[#allocation2 + $0xad] sm:$0xff]
          %v1130 = vld [vmem:[#allocation2 + $0xb5] sm:$0xff]
          %v1131 = vld [vmem:[#allocation2 + $0xbd] sm:$0xff]
          %v1132 = vld [vmem:[#allocation2 + $0xc5] sm:$0xff]
          %v1133 = vld [vmem:[#allocation2 + $0xcd] sm:$0xff]
          %v1134 = vld [vmem:[#allocation2 + $0xd5] sm:$0xff]
          %v1135 = vld [vmem:[#allocation2 + $0xdd] sm:$0xff]
          %v1136 = vld [vmem:[#allocation2 + $0xe5] sm:$0xff]
          %v1137 = vld [vmem:[#allocation2 + $0xed] sm:$0x3f]
          %v1138 = vpack.c.bf16 %v1113, %v1112
          %v1139 = vpack.c.bf16 %v1115, %v1114
          %v1140 = vpack.c.bf16 %v1117, %v1116
          %v1141 = vpack.c.bf16 %v1119, %v1118
          %v1142 = vpack.c.bf16 %v1121, %v1120
          %v1143 = vpack.c.bf16 %v1123, %v1122
          %v1144 = vpack.c.bf16 %v1124, %v1124
          %v1145 = vpack.c.bf16 %v1126, %v1125
          %v1146 = vpack.c.bf16 %v1128, %v1127
          %v1147 = vpack.c.bf16 %v1130, %v1129
          %v1148 = vpack.c.bf16 %v1132, %v1131
          %v1149 = vpack.c.bf16 %v1134, %v1133
          %v1150 = vpack.c.bf16 %v1136, %v1135
          %v1151 = vpack.c.bf16 %v1137, %v1137
          %vm1152 = vsmask.f32 7424
          %v1154 = vshrl.u32 %v1138, 16
          %v1156 = vshll.u32 %v1138, 16
          %v1158 = vrot.slane %v1156, 1
          %v1159 = vor.u32 %v1154, %v1158
          %v1161 = vshll.u32 %v1139, 16
          %v1163 = vrot.slane %v1161, 1
          %v1164 = vsel %vm1152, %v1159, %v1163
          %v1165 = vshrl.u32 %v1139, 16
          %v1167 = vor.u32 %v1165, %v1163
          %v1169 = vshll.u32 %v1140, 16
          %v1171 = vrot.slane %v1169, 1
          %v1172 = vsel %vm1152, %v1167, %v1171
          %v1173 = vshrl.u32 %v1140, 16
          %v1175 = vor.u32 %v1173, %v1171
          %v1177 = vshll.u32 %v1141, 16
          %v1179 = vrot.slane %v1177, 1
          %v1180 = vsel %vm1152, %v1175, %v1179
          %v1181 = vshrl.u32 %v1141, 16
          %v1183 = vor.u32 %v1181, %v1179
          %v1185 = vshll.u32 %v1142, 16
          %v1187 = vrot.slane %v1185, 1
          %v1188 = vsel %vm1152, %v1183, %v1187
          %v1189 = vshrl.u32 %v1142, 16
          %v1191 = vor.u32 %v1189, %v1187
          %v1193 = vshll.u32 %v1143, 16
          %v1195 = vrot.slane %v1193, 1
          %v1196 = vsel %vm1152, %v1191, %v1195
          %v1197 = vshrl.u32 %v1143, 16
          %v1199 = vor.u32 %v1197, %v1195
          %v1201 = vshll.u32 %v1144, 16
          %v1203 = vrot.slane %v1201, 1
          %v1204 = vsel %vm1152, %v1199, %v1203
          %v1206 = vshrl.u32 %v1145, 16
          %v1208 = vshll.u32 %v1145, 16
          %v1210 = vrot.slane %v1208, 1
          %v1211 = vor.u32 %v1206, %v1210
          %v1213 = vshll.u32 %v1146, 16
          %v1215 = vrot.slane %v1213, 1
          %v1216 = vsel %vm1152, %v1211, %v1215
          %v1217 = vshrl.u32 %v1146, 16
          %v1219 = vor.u32 %v1217, %v1215
          %v1221 = vshll.u32 %v1147, 16
          %v1223 = vrot.slane %v1221, 1
          %v1224 = vsel %vm1152, %v1219, %v1223
          %v1225 = vshrl.u32 %v1147, 16
          %v1227 = vor.u32 %v1225, %v1223
          %v1229 = vshll.u32 %v1148, 16
          %v1231 = vrot.slane %v1229, 1
          %v1232 = vsel %vm1152, %v1227, %v1231
          %v1233 = vshrl.u32 %v1148, 16
          %v1235 = vor.u32 %v1233, %v1231
          %v1237 = vshll.u32 %v1149, 16
          %v1239 = vrot.slane %v1237, 1
          %v1240 = vsel %vm1152, %v1235, %v1239
          %v1241 = vshrl.u32 %v1149, 16
          %v1243 = vor.u32 %v1241, %v1239
          %v1245 = vshll.u32 %v1150, 16
          %v1247 = vrot.slane %v1245, 1
          %v1248 = vsel %vm1152, %v1243, %v1247
          %v1249 = vshrl.u32 %v1150, 16
          %v1251 = vor.u32 %v1249, %v1247
          %v1253 = vshll.u32 %v1151, 16
          %v1255 = vrot.slane %v1253, 1
          %v1256 = vsel %vm1152, %v1251, %v1255
          %vm1283 = vcmask 1046528
          %v1284 = vrot.slane %v1138, 1
          %v1285 = vrot.slane %v1139, 1
          %v1286 = vsel %vm1283, %v1284, %v1285
          %v1287 = vrot.slane %v1140, 1
          %v1288 = vsel %vm1283, %v1285, %v1287
          %v1289 = vrot.slane %v1141, 1
          %v1290 = vsel %vm1283, %v1287, %v1289
          %v1291 = vrot.slane %v1142, 1
          %v1292 = vsel %vm1283, %v1289, %v1291
          %v1293 = vrot.slane %v1143, 1
          %v1294 = vsel %vm1283, %v1291, %v1293
          %v1295 = vrot.slane %v1144, 1
          %v1296 = vsel %vm1283, %v1293, %v1295
          %v1297 = vrot.slane %v1145, 1
          %v1298 = vrot.slane %v1146, 1
          %v1299 = vsel %vm1283, %v1297, %v1298
          %v1300 = vrot.slane %v1147, 1
          %v1301 = vsel %vm1283, %v1298, %v1300
          %v1302 = vrot.slane %v1148, 1
          %v1303 = vsel %vm1283, %v1300, %v1302
          %v1304 = vrot.slane %v1149, 1
          %v1305 = vsel %vm1283, %v1302, %v1304
          %v1306 = vrot.slane %v1150, 1
          %v1307 = vsel %vm1283, %v1304, %v1306
          %v1308 = vrot.slane %v1151, 1
          %v1309 = vsel %vm1283, %v1306, %v1308
          %vm1322 = vsmask.f32 6400
          %v1323 = vrot.slane %v1154, 1
          %v1324 = vrot.slane %v1156, 2
          %v1325 = vor.u32 %v1323, %v1324
          %v1326 = vrot.slane %v1165, 1
          %v1327 = vrot.slane %v1161, 2
          %v1328 = vor.u32 %v1326, %v1327
          %v1329 = vsel %vm1322, %v1325, %v1328
          %v1330 = vrot.slane %v1173, 1
          %v1331 = vrot.slane %v1169, 2
          %v1332 = vor.u32 %v1330, %v1331
          %v1333 = vsel %vm1322, %v1328, %v1332
          %v1334 = vrot.slane %v1181, 1
          %v1335 = vrot.slane %v1177, 2
          %v1336 = vor.u32 %v1334, %v1335
          %v1337 = vsel %vm1322, %v1332, %v1336
          %v1338 = vrot.slane %v1189, 1
          %v1339 = vrot.slane %v1185, 2
          %v1340 = vor.u32 %v1338, %v1339
          %v1341 = vsel %vm1322, %v1336, %v1340
          %v1342 = vrot.slane %v1197, 1
          %v1343 = vrot.slane %v1193, 2
          %v1344 = vor.u32 %v1342, %v1343
          %v1345 = vsel %vm1322, %v1340, %v1344
          %v1346 = vshrl.u32 %v1144, 16
          %v1348 = vrot.slane %v1346, 1
          %v1349 = vrot.slane %v1201, 2
          %v1350 = vor.u32 %v1348, %v1349
          %v1351 = vsel %vm1322, %v1344, %v1350
          %v1352 = vrot.slane %v1206, 1
          %v1353 = vrot.slane %v1208, 2
          %v1354 = vor.u32 %v1352, %v1353
          %v1355 = vrot.slane %v1217, 1
          %v1356 = vrot.slane %v1213, 2
          %v1357 = vor.u32 %v1355, %v1356
          %v1358 = vsel %vm1322, %v1354, %v1357
          %v1359 = vrot.slane %v1225, 1
          %v1360 = vrot.slane %v1221, 2
          %v1361 = vor.u32 %v1359, %v1360
          %v1362 = vsel %vm1322, %v1357, %v1361
          %v1363 = vrot.slane %v1233, 1
          %v1364 = vrot.slane %v1229, 2
          %v1365 = vor.u32 %v1363, %v1364
          %v1366 = vsel %vm1322, %v1361, %v1365
          %v1367 = vrot.slane %v1241, 1
          %v1368 = vrot.slane %v1237, 2
          %v1369 = vor.u32 %v1367, %v1368
          %v1370 = vsel %vm1322, %v1365, %v1369
          %v1371 = vrot.slane %v1249, 1
          %v1372 = vrot.slane %v1245, 2
          %v1373 = vor.u32 %v1371, %v1372
          %v1374 = vsel %vm1322, %v1369, %v1373
          %v1375 = vshrl.u32 %v1151, 16
          %v1377 = vrot.slane %v1375, 1
          %v1378 = vrot.slane %v1253, 2
          %v1379 = vor.u32 %v1377, %v1378
          %v1380 = vsel %vm1322, %v1373, %v1379
          %vm1393 = vcmask 1045504
          %v1394 = vrot.slane %v1138, 2
          %v1395 = vrot.slane %v1139, 2
          %v1396 = vsel %vm1393, %v1394, %v1395
          %v1397 = vrot.slane %v1140, 2
          %v1398 = vsel %vm1393, %v1395, %v1397
          %v1399 = vrot.slane %v1141, 2
          %v1400 = vsel %vm1393, %v1397, %v1399
          %v1401 = vrot.slane %v1142, 2
          %v1402 = vsel %vm1393, %v1399, %v1401
          %v1403 = vrot.slane %v1143, 2
          %v1404 = vsel %vm1393, %v1401, %v1403
          %v1405 = vrot.slane %v1144, 2
          %v1406 = vsel %vm1393, %v1403, %v1405
          %v1407 = vrot.slane %v1145, 2
          %v1408 = vrot.slane %v1146, 2
          %v1409 = vsel %vm1393, %v1407, %v1408
          %v1410 = vrot.slane %v1147, 2
          %v1411 = vsel %vm1393, %v1408, %v1410
          %v1412 = vrot.slane %v1148, 2
          %v1413 = vsel %vm1393, %v1410, %v1412
          %v1414 = vrot.slane %v1149, 2
          %v1415 = vsel %vm1393, %v1412, %v1414
          %v1416 = vrot.slane %v1150, 2
          %v1417 = vsel %vm1393, %v1414, %v1416
          %v1418 = vrot.slane %v1151, 2
          %v1419 = vsel %vm1393, %v1416, %v1418
          %vm1432 = vsmask.f32 5376
          %v1433 = vrot.slane %v1154, 2
          %v1434 = vrot.slane %v1156, 3
          %v1435 = vor.u32 %v1433, %v1434
          %v1436 = vrot.slane %v1165, 2
          %v1437 = vrot.slane %v1161, 3
          %v1438 = vor.u32 %v1436, %v1437
          %v1439 = vsel %vm1432, %v1435, %v1438
          %v1440 = vrot.slane %v1173, 2
          %v1441 = vrot.slane %v1169, 3
          %v1442 = vor.u32 %v1440, %v1441
          %v1443 = vsel %vm1432, %v1438, %v1442
          %v1444 = vrot.slane %v1181, 2
          %v1445 = vrot.slane %v1177, 3
          %v1446 = vor.u32 %v1444, %v1445
          %v1447 = vsel %vm1432, %v1442, %v1446
          %v1448 = vrot.slane %v1189, 2
          %v1449 = vrot.slane %v1185, 3
          %v1450 = vor.u32 %v1448, %v1449
          %v1451 = vsel %vm1432, %v1446, %v1450
          %v1452 = vrot.slane %v1197, 2
          %v1453 = vrot.slane %v1193, 3
          %v1454 = vor.u32 %v1452, %v1453
          %v1455 = vsel %vm1432, %v1450, %v1454
          %v1456 = vrot.slane %v1346, 2
          %v1457 = vrot.slane %v1201, 3
          %v1458 = vor.u32 %v1456, %v1457
          %v1459 = vsel %vm1432, %v1454, %v1458
          %v1460 = vrot.slane %v1206, 2
          %v1461 = vrot.slane %v1208, 3
          %v1462 = vor.u32 %v1460, %v1461
          %v1463 = vrot.slane %v1217, 2
          %v1464 = vrot.slane %v1213, 3
          %v1465 = vor.u32 %v1463, %v1464
          %v1466 = vsel %vm1432, %v1462, %v1465
          %v1467 = vrot.slane %v1225, 2
          %v1468 = vrot.slane %v1221, 3
          %v1469 = vor.u32 %v1467, %v1468
          %v1470 = vsel %vm1432, %v1465, %v1469
          %v1471 = vrot.slane %v1233, 2
          %v1472 = vrot.slane %v1229, 3
          %v1473 = vor.u32 %v1471, %v1472
          %v1474 = vsel %vm1432, %v1469, %v1473
          %v1475 = vrot.slane %v1241, 2
          %v1476 = vrot.slane %v1237, 3
          %v1477 = vor.u32 %v1475, %v1476
          %v1478 = vsel %vm1432, %v1473, %v1477
          %v1479 = vrot.slane %v1249, 2
          %v1480 = vrot.slane %v1245, 3
          %v1481 = vor.u32 %v1479, %v1480
          %v1482 = vsel %vm1432, %v1477, %v1481
          %v1483 = vrot.slane %v1375, 2
          %v1484 = vrot.slane %v1253, 3
          %v1485 = vor.u32 %v1483, %v1484
          %v1486 = vsel %vm1432, %v1481, %v1485
          %vm1499 = vcmask 1044480
          %v1500 = vrot.slane %v1138, 3
          %v1501 = vrot.slane %v1139, 3
          %v1502 = vsel %vm1499, %v1500, %v1501
          %v1503 = vrot.slane %v1140, 3
          %v1504 = vsel %vm1499, %v1501, %v1503
          %v1505 = vrot.slane %v1141, 3
          %v1506 = vsel %vm1499, %v1503, %v1505
          %v1507 = vrot.slane %v1142, 3
          %v1508 = vsel %vm1499, %v1505, %v1507
          %v1509 = vrot.slane %v1143, 3
          %v1510 = vsel %vm1499, %v1507, %v1509
          %v1511 = vrot.slane %v1144, 3
          %v1512 = vsel %vm1499, %v1509, %v1511
          %v1513 = vrot.slane %v1145, 3
          %v1514 = vrot.slane %v1146, 3
          %v1515 = vsel %vm1499, %v1513, %v1514
          %v1516 = vrot.slane %v1147, 3
          %v1517 = vsel %vm1499, %v1514, %v1516
          %v1518 = vrot.slane %v1148, 3
          %v1519 = vsel %vm1499, %v1516, %v1518
          %v1520 = vrot.slane %v1149, 3
          %v1521 = vsel %vm1499, %v1518, %v1520
          %v1522 = vrot.slane %v1150, 3
          %v1523 = vsel %vm1499, %v1520, %v1522
          %v1524 = vrot.slane %v1151, 3
          %v1525 = vsel %vm1499, %v1522, %v1524
          %v1539 = vlaneseq
          %v1540 = vshrl.u32 %v1539, 7
          %v1541 = vsub.s32 0, %v1540
          %v1542 = vrot.slane %v1111, %v1541
          %v1656 = vunpack.c.l.b16 %v999
          %v1657 = vunpack.c.l.b16 %v1000
          %v1658 = vunpack.c.l.b16 %v1001
          %v1659 = vunpack.c.l.b16 %v1002
          %v1660 = vunpack.c.l.b16 %v1003
          %v1661 = vunpack.c.l.b16 %v1004
          %v1662 = vunpack.c.l.b16 %v1005
          %v1663 = vunpack.c.l.b16 %v1006
          %v1664 = vunpack.c.l.b16 %v1007
          %v1665 = vunpack.c.l.b16 %v1008
          %v1666 = vunpack.c.l.b16 %v1009
          %v1667 = vunpack.c.l.b16 %v1010
          %v1668 = vunpack.c.l.b16 %v1011
          %v1669 = vunpack.c.l.b16 %v1012
          %v1670 = vunpack.c.l.b16 %v1013
          %v1671 = vunpack.c.l.b16 %v1014
          %v1672 = vunpack.c.l.b16 %v1015
          %v1673 = vunpack.c.l.b16 %v1016
          %v1674 = vunpack.c.l.b16 %v1017
          %v1675 = vunpack.c.l.b16 %v1018
          %v1676 = vunpack.c.l.b16 %v1019
          %v1677 = vunpack.c.l.b16 %v1020
          %v1678 = vunpack.c.l.b16 %v1021
          %v1679 = vunpack.c.l.b16 %v1022
          %v1680 = vunpack.c.l.b16 %v1023
          %v1681 = vunpack.c.l.b16 %v1024
          %v1682 = vunpack.c.l.b16 %v1025
          %v1683 = vunpack.c.l.b16 %v1026
          %v1684 = vunpack.c.l.b16 %v1027
          %v1685 = vunpack.c.l.b16 %v1028
          %v1686 = vunpack.c.l.b16 %v1029
          %v1687 = vunpack.c.l.b16 %v1030
          %v1688 = vunpack.c.l.b16 %v1031
          %v1689 = vunpack.c.l.b16 %v1032
          %v1690 = vunpack.c.l.b16 %v1033
          %v1691 = vunpack.c.l.b16 %v1034
          %v1692 = vunpack.c.l.b16 %v1035
          %v1693 = vunpack.c.l.b16 %v1036
          %v1694 = vunpack.c.l.b16 %v1037
          %v1695 = vunpack.c.l.b16 %v1038
          %v1696 = vunpack.c.l.b16 %v1039
          %v1697 = vunpack.c.l.b16 %v1040
          %v1698 = vunpack.c.l.b16 %v1041
          %v1699 = vunpack.c.l.b16 %v1042
          %v1700 = vunpack.c.l.b16 %v1043
          %v1701 = vunpack.c.l.b16 %v1044
          %v1702 = vunpack.c.l.b16 %v1045
          %v1703 = vunpack.c.l.b16 %v1046
          %v1704 = vunpack.c.l.b16 %v1047
          %v1705 = vunpack.c.l.b16 %v1048
          %v1706 = vunpack.c.l.b16 %v1049
          %v1707 = vunpack.c.l.b16 %v1050
          %v1708 = vunpack.c.l.b16 %v1051
          %v1709 = vunpack.c.l.b16 %v1052
          %v1710 = vunpack.c.l.b16 %v1053
          %v1711 = vunpack.c.l.b16 %v1054
          %v1712 = vunpack.c.l.b16 %v1055
          %v1713 = vunpack.c.l.b16 %v1056
          %v1714 = vunpack.c.l.b16 %v1057
          %v1715 = vunpack.c.l.b16 %v1058
          %v1716 = vunpack.c.l.b16 %v1059
          %v1717 = vunpack.c.l.b16 %v1060
          %v1718 = vunpack.c.l.b16 %v1061
          %v1719 = vunpack.c.l.b16 %v1062
          %v1720 = vunpack.c.l.b16 %v1063
          %v1721 = vunpack.c.l.b16 %v1064
          %v1722 = vunpack.c.l.b16 %v1065
          %v1723 = vunpack.c.l.b16 %v1066
          %v1724 = vunpack.c.l.b16 %v1067
          %v1725 = vunpack.c.l.b16 %v1068
          %v1726 = vunpack.c.l.b16 %v1069
          %v1727 = vunpack.c.l.b16 %v1070
          %v1728 = vunpack.c.l.b16 %v1071
          %v1729 = vunpack.c.l.b16 %v1072
          %v1730 = vunpack.c.l.b16 %v1073
          %v1731 = vunpack.c.l.b16 %v1074
          %v1732 = vunpack.c.l.b16 %v1075
          %v1733 = vunpack.c.l.b16 %v1076
          %v1734 = vunpack.c.l.b16 %v1077
          %v1735 = vunpack.c.l.b16 %v1078
          %v1736 = vunpack.c.l.b16 %v1079
          %v1737 = vunpack.c.l.b16 %v1080
          %v1738 = vunpack.c.l.b16 %v1081
          %v1739 = vunpack.c.l.b16 %v1082
          %v1740 = vunpack.c.l.b16 %v1083
          %v1741 = vunpack.c.l.b16 %v1084
          %v1742 = vunpack.c.l.b16 %v1085
          %v1743 = vunpack.c.l.b16 %v1086
          %v1744 = vunpack.c.l.b16 %v1087
          %v1745 = vunpack.c.l.b16 %v1088
          %v1746 = vunpack.c.l.b16 %v1089
          %v1747 = vunpack.c.l.b16 %v1090
          %v1748 = vunpack.c.l.b16 %v1091
          %v1749 = vunpack.c.l.b16 %v1092
          %v1750 = vunpack.c.l.b16 %v1093
          %v1751 = vunpack.c.l.b16 %v1094
          %v1752 = vunpack.c.l.b16 %v1095
          %v1753 = vunpack.c.l.b16 %v1096
          %v1754 = vunpack.c.l.b16 %v1097
          %v1755 = vunpack.c.l.b16 %v1098
          %v1756 = vunpack.c.l.b16 %v1099
          %v1757 = vunpack.c.l.b16 %v1100
          %v1758 = vunpack.c.l.b16 %v1101
          %v1759 = vunpack.c.l.b16 %v1102
          %v1760 = vunpack.c.l.b16 %v1103
          %v1761 = vunpack.c.l.b16 %v1104
          %v1762 = vunpack.c.l.b16 %v1105
          %v1763 = vunpack.c.l.b16 %v1106
          %v1764 = vunpack.c.l.b16 %v1107
          %v1765 = vunpack.c.l.b16 %v1108
          %v1766 = vunpack.c.l.b16 %v1109
          %v1767 = vunpack.c.l.b16 %v1110
          %v1768 = vpack.c.b16 %v1657, %v1656
          %v1769 = vpack.c.b16 %v1659, %v1658
          %v1770 = vpack.c.b16 %v1661, %v1660
          %v1771 = vpack.c.b16 %v1663, %v1662
          %v1772 = vpack.c.b16 %v1665, %v1664
          %v1773 = vpack.c.b16 %v1667, %v1666
          %v1774 = vpack.c.b16 %v1669, %v1668
          %v1775 = vpack.c.b16 %v1671, %v1670
          %v1776 = vpack.c.b16 %v1673, %v1672
          %v1777 = vpack.c.b16 %v1675, %v1674
          %v1778 = vpack.c.b16 %v1677, %v1676
          %v1779 = vpack.c.b16 %v1679, %v1678
          %v1780 = vpack.c.b16 %v1681, %v1680
          %v1781 = vpack.c.b16 %v1683, %v1682
          %v1782 = vpack.c.b16 %v1685, %v1684
          %v1783 = vpack.c.b16 %v1687, %v1686
          %v1784 = vpack.c.b16 %v1689, %v1688
          %v1785 = vpack.c.b16 %v1691, %v1690
          %v1786 = vpack.c.b16 %v1693, %v1692
          %v1787 = vpack.c.b16 %v1695, %v1694
          %v1788 = vpack.c.b16 %v1697, %v1696
          %v1789 = vpack.c.b16 %v1699, %v1698
          %v1790 = vpack.c.b16 %v1701, %v1700
          %v1791 = vpack.c.b16 %v1703, %v1702
          %v1792 = vpack.c.b16 %v1705, %v1704
          %v1793 = vpack.c.b16 %v1707, %v1706
          %v1794 = vpack.c.b16 %v1709, %v1708
          %v1795 = vpack.c.b16 %v1711, %v1710
          %v1796 = vpack.c.b16 %v1713, %v1712
          %v1797 = vpack.c.b16 %v1715, %v1714
          %v1798 = vpack.c.b16 %v1717, %v1716
          %v1799 = vpack.c.b16 %v1719, %v1718
          %v1800 = vpack.c.b16 %v1721, %v1720
          %v1801 = vpack.c.b16 %v1723, %v1722
          %v1802 = vpack.c.b16 %v1725, %v1724
          %v1803 = vpack.c.b16 %v1727, %v1726
          %v1804 = vpack.c.b16 %v1729, %v1728
          %v1805 = vpack.c.b16 %v1731, %v1730
          %v1806 = vpack.c.b16 %v1733, %v1732
          %v1807 = vpack.c.b16 %v1735, %v1734
          %v1808 = vpack.c.b16 %v1737, %v1736
          %v1809 = vpack.c.b16 %v1739, %v1738
          %v1810 = vpack.c.b16 %v1741, %v1740
          %v1811 = vpack.c.b16 %v1743, %v1742
          %v1812 = vpack.c.b16 %v1745, %v1744
          %v1813 = vpack.c.b16 %v1747, %v1746
          %v1814 = vpack.c.b16 %v1749, %v1748
          %v1815 = vpack.c.b16 %v1751, %v1750
          %v1816 = vpack.c.b16 %v1753, %v1752
          %v1817 = vpack.c.b16 %v1755, %v1754
          %v1818 = vpack.c.b16 %v1757, %v1756
          %v1819 = vpack.c.b16 %v1759, %v1758
          %v1820 = vpack.c.b16 %v1761, %v1760
          %v1821 = vpack.c.b16 %v1763, %v1762
          %v1822 = vpack.c.b16 %v1765, %v1764
          %v1823 = vpack.c.b16 %v1767, %v1766
          %1880 = vmatprep.subr.bf16.mxu0 0
          %1881 = vmatpush1.bf16.msra.mxu0 %v1775
          %1882 = vmatprep.subr.bf16.mxu0 0
          %1883 = vmatpush1.bf16.msra.mxu0 %v1774
          %1884 = vmatprep.subr.bf16.mxu0 0
          %1885 = vmatpush1.bf16.msra.mxu0 %v1773
          %1886 = vmatprep.subr.bf16.mxu0 0
          %1887 = vmatpush1.bf16.msra.mxu0 %v1772
          %1888 = vmatprep.subr.bf16.mxu0 0
          %1889 = vmatpush1.bf16.msra.mxu0 %v1771
          %1890 = vmatprep.subr.bf16.mxu0 0
          %1891 = vmatpush1.bf16.msra.mxu0 %v1770
          %1892 = vmatprep.subr.bf16.mxu0 0
          %1893 = vmatpush1.bf16.msra.mxu0 %v1769
          %1894 = vmatprep.subr.bf16.mxu0 0
          %1895 = vmatpush1.bf16.msra.mxu0 %v1768
          %1896 = vmatprep.subr.bf16.mxu0 0
          %1897 = vmatpush2.bf16.msra.mxu0 %v1783
          %1898 = vmatprep.subr.bf16.mxu0 0
          %1899 = vmatpush2.bf16.msra.mxu0 %v1782
          %1900 = vmatprep.subr.bf16.mxu0 0
          %1901 = vmatpush2.bf16.msra.mxu0 %v1781
          %1902 = vmatprep.subr.bf16.mxu0 0
          %1903 = vmatpush2.bf16.msra.mxu0 %v1780
          %1904 = vmatprep.subr.bf16.mxu0 0
          %1905 = vmatpush2.bf16.msra.mxu0 %v1779
          %1906 = vmatprep.subr.bf16.mxu0 0
          %1907 = vmatpush2.bf16.msra.mxu0 %v1778
          %1908 = vmatprep.subr.bf16.mxu0 0
          %1909 = vmatpush2.bf16.msra.mxu0 %v1777
          %1910 = vmatprep.subr.bf16.mxu0 0
          %1911 = vmatpush2.bf16.msra.mxu0 %v1776
          %1912 = vmatprep.mubr.bf16.mxu0 %v1164
          %1913 = vmatmul.mubr.bf16.gmra.mxu0 %v1138
          %v1914 = vpop.f32.mrf.mxu0
          %v1915 = vadd.f32 %v1542, %v1914
          %v1916 = vpop.f32.mrf.mxu0
          %v1917 = vpop.f32.mrf.mxu0
          %v1918 = vadd.f32 %v1542, %v1917
          %v1919 = vpop.f32.mrf.mxu0
          %1920 = vmatprep.mubr.bf16.mxu0 %v1172
          %1921 = vmatmul.mubr.bf16.gmra.mxu0 %v1139
          %v1922 = vpop.f32.mrf.mxu0
          %v1923 = vadd.f32 %v1542, %v1922
          %v1924 = vpop.f32.mrf.mxu0
          %v1925 = vpop.f32.mrf.mxu0
          %v1926 = vadd.f32 %v1542, %v1925
          %v1927 = vpop.f32.mrf.mxu0
          %1928 = vmatprep.mubr.bf16.mxu0 %v1180
          %1929 = vmatmul.mubr.bf16.gmra.mxu0 %v1140
          %v1930 = vpop.f32.mrf.mxu0
          %v1931 = vadd.f32 %v1542, %v1930
          %v1932 = vpop.f32.mrf.mxu0
          %v1933 = vpop.f32.mrf.mxu0
          %v1934 = vadd.f32 %v1542, %v1933
          %v1935 = vpop.f32.mrf.mxu0
          %1936 = vmatprep.mubr.bf16.mxu0 %v1188
          %1937 = vmatmul.mubr.bf16.gmra.mxu0 %v1141
          %v1938 = vpop.f32.mrf.mxu0
          %v1939 = vadd.f32 %v1542, %v1938
          %v1940 = vpop.f32.mrf.mxu0
          %v1941 = vpop.f32.mrf.mxu0
          %v1942 = vadd.f32 %v1542, %v1941
          %v1943 = vpop.f32.mrf.mxu0
          %1944 = vmatprep.mubr.bf16.mxu0 %v1196
          %1945 = vmatmul.mubr.bf16.gmra.mxu0 %v1142
          %v1946 = vpop.f32.mrf.mxu0
          %v1947 = vadd.f32 %v1542, %v1946
          %v1948 = vpop.f32.mrf.mxu0
          %v1949 = vpop.f32.mrf.mxu0
          %v1950 = vadd.f32 %v1542, %v1949
          %v1951 = vpop.f32.mrf.mxu0
          %1952 = vmatprep.mubr.bf16.mxu0 %v1204
          %1953 = vmatmul.mubr.bf16.gmra.mxu0 %v1143
          %v1954 = vpop.f32.mrf.mxu0
          %v1955 = vadd.f32 %v1542, %v1954
          %v1956 = vpop.f32.mrf.mxu0
          %v1957 = vpop.f32.mrf.mxu0
          %v1958 = vadd.f32 %v1542, %v1957
          %v1959 = vpop.f32.mrf.mxu0
          %1960 = vmatprep.mubr.bf16.mxu0 %v1216
          %1961 = vmatmul.mubr.bf16.gmra.mxu0 %v1145
          %v1962 = vpop.f32.mrf.mxu0
          %v1963 = vadd.f32 %v1542, %v1962
          %v1964 = vpop.f32.mrf.mxu0
          %v1965 = vpop.f32.mrf.mxu0
          %v1966 = vadd.f32 %v1542, %v1965
          %v1967 = vpop.f32.mrf.mxu0
          %1968 = vmatprep.mubr.bf16.mxu0 %v1224
          %1969 = vmatmul.mubr.bf16.gmra.mxu0 %v1146
          %v1970 = vpop.f32.mrf.mxu0
          %v1971 = vadd.f32 %v1542, %v1970
          %v1972 = vpop.f32.mrf.mxu0
          %v1973 = vpop.f32.mrf.mxu0
          %v1974 = vadd.f32 %v1542, %v1973
          %v1975 = vpop.f32.mrf.mxu0
          %1976 = vmatprep.mubr.bf16.mxu0 %v1232
          %1977 = vmatmul.mubr.bf16.gmra.mxu0 %v1147
          %v1978 = vpop.f32.mrf.mxu0
          %v1979 = vadd.f32 %v1542, %v1978
          %v1980 = vpop.f32.mrf.mxu0
          %v1981 = vpop.f32.mrf.mxu0
          %v1982 = vadd.f32 %v1542, %v1981
          %v1983 = vpop.f32.mrf.mxu0
          %1984 = vmatprep.mubr.bf16.mxu0 %v1240
          %1985 = vmatmul.mubr.bf16.gmra.mxu0 %v1148
          %v1986 = vpop.f32.mrf.mxu0
          %v1987 = vadd.f32 %v1542, %v1986
          %v1988 = vpop.f32.mrf.mxu0
          %v1989 = vpop.f32.mrf.mxu0
          %v1990 = vadd.f32 %v1542, %v1989
          %v1991 = vpop.f32.mrf.mxu0
          %1992 = vmatprep.mubr.bf16.mxu0 %v1248
          %1993 = vmatmul.mubr.bf16.gmra.mxu0 %v1149
          %v1994 = vpop.f32.mrf.mxu0
          %v1995 = vadd.f32 %v1542, %v1994
          %v1996 = vpop.f32.mrf.mxu0
          %v1997 = vpop.f32.mrf.mxu0
          %v1998 = vadd.f32 %v1542, %v1997
          %v1999 = vpop.f32.mrf.mxu0
          %2000 = vmatprep.mubr.bf16.mxu0 %v1256
          %2001 = vmatmul.mubr.bf16.gmra.mxu0 %v1150
          %v2002 = vpop.f32.mrf.mxu0
          %v2003 = vadd.f32 %v1542, %v2002
          %v2004 = vpop.f32.mrf.mxu0
          %v2005 = vpop.f32.mrf.mxu0
          %v2006 = vadd.f32 %v1542, %v2005
          %v2007 = vpop.f32.mrf.mxu0
          %2008 = vdwg.mxu0
          %2009 = vmatprep.subr.bf16.mxu0 0
          %2010 = vmatpush1.bf16.msra.mxu0 %v1791
          %2011 = vmatprep.subr.bf16.mxu0 0
          %2012 = vmatpush1.bf16.msra.mxu0 %v1790
          %2013 = vmatprep.subr.bf16.mxu0 0
          %2014 = vmatpush1.bf16.msra.mxu0 %v1789
          %2015 = vmatprep.subr.bf16.mxu0 0
          %2016 = vmatpush1.bf16.msra.mxu0 %v1788
          %2017 = vmatprep.subr.bf16.mxu0 0
          %2018 = vmatpush1.bf16.msra.mxu0 %v1787
          %2019 = vmatprep.subr.bf16.mxu0 0
          %2020 = vmatpush1.bf16.msra.mxu0 %v1786
          %2021 = vmatprep.subr.bf16.mxu0 0
          %2022 = vmatpush1.bf16.msra.mxu0 %v1785
          %2023 = vmatprep.subr.bf16.mxu0 0
          %2024 = vmatpush1.bf16.msra.mxu0 %v1784
          %2025 = vmatprep.subr.bf16.mxu0 0
          %2026 = vmatpush2.bf16.msra.mxu0 %v1799
          %2027 = vmatprep.subr.bf16.mxu0 0
          %2028 = vmatpush2.bf16.msra.mxu0 %v1798
          %2029 = vmatprep.subr.bf16.mxu0 0
          %2030 = vmatpush2.bf16.msra.mxu0 %v1797
          %2031 = vmatprep.subr.bf16.mxu0 0
          %2032 = vmatpush2.bf16.msra.mxu0 %v1796
          %2033 = vmatprep.subr.bf16.mxu0 0
          %2034 = vmatpush2.bf16.msra.mxu0 %v1795
          %2035 = vmatprep.subr.bf16.mxu0 0
          %2036 = vmatpush2.bf16.msra.mxu0 %v1794
          %2037 = vmatprep.subr.bf16.mxu0 0
          %2038 = vmatpush2.bf16.msra.mxu0 %v1793
          %2039 = vmatprep.subr.bf16.mxu0 0
          %2040 = vmatpush2.bf16.msra.mxu0 %v1792
          %2041 = vmatprep.mubr.bf16.mxu0 %v1329
          %2042 = vmatmul.mubr.bf16.gmra.mxu0 %v1286
          %v2043 = vpop.f32.mrf.mxu0
          %v2044 = vadd.f32 %v1915, %v2043
          %v2045 = vpop.f32.mrf.mxu0
          %v2046 = vpop.f32.mrf.mxu0
          %v2047 = vadd.f32 %v1918, %v2046
          %v2048 = vpop.f32.mrf.mxu0
          %2049 = vmatprep.mubr.bf16.mxu0 %v1333
          %2050 = vmatmul.mubr.bf16.gmra.mxu0 %v1288
          %v2051 = vpop.f32.mrf.mxu0
          %v2052 = vadd.f32 %v1923, %v2051
          %v2053 = vpop.f32.mrf.mxu0
          %v2054 = vpop.f32.mrf.mxu0
          %v2055 = vadd.f32 %v1926, %v2054
          %v2056 = vpop.f32.mrf.mxu0
          %2057 = vmatprep.mubr.bf16.mxu0 %v1337
          %2058 = vmatmul.mubr.bf16.gmra.mxu0 %v1290
          %v2059 = vpop.f32.mrf.mxu0
          %v2060 = vadd.f32 %v1931, %v2059
          %v2061 = vpop.f32.mrf.mxu0
          %v2062 = vpop.f32.mrf.mxu0
          %v2063 = vadd.f32 %v1934, %v2062
          %v2064 = vpop.f32.mrf.mxu0
          %2065 = vmatprep.mubr.bf16.mxu0 %v1341
          %2066 = vmatmul.mubr.bf16.gmra.mxu0 %v1292
          %v2067 = vpop.f32.mrf.mxu0
          %v2068 = vadd.f32 %v1939, %v2067
          %v2069 = vpop.f32.mrf.mxu0
          %v2070 = vpop.f32.mrf.mxu0
          %v2071 = vadd.f32 %v1942, %v2070
          %v2072 = vpop.f32.mrf.mxu0
          %2073 = vmatprep.mubr.bf16.mxu0 %v1345
          %2074 = vmatmul.mubr.bf16.gmra.mxu0 %v1294
          %v2075 = vpop.f32.mrf.mxu0
          %v2076 = vadd.f32 %v1947, %v2075
          %v2077 = vpop.f32.mrf.mxu0
          %v2078 = vpop.f32.mrf.mxu0
          %v2079 = vadd.f32 %v1950, %v2078
          %v2080 = vpop.f32.mrf.mxu0
          %2081 = vmatprep.mubr.bf16.mxu0 %v1351
          %2082 = vmatmul.mubr.bf16.gmra.mxu0 %v1296
          %v2083 = vpop.f32.mrf.mxu0
          %v2084 = vadd.f32 %v1955, %v2083
          %v2085 = vpop.f32.mrf.mxu0
          %v2086 = vpop.f32.mrf.mxu0
          %v2087 = vadd.f32 %v1958, %v2086
          %v2088 = vpop.f32.mrf.mxu0
          %2089 = vmatprep.mubr.bf16.mxu0 %v1358
          %2090 = vmatmul.mubr.bf16.gmra.mxu0 %v1299
          %v2091 = vpop.f32.mrf.mxu0
          %v2092 = vadd.f32 %v1963, %v2091
          %v2093 = vpop.f32.mrf.mxu0
          %v2094 = vpop.f32.mrf.mxu0
          %v2095 = vadd.f32 %v1966, %v2094
          %v2096 = vpop.f32.mrf.mxu0
          %2097 = vmatprep.mubr.bf16.mxu0 %v1362
          %2098 = vmatmul.mubr.bf16.gmra.mxu0 %v1301
          %v2099 = vpop.f32.mrf.mxu0
          %v2100 = vadd.f32 %v1971, %v2099
          %v2101 = vpop.f32.mrf.mxu0
          %v2102 = vpop.f32.mrf.mxu0
          %v2103 = vadd.f32 %v1974, %v2102
          %v2104 = vpop.f32.mrf.mxu0
          %2105 = vmatprep.mubr.bf16.mxu0 %v1366
          %2106 = vmatmul.mubr.bf16.gmra.mxu0 %v1303
          %v2107 = vpop.f32.mrf.mxu0
          %v2108 = vadd.f32 %v1979, %v2107
          %v2109 = vpop.f32.mrf.mxu0
          %v2110 = vpop.f32.mrf.mxu0
          %v2111 = vadd.f32 %v1982, %v2110
          %v2112 = vpop.f32.mrf.mxu0
          %2113 = vmatprep.mubr.bf16.mxu0 %v1370
          %2114 = vmatmul.mubr.bf16.gmra.mxu0 %v1305
          %v2115 = vpop.f32.mrf.mxu0
          %v2116 = vadd.f32 %v1987, %v2115
          %v2117 = vpop.f32.mrf.mxu0
          %v2118 = vpop.f32.mrf.mxu0
          %v2119 = vadd.f32 %v1990, %v2118
          %v2120 = vpop.f32.mrf.mxu0
          %2121 = vmatprep.mubr.bf16.mxu0 %v1374
          %2122 = vmatmul.mubr.bf16.gmra.mxu0 %v1307
          %v2123 = vpop.f32.mrf.mxu0
          %v2124 = vadd.f32 %v1995, %v2123
          %v2125 = vpop.f32.mrf.mxu0
          %v2126 = vpop.f32.mrf.mxu0
          %v2127 = vadd.f32 %v1998, %v2126
          %v2128 = vpop.f32.mrf.mxu0
          %2129 = vmatprep.mubr.bf16.mxu0 %v1380
          %2130 = vmatmul.mubr.bf16.gmra.mxu0 %v1309
          %v2131 = vpop.f32.mrf.mxu0
          %v2132 = vadd.f32 %v2003, %v2131
          %v2133 = vpop.f32.mrf.mxu0
          %v2134 = vpop.f32.mrf.mxu0
          %v2135 = vadd.f32 %v2006, %v2134
          %v2136 = vpop.f32.mrf.mxu0
          %2137 = vdwg.mxu0
          %2138 = vmatprep.subr.bf16.mxu0 0
          %2139 = vmatpush1.bf16.msra.mxu0 %v1807
          %2140 = vmatprep.subr.bf16.mxu0 0
          %2141 = vmatpush1.bf16.msra.mxu0 %v1806
          %2142 = vmatprep.subr.bf16.mxu0 0
          %2143 = vmatpush1.bf16.msra.mxu0 %v1805
          %2144 = vmatprep.subr.bf16.mxu0 0
          %2145 = vmatpush1.bf16.msra.mxu0 %v1804
          %2146 = vmatprep.subr.bf16.mxu0 0
          %2147 = vmatpush1.bf16.msra.mxu0 %v1803
          %2148 = vmatprep.subr.bf16.mxu0 0
          %2149 = vmatpush1.bf16.msra.mxu0 %v1802
          %2150 = vmatprep.subr.bf16.mxu0 0
          %2151 = vmatpush1.bf16.msra.mxu0 %v1801
          %2152 = vmatprep.subr.bf16.mxu0 0
          %2153 = vmatpush1.bf16.msra.mxu0 %v1800
          %2154 = vmatprep.subr.bf16.mxu0 0
          %2155 = vmatpush2.bf16.msra.mxu0 %v1815
          %2156 = vmatprep.subr.bf16.mxu0 0
          %2157 = vmatpush2.bf16.msra.mxu0 %v1814
          %2158 = vmatprep.subr.bf16.mxu0 0
          %2159 = vmatpush2.bf16.msra.mxu0 %v1813
          %2160 = vmatprep.subr.bf16.mxu0 0
          %2161 = vmatpush2.bf16.msra.mxu0 %v1812
          %2162 = vmatprep.subr.bf16.mxu0 0
          %2163 = vmatpush2.bf16.msra.mxu0 %v1811
          %2164 = vmatprep.subr.bf16.mxu0 0
          %2165 = vmatpush2.bf16.msra.mxu0 %v1810
          %2166 = vmatprep.subr.bf16.mxu0 0
          %2167 = vmatpush2.bf16.msra.mxu0 %v1809
          %2168 = vmatprep.subr.bf16.mxu0 0
          %2169 = vmatpush2.bf16.msra.mxu0 %v1808
          %2170 = vmatprep.mubr.bf16.mxu0 %v1439
          %2171 = vmatmul.mubr.bf16.gmra.mxu0 %v1396
          %v2172 = vpop.f32.mrf.mxu0
          %v2173 = vadd.f32 %v2044, %v2172
          %v2174 = vpop.f32.mrf.mxu0
          %v2175 = vpop.f32.mrf.mxu0
          %v2176 = vadd.f32 %v2047, %v2175
          %v2177 = vpop.f32.mrf.mxu0
          %2178 = vmatprep.mubr.bf16.mxu0 %v1443
          %2179 = vmatmul.mubr.bf16.gmra.mxu0 %v1398
          %v2180 = vpop.f32.mrf.mxu0
          %v2181 = vadd.f32 %v2052, %v2180
          %v2182 = vpop.f32.mrf.mxu0
          %v2183 = vpop.f32.mrf.mxu0
          %v2184 = vadd.f32 %v2055, %v2183
          %v2185 = vpop.f32.mrf.mxu0
          %2186 = vmatprep.mubr.bf16.mxu0 %v1447
          %2187 = vmatmul.mubr.bf16.gmra.mxu0 %v1400
          %v2188 = vpop.f32.mrf.mxu0
          %v2189 = vadd.f32 %v2060, %v2188
          %v2190 = vpop.f32.mrf.mxu0
          %v2191 = vpop.f32.mrf.mxu0
          %v2192 = vadd.f32 %v2063, %v2191
          %v2193 = vpop.f32.mrf.mxu0
          %2194 = vmatprep.mubr.bf16.mxu0 %v1451
          %2195 = vmatmul.mubr.bf16.gmra.mxu0 %v1402
          %v2196 = vpop.f32.mrf.mxu0
          %v2197 = vadd.f32 %v2068, %v2196
          %v2198 = vpop.f32.mrf.mxu0
          %v2199 = vpop.f32.mrf.mxu0
          %v2200 = vadd.f32 %v2071, %v2199
          %v2201 = vpop.f32.mrf.mxu0
          %2202 = vmatprep.mubr.bf16.mxu0 %v1455
          %2203 = vmatmul.mubr.bf16.gmra.mxu0 %v1404
          %v2204 = vpop.f32.mrf.mxu0
          %v2205 = vadd.f32 %v2076, %v2204
          %v2206 = vpop.f32.mrf.mxu0
          %v2207 = vpop.f32.mrf.mxu0
          %v2208 = vadd.f32 %v2079, %v2207
          %v2209 = vpop.f32.mrf.mxu0
          %2210 = vmatprep.mubr.bf16.mxu0 %v1459
          %2211 = vmatmul.mubr.bf16.gmra.mxu0 %v1406
          %v2212 = vpop.f32.mrf.mxu0
          %v2213 = vadd.f32 %v2084, %v2212
          %v2214 = vpop.f32.mrf.mxu0
          %v2215 = vpop.f32.mrf.mxu0
          %v2216 = vadd.f32 %v2087, %v2215
          %v2217 = vpop.f32.mrf.mxu0
          %2218 = vmatprep.mubr.bf16.mxu0 %v1466
          %2219 = vmatmul.mubr.bf16.gmra.mxu0 %v1409
          %v2220 = vpop.f32.mrf.mxu0
          %v2221 = vadd.f32 %v2092, %v2220
          %v2222 = vpop.f32.mrf.mxu0
          %v2223 = vpop.f32.mrf.mxu0
          %v2224 = vadd.f32 %v2095, %v2223
          %v2225 = vpop.f32.mrf.mxu0
          %2226 = vmatprep.mubr.bf16.mxu0 %v1470
          %2227 = vmatmul.mubr.bf16.gmra.mxu0 %v1411
          %v2228 = vpop.f32.mrf.mxu0
          %v2229 = vadd.f32 %v2100, %v2228
          %v2230 = vpop.f32.mrf.mxu0
          %v2231 = vpop.f32.mrf.mxu0
          %v2232 = vadd.f32 %v2103, %v2231
          %v2233 = vpop.f32.mrf.mxu0
          %2234 = vmatprep.mubr.bf16.mxu0 %v1474
          %2235 = vmatmul.mubr.bf16.gmra.mxu0 %v1413
          %v2236 = vpop.f32.mrf.mxu0
          %v2237 = vadd.f32 %v2108, %v2236
          %v2238 = vpop.f32.mrf.mxu0
          %v2239 = vpop.f32.mrf.mxu0
          %v2240 = vadd.f32 %v2111, %v2239
          %v2241 = vpop.f32.mrf.mxu0
          %2242 = vmatprep.mubr.bf16.mxu0 %v1478
          %2243 = vmatmul.mubr.bf16.gmra.mxu0 %v1415
          %v2244 = vpop.f32.mrf.mxu0
          %v2245 = vadd.f32 %v2116, %v2244
          %v2246 = vpop.f32.mrf.mxu0
          %v2247 = vpop.f32.mrf.mxu0
          %v2248 = vadd.f32 %v2119, %v2247
          %v2249 = vpop.f32.mrf.mxu0
          %2250 = vmatprep.mubr.bf16.mxu0 %v1482
          %2251 = vmatmul.mubr.bf16.gmra.mxu0 %v1417
          %v2252 = vpop.f32.mrf.mxu0
          %v2253 = vadd.f32 %v2124, %v2252
          %v2254 = vpop.f32.mrf.mxu0
          %v2255 = vpop.f32.mrf.mxu0
          %v2256 = vadd.f32 %v2127, %v2255
          %v2257 = vpop.f32.mrf.mxu0
          %2258 = vmatprep.mubr.bf16.mxu0 %v1486
          %2259 = vmatmul.mubr.bf16.gmra.mxu0 %v1419
          %v2260 = vpop.f32.mrf.mxu0
          %v2261 = vadd.f32 %v2132, %v2260
          %v2262 = vpop.f32.mrf.mxu0
          %v2263 = vpop.f32.mrf.mxu0
          %v2264 = vadd.f32 %v2135, %v2263
          %v2265 = vpop.f32.mrf.mxu0
          %2266 = vdwg.mxu0
          %2267 = vmatprep.subr.bf16.mxu0 0
          %2268 = vmatpush1.bf16.msra.mxu0 %v1823
          %2269 = vmatprep.subr.bf16.mxu0 0
          %2270 = vmatpush1.bf16.msra.mxu0 %v1822
          %2271 = vmatprep.subr.bf16.mxu0 0
          %2272 = vmatpush1.bf16.msra.mxu0 %v1821
          %2273 = vmatprep.subr.bf16.mxu0 0
          %2274 = vmatpush1.bf16.msra.mxu0 %v1820
          %2275 = vmatprep.subr.bf16.mxu0 0
          %2276 = vmatpush1.bf16.msra.mxu0 %v1819
          %2277 = vmatprep.subr.bf16.mxu0 0
          %2278 = vmatpush1.bf16.msra.mxu0 %v1818
          %2279 = vmatprep.subr.bf16.mxu0 0
          %2280 = vmatpush1.bf16.msra.mxu0 %v1817
          %2281 = vmatprep.subr.bf16.mxu0 0
          %2282 = vmatpush1.bf16.msra.mxu0 %v1816
          %2283 = vmatprep.subr.bf16.mxu0 0
          %2284 = vmatpush2.bf16.msra.mxu0 0
          %2285 = vmatprep.subr.bf16.mxu0 0
          %2286 = vmatpush2.bf16.msra.mxu0 0
          %2287 = vmatprep.subr.bf16.mxu0 0
          %2288 = vmatpush2.bf16.msra.mxu0 0
          %2289 = vmatprep.subr.bf16.mxu0 0
          %2290 = vmatpush2.bf16.msra.mxu0 0
          %2291 = vmatprep.subr.bf16.mxu0 0
          %2292 = vmatpush2.bf16.msra.mxu0 0
          %2293 = vmatprep.subr.bf16.mxu0 0
          %2294 = vmatpush2.bf16.msra.mxu0 0
          %2295 = vmatprep.subr.bf16.mxu0 0
          %2296 = vmatpush2.bf16.msra.mxu0 0
          %2297 = vmatprep.subr.bf16.mxu0 0
          %2298 = vmatpush2.bf16.msra.mxu0 0
          %2299 = vmatprep.mubr.bf16.mxu0 0
          %2300 = vmatmul.mubr.bf16.gmra.mxu0 %v1502
          %v2301 = vpop.f32.mrf.mxu0
          %v2302 = vadd.f32 %v2173, %v2301
          %v2303 = vpop.f32.mrf.mxu0
          %v2304 = vpop.f32.mrf.mxu0
          %v2305 = vadd.f32 %v2176, %v2304
          %v2306 = vpop.f32.mrf.mxu0
          %2307 = vmatprep.mubr.bf16.mxu0 0
          %2308 = vmatmul.mubr.bf16.gmra.mxu0 %v1504
          %v2309 = vpop.f32.mrf.mxu0
          %v2310 = vadd.f32 %v2181, %v2309
          %v2311 = vpop.f32.mrf.mxu0
          %v2312 = vpop.f32.mrf.mxu0
          %v2313 = vadd.f32 %v2184, %v2312
          %v2314 = vpop.f32.mrf.mxu0
          %2315 = vmatprep.mubr.bf16.mxu0 0
          %2316 = vmatmul.mubr.bf16.gmra.mxu0 %v1506
          %v2317 = vpop.f32.mrf.mxu0
          %v2318 = vadd.f32 %v2189, %v2317
          %v2319 = vpop.f32.mrf.mxu0
          %v2320 = vpop.f32.mrf.mxu0
          %v2321 = vadd.f32 %v2192, %v2320
          %v2322 = vpop.f32.mrf.mxu0
          %2323 = vmatprep.mubr.bf16.mxu0 0
          %2324 = vmatmul.mubr.bf16.gmra.mxu0 %v1508
          %v2325 = vpop.f32.mrf.mxu0
          %v2326 = vadd.f32 %v2197, %v2325
          %v2327 = vpop.f32.mrf.mxu0
          %v2328 = vpop.f32.mrf.mxu0
          %v2329 = vadd.f32 %v2200, %v2328
          %v2330 = vpop.f32.mrf.mxu0
          %2331 = vmatprep.mubr.bf16.mxu0 0
          %2332 = vmatmul.mubr.bf16.gmra.mxu0 %v1510
          %v2333 = vpop.f32.mrf.mxu0
          %v2334 = vadd.f32 %v2205, %v2333
          %v2335 = vpop.f32.mrf.mxu0
          %v2336 = vpop.f32.mrf.mxu0
          %v2337 = vadd.f32 %v2208, %v2336
          %v2338 = vpop.f32.mrf.mxu0
          %2339 = vmatprep.mubr.bf16.mxu0 0
          %2340 = vmatmul.mubr.bf16.gmra.mxu0 %v1512
          %v2341 = vpop.f32.mrf.mxu0
          %v2342 = vadd.f32 %v2213, %v2341
          %v2343 = vpop.f32.mrf.mxu0
          %v2344 = vpop.f32.mrf.mxu0
          %v2345 = vadd.f32 %v2216, %v2344
          %v2346 = vpop.f32.mrf.mxu0
          %2347 = vmatprep.mubr.bf16.mxu0 0
          %2348 = vmatmul.mubr.bf16.gmra.mxu0 %v1515
          %v2349 = vpop.f32.mrf.mxu0
          %v2350 = vadd.f32 %v2221, %v2349
          %v2351 = vpop.f32.mrf.mxu0
          %v2352 = vpop.f32.mrf.mxu0
          %v2353 = vadd.f32 %v2224, %v2352
          %v2354 = vpop.f32.mrf.mxu0
          %2355 = vmatprep.mubr.bf16.mxu0 0
          %2356 = vmatmul.mubr.bf16.gmra.mxu0 %v1517
          %v2357 = vpop.f32.mrf.mxu0
          %v2358 = vadd.f32 %v2229, %v2357
          %v2359 = vpop.f32.mrf.mxu0
          %v2360 = vpop.f32.mrf.mxu0
          %v2361 = vadd.f32 %v2232, %v2360
          %v2362 = vpop.f32.mrf.mxu0
          %2363 = vmatprep.mubr.bf16.mxu0 0
          %2364 = vmatmul.mubr.bf16.gmra.mxu0 %v1519
          %v2365 = vpop.f32.mrf.mxu0
          %v2366 = vadd.f32 %v2237, %v2365
          %v2367 = vpop.f32.mrf.mxu0
          %v2368 = vpop.f32.mrf.mxu0
          %v2369 = vadd.f32 %v2240, %v2368
          %v2370 = vpop.f32.mrf.mxu0
          %2371 = vmatprep.mubr.bf16.mxu0 0
          %2372 = vmatmul.mubr.bf16.gmra.mxu0 %v1521
          %v2373 = vpop.f32.mrf.mxu0
          %v2374 = vadd.f32 %v2245, %v2373
          %v2375 = vpop.f32.mrf.mxu0
          %v2376 = vpop.f32.mrf.mxu0
          %v2377 = vadd.f32 %v2248, %v2376
          %v2378 = vpop.f32.mrf.mxu0
          %2379 = vmatprep.mubr.bf16.mxu0 0
          %2380 = vmatmul.mubr.bf16.gmra.mxu0 %v1523
          %v2381 = vpop.f32.mrf.mxu0
          %v2382 = vadd.f32 %v2253, %v2381
          %v2383 = vpop.f32.mrf.mxu0
          %v2384 = vpop.f32.mrf.mxu0
          %v2385 = vadd.f32 %v2256, %v2384
          %v2386 = vpop.f32.mrf.mxu0
          %2387 = vmatprep.mubr.bf16.mxu0 0
          %2388 = vmatmul.mubr.bf16.gmra.mxu0 %v1525
          %v2389 = vpop.f32.mrf.mxu0
          %v2390 = vadd.f32 %v2261, %v2389
          %v2391 = vpop.f32.mrf.mxu0
          %v2392 = vpop.f32.mrf.mxu0
          %v2393 = vadd.f32 %v2264, %v2392
          %v2394 = vpop.f32.mrf.mxu0
          %2395 = vdwg.mxu0
          %2396 = vst [vmem:[#allocation2 + $0x10] sm:$0xff] %v2302
          %2397 = vst [vmem:[#allocation2 + $0x18] sm:$0xff] %v2305
          %2398 = vst [vmem:[#allocation2 + $0x20] sm:$0xff] %v2310
          %2399 = vst [vmem:[#allocation2 + $0x28] sm:$0xff] %v2313
          %2400 = vst [vmem:[#allocation2 + $0x30] sm:$0xff] %v2318
          %2401 = vst [vmem:[#allocation2 + $0x38] sm:$0xff] %v2321
          %2402 = vst [vmem:[#allocation2 + $0x40] sm:$0xff] %v2326
          %2403 = vst [vmem:[#allocation2 + $0x48] sm:$0xff] %v2329
          %2404 = vst [vmem:[#allocation2 + $0x50] sm:$0xff] %v2334
          %2405 = vst [vmem:[#allocation2 + $0x58] sm:$0xff] %v2337
          %2406 = vst [vmem:[#allocation2 + $0x60] sm:$0xff] %v2342
          %2407 = vst [vmem:[#allocation2 + $0x68] sm:$0xff] %v2345
          %2408 = vst [vmem:[#allocation2 + $0x90] sm:$0xff] %v2350
          %2409 = vst [vmem:[#allocation2 + $0x98] sm:$0xff] %v2353
          %2410 = vst [vmem:[#allocation2 + $0xa0] sm:$0xff] %v2358
          %2411 = vst [vmem:[#allocation2 + $0xa8] sm:$0xff] %v2361
          %2412 = vst [vmem:[#allocation2 + $0xb0] sm:$0xff] %v2366
          %2413 = vst [vmem:[#allocation2 + $0xb8] sm:$0xff] %v2369
          %2414 = vst [vmem:[#allocation2 + $0xc0] sm:$0xff] %v2374
          %2415 = vst [vmem:[#allocation2 + $0xc8] sm:$0xff] %v2377
          %2416 = vst [vmem:[#allocation2 + $0xd0] sm:$0xff] %v2382
          %2417 = vst [vmem:[#allocation2 + $0xd8] sm:$0xff] %v2385
          %2418 = vst [vmem:[#allocation2 + $0xe0] sm:$0xff] %v2390
          %2419 = vst [vmem:[#allocation2 + $0xe8] sm:$0xff] %v2393
        $region116: #{net_forward.1} parent=71 // pred_fallthru
          _
        %v2420 = vld [vmem:[%s539] sm:$0xff]
        %v2421 = vld [vmem:[%s539 + $0x8] sm:$0xff]
        %v2422 = vld [vmem:[%s539 + $0x10] sm:$0xff]
        %v2423 = vld [vmem:[%s539 + $0x18] sm:$0xff]
        %v2424 = vld [vmem:[%s539 + $0x20] sm:$0xff]
        %v2425 = vld [vmem:[%s539 + $0x28] sm:$0xff]
        %v2426 = vld [vmem:[%s539 + $0x30] sm:$0xff]
        %v2427 = vld [vmem:[%s539 + $0x38] sm:$0xff]
        %v2428 = vld [vmem:[%s539 + $0x40] sm:$0xff]
        %v2429 = vld [vmem:[%s539 + $0x48] sm:$0xff]
        %v2430 = vld [vmem:[%s539 + $0x50] sm:$0xff]
        %v2431 = vld [vmem:[%s539 + $0x58] sm:$0xff]
        %v2432 = vld [vmem:[%s539 + $0x60] sm:$0xff]
        %v2433 = vld [vmem:[%s539 + $0x68] sm:$0xff]
        %v2434 = vld [vmem:[%s539 + $0x70] sm:$0xff]
        %v2435 = vld [vmem:[%s539 + $0x78] sm:$0xff]
        %v2436 = vld [vmem:[%s539 + $0x80] sm:$0xff]
        %v2437 = vld [vmem:[%s539 + $0x88] sm:$0xff]
        %v2438 = vld [vmem:[%s539 + $0x90] sm:$0xff]
        %v2439 = vld [vmem:[%s539 + $0x98] sm:$0xff]
        %v2440 = vld [vmem:[%s539 + $0xa0] sm:$0xff]
        %v2441 = vld [vmem:[%s539 + $0xa8] sm:$0xff]
        %v2442 = vld [vmem:[%s539 + $0xb0] sm:$0xff]
        %v2443 = vld [vmem:[%s539 + $0xb8] sm:$0xff]
        %v2444 = vld [vmem:[%s539 + $0xc0] sm:$0xff]
        %v2445 = vld [vmem:[%s539 + $0xc8] sm:$0xff]
        %v2446 = vld [vmem:[%s539 + $0xd0] sm:$0xff]
        %v2447 = vld [vmem:[%s539 + $0xd8] sm:$0xff]
        %v2448 = vld [vmem:[%s539 + $0xe0] sm:$0xff]
        %v2449 = vld [vmem:[%s539 + $0xe8] sm:$0xff]
        %v2450 = vld [vmem:[%s539 + $0xf0] sm:$0xff]
        %v2451 = vld [vmem:[%s539 + $0xf8] sm:$0xff]
        %v2452 = vld [vmem:[%s539 + $0x100] sm:$0xff]
        %v2453 = vld [vmem:[%s539 + $0x108] sm:$0xff]
        %v2454 = vld [vmem:[%s539 + $0x110] sm:$0xff]
        %v2455 = vld [vmem:[%s539 + $0x118] sm:$0xff]
        %v2456 = vld [vmem:[%s539 + $0x120] sm:$0xff]
        %v2457 = vld [vmem:[%s539 + $0x128] sm:$0xff]
        %v2458 = vld [vmem:[%s539 + $0x130] sm:$0xff]
        %v2459 = vld [vmem:[%s539 + $0x138] sm:$0xff]
        %v2460 = vld [vmem:[%s539 + $0x140] sm:$0xff]
        %v2461 = vld [vmem:[%s539 + $0x148] sm:$0xff]
        %v2462 = vld [vmem:[%s539 + $0x150] sm:$0xff]
        %v2463 = vld [vmem:[%s539 + $0x158] sm:$0xff]
        %v2464 = vld [vmem:[%s539 + $0x160] sm:$0xff]
        %v2465 = vld [vmem:[%s539 + $0x168] sm:$0xff]
        %v2466 = vld [vmem:[%s539 + $0x170] sm:$0xff]
        %v2467 = vld [vmem:[%s539 + $0x178] sm:$0xff]
        %v2468 = vld [vmem:[%s539 + $0x180] sm:$0xff]
        %v2469 = vld [vmem:[%s539 + $0x188] sm:$0xff]
        %v2470 = vld [vmem:[%s539 + $0x190] sm:$0xff]
        %v2471 = vld [vmem:[%s539 + $0x198] sm:$0xff]
        %v2472 = vld [vmem:[%s539 + $0x1a0] sm:$0xff]
        %v2473 = vld [vmem:[%s539 + $0x1a8] sm:$0xff]
        %v2474 = vld [vmem:[%s539 + $0x1b0] sm:$0xff]
        %v2475 = vld [vmem:[%s539 + $0x1b8] sm:$0xff]
        %v2476 = vld [vmem:[%s539 + $0x1c0] sm:$0xff]
        %v2477 = vld [vmem:[%s539 + $0x1c8] sm:$0xff]
        %v2478 = vld [vmem:[%s539 + $0x1d0] sm:$0xff]
        %v2479 = vld [vmem:[%s539 + $0x1d8] sm:$0xff]
        %v2480 = vld [vmem:[%s539 + $0x1e0] sm:$0xff]
        %v2481 = vld [vmem:[%s539 + $0x1e8] sm:$0xff]
        %v2482 = vld [vmem:[%s539 + $0x1f0] sm:$0xff]
        %v2483 = vld [vmem:[%s539 + $0x1f8] sm:$0xff]
        %v2484 = vld [vmem:[%s539 + $0x200] sm:$0xff]
        %v2485 = vld [vmem:[%s539 + $0x208] sm:$0xff]
        %v2486 = vld [vmem:[%s539 + $0x210] sm:$0xff]
        %v2487 = vld [vmem:[%s539 + $0x218] sm:$0xff]
        %v2488 = vld [vmem:[%s539 + $0x220] sm:$0xff]
        %v2489 = vld [vmem:[%s539 + $0x228] sm:$0xff]
        %v2490 = vld [vmem:[%s539 + $0x230] sm:$0xff]
        %v2491 = vld [vmem:[%s539 + $0x238] sm:$0xff]
        %v2492 = vld [vmem:[%s539 + $0x240] sm:$0xff]
        %v2493 = vld [vmem:[%s539 + $0x248] sm:$0xff]
        %v2494 = vld [vmem:[%s539 + $0x250] sm:$0xff]
        %v2495 = vld [vmem:[%s539 + $0x258] sm:$0xff]
        %v2496 = vld [vmem:[%s539 + $0x260] sm:$0xff]
        %v2497 = vld [vmem:[%s539 + $0x268] sm:$0xff]
        %v2498 = vld [vmem:[%s539 + $0x270] sm:$0xff]
        %v2499 = vld [vmem:[%s539 + $0x278] sm:$0xff]
        %v2500 = vld [vmem:[%s539 + $0x280] sm:$0xff]
        %v2501 = vld [vmem:[%s539 + $0x288] sm:$0xff]
        %v2502 = vld [vmem:[%s539 + $0x290] sm:$0xff]
        %v2503 = vld [vmem:[%s539 + $0x298] sm:$0xff]
        %v2504 = vld [vmem:[%s539 + $0x2a0] sm:$0xff]
        %v2505 = vld [vmem:[%s539 + $0x2a8] sm:$0xff]
        %v2506 = vld [vmem:[%s539 + $0x2b0] sm:$0xff]
        %v2507 = vld [vmem:[%s539 + $0x2b8] sm:$0xff]
        %v2508 = vld [vmem:[%s539 + $0x2c0] sm:$0xff]
        %v2509 = vld [vmem:[%s539 + $0x2c8] sm:$0xff]
        %v2510 = vld [vmem:[%s539 + $0x2d0] sm:$0xff]
        %v2511 = vld [vmem:[%s539 + $0x2d8] sm:$0xff]
        %v2512 = vld [vmem:[%s539 + $0x2e0] sm:$0xff]
        %v2513 = vld [vmem:[%s539 + $0x2e8] sm:$0xff]
        %v2514 = vld [vmem:[%s539 + $0x2f0] sm:$0xff]
        %v2515 = vld [vmem:[%s539 + $0x2f8] sm:$0xff]
        %v2516 = vld [vmem:[%s539 + $0x300] sm:$0xff]
        %v2517 = vld [vmem:[%s539 + $0x308] sm:$0xff]
        %v2518 = vld [vmem:[%s539 + $0x310] sm:$0xff]
        %v2519 = vld [vmem:[%s539 + $0x318] sm:$0xff]
        %v2520 = vld [vmem:[%s539 + $0x320] sm:$0xff]
        %v2521 = vld [vmem:[%s539 + $0x328] sm:$0xff]
        %v2522 = vld [vmem:[%s539 + $0x330] sm:$0xff]
        %v2523 = vld [vmem:[%s539 + $0x338] sm:$0xff]
        %v2524 = vld [vmem:[%s539 + $0x340] sm:$0xff]
        %v2525 = vld [vmem:[%s539 + $0x348] sm:$0xff]
        %v2526 = vld [vmem:[%s539 + $0x350] sm:$0xff]
        %v2527 = vld [vmem:[%s539 + $0x358] sm:$0xff]
        %v2528 = vld [vmem:[%s539 + $0x360] sm:$0xff]
        %v2529 = vld [vmem:[%s539 + $0x368] sm:$0xff]
        %v2530 = vld [vmem:[%s539 + $0x370] sm:$0xff]
        %v2531 = vld [vmem:[%s539 + $0x378] sm:$0xff]
        %v2532 = vld [vmem:[%s539 + $0x380] sm:$0xff]
        %v2533 = vld [vmem:[%s539 + $0x388] sm:$0xff]
        %v2534 = vld [vmem:[%s539 + $0x390] sm:$0xff]
        %v2535 = vld [vmem:[%s539 + $0x398] sm:$0xff]
        %v2536 = vld [vmem:[%s539 + $0x3a0] sm:$0xff]
        %v2537 = vld [vmem:[%s539 + $0x3a8] sm:$0xff]
        %v2538 = vld [vmem:[%s539 + $0x3b0] sm:$0xff]
        %v2539 = vld [vmem:[%s539 + $0x3b8] sm:$0xff]
        %v2540 = vld [vmem:[%s539 + $0x3c0] sm:$0xff]
        %v2541 = vld [vmem:[%s539 + $0x3c8] sm:$0xff]
        %v2542 = vld [vmem:[%s539 + $0x3d0] sm:$0xff]
        %v2543 = vld [vmem:[%s539 + $0x3d8] sm:$0xff]
        %v2544 = vld [vmem:[%s539 + $0x3e0] sm:$0xff]
        %v2545 = vld [vmem:[%s539 + $0x3e8] sm:$0xff]
        %v2546 = vld [vmem:[%s539 + $0x3f0] sm:$0xff]
        %v2547 = vld [vmem:[%s539 + $0x3f8] sm:$0xff]
        %v2548 = vld [vmem:[%s539 + $0x400] sm:$0xff]
        %v2549 = vld [vmem:[%s539 + $0x408] sm:$0xff]
        %v2550 = vld [vmem:[%s539 + $0x410] sm:$0xff]
        %v2551 = vld [vmem:[%s539 + $0x418] sm:$0xff]
        %v2552 = vld [vmem:[%s539 + $0x420] sm:$0xff]
        %v2553 = vld [vmem:[%s539 + $0x428] sm:$0xff]
        %v2554 = vld [vmem:[%s539 + $0x430] sm:$0xff]
        %v2555 = vld [vmem:[%s539 + $0x438] sm:$0xff]
        %v2556 = vld [vmem:[%s539 + $0x440] sm:$0xff]
        %v2557 = vld [vmem:[%s539 + $0x448] sm:$0xff]
        %v2558 = vld [vmem:[%s539 + $0x450] sm:$0xff]
        %v2559 = vld [vmem:[%s539 + $0x458] sm:$0xff]
        %v2560 = vld [vmem:[%s539 + $0x460] sm:$0xff]
        %v2561 = vld [vmem:[%s539 + $0x468] sm:$0xff]
        %v2562 = vld [vmem:[%s539 + $0x470] sm:$0xff]
        %v2563 = vld [vmem:[%s539 + $0x478] sm:$0xff]
        %v2564 = vld [vmem:[%s539 + $0x480] sm:$0xff]
        %v2565 = vld [vmem:[%s539 + $0x488] sm:$0xff]
        %v2566 = vld [vmem:[%s539 + $0x490] sm:$0xff]
        %v2567 = vld [vmem:[%s539 + $0x498] sm:$0xff]
        %v2568 = vld [vmem:[%s539 + $0x4a0] sm:$0xff]
        %v2569 = vld [vmem:[%s539 + $0x4a8] sm:$0xff]
        %v2570 = vld [vmem:[%s539 + $0x4b0] sm:$0xff]
        %v2571 = vld [vmem:[%s539 + $0x4b8] sm:$0xff]
        %v2572 = vld [vmem:[%s539 + $0x4c0] sm:$0xff]
        %v2573 = vld [vmem:[%s539 + $0x4c8] sm:$0xff]
        %v2574 = vld [vmem:[%s539 + $0x4d0] sm:$0xff]
        %v2575 = vld [vmem:[%s539 + $0x4d8] sm:$0xff]
        %v2576 = vld [vmem:[%s539 + $0x4e0] sm:$0xff]
        %v2577 = vld [vmem:[%s539 + $0x4e8] sm:$0xff]
        %v2578 = vld [vmem:[%s539 + $0x4f0] sm:$0xff]
        %v2579 = vld [vmem:[%s539 + $0x4f8] sm:$0xff]
        %v2580 = vld [vmem:[%s539 + $0x500] sm:$0xff]
        %v2581 = vld [vmem:[%s539 + $0x508] sm:$0xff]
        %v2582 = vld [vmem:[%s539 + $0x510] sm:$0xff]
        %v2583 = vld [vmem:[%s539 + $0x518] sm:$0xff]
        %v2584 = vld [vmem:[%s539 + $0x520] sm:$0xff]
        %v2585 = vld [vmem:[%s539 + $0x528] sm:$0xff]
        %v2586 = vld [vmem:[%s539 + $0x530] sm:$0xff]
        %v2587 = vld [vmem:[%s539 + $0x538] sm:$0xff]
        %v2588 = vld [vmem:[%s539 + $0x540] sm:$0xff]
        %v2589 = vld [vmem:[%s539 + $0x548] sm:$0xff]
        %v2590 = vld [vmem:[%s539 + $0x550] sm:$0xff]
        %v2591 = vld [vmem:[%s539 + $0x558] sm:$0xff]
        %v2592 = vld [vmem:[%s539 + $0x560] sm:$0xff]
        %v2593 = vld [vmem:[%s539 + $0x568] sm:$0xff]
        %v2594 = vld [vmem:[%s539 + $0x570] sm:$0xff]
        %v2595 = vld [vmem:[%s539 + $0x578] sm:$0xff]
        %v2596 = vld [vmem:[%s539 + $0x580] sm:$0xff]
        %v2597 = vld [vmem:[%s539 + $0x588] sm:$0xff]
        %v2598 = vld [vmem:[%s539 + $0x590] sm:$0xff]
        %v2599 = vld [vmem:[%s539 + $0x598] sm:$0xff]
        %v2600 = vld [vmem:[%s539 + $0x5a0] sm:$0xff]
        %v2601 = vld [vmem:[%s539 + $0x5a8] sm:$0xff]
        %v2602 = vld [vmem:[%s539 + $0x5b0] sm:$0xff]
        %v2603 = vld [vmem:[%s539 + $0x5b8] sm:$0xff]
        %v2604 = vld [vmem:[%s539 + $0x5c0] sm:$0xff]
        %v2605 = vld [vmem:[%s539 + $0x5c8] sm:$0xff]
        %v2606 = vld [vmem:[%s539 + $0x5d0] sm:$0xff]
        %v2607 = vld [vmem:[%s539 + $0x5d8] sm:$0xff]
        %v2608 = vld [vmem:[%s539 + $0x5e0] sm:$0xff]
        %v2609 = vld [vmem:[%s539 + $0x5e8] sm:$0xff]
        %v2610 = vld [vmem:[%s539 + $0x5f0] sm:$0xff]
        %v2611 = vld [vmem:[%s539 + $0x5f8] sm:$0xff]
        %v2612 = vld [vmem:[%s539 + $0x600] sm:$0xff]
        %v2613 = vld [vmem:[%s539 + $0x608] sm:$0xff]
        %v2614 = vld [vmem:[%s539 + $0x610] sm:$0xff]
        %v2615 = vld [vmem:[%s539 + $0x618] sm:$0xff]
        %v2616 = vld [vmem:[%s539 + $0x620] sm:$0xff]
        %v2617 = vld [vmem:[%s539 + $0x628] sm:$0xff]
        %v2618 = vld [vmem:[%s539 + $0x630] sm:$0xff]
        %v2619 = vld [vmem:[%s539 + $0x638] sm:$0xff]
        %v2620 = vld [vmem:[%s539 + $0x640] sm:$0xff]
        %v2621 = vld [vmem:[%s539 + $0x648] sm:$0xff]
        %v2622 = vld [vmem:[%s539 + $0x650] sm:$0xff]
        %v2623 = vld [vmem:[%s539 + $0x658] sm:$0xff]
        %v2624 = vld [vmem:[%s539 + $0x660] sm:$0xff]
        %v2625 = vld [vmem:[%s539 + $0x668] sm:$0xff]
        %v2626 = vld [vmem:[%s539 + $0x670] sm:$0xff]
        %v2627 = vld [vmem:[%s539 + $0x678] sm:$0xff]
        %v2628 = vld [vmem:[%s539 + $0x680] sm:$0xff]
        %v2629 = vld [vmem:[%s539 + $0x688] sm:$0xff]
        %v2630 = vld [vmem:[%s539 + $0x690] sm:$0xff]
        %v2631 = vld [vmem:[%s539 + $0x698] sm:$0xff]
        %v2632 = vld [vmem:[%s539 + $0x6a0] sm:$0xff]
        %v2633 = vld [vmem:[%s539 + $0x6a8] sm:$0xff]
        %v2634 = vld [vmem:[%s539 + $0x6b0] sm:$0xff]
        %v2635 = vld [vmem:[%s539 + $0x6b8] sm:$0xff]
        %v2636 = vld [vmem:[%s539 + $0x6c0] sm:$0xff]
        %v2637 = vld [vmem:[%s539 + $0x6c8] sm:$0xff]
        %v2638 = vld [vmem:[%s539 + $0x6d0] sm:$0xff]
        %v2639 = vld [vmem:[%s539 + $0x6d8] sm:$0xff]
        %v2640 = vld [vmem:[%s539 + $0x6e0] sm:$0xff]
        %v2641 = vld [vmem:[%s539 + $0x6e8] sm:$0xff]
        %v2642 = vld [vmem:[%s539 + $0x6f0] sm:$0xff]
        %v2643 = vld [vmem:[%s539 + $0x6f8] sm:$0xff]
        %v2644 = vld [vmem:[%s539 + $0x700] sm:$0xff]
        %v2645 = vld [vmem:[%s539 + $0x708] sm:$0xff]
        %v2646 = vld [vmem:[%s539 + $0x710] sm:$0xff]
        %v2647 = vld [vmem:[%s539 + $0x718] sm:$0xff]
        %v2648 = vld [vmem:[%s539 + $0x720] sm:$0xff]
        %v2649 = vld [vmem:[%s539 + $0x728] sm:$0xff]
        %v2650 = vld [vmem:[%s539 + $0x730] sm:$0xff]
        %v2651 = vld [vmem:[%s539 + $0x738] sm:$0xff]
        %v2652 = vld [vmem:[%s539 + $0x740] sm:$0xff]
        %v2653 = vld [vmem:[%s539 + $0x748] sm:$0xff]
        %v2654 = vld [vmem:[%s539 + $0x750] sm:$0xff]
        %v2655 = vld [vmem:[%s539 + $0x758] sm:$0xff]
        %v2656 = vld [vmem:[%s539 + $0x760] sm:$0xff]
        %v2657 = vld [vmem:[%s539 + $0x768] sm:$0xff]
        %v2658 = vld [vmem:[%s539 + $0x770] sm:$0xff]
        %v2659 = vld [vmem:[%s539 + $0x778] sm:$0xff]
        %v2660 = vld [vmem:[%s539 + $0x780] sm:$0xff]
        %v2661 = vld [vmem:[%s539 + $0x788] sm:$0xff]
        %v2662 = vld [vmem:[%s539 + $0x790] sm:$0xff]
        %v2663 = vld [vmem:[%s539 + $0x798] sm:$0xff]
        %v2664 = vld [vmem:[%s539 + $0x7a0] sm:$0xff]
        %v2665 = vld [vmem:[%s539 + $0x7a8] sm:$0xff]
        %v2666 = vld [vmem:[%s539 + $0x7b0] sm:$0xff]
        %v2667 = vld [vmem:[%s539 + $0x7b8] sm:$0xff]
        %v2668 = vld [vmem:[%s539 + $0x7c0] sm:$0xff]
        %v2669 = vld [vmem:[%s539 + $0x7c8] sm:$0xff]
        %v2670 = vld [vmem:[%s539 + $0x7d0] sm:$0xff]
        %v2671 = vld [vmem:[%s539 + $0x7d8] sm:$0xff]
        %v2672 = vld [vmem:[%s539 + $0x7e0] sm:$0xff]
        %v2673 = vld [vmem:[%s539 + $0x7e8] sm:$0xff]
        %v2674 = vld [vmem:[%s539 + $0x7f0] sm:$0xff]
        %v2675 = vld [vmem:[%s539 + $0x7f8] sm:$0xff]
        %v2676 = vld [vmem:[%s539 + $0x800] sm:$0xff]
        %v2677 = vld [vmem:[%s539 + $0x808] sm:$0xff]
        %v2678 = vld [vmem:[%s539 + $0x810] sm:$0xff]
        %v2679 = vld [vmem:[%s539 + $0x818] sm:$0xff]
        %v2680 = vld [vmem:[%s539 + $0x820] sm:$0xff]
        %v2681 = vld [vmem:[%s539 + $0x828] sm:$0xff]
        %v2682 = vld [vmem:[%s539 + $0x830] sm:$0xff]
        %v2683 = vld [vmem:[%s539 + $0x838] sm:$0xff]
        %v2684 = vld [vmem:[%s539 + $0x840] sm:$0xff]
        %v2685 = vld [vmem:[%s539 + $0x848] sm:$0xff]
        %v2686 = vld [vmem:[%s539 + $0x850] sm:$0xff]
        %v2687 = vld [vmem:[%s539 + $0x858] sm:$0xff]
        %v2688 = vld [vmem:[%s539 + $0x860] sm:$0xff]
        %v2689 = vld [vmem:[%s539 + $0x868] sm:$0xff]
        %v2690 = vld [vmem:[%s539 + $0x870] sm:$0xff]
        %v2691 = vld [vmem:[%s539 + $0x878] sm:$0xff]
        %v2692 = vld [vmem:[%s548] ss:$8 sm:$0x3]
        %s2693 = scalar_lea.vmem %s548, 1 [#allocation14]
        %v2694 = vld [vmem:[%s2693] ss:$8 sm:$0x3]
        %v2695 = vld [vmem:[%s557] sm:$0xf]
        %v2696 = vld [vmem:[%s557 + $0x4] sm:$0xf]
        %v2697 = vld [vmem:[%s557 + $0x8] sm:$0xf]
        %v2698 = vld [vmem:[%s557 + $0xc] sm:$0xf]
        %v2699 = vld [vmem:[%s557 + $0x10] sm:$0xf]
        %v2700 = vld [vmem:[%s557 + $0x14] sm:$0xf]
        %v2701 = vld [vmem:[%s557 + $0x18] sm:$0xf]
        %v2702 = vld [vmem:[%s557 + $0x1c] sm:$0xf]
        %v2703 = vld [vmem:[%s557 + $0x20] sm:$0xf]
        %v2704 = vld [vmem:[%s557 + $0x24] sm:$0xf]
        %v2705 = vld [vmem:[%s557 + $0x28] sm:$0xf]
        %v2706 = vld [vmem:[%s557 + $0x2c] sm:$0xf]
        %v2707 = vld [vmem:[%s557 + $0x30] sm:$0xf]
        %v2708 = vld [vmem:[%s557 + $0x34] sm:$0xf]
        %v2709 = vld [vmem:[%s557 + $0x38] sm:$0xf]
        %v2710 = vld [vmem:[%s557 + $0x3c] sm:$0xf]
        %v2711 = vld [vmem:[%s557 + $0x40] sm:$0xf]
        %v2712 = vld [vmem:[%s557 + $0x44] sm:$0xf]
        %v2713 = vld [vmem:[%s557 + $0x48] sm:$0xf]
        %v2714 = vld [vmem:[%s557 + $0x4c] sm:$0xf]
        %v2715 = vld [vmem:[%s557 + $0x50] sm:$0xf]
        %v2716 = vld [vmem:[%s557 + $0x54] sm:$0xf]
        %v2717 = vld [vmem:[%s557 + $0x58] sm:$0xf]
        %v2718 = vld [vmem:[%s557 + $0x5c] sm:$0xf]
        %v2719 = vld [vmem:[%s557 + $0x60] sm:$0xf]
        %v2720 = vld [vmem:[%s557 + $0x64] sm:$0xf]
        %v2721 = vld [vmem:[%s557 + $0x68] sm:$0xf]
        %v2722 = vld [vmem:[%s557 + $0x6c] sm:$0xf]
        %v2723 = vld [vmem:[%s557 + $0x70] sm:$0xf]
        %v2724 = vld [vmem:[%s557 + $0x74] sm:$0xf]
        %v2725 = vld [vmem:[%s557 + $0x78] sm:$0xf]
        %v2726 = vld [vmem:[%s557 + $0x7c] sm:$0xf]
        %v2727 = vld [vmem:[%s557 + $0x80] sm:$0xf]
        %v2728 = vld [vmem:[%s557 + $0x84] sm:$0xf]
        %v2729 = vld [vmem:[%s557 + $0x88] sm:$0xf]
        %v2730 = vld [vmem:[%s557 + $0x8c] sm:$0xf]
        %v2731 = vld [vmem:[%s557 + $0x90] sm:$0xf]
        %v2732 = vld [vmem:[%s557 + $0x94] sm:$0xf]
        %v2733 = vld [vmem:[%s557 + $0x98] sm:$0xf]
        %v2734 = vld [vmem:[%s557 + $0x9c] sm:$0xf]
        %v2735 = vld [vmem:[%s557 + $0xa0] sm:$0xf]
        %v2736 = vld [vmem:[%s557 + $0xa4] sm:$0xf]
        %v2737 = vld [vmem:[%s557 + $0xa8] sm:$0xf]
        %v2738 = vld [vmem:[%s557 + $0xac] sm:$0xf]
        %v2739 = vld [vmem:[%s557 + $0xb0] sm:$0xf]
        %v2740 = vld [vmem:[%s557 + $0xb4] sm:$0xf]
        %v2741 = vld [vmem:[%s557 + $0xb8] sm:$0xf]
        %v2742 = vld [vmem:[%s557 + $0xbc] sm:$0xf]
        %v2743 = vld [vmem:[%s557 + $0xc0] sm:$0xf]
        %v2744 = vld [vmem:[%s557 + $0xc4] sm:$0xf]
        %v2745 = vld [vmem:[%s557 + $0xc8] sm:$0xf]
        %v2746 = vld [vmem:[%s557 + $0xcc] sm:$0xf]
        %v2747 = vld [vmem:[%s557 + $0xd0] sm:$0xf]
        %v2748 = vld [vmem:[%s557 + $0xd4] sm:$0xf]
        %v2749 = vld [vmem:[%s557 + $0xd8] sm:$0xf]
        %v2750 = vld [vmem:[%s557 + $0xdc] sm:$0xf]
        %v2751 = vld [vmem:[%s557 + $0xe0] sm:$0xf]
        %v2752 = vld [vmem:[%s557 + $0xe4] sm:$0xf]
        %v2753 = vld [vmem:[%s557 + $0xe8] sm:$0xf]
        %v2754 = vld [vmem:[%s557 + $0xec] sm:$0xf]
        %v2755 = vld [vmem:[%s557 + $0xf0] sm:$0xf]
        %v2756 = vld [vmem:[%s557 + $0xf4] sm:$0xf]
        %v2757 = vld [vmem:[%s557 + $0xf8] sm:$0xf]
        %v2758 = vld [vmem:[%s557 + $0xfc] sm:$0xf]
        %v2759 = vld [vmem:[%s557 + $0x100] sm:$0xf]
        %v2760 = vld [vmem:[%s557 + $0x104] sm:$0xf]
        %v2761 = vld [vmem:[%s557 + $0x108] sm:$0xf]
        %v2762 = vld [vmem:[%s557 + $0x10c] sm:$0xf]
        %v2763 = vld [vmem:[%s557 + $0x110] sm:$0xf]
        %v2764 = vld [vmem:[%s557 + $0x114] sm:$0xf]
        %v2765 = vld [vmem:[%s557 + $0x118] sm:$0xf]
        %v2766 = vld [vmem:[%s557 + $0x11c] sm:$0xf]
        %v2767 = vld [vmem:[%s557 + $0x120] sm:$0xf]
        %v2768 = vld [vmem:[%s557 + $0x124] sm:$0xf]
        %v2769 = vld [vmem:[%s557 + $0x128] sm:$0xf]
        %v2770 = vld [vmem:[%s557 + $0x12c] sm:$0xf]
        %v2771 = vld [vmem:[%s557 + $0x130] sm:$0xf]
        %v2772 = vld [vmem:[%s557 + $0x134] sm:$0xf]
        %v2773 = vld [vmem:[%s557 + $0x138] sm:$0xf]
        %v2774 = vld [vmem:[%s557 + $0x13c] sm:$0xf]
        %v2775 = vld [vmem:[%s557 + $0x140] sm:$0xf]
        %v2776 = vld [vmem:[%s557 + $0x144] sm:$0xf]
        %v2777 = vld [vmem:[%s557 + $0x148] sm:$0xf]
        %v2778 = vld [vmem:[%s557 + $0x14c] sm:$0xf]
        %v2779 = vld [vmem:[%s557 + $0x150] sm:$0xf]
        %v2780 = vld [vmem:[%s557 + $0x154] sm:$0xf]
        %v2781 = vld [vmem:[%s557 + $0x158] sm:$0xf]
        %v2782 = vld [vmem:[%s557 + $0x15c] sm:$0xf]
        %v2783 = vld [vmem:[%s557 + $0x160] sm:$0xf]
        %v2784 = vld [vmem:[%s557 + $0x164] sm:$0xf]
        %v2785 = vld [vmem:[%s557 + $0x168] sm:$0xf]
        %v2786 = vld [vmem:[%s557 + $0x16c] sm:$0xf]
        %v2787 = vld [vmem:[%s557 + $0x170] sm:$0xf]
        %v2788 = vld [vmem:[%s557 + $0x174] sm:$0xf]
        %v2789 = vld [vmem:[%s557 + $0x178] sm:$0xf]
        %v2790 = vld [vmem:[%s557 + $0x17c] sm:$0xf]
        %v2791 = vld [vmem:[%s566] sm:$0x1]
        %v2792 = vld [vmem:[#allocation2 + $0xd] sm:$0xff]
        %v2793 = vld [vmem:[#allocation2 + $0x15] sm:$0xff]
        %v2794 = vld [vmem:[#allocation2 + $0x1d] sm:$0xff]
        %v2795 = vld [vmem:[#allocation2 + $0x25] sm:$0xff]
        %v2796 = vld [vmem:[#allocation2 + $0x2d] sm:$0xff]
        %v2797 = vld [vmem:[#allocation2 + $0x35] sm:$0xff]
        %v2798 = vld [vmem:[#allocation2 + $0x3d] sm:$0xff]
        %v2799 = vld [vmem:[#allocation2 + $0x45] sm:$0xff]
        %v2800 = vld [vmem:[#allocation2 + $0x4d] sm:$0xff]
        %v2801 = vld [vmem:[#allocation2 + $0x55] sm:$0xff]
        %v2802 = vld [vmem:[#allocation2 + $0x5d] sm:$0xff]
        %v2803 = vld [vmem:[#allocation2 + $0x65] sm:$0xff]
        %v2804 = vld [vmem:[#allocation2 + $0x6d] sm:$0x3f]
        %v2805 = vld [vmem:[#allocation2 + $0x8d] sm:$0xff]
        %v2806 = vld [vmem:[#allocation2 + $0x95] sm:$0xff]
        %v2807 = vld [vmem:[#allocation2 + $0x9d] sm:$0xff]
        %v2808 = vld [vmem:[#allocation2 + $0xa5] sm:$0xff]
        %v2809 = vld [vmem:[#allocation2 + $0xad] sm:$0xff]
        %v2810 = vld [vmem:[#allocation2 + $0xb5] sm:$0xff]
        %v2811 = vld [vmem:[#allocation2 + $0xbd] sm:$0xff]
        %v2812 = vld [vmem:[#allocation2 + $0xc5] sm:$0xff]
        %v2813 = vld [vmem:[#allocation2 + $0xcd] sm:$0xff]
        %v2814 = vld [vmem:[#allocation2 + $0xd5] sm:$0xff]
        %v2815 = vld [vmem:[#allocation2 + $0xdd] sm:$0xff]
        %v2816 = vld [vmem:[#allocation2 + $0xe5] sm:$0xff]
        %v2817 = vld [vmem:[#allocation2 + $0xed] sm:$0x3f]
        %v2818 = vpack.c.bf16 %v2793, %v2792
        %v2819 = vpack.c.bf16 %v2795, %v2794
        %v2820 = vpack.c.bf16 %v2797, %v2796
        %v2821 = vpack.c.bf16 %v2799, %v2798
        %v2822 = vpack.c.bf16 %v2801, %v2800
        %v2823 = vpack.c.bf16 %v2803, %v2802
        %v2824 = vpack.c.bf16 %v2804, %v2804
        %v2825 = vpack.c.bf16 %v2806, %v2805
        %v2826 = vpack.c.bf16 %v2808, %v2807
        %v2827 = vpack.c.bf16 %v2810, %v2809
        %v2828 = vpack.c.bf16 %v2812, %v2811
        %v2829 = vpack.c.bf16 %v2814, %v2813
        %v2830 = vpack.c.bf16 %v2816, %v2815
        %v2831 = vpack.c.bf16 %v2817, %v2817
        %vm2832 = vsmask.f32 7424
        %v2834 = vshrl.u32 %v2818, 16
        %v2836 = vshll.u32 %v2818, 16
        %v2838 = vrot.slane %v2836, 1
        %v2839 = vor.u32 %v2834, %v2838
        %v2841 = vshll.u32 %v2819, 16
        %v2843 = vrot.slane %v2841, 1
        %v2844 = vsel %vm2832, %v2839, %v2843
        %v2845 = vshrl.u32 %v2819, 16
        %v2847 = vor.u32 %v2845, %v2843
        %v2849 = vshll.u32 %v2820, 16
        %v2851 = vrot.slane %v2849, 1
        %v2852 = vsel %vm2832, %v2847, %v2851
        %v2853 = vshrl.u32 %v2820, 16
        %v2855 = vor.u32 %v2853, %v2851
        %v2857 = vshll.u32 %v2821, 16
        %v2859 = vrot.slane %v2857, 1
        %v2860 = vsel %vm2832, %v2855, %v2859
        %v2861 = vshrl.u32 %v2821, 16
        %v2863 = vor.u32 %v2861, %v2859
        %v2865 = vshll.u32 %v2822, 16
        %v2867 = vrot.slane %v2865, 1
        %v2868 = vsel %vm2832, %v2863, %v2867
        %v2869 = vshrl.u32 %v2822, 16
        %v2871 = vor.u32 %v2869, %v2867
        %v2873 = vshll.u32 %v2823, 16
        %v2875 = vrot.slane %v2873, 1
        %v2876 = vsel %vm2832, %v2871, %v2875
        %v2877 = vshrl.u32 %v2823, 16
        %v2879 = vor.u32 %v2877, %v2875
        %v2881 = vshll.u32 %v2824, 16
        %v2883 = vrot.slane %v2881, 1
        %v2884 = vsel %vm2832, %v2879, %v2883
        %v2886 = vshrl.u32 %v2825, 16
        %v2888 = vshll.u32 %v2825, 16
        %v2890 = vrot.slane %v2888, 1
        %v2891 = vor.u32 %v2886, %v2890
        %v2893 = vshll.u32 %v2826, 16
        %v2895 = vrot.slane %v2893, 1
        %v2896 = vsel %vm2832, %v2891, %v2895
        %v2897 = vshrl.u32 %v2826, 16
        %v2899 = vor.u32 %v2897, %v2895
        %v2901 = vshll.u32 %v2827, 16
        %v2903 = vrot.slane %v2901, 1
        %v2904 = vsel %vm2832, %v2899, %v2903
        %v2905 = vshrl.u32 %v2827, 16
        %v2907 = vor.u32 %v2905, %v2903
        %v2909 = vshll.u32 %v2828, 16
        %v2911 = vrot.slane %v2909, 1
        %v2912 = vsel %vm2832, %v2907, %v2911
        %v2913 = vshrl.u32 %v2828, 16
        %v2915 = vor.u32 %v2913, %v2911
        %v2917 = vshll.u32 %v2829, 16
        %v2919 = vrot.slane %v2917, 1
        %v2920 = vsel %vm2832, %v2915, %v2919
        %v2921 = vshrl.u32 %v2829, 16
        %v2923 = vor.u32 %v2921, %v2919
        %v2925 = vshll.u32 %v2830, 16
        %v2927 = vrot.slane %v2925, 1
        %v2928 = vsel %vm2832, %v2923, %v2927
        %v2929 = vshrl.u32 %v2830, 16
        %v2931 = vor.u32 %v2929, %v2927
        %v2933 = vshll.u32 %v2831, 16
        %v2935 = vrot.slane %v2933, 1
        %v2936 = vsel %vm2832, %v2931, %v2935
        %vm2963 = vcmask 1046528
        %v2964 = vrot.slane %v2818, 1
        %v2965 = vrot.slane %v2819, 1
        %v2966 = vsel %vm2963, %v2964, %v2965
        %v2967 = vrot.slane %v2820, 1
        %v2968 = vsel %vm2963, %v2965, %v2967
        %v2969 = vrot.slane %v2821, 1
        %v2970 = vsel %vm2963, %v2967, %v2969
        %v2971 = vrot.slane %v2822, 1
        %v2972 = vsel %vm2963, %v2969, %v2971
        %v2973 = vrot.slane %v2823, 1
        %v2974 = vsel %vm2963, %v2971, %v2973
        %v2975 = vrot.slane %v2824, 1
        %v2976 = vsel %vm2963, %v2973, %v2975
        %v2977 = vrot.slane %v2825, 1
        %v2978 = vrot.slane %v2826, 1
        %v2979 = vsel %vm2963, %v2977, %v2978
        %v2980 = vrot.slane %v2827, 1
        %v2981 = vsel %vm2963, %v2978, %v2980
        %v2982 = vrot.slane %v2828, 1
        %v2983 = vsel %vm2963, %v2980, %v2982
        %v2984 = vrot.slane %v2829, 1
        %v2985 = vsel %vm2963, %v2982, %v2984
        %v2986 = vrot.slane %v2830, 1
        %v2987 = vsel %vm2963, %v2984, %v2986
        %v2988 = vrot.slane %v2831, 1
        %v2989 = vsel %vm2963, %v2986, %v2988
        %vm3002 = vsmask.f32 6400
        %v3003 = vrot.slane %v2834, 1
        %v3004 = vrot.slane %v2836, 2
        %v3005 = vor.u32 %v3003, %v3004
        %v3006 = vrot.slane %v2845, 1
        %v3007 = vrot.slane %v2841, 2
        %v3008 = vor.u32 %v3006, %v3007
        %v3009 = vsel %vm3002, %v3005, %v3008
        %v3010 = vrot.slane %v2853, 1
        %v3011 = vrot.slane %v2849, 2
        %v3012 = vor.u32 %v3010, %v3011
        %v3013 = vsel %vm3002, %v3008, %v3012
        %v3014 = vrot.slane %v2861, 1
        %v3015 = vrot.slane %v2857, 2
        %v3016 = vor.u32 %v3014, %v3015
        %v3017 = vsel %vm3002, %v3012, %v3016
        %v3018 = vrot.slane %v2869, 1
        %v3019 = vrot.slane %v2865, 2
        %v3020 = vor.u32 %v3018, %v3019
        %v3021 = vsel %vm3002, %v3016, %v3020
        %v3022 = vrot.slane %v2877, 1
        %v3023 = vrot.slane %v2873, 2
        %v3024 = vor.u32 %v3022, %v3023
        %v3025 = vsel %vm3002, %v3020, %v3024
        %v3026 = vshrl.u32 %v2824, 16
        %v3028 = vrot.slane %v3026, 1
        %v3029 = vrot.slane %v2881, 2
        %v3030 = vor.u32 %v3028, %v3029
        %v3031 = vsel %vm3002, %v3024, %v3030
        %v3032 = vrot.slane %v2886, 1
        %v3033 = vrot.slane %v2888, 2
        %v3034 = vor.u32 %v3032, %v3033
        %v3035 = vrot.slane %v2897, 1
        %v3036 = vrot.slane %v2893, 2
        %v3037 = vor.u32 %v3035, %v3036
        %v3038 = vsel %vm3002, %v3034, %v3037
        %v3039 = vrot.slane %v2905, 1
        %v3040 = vrot.slane %v2901, 2
        %v3041 = vor.u32 %v3039, %v3040
        %v3042 = vsel %vm3002, %v3037, %v3041
        %v3043 = vrot.slane %v2913, 1
        %v3044 = vrot.slane %v2909, 2
        %v3045 = vor.u32 %v3043, %v3044
        %v3046 = vsel %vm3002, %v3041, %v3045
        %v3047 = vrot.slane %v2921, 1
        %v3048 = vrot.slane %v2917, 2
        %v3049 = vor.u32 %v3047, %v3048
        %v3050 = vsel %vm3002, %v3045, %v3049
        %v3051 = vrot.slane %v2929, 1
        %v3052 = vrot.slane %v2925, 2
        %v3053 = vor.u32 %v3051, %v3052
        %v3054 = vsel %vm3002, %v3049, %v3053
        %v3055 = vshrl.u32 %v2831, 16
        %v3057 = vrot.slane %v3055, 1
        %v3058 = vrot.slane %v2933, 2
        %v3059 = vor.u32 %v3057, %v3058
        %v3060 = vsel %vm3002, %v3053, %v3059
        %vm3073 = vcmask 1045504
        %v3074 = vrot.slane %v2818, 2
        %v3075 = vrot.slane %v2819, 2
        %v3076 = vsel %vm3073, %v3074, %v3075
        %v3077 = vrot.slane %v2820, 2
        %v3078 = vsel %vm3073, %v3075, %v3077
        %v3079 = vrot.slane %v2821, 2
        %v3080 = vsel %vm3073, %v3077, %v3079
        %v3081 = vrot.slane %v2822, 2
        %v3082 = vsel %vm3073, %v3079, %v3081
        %v3083 = vrot.slane %v2823, 2
        %v3084 = vsel %vm3073, %v3081, %v3083
        %v3085 = vrot.slane %v2824, 2
        %v3086 = vsel %vm3073, %v3083, %v3085
        %v3087 = vrot.slane %v2825, 2
        %v3088 = vrot.slane %v2826, 2
        %v3089 = vsel %vm3073, %v3087, %v3088
        %v3090 = vrot.slane %v2827, 2
        %v3091 = vsel %vm3073, %v3088, %v3090
        %v3092 = vrot.slane %v2828, 2
        %v3093 = vsel %vm3073, %v3090, %v3092
        %v3094 = vrot.slane %v2829, 2
        %v3095 = vsel %vm3073, %v3092, %v3094
        %v3096 = vrot.slane %v2830, 2
        %v3097 = vsel %vm3073, %v3094, %v3096
        %v3098 = vrot.slane %v2831, 2
        %v3099 = vsel %vm3073, %v3096, %v3098
        %vm3112 = vsmask.f32 5376
        %v3113 = vrot.slane %v2834, 2
        %v3114 = vrot.slane %v2836, 3
        %v3115 = vor.u32 %v3113, %v3114
        %v3116 = vrot.slane %v2845, 2
        %v3117 = vrot.slane %v2841, 3
        %v3118 = vor.u32 %v3116, %v3117
        %v3119 = vsel %vm3112, %v3115, %v3118
        %v3120 = vrot.slane %v2853, 2
        %v3121 = vrot.slane %v2849, 3
        %v3122 = vor.u32 %v3120, %v3121
        %v3123 = vsel %vm3112, %v3118, %v3122
        %v3124 = vrot.slane %v2861, 2
        %v3125 = vrot.slane %v2857, 3
        %v3126 = vor.u32 %v3124, %v3125
        %v3127 = vsel %vm3112, %v3122, %v3126
        %v3128 = vrot.slane %v2869, 2
        %v3129 = vrot.slane %v2865, 3
        %v3130 = vor.u32 %v3128, %v3129
        %v3131 = vsel %vm3112, %v3126, %v3130
        %v3132 = vrot.slane %v2877, 2
        %v3133 = vrot.slane %v2873, 3
        %v3134 = vor.u32 %v3132, %v3133
        %v3135 = vsel %vm3112, %v3130, %v3134
        %v3136 = vrot.slane %v3026, 2
        %v3137 = vrot.slane %v2881, 3
        %v3138 = vor.u32 %v3136, %v3137
        %v3139 = vsel %vm3112, %v3134, %v3138
        %v3140 = vrot.slane %v2886, 2
        %v3141 = vrot.slane %v2888, 3
        %v3142 = vor.u32 %v3140, %v3141
        %v3143 = vrot.slane %v2897, 2
        %v3144 = vrot.slane %v2893, 3
        %v3145 = vor.u32 %v3143, %v3144
        %v3146 = vsel %vm3112, %v3142, %v3145
        %v3147 = vrot.slane %v2905, 2
        %v3148 = vrot.slane %v2901, 3
        %v3149 = vor.u32 %v3147, %v3148
        %v3150 = vsel %vm3112, %v3145, %v3149
        %v3151 = vrot.slane %v2913, 2
        %v3152 = vrot.slane %v2909, 3
        %v3153 = vor.u32 %v3151, %v3152
        %v3154 = vsel %vm3112, %v3149, %v3153
        %v3155 = vrot.slane %v2921, 2
        %v3156 = vrot.slane %v2917, 3
        %v3157 = vor.u32 %v3155, %v3156
        %v3158 = vsel %vm3112, %v3153, %v3157
        %v3159 = vrot.slane %v2929, 2
        %v3160 = vrot.slane %v2925, 3
        %v3161 = vor.u32 %v3159, %v3160
        %v3162 = vsel %vm3112, %v3157, %v3161
        %v3163 = vrot.slane %v3055, 2
        %v3164 = vrot.slane %v2933, 3
        %v3165 = vor.u32 %v3163, %v3164
        %v3166 = vsel %vm3112, %v3161, %v3165
        %vm3179 = vcmask 1044480
        %v3180 = vrot.slane %v2818, 3
        %v3181 = vrot.slane %v2819, 3
        %v3182 = vsel %vm3179, %v3180, %v3181
        %v3183 = vrot.slane %v2820, 3
        %v3184 = vsel %vm3179, %v3181, %v3183
        %v3185 = vrot.slane %v2821, 3
        %v3186 = vsel %vm3179, %v3183, %v3185
        %v3187 = vrot.slane %v2822, 3
        %v3188 = vsel %vm3179, %v3185, %v3187
        %v3189 = vrot.slane %v2823, 3
        %v3190 = vsel %vm3179, %v3187, %v3189
        %v3191 = vrot.slane %v2824, 3
        %v3192 = vsel %vm3179, %v3189, %v3191
        %v3193 = vrot.slane %v2825, 3
        %v3194 = vrot.slane %v2826, 3
        %v3195 = vsel %vm3179, %v3193, %v3194
        %v3196 = vrot.slane %v2827, 3
        %v3197 = vsel %vm3179, %v3194, %v3196
        %v3198 = vrot.slane %v2828, 3
        %v3199 = vsel %vm3179, %v3196, %v3198
        %v3200 = vrot.slane %v2829, 3
        %v3201 = vsel %vm3179, %v3198, %v3200
        %v3202 = vrot.slane %v2830, 3
        %v3203 = vsel %vm3179, %v3200, %v3202
        %v3204 = vrot.slane %v2831, 3
        %v3205 = vsel %vm3179, %v3202, %v3204
        %v3219 = vlaneseq
        %v3220 = vshrl.u32 %v3219, 7
        %v3221 = vsub.s32 0, %v3220
        %v3222 = vrot.slane %v2692, %v3221
        %v3223 = vlaneseq
        %v3224 = vshrl.u32 %v3223, 7
        %v3225 = vsub.s32 1, %v3224
        %v3226 = vrot.slane %v2692, %v3225
        %v3341 = vunpack.c.l.b16 %v2420
        %v3342 = vunpack.c.h.b16 %v2420
        %v3343 = vunpack.c.l.b16 %v2421
        %v3344 = vunpack.c.h.b16 %v2421
        %v3345 = vunpack.c.l.b16 %v2422
        %v3346 = vunpack.c.h.b16 %v2422
        %v3347 = vunpack.c.l.b16 %v2423
        %v3348 = vunpack.c.h.b16 %v2423
        %v3349 = vunpack.c.l.b16 %v2424
        %v3350 = vunpack.c.h.b16 %v2424
        %v3351 = vunpack.c.l.b16 %v2425
        %v3352 = vunpack.c.h.b16 %v2425
        %v3353 = vunpack.c.l.b16 %v2426
        %v3354 = vunpack.c.h.b16 %v2426
        %v3355 = vunpack.c.l.b16 %v2427
        %v3356 = vunpack.c.h.b16 %v2427
        %v3357 = vunpack.c.l.b16 %v2428
        %v3358 = vunpack.c.h.b16 %v2428
        %v3359 = vunpack.c.l.b16 %v2429
        %v3360 = vunpack.c.h.b16 %v2429
        %v3361 = vunpack.c.l.b16 %v2430
        %v3362 = vunpack.c.h.b16 %v2430
        %v3363 = vunpack.c.l.b16 %v2431
        %v3364 = vunpack.c.h.b16 %v2431
        %v3365 = vunpack.c.l.b16 %v2432
        %v3366 = vunpack.c.h.b16 %v2432
        %v3367 = vunpack.c.l.b16 %v2433
        %v3368 = vunpack.c.h.b16 %v2433
        %v3369 = vunpack.c.l.b16 %v2434
        %v3370 = vunpack.c.h.b16 %v2434
        %v3371 = vunpack.c.l.b16 %v2435
        %v3372 = vunpack.c.h.b16 %v2435
        %v3373 = vunpack.c.l.b16 %v2436
        %v3374 = vunpack.c.h.b16 %v2436
        %v3375 = vunpack.c.l.b16 %v2437
        %v3376 = vunpack.c.h.b16 %v2437
        %v3377 = vunpack.c.l.b16 %v2438
        %v3378 = vunpack.c.h.b16 %v2438
        %v3379 = vunpack.c.l.b16 %v2439
        %v3380 = vunpack.c.h.b16 %v2439
        %v3381 = vunpack.c.l.b16 %v2440
        %v3382 = vunpack.c.h.b16 %v2440
        %v3383 = vunpack.c.l.b16 %v2441
        %v3384 = vunpack.c.h.b16 %v2441
        %v3385 = vunpack.c.l.b16 %v2442
        %v3386 = vunpack.c.h.b16 %v2442
        %v3387 = vunpack.c.l.b16 %v2443
        %v3388 = vunpack.c.h.b16 %v2443
        %v3389 = vunpack.c.l.b16 %v2444
        %v3390 = vunpack.c.h.b16 %v2444
        %v3391 = vunpack.c.l.b16 %v2445
        %v3392 = vunpack.c.h.b16 %v2445
        %v3393 = vunpack.c.l.b16 %v2446
        %v3394 = vunpack.c.h.b16 %v2446
        %v3395 = vunpack.c.l.b16 %v2447
        %v3396 = vunpack.c.h.b16 %v2447
        %v3397 = vunpack.c.l.b16 %v2448
        %v3398 = vunpack.c.h.b16 %v2448
        %v3399 = vunpack.c.l.b16 %v2449
        %v3400 = vunpack.c.h.b16 %v2449
        %v3401 = vunpack.c.l.b16 %v2450
        %v3402 = vunpack.c.h.b16 %v2450
        %v3403 = vunpack.c.l.b16 %v2451
        %v3404 = vunpack.c.h.b16 %v2451
        %v3405 = vunpack.c.l.b16 %v2452
        %v3406 = vunpack.c.h.b16 %v2452
        %v3407 = vunpack.c.l.b16 %v2453
        %v3408 = vunpack.c.h.b16 %v2453
        %v3409 = vunpack.c.l.b16 %v2454
        %v3410 = vunpack.c.h.b16 %v2454
        %v3411 = vunpack.c.l.b16 %v2455
        %v3412 = vunpack.c.h.b16 %v2455
        %v3413 = vunpack.c.l.b16 %v2456
        %v3414 = vunpack.c.h.b16 %v2456
        %v3415 = vunpack.c.l.b16 %v2457
        %v3416 = vunpack.c.h.b16 %v2457
        %v3417 = vunpack.c.l.b16 %v2458
        %v3418 = vunpack.c.h.b16 %v2458
        %v3419 = vunpack.c.l.b16 %v2459
        %v3420 = vunpack.c.h.b16 %v2459
        %v3421 = vunpack.c.l.b16 %v2460
        %v3422 = vunpack.c.h.b16 %v2460
        %v3423 = vunpack.c.l.b16 %v2461
        %v3424 = vunpack.c.h.b16 %v2461
        %v3425 = vunpack.c.l.b16 %v2462
        %v3426 = vunpack.c.h.b16 %v2462
        %v3427 = vunpack.c.l.b16 %v2463
        %v3428 = vunpack.c.h.b16 %v2463
        %v3429 = vunpack.c.l.b16 %v2464
        %v3430 = vunpack.c.h.b16 %v2464
        %v3431 = vunpack.c.l.b16 %v2465
        %v3432 = vunpack.c.h.b16 %v2465
        %v3433 = vunpack.c.l.b16 %v2466
        %v3434 = vunpack.c.h.b16 %v2466
        %v3435 = vunpack.c.l.b16 %v2467
        %v3436 = vunpack.c.h.b16 %v2467
        %v3437 = vunpack.c.l.b16 %v2468
        %v3438 = vunpack.c.h.b16 %v2468
        %v3439 = vunpack.c.l.b16 %v2469
        %v3440 = vunpack.c.h.b16 %v2469
        %v3441 = vunpack.c.l.b16 %v2470
        %v3442 = vunpack.c.h.b16 %v2470
        %v3443 = vunpack.c.l.b16 %v2471
        %v3444 = vunpack.c.h.b16 %v2471
        %v3445 = vunpack.c.l.b16 %v2472
        %v3446 = vunpack.c.h.b16 %v2472
        %v3447 = vunpack.c.l.b16 %v2473
        %v3448 = vunpack.c.h.b16 %v2473
        %v3449 = vunpack.c.l.b16 %v2474
        %v3450 = vunpack.c.h.b16 %v2474
        %v3451 = vunpack.c.l.b16 %v2475
        %v3452 = vunpack.c.h.b16 %v2475
        %v3453 = vunpack.c.l.b16 %v2476
        %v3454 = vunpack.c.h.b16 %v2476
        %v3455 = vunpack.c.l.b16 %v2477
        %v3456 = vunpack.c.h.b16 %v2477
        %v3457 = vunpack.c.l.b16 %v2478
        %v3458 = vunpack.c.h.b16 %v2478
        %v3459 = vunpack.c.l.b16 %v2479
        %v3460 = vunpack.c.h.b16 %v2479
        %v3461 = vunpack.c.l.b16 %v2480
        %v3462 = vunpack.c.h.b16 %v2480
        %v3463 = vunpack.c.l.b16 %v2481
        %v3464 = vunpack.c.h.b16 %v2481
        %v3465 = vunpack.c.l.b16 %v2482
        %v3466 = vunpack.c.h.b16 %v2482
        %v3467 = vunpack.c.l.b16 %v2483
        %v3468 = vunpack.c.h.b16 %v2483
        %v3469 = vunpack.c.l.b16 %v2484
        %v3470 = vunpack.c.h.b16 %v2484
        %v3471 = vunpack.c.l.b16 %v2485
        %v3472 = vunpack.c.h.b16 %v2485
        %v3473 = vunpack.c.l.b16 %v2486
        %v3474 = vunpack.c.h.b16 %v2486
        %v3475 = vunpack.c.l.b16 %v2487
        %v3476 = vunpack.c.h.b16 %v2487
        %v3477 = vunpack.c.l.b16 %v2488
        %v3478 = vunpack.c.h.b16 %v2488
        %v3479 = vunpack.c.l.b16 %v2489
        %v3480 = vunpack.c.h.b16 %v2489
        %v3481 = vunpack.c.l.b16 %v2490
        %v3482 = vunpack.c.h.b16 %v2490
        %v3483 = vunpack.c.l.b16 %v2491
        %v3484 = vunpack.c.h.b16 %v2491
        %v3485 = vunpack.c.l.b16 %v2492
        %v3486 = vunpack.c.h.b16 %v2492
        %v3487 = vunpack.c.l.b16 %v2493
        %v3488 = vunpack.c.h.b16 %v2493
        %v3489 = vunpack.c.l.b16 %v2494
        %v3490 = vunpack.c.h.b16 %v2494
        %v3491 = vunpack.c.l.b16 %v2495
        %v3492 = vunpack.c.h.b16 %v2495
        %v3493 = vunpack.c.l.b16 %v2496
        %v3494 = vunpack.c.h.b16 %v2496
        %v3495 = vunpack.c.l.b16 %v2497
        %v3496 = vunpack.c.h.b16 %v2497
        %v3497 = vunpack.c.l.b16 %v2498
        %v3498 = vunpack.c.h.b16 %v2498
        %v3499 = vunpack.c.l.b16 %v2499
        %v3500 = vunpack.c.h.b16 %v2499
        %v3501 = vunpack.c.l.b16 %v2500
        %v3502 = vunpack.c.h.b16 %v2500
        %v3503 = vunpack.c.l.b16 %v2501
        %v3504 = vunpack.c.h.b16 %v2501
        %v3505 = vunpack.c.l.b16 %v2502
        %v3506 = vunpack.c.h.b16 %v2502
        %v3507 = vunpack.c.l.b16 %v2503
        %v3508 = vunpack.c.h.b16 %v2503
        %v3509 = vunpack.c.l.b16 %v2504
        %v3510 = vunpack.c.h.b16 %v2504
        %v3511 = vunpack.c.l.b16 %v2505
        %v3512 = vunpack.c.h.b16 %v2505
        %v3513 = vunpack.c.l.b16 %v2506
        %v3514 = vunpack.c.h.b16 %v2506
        %v3515 = vunpack.c.l.b16 %v2507
        %v3516 = vunpack.c.h.b16 %v2507
        %v3517 = vunpack.c.l.b16 %v2508
        %v3518 = vunpack.c.h.b16 %v2508
        %v3519 = vunpack.c.l.b16 %v2509
        %v3520 = vunpack.c.h.b16 %v2509
        %v3521 = vunpack.c.l.b16 %v2510
        %v3522 = vunpack.c.h.b16 %v2510
        %v3523 = vunpack.c.l.b16 %v2511
        %v3524 = vunpack.c.h.b16 %v2511
        %v3525 = vunpack.c.l.b16 %v2512
        %v3526 = vunpack.c.h.b16 %v2512
        %v3527 = vunpack.c.l.b16 %v2513
        %v3528 = vunpack.c.h.b16 %v2513
        %v3529 = vunpack.c.l.b16 %v2514
        %v3530 = vunpack.c.h.b16 %v2514
        %v3531 = vunpack.c.l.b16 %v2515
        %v3532 = vunpack.c.h.b16 %v2515
        %v3533 = vunpack.c.l.b16 %v2516
        %v3534 = vunpack.c.h.b16 %v2516
        %v3535 = vunpack.c.l.b16 %v2517
        %v3536 = vunpack.c.h.b16 %v2517
        %v3537 = vunpack.c.l.b16 %v2518
        %v3538 = vunpack.c.h.b16 %v2518
        %v3539 = vunpack.c.l.b16 %v2519
        %v3540 = vunpack.c.h.b16 %v2519
        %v3541 = vunpack.c.l.b16 %v2520
        %v3542 = vunpack.c.h.b16 %v2520
        %v3543 = vunpack.c.l.b16 %v2521
        %v3544 = vunpack.c.h.b16 %v2521
        %v3545 = vunpack.c.l.b16 %v2522
        %v3546 = vunpack.c.h.b16 %v2522
        %v3547 = vunpack.c.l.b16 %v2523
        %v3548 = vunpack.c.h.b16 %v2523
        %v3549 = vunpack.c.l.b16 %v2524
        %v3550 = vunpack.c.h.b16 %v2524
        %v3551 = vunpack.c.l.b16 %v2525
        %v3552 = vunpack.c.h.b16 %v2525
        %v3553 = vunpack.c.l.b16 %v2526
        %v3554 = vunpack.c.h.b16 %v2526
        %v3555 = vunpack.c.l.b16 %v2527
        %v3556 = vunpack.c.h.b16 %v2527
        %v3557 = vunpack.c.l.b16 %v2528
        %v3558 = vunpack.c.h.b16 %v2528
        %v3559 = vunpack.c.l.b16 %v2529
        %v3560 = vunpack.c.h.b16 %v2529
        %v3561 = vunpack.c.l.b16 %v2530
        %v3562 = vunpack.c.h.b16 %v2530
        %v3563 = vunpack.c.l.b16 %v2531
        %v3564 = vunpack.c.h.b16 %v2531
        %v3565 = vpack.c.b16 %v3343, %v3341
        %v3566 = vpack.c.b16 %v3344, %v3342
        %v3567 = vpack.c.b16 %v3347, %v3345
        %v3568 = vpack.c.b16 %v3348, %v3346
        %v3569 = vpack.c.b16 %v3351, %v3349
        %v3570 = vpack.c.b16 %v3352, %v3350
        %v3571 = vpack.c.b16 %v3355, %v3353
        %v3572 = vpack.c.b16 %v3356, %v3354
        %v3573 = vpack.c.b16 %v3359, %v3357
        %v3574 = vpack.c.b16 %v3360, %v3358
        %v3575 = vpack.c.b16 %v3363, %v3361
        %v3576 = vpack.c.b16 %v3364, %v3362
        %v3577 = vpack.c.b16 %v3367, %v3365
        %v3578 = vpack.c.b16 %v3368, %v3366
        %v3579 = vpack.c.b16 %v3371, %v3369
        %v3580 = vpack.c.b16 %v3372, %v3370
        %v3581 = vpack.c.b16 %v3375, %v3373
        %v3582 = vpack.c.b16 %v3376, %v3374
        %v3583 = vpack.c.b16 %v3379, %v3377
        %v3584 = vpack.c.b16 %v3380, %v3378
        %v3585 = vpack.c.b16 %v3383, %v3381
        %v3586 = vpack.c.b16 %v3384, %v3382
        %v3587 = vpack.c.b16 %v3387, %v3385
        %v3588 = vpack.c.b16 %v3388, %v3386
        %v3589 = vpack.c.b16 %v3391, %v3389
        %v3590 = vpack.c.b16 %v3392, %v3390
        %v3591 = vpack.c.b16 %v3395, %v3393
        %v3592 = vpack.c.b16 %v3396, %v3394
        %v3593 = vpack.c.b16 %v3399, %v3397
        %v3594 = vpack.c.b16 %v3400, %v3398
        %v3595 = vpack.c.b16 %v3403, %v3401
        %v3596 = vpack.c.b16 %v3404, %v3402
        %v3597 = vpack.c.b16 %v3407, %v3405
        %v3598 = vpack.c.b16 %v3408, %v3406
        %v3599 = vpack.c.b16 %v3411, %v3409
        %v3600 = vpack.c.b16 %v3412, %v3410
        %v3601 = vpack.c.b16 %v3415, %v3413
        %v3602 = vpack.c.b16 %v3416, %v3414
        %v3603 = vpack.c.b16 %v3419, %v3417
        %v3604 = vpack.c.b16 %v3420, %v3418
        %v3605 = vpack.c.b16 %v3423, %v3421
        %v3606 = vpack.c.b16 %v3424, %v3422
        %v3607 = vpack.c.b16 %v3427, %v3425
        %v3608 = vpack.c.b16 %v3428, %v3426
        %v3609 = vpack.c.b16 %v3431, %v3429
        %v3610 = vpack.c.b16 %v3432, %v3430
        %v3611 = vpack.c.b16 %v3435, %v3433
        %v3612 = vpack.c.b16 %v3436, %v3434
        %v3613 = vpack.c.b16 %v3439, %v3437
        %v3614 = vpack.c.b16 %v3440, %v3438
        %v3615 = vpack.c.b16 %v3443, %v3441
        %v3616 = vpack.c.b16 %v3444, %v3442
        %v3617 = vpack.c.b16 %v3447, %v3445
        %v3618 = vpack.c.b16 %v3448, %v3446
        %v3619 = vpack.c.b16 %v3451, %v3449
        %v3620 = vpack.c.b16 %v3452, %v3450
        %v3621 = vpack.c.b16 %v3455, %v3453
        %v3622 = vpack.c.b16 %v3456, %v3454
        %v3623 = vpack.c.b16 %v3459, %v3457
        %v3624 = vpack.c.b16 %v3460, %v3458
        %v3625 = vpack.c.b16 %v3463, %v3461
        %v3626 = vpack.c.b16 %v3464, %v3462
        %v3627 = vpack.c.b16 %v3467, %v3465
        %v3628 = vpack.c.b16 %v3468, %v3466
        %v3629 = vpack.c.b16 %v3471, %v3469
        %v3630 = vpack.c.b16 %v3472, %v3470
        %v3631 = vpack.c.b16 %v3475, %v3473
        %v3632 = vpack.c.b16 %v3476, %v3474
        %v3633 = vpack.c.b16 %v3479, %v3477
        %v3634 = vpack.c.b16 %v3480, %v3478
        %v3635 = vpack.c.b16 %v3483, %v3481
        %v3636 = vpack.c.b16 %v3484, %v3482
        %v3637 = vpack.c.b16 %v3487, %v3485
        %v3638 = vpack.c.b16 %v3488, %v3486
        %v3639 = vpack.c.b16 %v3491, %v3489
        %v3640 = vpack.c.b16 %v3492, %v3490
        %v3641 = vpack.c.b16 %v3495, %v3493
        %v3642 = vpack.c.b16 %v3496, %v3494
        %v3643 = vpack.c.b16 %v3499, %v3497
        %v3644 = vpack.c.b16 %v3500, %v3498
        %v3645 = vpack.c.b16 %v3503, %v3501
        %v3646 = vpack.c.b16 %v3504, %v3502
        %v3647 = vpack.c.b16 %v3507, %v3505
        %v3648 = vpack.c.b16 %v3508, %v3506
        %v3649 = vpack.c.b16 %v3511, %v3509
        %v3650 = vpack.c.b16 %v3512, %v3510
        %v3651 = vpack.c.b16 %v3515, %v3513
        %v3652 = vpack.c.b16 %v3516, %v3514
        %v3653 = vpack.c.b16 %v3519, %v3517
        %v3654 = vpack.c.b16 %v3520, %v3518
        %v3655 = vpack.c.b16 %v3523, %v3521
        %v3656 = vpack.c.b16 %v3524, %v3522
        %v3657 = vpack.c.b16 %v3527, %v3525
        %v3658 = vpack.c.b16 %v3528, %v3526
        %v3659 = vpack.c.b16 %v3531, %v3529
        %v3660 = vpack.c.b16 %v3532, %v3530
        %v3661 = vpack.c.b16 %v3535, %v3533
        %v3662 = vpack.c.b16 %v3536, %v3534
        %v3663 = vpack.c.b16 %v3539, %v3537
        %v3664 = vpack.c.b16 %v3540, %v3538
        %v3665 = vpack.c.b16 %v3543, %v3541
        %v3666 = vpack.c.b16 %v3544, %v3542
        %v3667 = vpack.c.b16 %v3547, %v3545
        %v3668 = vpack.c.b16 %v3548, %v3546
        %v3669 = vpack.c.b16 %v3551, %v3549
        %v3670 = vpack.c.b16 %v3552, %v3550
        %v3671 = vpack.c.b16 %v3555, %v3553
        %v3672 = vpack.c.b16 %v3556, %v3554
        %v3673 = vpack.c.b16 %v3559, %v3557
        %v3674 = vpack.c.b16 %v3560, %v3558
        %v3675 = vpack.c.b16 %v3563, %v3561
        %v3676 = vpack.c.b16 %v3564, %v3562
        %3789 = vmatprep.subr.bf16.mxu0 %v3580
        %3790 = vmatpush1.bf16.msra.mxu0 %v3579
        %3791 = vmatprep.subr.bf16.mxu0 %v3578
        %3792 = vmatpush1.bf16.msra.mxu0 %v3577
        %3793 = vmatprep.subr.bf16.mxu0 %v3576
        %3794 = vmatpush1.bf16.msra.mxu0 %v3575
        %3795 = vmatprep.subr.bf16.mxu0 %v3574
        %3796 = vmatpush1.bf16.msra.mxu0 %v3573
        %3797 = vmatprep.subr.bf16.mxu0 %v3572
        %3798 = vmatpush1.bf16.msra.mxu0 %v3571
        %3799 = vmatprep.subr.bf16.mxu0 %v3570
        %3800 = vmatpush1.bf16.msra.mxu0 %v3569
        %3801 = vmatprep.subr.bf16.mxu0 %v3568
        %3802 = vmatpush1.bf16.msra.mxu0 %v3567
        %3803 = vmatprep.subr.bf16.mxu0 %v3566
        %3804 = vmatpush1.bf16.msra.mxu0 %v3565
        %3805 = vmatprep.subr.bf16.mxu0 %v3596
        %3806 = vmatpush2.bf16.msra.mxu0 %v3595
        %3807 = vmatprep.subr.bf16.mxu0 %v3594
        %3808 = vmatpush2.bf16.msra.mxu0 %v3593
        %3809 = vmatprep.subr.bf16.mxu0 %v3592
        %3810 = vmatpush2.bf16.msra.mxu0 %v3591
        %3811 = vmatprep.subr.bf16.mxu0 %v3590
        %3812 = vmatpush2.bf16.msra.mxu0 %v3589
        %3813 = vmatprep.subr.bf16.mxu0 %v3588
        %3814 = vmatpush2.bf16.msra.mxu0 %v3587
        %3815 = vmatprep.subr.bf16.mxu0 %v3586
        %3816 = vmatpush2.bf16.msra.mxu0 %v3585
        %3817 = vmatprep.subr.bf16.mxu0 %v3584
        %3818 = vmatpush2.bf16.msra.mxu0 %v3583
        %3819 = vmatprep.subr.bf16.mxu0 %v3582
        %3820 = vmatpush2.bf16.msra.mxu0 %v3581
        %3821 = vmatprep.mubr.bf16.mxu0 %v2844
        %3822 = vmatmul.mubr.bf16.gmra.mxu0 %v2818
        %v3823 = vpop.f32.mrf.mxu0
        %v3824 = vadd.f32 %v3222, %v3823
        %v3825 = vpop.f32.mrf.mxu0
        %v3826 = vadd.f32 %v3226, %v3825
        %v3827 = vpop.f32.mrf.mxu0
        %v3828 = vadd.f32 %v3222, %v3827
        %v3829 = vpop.f32.mrf.mxu0
        %v3830 = vadd.f32 %v3226, %v3829
        %3831 = vmatprep.mubr.bf16.mxu0 %v2852
        %3832 = vmatmul.mubr.bf16.gmra.mxu0 %v2819
        %v3833 = vpop.f32.mrf.mxu0
        %v3834 = vadd.f32 %v3222, %v3833
        %v3835 = vpop.f32.mrf.mxu0
        %v3836 = vadd.f32 %v3226, %v3835
        %v3837 = vpop.f32.mrf.mxu0
        %v3838 = vadd.f32 %v3222, %v3837
        %v3839 = vpop.f32.mrf.mxu0
        %v3840 = vadd.f32 %v3226, %v3839
        %3841 = vmatprep.mubr.bf16.mxu0 %v2860
        %3842 = vmatmul.mubr.bf16.gmra.mxu0 %v2820
        %v3843 = vpop.f32.mrf.mxu0
        %v3844 = vadd.f32 %v3222, %v3843
        %v3845 = vpop.f32.mrf.mxu0
        %v3846 = vadd.f32 %v3226, %v3845
        %v3847 = vpop.f32.mrf.mxu0
        %v3848 = vadd.f32 %v3222, %v3847
        %v3849 = vpop.f32.mrf.mxu0
        %v3850 = vadd.f32 %v3226, %v3849
        %3851 = vmatprep.mubr.bf16.mxu0 %v2868
        %3852 = vmatmul.mubr.bf16.gmra.mxu0 %v2821
        %v3853 = vpop.f32.mrf.mxu0
        %v3854 = vadd.f32 %v3222, %v3853
        %v3855 = vpop.f32.mrf.mxu0
        %v3856 = vadd.f32 %v3226, %v3855
        %v3857 = vpop.f32.mrf.mxu0
        %v3858 = vadd.f32 %v3222, %v3857
        %v3859 = vpop.f32.mrf.mxu0
        %v3860 = vadd.f32 %v3226, %v3859
        %3861 = vmatprep.mubr.bf16.mxu0 %v2876
        %3862 = vmatmul.mubr.bf16.gmra.mxu0 %v2822
        %v3863 = vpop.f32.mrf.mxu0
        %v3864 = vadd.f32 %v3222, %v3863
        %v3865 = vpop.f32.mrf.mxu0
        %v3866 = vadd.f32 %v3226, %v3865
        %v3867 = vpop.f32.mrf.mxu0
        %v3868 = vadd.f32 %v3222, %v3867
        %v3869 = vpop.f32.mrf.mxu0
        %v3870 = vadd.f32 %v3226, %v3869
        %3871 = vmatprep.mubr.bf16.mxu0 %v2884
        %3872 = vmatmul.mubr.bf16.gmra.mxu0 %v2823
        %v3873 = vpop.f32.mrf.mxu0
        %v3874 = vadd.f32 %v3222, %v3873
        %v3875 = vpop.f32.mrf.mxu0
        %v3876 = vadd.f32 %v3226, %v3875
        %v3877 = vpop.f32.mrf.mxu0
        %v3878 = vadd.f32 %v3222, %v3877
        %v3879 = vpop.f32.mrf.mxu0
        %v3880 = vadd.f32 %v3226, %v3879
        %3881 = vmatprep.mubr.bf16.mxu0 %v2896
        %3882 = vmatmul.mubr.bf16.gmra.mxu0 %v2825
        %v3883 = vpop.f32.mrf.mxu0
        %v3884 = vadd.f32 %v3222, %v3883
        %v3885 = vpop.f32.mrf.mxu0
        %v3886 = vadd.f32 %v3226, %v3885
        %v3887 = vpop.f32.mrf.mxu0
        %v3888 = vadd.f32 %v3222, %v3887
        %v3889 = vpop.f32.mrf.mxu0
        %v3890 = vadd.f32 %v3226, %v3889
        %3891 = vmatprep.mubr.bf16.mxu0 %v2904
        %3892 = vmatmul.mubr.bf16.gmra.mxu0 %v2826
        %v3893 = vpop.f32.mrf.mxu0
        %v3894 = vadd.f32 %v3222, %v3893
        %v3895 = vpop.f32.mrf.mxu0
        %v3896 = vadd.f32 %v3226, %v3895
        %v3897 = vpop.f32.mrf.mxu0
        %v3898 = vadd.f32 %v3222, %v3897
        %v3899 = vpop.f32.mrf.mxu0
        %v3900 = vadd.f32 %v3226, %v3899
        %3901 = vmatprep.mubr.bf16.mxu0 %v2912
        %3902 = vmatmul.mubr.bf16.gmra.mxu0 %v2827
        %v3903 = vpop.f32.mrf.mxu0
        %v3904 = vadd.f32 %v3222, %v3903
        %v3905 = vpop.f32.mrf.mxu0
        %v3906 = vadd.f32 %v3226, %v3905
        %v3907 = vpop.f32.mrf.mxu0
        %v3908 = vadd.f32 %v3222, %v3907
        %v3909 = vpop.f32.mrf.mxu0
        %v3910 = vadd.f32 %v3226, %v3909
        %3911 = vmatprep.mubr.bf16.mxu0 %v2920
        %3912 = vmatmul.mubr.bf16.gmra.mxu0 %v2828
        %v3913 = vpop.f32.mrf.mxu0
        %v3914 = vadd.f32 %v3222, %v3913
        %v3915 = vpop.f32.mrf.mxu0
        %v3916 = vadd.f32 %v3226, %v3915
        %v3917 = vpop.f32.mrf.mxu0
        %v3918 = vadd.f32 %v3222, %v3917
        %v3919 = vpop.f32.mrf.mxu0
        %v3920 = vadd.f32 %v3226, %v3919
        %3921 = vmatprep.mubr.bf16.mxu0 %v2928
        %3922 = vmatmul.mubr.bf16.gmra.mxu0 %v2829
        %v3923 = vpop.f32.mrf.mxu0
        %v3924 = vadd.f32 %v3222, %v3923
        %v3925 = vpop.f32.mrf.mxu0
        %v3926 = vadd.f32 %v3226, %v3925
        %v3927 = vpop.f32.mrf.mxu0
        %v3928 = vadd.f32 %v3222, %v3927
        %v3929 = vpop.f32.mrf.mxu0
        %v3930 = vadd.f32 %v3226, %v3929
        %3931 = vmatprep.mubr.bf16.mxu0 %v2936
        %3932 = vmatmul.mubr.bf16.gmra.mxu0 %v2830
        %v3933 = vpop.f32.mrf.mxu0
        %v3934 = vadd.f32 %v3222, %v3933
        %v3935 = vpop.f32.mrf.mxu0
        %v3936 = vadd.f32 %v3226, %v3935
        %v3937 = vpop.f32.mrf.mxu0
        %v3938 = vadd.f32 %v3222, %v3937
        %v3939 = vpop.f32.mrf.mxu0
        %v3940 = vadd.f32 %v3226, %v3939
        %3941 = vdwg.mxu0
        %3942 = vmatprep.subr.bf16.mxu0 %v3612
        %3943 = vmatpush1.bf16.msra.mxu0 %v3611
        %3944 = vmatprep.subr.bf16.mxu0 %v3610
        %3945 = vmatpush1.bf16.msra.mxu0 %v3609
        %3946 = vmatprep.subr.bf16.mxu0 %v3608
        %3947 = vmatpush1.bf16.msra.mxu0 %v3607
        %3948 = vmatprep.subr.bf16.mxu0 %v3606
        %3949 = vmatpush1.bf16.msra.mxu0 %v3605
        %3950 = vmatprep.subr.bf16.mxu0 %v3604
        %3951 = vmatpush1.bf16.msra.mxu0 %v3603
        %3952 = vmatprep.subr.bf16.mxu0 %v3602
        %3953 = vmatpush1.bf16.msra.mxu0 %v3601
        %3954 = vmatprep.subr.bf16.mxu0 %v3600
        %3955 = vmatpush1.bf16.msra.mxu0 %v3599
        %3956 = vmatprep.subr.bf16.mxu0 %v3598
        %3957 = vmatpush1.bf16.msra.mxu0 %v3597
        %3958 = vmatprep.subr.bf16.mxu0 %v3628
        %3959 = vmatpush2.bf16.msra.mxu0 %v3627
        %3960 = vmatprep.subr.bf16.mxu0 %v3626
        %3961 = vmatpush2.bf16.msra.mxu0 %v3625
        %3962 = vmatprep.subr.bf16.mxu0 %v3624
        %3963 = vmatpush2.bf16.msra.mxu0 %v3623
        %3964 = vmatprep.subr.bf16.mxu0 %v3622
        %3965 = vmatpush2.bf16.msra.mxu0 %v3621
        %3966 = vmatprep.subr.bf16.mxu0 %v3620
        %3967 = vmatpush2.bf16.msra.mxu0 %v3619
        %3968 = vmatprep.subr.bf16.mxu0 %v3618
        %3969 = vmatpush2.bf16.msra.mxu0 %v3617
        %3970 = vmatprep.subr.bf16.mxu0 %v3616
        %3971 = vmatpush2.bf16.msra.mxu0 %v3615
        %3972 = vmatprep.subr.bf16.mxu0 %v3614
        %3973 = vmatpush2.bf16.msra.mxu0 %v3613
        %3974 = vmatprep.mubr.bf16.mxu0 %v3009
        %3975 = vmatmul.mubr.bf16.gmra.mxu0 %v2966
        %v3976 = vpop.f32.mrf.mxu0
        %v3977 = vadd.f32 %v3824, %v3976
        %v3978 = vpop.f32.mrf.mxu0
        %v3979 = vadd.f32 %v3826, %v3978
        %v3980 = vpop.f32.mrf.mxu0
        %v3981 = vadd.f32 %v3828, %v3980
        %v3982 = vpop.f32.mrf.mxu0
        %v3983 = vadd.f32 %v3830, %v3982
        %3984 = vmatprep.mubr.bf16.mxu0 %v3013
        %3985 = vmatmul.mubr.bf16.gmra.mxu0 %v2968
        %v3986 = vpop.f32.mrf.mxu0
        %v3987 = vadd.f32 %v3834, %v3986
        %v3988 = vpop.f32.mrf.mxu0
        %v3989 = vadd.f32 %v3836, %v3988
        %v3990 = vpop.f32.mrf.mxu0
        %v3991 = vadd.f32 %v3838, %v3990
        %v3992 = vpop.f32.mrf.mxu0
        %v3993 = vadd.f32 %v3840, %v3992
        %3994 = vmatprep.mubr.bf16.mxu0 %v3017
        %3995 = vmatmul.mubr.bf16.gmra.mxu0 %v2970
        %v3996 = vpop.f32.mrf.mxu0
        %v3997 = vadd.f32 %v3844, %v3996
        %v3998 = vpop.f32.mrf.mxu0
        %v3999 = vadd.f32 %v3846, %v3998
        %v4000 = vpop.f32.mrf.mxu0
        %v4001 = vadd.f32 %v3848, %v4000
        %v4002 = vpop.f32.mrf.mxu0
        %v4003 = vadd.f32 %v3850, %v4002
        %4004 = vmatprep.mubr.bf16.mxu0 %v3021
        %4005 = vmatmul.mubr.bf16.gmra.mxu0 %v2972
        %v4006 = vpop.f32.mrf.mxu0
        %v4007 = vadd.f32 %v3854, %v4006
        %v4008 = vpop.f32.mrf.mxu0
        %v4009 = vadd.f32 %v3856, %v4008
        %v4010 = vpop.f32.mrf.mxu0
        %v4011 = vadd.f32 %v3858, %v4010
        %v4012 = vpop.f32.mrf.mxu0
        %v4013 = vadd.f32 %v3860, %v4012
        %4014 = vmatprep.mubr.bf16.mxu0 %v3025
        %4015 = vmatmul.mubr.bf16.gmra.mxu0 %v2974
        %v4016 = vpop.f32.mrf.mxu0
        %v4017 = vadd.f32 %v3864, %v4016
        %v4018 = vpop.f32.mrf.mxu0
        %v4019 = vadd.f32 %v3866, %v4018
        %v4020 = vpop.f32.mrf.mxu0
        %v4021 = vadd.f32 %v3868, %v4020
        %v4022 = vpop.f32.mrf.mxu0
        %v4023 = vadd.f32 %v3870, %v4022
        %4024 = vmatprep.mubr.bf16.mxu0 %v3031
        %4025 = vmatmul.mubr.bf16.gmra.mxu0 %v2976
        %v4026 = vpop.f32.mrf.mxu0
        %v4027 = vadd.f32 %v3874, %v4026
        %v4028 = vpop.f32.mrf.mxu0
        %v4029 = vadd.f32 %v3876, %v4028
        %v4030 = vpop.f32.mrf.mxu0
        %v4031 = vadd.f32 %v3878, %v4030
        %v4032 = vpop.f32.mrf.mxu0
        %v4033 = vadd.f32 %v3880, %v4032
        %4034 = vmatprep.mubr.bf16.mxu0 %v3038
        %4035 = vmatmul.mubr.bf16.gmra.mxu0 %v2979
        %v4036 = vpop.f32.mrf.mxu0
        %v4037 = vadd.f32 %v3884, %v4036
        %v4038 = vpop.f32.mrf.mxu0
        %v4039 = vadd.f32 %v3886, %v4038
        %v4040 = vpop.f32.mrf.mxu0
        %v4041 = vadd.f32 %v3888, %v4040
        %v4042 = vpop.f32.mrf.mxu0
        %v4043 = vadd.f32 %v3890, %v4042
        %4044 = vmatprep.mubr.bf16.mxu0 %v3042
        %4045 = vmatmul.mubr.bf16.gmra.mxu0 %v2981
        %v4046 = vpop.f32.mrf.mxu0
        %v4047 = vadd.f32 %v3894, %v4046
        %v4048 = vpop.f32.mrf.mxu0
        %v4049 = vadd.f32 %v3896, %v4048
        %v4050 = vpop.f32.mrf.mxu0
        %v4051 = vadd.f32 %v3898, %v4050
        %v4052 = vpop.f32.mrf.mxu0
        %v4053 = vadd.f32 %v3900, %v4052
        %4054 = vmatprep.mubr.bf16.mxu0 %v3046
        %4055 = vmatmul.mubr.bf16.gmra.mxu0 %v2983
        %v4056 = vpop.f32.mrf.mxu0
        %v4057 = vadd.f32 %v3904, %v4056
        %v4058 = vpop.f32.mrf.mxu0
        %v4059 = vadd.f32 %v3906, %v4058
        %v4060 = vpop.f32.mrf.mxu0
        %v4061 = vadd.f32 %v3908, %v4060
        %v4062 = vpop.f32.mrf.mxu0
        %v4063 = vadd.f32 %v3910, %v4062
        %4064 = vmatprep.mubr.bf16.mxu0 %v3050
        %4065 = vmatmul.mubr.bf16.gmra.mxu0 %v2985
        %v4066 = vpop.f32.mrf.mxu0
        %v4067 = vadd.f32 %v3914, %v4066
        %v4068 = vpop.f32.mrf.mxu0
        %v4069 = vadd.f32 %v3916, %v4068
        %v4070 = vpop.f32.mrf.mxu0
        %v4071 = vadd.f32 %v3918, %v4070
        %v4072 = vpop.f32.mrf.mxu0
        %v4073 = vadd.f32 %v3920, %v4072
        %4074 = vmatprep.mubr.bf16.mxu0 %v3054
        %4075 = vmatmul.mubr.bf16.gmra.mxu0 %v2987
        %v4076 = vpop.f32.mrf.mxu0
        %v4077 = vadd.f32 %v3924, %v4076
        %v4078 = vpop.f32.mrf.mxu0
        %v4079 = vadd.f32 %v3926, %v4078
        %v4080 = vpop.f32.mrf.mxu0
        %v4081 = vadd.f32 %v3928, %v4080
        %v4082 = vpop.f32.mrf.mxu0
        %v4083 = vadd.f32 %v3930, %v4082
        %4084 = vmatprep.mubr.bf16.mxu0 %v3060
        %4085 = vmatmul.mubr.bf16.gmra.mxu0 %v2989
        %v4086 = vpop.f32.mrf.mxu0
        %v4087 = vadd.f32 %v3934, %v4086
        %v4088 = vpop.f32.mrf.mxu0
        %v4089 = vadd.f32 %v3936, %v4088
        %v4090 = vpop.f32.mrf.mxu0
        %v4091 = vadd.f32 %v3938, %v4090
        %v4092 = vpop.f32.mrf.mxu0
        %v4093 = vadd.f32 %v3940, %v4092
        %4094 = vdwg.mxu0
        %4095 = vmatprep.subr.bf16.mxu0 %v3644
        %4096 = vmatpush1.bf16.msra.mxu0 %v3643
        %4097 = vmatprep.subr.bf16.mxu0 %v3642
        %4098 = vmatpush1.bf16.msra.mxu0 %v3641
        %4099 = vmatprep.subr.bf16.mxu0 %v3640
        %4100 = vmatpush1.bf16.msra.mxu0 %v3639
        %4101 = vmatprep.subr.bf16.mxu0 %v3638
        %4102 = vmatpush1.bf16.msra.mxu0 %v3637
        %4103 = vmatprep.subr.bf16.mxu0 %v3636
        %4104 = vmatpush1.bf16.msra.mxu0 %v3635
        %4105 = vmatprep.subr.bf16.mxu0 %v3634
        %4106 = vmatpush1.bf16.msra.mxu0 %v3633
        %4107 = vmatprep.subr.bf16.mxu0 %v3632
        %4108 = vmatpush1.bf16.msra.mxu0 %v3631
        %4109 = vmatprep.subr.bf16.mxu0 %v3630
        %4110 = vmatpush1.bf16.msra.mxu0 %v3629
        %4111 = vmatprep.subr.bf16.mxu0 %v3660
        %4112 = vmatpush2.bf16.msra.mxu0 %v3659
        %4113 = vmatprep.subr.bf16.mxu0 %v3658
        %4114 = vmatpush2.bf16.msra.mxu0 %v3657
        %4115 = vmatprep.subr.bf16.mxu0 %v3656
        %4116 = vmatpush2.bf16.msra.mxu0 %v3655
        %4117 = vmatprep.subr.bf16.mxu0 %v3654
        %4118 = vmatpush2.bf16.msra.mxu0 %v3653
        %4119 = vmatprep.subr.bf16.mxu0 %v3652
        %4120 = vmatpush2.bf16.msra.mxu0 %v3651
        %4121 = vmatprep.subr.bf16.mxu0 %v3650
        %4122 = vmatpush2.bf16.msra.mxu0 %v3649
        %4123 = vmatprep.subr.bf16.mxu0 %v3648
        %4124 = vmatpush2.bf16.msra.mxu0 %v3647
        %4125 = vmatprep.subr.bf16.mxu0 %v3646
        %4126 = vmatpush2.bf16.msra.mxu0 %v3645
        %4127 = vmatprep.mubr.bf16.mxu0 %v3119
        %4128 = vmatmul.mubr.bf16.gmra.mxu0 %v3076
        %v4129 = vpop.f32.mrf.mxu0
        %v4130 = vadd.f32 %v3977, %v4129
        %v4131 = vpop.f32.mrf.mxu0
        %v4132 = vadd.f32 %v3979, %v4131
        %v4133 = vpop.f32.mrf.mxu0
        %v4134 = vadd.f32 %v3981, %v4133
        %v4135 = vpop.f32.mrf.mxu0
        %v4136 = vadd.f32 %v3983, %v4135
        %4137 = vmatprep.mubr.bf16.mxu0 %v3123
        %4138 = vmatmul.mubr.bf16.gmra.mxu0 %v3078
        %v4139 = vpop.f32.mrf.mxu0
        %v4140 = vadd.f32 %v3987, %v4139
        %v4141 = vpop.f32.mrf.mxu0
        %v4142 = vadd.f32 %v3989, %v4141
        %v4143 = vpop.f32.mrf.mxu0
        %v4144 = vadd.f32 %v3991, %v4143
        %v4145 = vpop.f32.mrf.mxu0
        %v4146 = vadd.f32 %v3993, %v4145
        %4147 = vmatprep.mubr.bf16.mxu0 %v3127
        %4148 = vmatmul.mubr.bf16.gmra.mxu0 %v3080
        %v4149 = vpop.f32.mrf.mxu0
        %v4150 = vadd.f32 %v3997, %v4149
        %v4151 = vpop.f32.mrf.mxu0
        %v4152 = vadd.f32 %v3999, %v4151
        %v4153 = vpop.f32.mrf.mxu0
        %v4154 = vadd.f32 %v4001, %v4153
        %v4155 = vpop.f32.mrf.mxu0
        %v4156 = vadd.f32 %v4003, %v4155
        %4157 = vmatprep.mubr.bf16.mxu0 %v3131
        %4158 = vmatmul.mubr.bf16.gmra.mxu0 %v3082
        %v4159 = vpop.f32.mrf.mxu0
        %v4160 = vadd.f32 %v4007, %v4159
        %v4161 = vpop.f32.mrf.mxu0
        %v4162 = vadd.f32 %v4009, %v4161
        %v4163 = vpop.f32.mrf.mxu0
        %v4164 = vadd.f32 %v4011, %v4163
        %v4165 = vpop.f32.mrf.mxu0
        %v4166 = vadd.f32 %v4013, %v4165
        %4167 = vmatprep.mubr.bf16.mxu0 %v3135
        %4168 = vmatmul.mubr.bf16.gmra.mxu0 %v3084
        %v4169 = vpop.f32.mrf.mxu0
        %v4170 = vadd.f32 %v4017, %v4169
        %v4171 = vpop.f32.mrf.mxu0
        %v4172 = vadd.f32 %v4019, %v4171
        %v4173 = vpop.f32.mrf.mxu0
        %v4174 = vadd.f32 %v4021, %v4173
        %v4175 = vpop.f32.mrf.mxu0
        %v4176 = vadd.f32 %v4023, %v4175
        %4177 = vmatprep.mubr.bf16.mxu0 %v3139
        %4178 = vmatmul.mubr.bf16.gmra.mxu0 %v3086
        %v4179 = vpop.f32.mrf.mxu0
        %v4180 = vadd.f32 %v4027, %v4179
        %v4181 = vpop.f32.mrf.mxu0
        %v4182 = vadd.f32 %v4029, %v4181
        %v4183 = vpop.f32.mrf.mxu0
        %v4184 = vadd.f32 %v4031, %v4183
        %v4185 = vpop.f32.mrf.mxu0
        %v4186 = vadd.f32 %v4033, %v4185
        %4187 = vmatprep.mubr.bf16.mxu0 %v3146
        %4188 = vmatmul.mubr.bf16.gmra.mxu0 %v3089
        %v4189 = vpop.f32.mrf.mxu0
        %v4190 = vadd.f32 %v4037, %v4189
        %v4191 = vpop.f32.mrf.mxu0
        %v4192 = vadd.f32 %v4039, %v4191
        %v4193 = vpop.f32.mrf.mxu0
        %v4194 = vadd.f32 %v4041, %v4193
        %v4195 = vpop.f32.mrf.mxu0
        %v4196 = vadd.f32 %v4043, %v4195
        %4197 = vmatprep.mubr.bf16.mxu0 %v3150
        %4198 = vmatmul.mubr.bf16.gmra.mxu0 %v3091
        %v4199 = vpop.f32.mrf.mxu0
        %v4200 = vadd.f32 %v4047, %v4199
        %v4201 = vpop.f32.mrf.mxu0
        %v4202 = vadd.f32 %v4049, %v4201
        %v4203 = vpop.f32.mrf.mxu0
        %v4204 = vadd.f32 %v4051, %v4203
        %v4205 = vpop.f32.mrf.mxu0
        %v4206 = vadd.f32 %v4053, %v4205
        %4207 = vmatprep.mubr.bf16.mxu0 %v3154
        %4208 = vmatmul.mubr.bf16.gmra.mxu0 %v3093
        %v4209 = vpop.f32.mrf.mxu0
        %v4210 = vadd.f32 %v4057, %v4209
        %v4211 = vpop.f32.mrf.mxu0
        %v4212 = vadd.f32 %v4059, %v4211
        %v4213 = vpop.f32.mrf.mxu0
        %v4214 = vadd.f32 %v4061, %v4213
        %v4215 = vpop.f32.mrf.mxu0
        %v4216 = vadd.f32 %v4063, %v4215
        %4217 = vmatprep.mubr.bf16.mxu0 %v3158
        %4218 = vmatmul.mubr.bf16.gmra.mxu0 %v3095
        %v4219 = vpop.f32.mrf.mxu0
        %v4220 = vadd.f32 %v4067, %v4219
        %v4221 = vpop.f32.mrf.mxu0
        %v4222 = vadd.f32 %v4069, %v4221
        %v4223 = vpop.f32.mrf.mxu0
        %v4224 = vadd.f32 %v4071, %v4223
        %v4225 = vpop.f32.mrf.mxu0
        %v4226 = vadd.f32 %v4073, %v4225
        %4227 = vmatprep.mubr.bf16.mxu0 %v3162
        %4228 = vmatmul.mubr.bf16.gmra.mxu0 %v3097
        %v4229 = vpop.f32.mrf.mxu0
        %v4230 = vadd.f32 %v4077, %v4229
        %v4231 = vpop.f32.mrf.mxu0
        %v4232 = vadd.f32 %v4079, %v4231
        %v4233 = vpop.f32.mrf.mxu0
        %v4234 = vadd.f32 %v4081, %v4233
        %v4235 = vpop.f32.mrf.mxu0
        %v4236 = vadd.f32 %v4083, %v4235
        %4237 = vmatprep.mubr.bf16.mxu0 %v3166
        %4238 = vmatmul.mubr.bf16.gmra.mxu0 %v3099
        %v4239 = vpop.f32.mrf.mxu0
        %v4240 = vadd.f32 %v4087, %v4239
        %v4241 = vpop.f32.mrf.mxu0
        %v4242 = vadd.f32 %v4089, %v4241
        %v4243 = vpop.f32.mrf.mxu0
        %v4244 = vadd.f32 %v4091, %v4243
        %v4245 = vpop.f32.mrf.mxu0
        %v4246 = vadd.f32 %v4093, %v4245
        %4247 = vdwg.mxu0
        %4248 = vmatprep.subr.bf16.mxu0 %v3676
        %4249 = vmatpush1.bf16.msra.mxu0 %v3675
        %4250 = vmatprep.subr.bf16.mxu0 %v3674
        %4251 = vmatpush1.bf16.msra.mxu0 %v3673
        %4252 = vmatprep.subr.bf16.mxu0 %v3672
        %4253 = vmatpush1.bf16.msra.mxu0 %v3671
        %4254 = vmatprep.subr.bf16.mxu0 %v3670
        %4255 = vmatpush1.bf16.msra.mxu0 %v3669
        %4256 = vmatprep.subr.bf16.mxu0 %v3668
        %4257 = vmatpush1.bf16.msra.mxu0 %v3667
        %4258 = vmatprep.subr.bf16.mxu0 %v3666
        %4259 = vmatpush1.bf16.msra.mxu0 %v3665
        %4260 = vmatprep.subr.bf16.mxu0 %v3664
        %4261 = vmatpush1.bf16.msra.mxu0 %v3663
        %4262 = vmatprep.subr.bf16.mxu0 %v3662
        %4263 = vmatpush1.bf16.msra.mxu0 %v3661
        %4264 = vmatprep.subr.bf16.mxu0 0
        %4265 = vmatpush2.bf16.msra.mxu0 0
        %4266 = vmatprep.subr.bf16.mxu0 0
        %4267 = vmatpush2.bf16.msra.mxu0 0
        %4268 = vmatprep.subr.bf16.mxu0 0
        %4269 = vmatpush2.bf16.msra.mxu0 0
        %4270 = vmatprep.subr.bf16.mxu0 0
        %4271 = vmatpush2.bf16.msra.mxu0 0
        %4272 = vmatprep.subr.bf16.mxu0 0
        %4273 = vmatpush2.bf16.msra.mxu0 0
        %4274 = vmatprep.subr.bf16.mxu0 0
        %4275 = vmatpush2.bf16.msra.mxu0 0
        %4276 = vmatprep.subr.bf16.mxu0 0
        %4277 = vmatpush2.bf16.msra.mxu0 0
        %4278 = vmatprep.subr.bf16.mxu0 0
        %4279 = vmatpush2.bf16.msra.mxu0 0
        %4280 = vmatprep.mubr.bf16.mxu0 0
        %4281 = vmatmul.mubr.bf16.gmra.mxu0 %v3182
        %v4282 = vpop.f32.mrf.mxu0
        %v4283 = vadd.f32 %v4130, %v4282
        %v4284 = vpop.f32.mrf.mxu0
        %v4285 = vadd.f32 %v4132, %v4284
        %v4286 = vpop.f32.mrf.mxu0
        %v4287 = vadd.f32 %v4134, %v4286
        %v4288 = vpop.f32.mrf.mxu0
        %v4289 = vadd.f32 %v4136, %v4288
        %4290 = vmatprep.mubr.bf16.mxu0 0
        %4291 = vmatmul.mubr.bf16.gmra.mxu0 %v3184
        %v4292 = vpop.f32.mrf.mxu0
        %v4293 = vadd.f32 %v4140, %v4292
        %v4294 = vpop.f32.mrf.mxu0
        %v4295 = vadd.f32 %v4142, %v4294
        %v4296 = vpop.f32.mrf.mxu0
        %v4297 = vadd.f32 %v4144, %v4296
        %v4298 = vpop.f32.mrf.mxu0
        %v4299 = vadd.f32 %v4146, %v4298
        %4300 = vmatprep.mubr.bf16.mxu0 0
        %4301 = vmatmul.mubr.bf16.gmra.mxu0 %v3186
        %v4302 = vpop.f32.mrf.mxu0
        %v4303 = vadd.f32 %v4150, %v4302
        %v4304 = vpop.f32.mrf.mxu0
        %v4305 = vadd.f32 %v4152, %v4304
        %v4306 = vpop.f32.mrf.mxu0
        %v4307 = vadd.f32 %v4154, %v4306
        %v4308 = vpop.f32.mrf.mxu0
        %v4309 = vadd.f32 %v4156, %v4308
        %4310 = vmatprep.mubr.bf16.mxu0 0
        %4311 = vmatmul.mubr.bf16.gmra.mxu0 %v3188
        %v4312 = vpop.f32.mrf.mxu0
        %v4313 = vadd.f32 %v4160, %v4312
        %v4314 = vpop.f32.mrf.mxu0
        %v4315 = vadd.f32 %v4162, %v4314
        %v4316 = vpop.f32.mrf.mxu0
        %v4317 = vadd.f32 %v4164, %v4316
        %v4318 = vpop.f32.mrf.mxu0
        %v4319 = vadd.f32 %v4166, %v4318
        %4320 = vmatprep.mubr.bf16.mxu0 0
        %4321 = vmatmul.mubr.bf16.gmra.mxu0 %v3190
        %v4322 = vpop.f32.mrf.mxu0
        %v4323 = vadd.f32 %v4170, %v4322
        %v4324 = vpop.f32.mrf.mxu0
        %v4325 = vadd.f32 %v4172, %v4324
        %v4326 = vpop.f32.mrf.mxu0
        %v4327 = vadd.f32 %v4174, %v4326
        %v4328 = vpop.f32.mrf.mxu0
        %v4329 = vadd.f32 %v4176, %v4328
        %4330 = vmatprep.mubr.bf16.mxu0 0
        %4331 = vmatmul.mubr.bf16.gmra.mxu0 %v3192
        %v4332 = vpop.f32.mrf.mxu0
        %v4333 = vadd.f32 %v4180, %v4332
        %v4334 = vpop.f32.mrf.mxu0
        %v4335 = vadd.f32 %v4182, %v4334
        %v4336 = vpop.f32.mrf.mxu0
        %v4337 = vadd.f32 %v4184, %v4336
        %v4338 = vpop.f32.mrf.mxu0
        %v4339 = vadd.f32 %v4186, %v4338
        %4340 = vmatprep.mubr.bf16.mxu0 0
        %4341 = vmatmul.mubr.bf16.gmra.mxu0 %v3195
        %v4342 = vpop.f32.mrf.mxu0
        %v4343 = vadd.f32 %v4190, %v4342
        %v4344 = vpop.f32.mrf.mxu0
        %v4345 = vadd.f32 %v4192, %v4344
        %v4346 = vpop.f32.mrf.mxu0
        %v4347 = vadd.f32 %v4194, %v4346
        %v4348 = vpop.f32.mrf.mxu0
        %v4349 = vadd.f32 %v4196, %v4348
        %4350 = vmatprep.mubr.bf16.mxu0 0
        %4351 = vmatmul.mubr.bf16.gmra.mxu0 %v3197
        %v4352 = vpop.f32.mrf.mxu0
        %v4353 = vadd.f32 %v4200, %v4352
        %v4354 = vpop.f32.mrf.mxu0
        %v4355 = vadd.f32 %v4202, %v4354
        %v4356 = vpop.f32.mrf.mxu0
        %v4357 = vadd.f32 %v4204, %v4356
        %v4358 = vpop.f32.mrf.mxu0
        %v4359 = vadd.f32 %v4206, %v4358
        %4360 = vmatprep.mubr.bf16.mxu0 0
        %4361 = vmatmul.mubr.bf16.gmra.mxu0 %v3199
        %v4362 = vpop.f32.mrf.mxu0
        %v4363 = vadd.f32 %v4210, %v4362
        %v4364 = vpop.f32.mrf.mxu0
        %v4365 = vadd.f32 %v4212, %v4364
        %v4366 = vpop.f32.mrf.mxu0
        %v4367 = vadd.f32 %v4214, %v4366
        %v4368 = vpop.f32.mrf.mxu0
        %v4369 = vadd.f32 %v4216, %v4368
        %4370 = vmatprep.mubr.bf16.mxu0 0
        %4371 = vmatmul.mubr.bf16.gmra.mxu0 %v3201
        %v4372 = vpop.f32.mrf.mxu0
        %v4373 = vadd.f32 %v4220, %v4372
        %v4374 = vpop.f32.mrf.mxu0
        %v4375 = vadd.f32 %v4222, %v4374
        %v4376 = vpop.f32.mrf.mxu0
        %v4377 = vadd.f32 %v4224, %v4376
        %v4378 = vpop.f32.mrf.mxu0
        %v4379 = vadd.f32 %v4226, %v4378
        %4380 = vmatprep.mubr.bf16.mxu0 0
        %4381 = vmatmul.mubr.bf16.gmra.mxu0 %v3203
        %v4382 = vpop.f32.mrf.mxu0
        %v4383 = vadd.f32 %v4230, %v4382
        %v4384 = vpop.f32.mrf.mxu0
        %v4385 = vadd.f32 %v4232, %v4384
        %v4386 = vpop.f32.mrf.mxu0
        %v4387 = vadd.f32 %v4234, %v4386
        %v4388 = vpop.f32.mrf.mxu0
        %v4389 = vadd.f32 %v4236, %v4388
        %4390 = vmatprep.mubr.bf16.mxu0 0
        %4391 = vmatmul.mubr.bf16.gmra.mxu0 %v3205
        %v4392 = vpop.f32.mrf.mxu0
        %v4393 = vadd.f32 %v4240, %v4392
        %v4394 = vpop.f32.mrf.mxu0
        %v4395 = vadd.f32 %v4242, %v4394
        %v4396 = vpop.f32.mrf.mxu0
        %v4397 = vadd.f32 %v4244, %v4396
        %v4398 = vpop.f32.mrf.mxu0
        %v4399 = vadd.f32 %v4246, %v4398
        %4400 = vdwg.mxu0
        %v4401 = vmul.f32 %v4283, %v4283
        %v4402 = vmul.f32 %v4285, %v4285
        %v4403 = vmul.f32 %v4287, %v4287
        %v4404 = vmul.f32 %v4289, %v4289
        %v4405 = vmul.f32 %v4293, %v4293
        %v4406 = vmul.f32 %v4295, %v4295
        %v4407 = vmul.f32 %v4297, %v4297
        %v4408 = vmul.f32 %v4299, %v4299
        %v4409 = vmul.f32 %v4303, %v4303
        %v4410 = vmul.f32 %v4305, %v4305
        %v4411 = vmul.f32 %v4307, %v4307
        %v4412 = vmul.f32 %v4309, %v4309
        %v4413 = vmul.f32 %v4313, %v4313
        %v4414 = vmul.f32 %v4315, %v4315
        %v4415 = vmul.f32 %v4317, %v4317
        %v4416 = vmul.f32 %v4319, %v4319
        %v4417 = vmul.f32 %v4323, %v4323
        %v4418 = vmul.f32 %v4325, %v4325
        %v4419 = vmul.f32 %v4327, %v4327
        %v4420 = vmul.f32 %v4329, %v4329
        %v4421 = vmul.f32 %v4333, %v4333
        %v4422 = vmul.f32 %v4335, %v4335
        %v4423 = vmul.f32 %v4337, %v4337
        %v4424 = vmul.f32 %v4339, %v4339
        %v4425 = vmul.f32 %v4343, %v4343
        %v4426 = vmul.f32 %v4345, %v4345
        %v4427 = vmul.f32 %v4347, %v4347
        %v4428 = vmul.f32 %v4349, %v4349
        %v4429 = vmul.f32 %v4353, %v4353
        %v4430 = vmul.f32 %v4355, %v4355
        %v4431 = vmul.f32 %v4357, %v4357
        %v4432 = vmul.f32 %v4359, %v4359
        %v4433 = vmul.f32 %v4363, %v4363
        %v4434 = vmul.f32 %v4365, %v4365
        %v4435 = vmul.f32 %v4367, %v4367
        %v4436 = vmul.f32 %v4369, %v4369
        %v4437 = vmul.f32 %v4373, %v4373
        %v4438 = vmul.f32 %v4375, %v4375
        %v4439 = vmul.f32 %v4377, %v4377
        %v4440 = vmul.f32 %v4379, %v4379
        %v4441 = vmul.f32 %v4383, %v4383
        %v4442 = vmul.f32 %v4385, %v4385
        %v4443 = vmul.f32 %v4387, %v4387
        %v4444 = vmul.f32 %v4389, %v4389
        %v4445 = vmul.f32 %v4393, %v4393
        %v4446 = vmul.f32 %v4395, %v4395
        %v4447 = vmul.f32 %v4397, %v4397
        %v4448 = vmul.f32 %v4399, %v4399
        %vm4449 = vcmask 523264
        %v4451 = vsel %vm4449, 1.0, 0
        %4453 = vmatprep.subr.mxu0 %v4359
        %4454 = vmatpush1.msra.mxu0 %v4357
        %4455 = vmatprep.subr.mxu0 %v4355
        %4456 = vmatpush1.msra.mxu0 %v4353
        %4457 = vmatprep.subr.mxu0 %v4349
        %4458 = vmatpush1.msra.mxu0 %v4347
        %4459 = vmatprep.subr.mxu0 %v4345
        %4460 = vmatpush1.msra.mxu0 %v4343
        %4461 = vmatprep.subr.mxu0 %v4339
        %4462 = vmatpush1.msra.mxu0 %v4337
        %4463 = vmatprep.subr.mxu0 %v4335
        %4464 = vmatpush1.msra.mxu0 %v4333
        %4465 = vmatprep.subr.mxu0 %v4329
        %4466 = vmatpush1.msra.mxu0 %v4327
        %4467 = vmatprep.subr.mxu0 %v4325
        %4468 = vmatpush1.msra.mxu0 %v4323
        %4469 = vmatprep.subr.mxu0 %v4319
        %4470 = vmatpush1.msra.mxu0 %v4317
        %4471 = vmatprep.subr.mxu0 %v4315
        %4472 = vmatpush1.msra.mxu0 %v4313
        %4473 = vmatprep.subr.mxu0 %v4309
        %4474 = vmatpush1.msra.mxu0 %v4307
        %4475 = vmatprep.subr.mxu0 %v4305
        %4476 = vmatpush1.msra.mxu0 %v4303
        %4477 = vmatprep.subr.mxu0 %v4299
        %4478 = vmatpush1.msra.mxu0 %v4297
        %4479 = vmatprep.subr.mxu0 %v4295
        %4480 = vmatpush1.msra.mxu0 %v4293
        %4481 = vmatprep.subr.mxu0 %v4289
        %4482 = vmatpush1.msra.mxu0 %v4287
        %4483 = vmatprep.subr.mxu0 %v4285
        %4484 = vmatpush1.msra.mxu0 %v4283
        %4485 = vmatprep.subr.mxu0 0.0
        %4486 = vmatpush2.msra.mxu0 0.0
        %4487 = vmatprep.subr.mxu0 0.0
        %4488 = vmatpush2.msra.mxu0 0.0
        %4489 = vmatprep.subr.mxu0 0.0
        %4490 = vmatpush2.msra.mxu0 0.0
        %4491 = vmatprep.subr.mxu0 0.0
        %4492 = vmatpush2.msra.mxu0 0.0
        %4493 = vmatprep.subr.mxu0 0.0
        %4494 = vmatpush2.msra.mxu0 0.0
        %4495 = vmatprep.subr.mxu0 0.0
        %4496 = vmatpush2.msra.mxu0 0.0
        %4497 = vmatprep.subr.mxu0 0.0
        %4498 = vmatpush2.msra.mxu0 0.0
        %4499 = vmatprep.subr.mxu0 0.0
        %4500 = vmatpush2.msra.mxu0 0.0
        %4501 = vmatprep.subr.mxu0 %v4399
        %4502 = vmatpush2.msra.mxu0 %v4397
        %4503 = vmatprep.subr.mxu0 %v4395
        %4504 = vmatpush2.msra.mxu0 %v4393
        %4505 = vmatprep.subr.mxu0 %v4389
        %4506 = vmatpush2.msra.mxu0 %v4387
        %4507 = vmatprep.subr.mxu0 %v4385
        %4508 = vmatpush2.msra.mxu0 %v4383
        %4509 = vmatprep.subr.mxu0 %v4379
        %4510 = vmatpush2.msra.mxu0 %v4377
        %4511 = vmatprep.subr.mxu0 %v4375
        %4512 = vmatpush2.msra.mxu0 %v4373
        %4513 = vmatprep.subr.mxu0 %v4369
        %4514 = vmatpush2.msra.mxu0 %v4367
        %4515 = vmatprep.subr.mxu0 %v4365
        %4516 = vmatpush2.msra.mxu0 %v4363
        %4517 = vmatprep.mubr.f32.mxu0 %v4451
        %4518 = vmatmul.mubr.f32.gmra.mxu0 1.0
        %v4519 = vpop.f32.mrf.mxu0
        %v4520 = vadd.f32 0.0, %v4519
        %v4521 = vpop.f32.mrf.mxu0
        %v4522 = vadd.f32 0.0, %v4521
        %4523 = vdwg.mxu0
        %4524 = vmatprep.subr.mxu0 %v4432
        %4525 = vmatpush1.msra.mxu0 %v4431
        %4526 = vmatprep.subr.mxu0 %v4430
        %4527 = vmatpush1.msra.mxu0 %v4429
        %4528 = vmatprep.subr.mxu0 %v4428
        %4529 = vmatpush1.msra.mxu0 %v4427
        %4530 = vmatprep.subr.mxu0 %v4426
        %4531 = vmatpush1.msra.mxu0 %v4425
        %4532 = vmatprep.subr.mxu0 %v4424
        %4533 = vmatpush1.msra.mxu0 %v4423
        %4534 = vmatprep.subr.mxu0 %v4422
        %4535 = vmatpush1.msra.mxu0 %v4421
        %4536 = vmatprep.subr.mxu0 %v4420
        %4537 = vmatpush1.msra.mxu0 %v4419
        %4538 = vmatprep.subr.mxu0 %v4418
        %4539 = vmatpush1.msra.mxu0 %v4417
        %4540 = vmatprep.subr.mxu0 %v4416
        %4541 = vmatpush1.msra.mxu0 %v4415
        %4542 = vmatprep.subr.mxu0 %v4414
        %4543 = vmatpush1.msra.mxu0 %v4413
        %4544 = vmatprep.subr.mxu0 %v4412
        %4545 = vmatpush1.msra.mxu0 %v4411
        %4546 = vmatprep.subr.mxu0 %v4410
        %4547 = vmatpush1.msra.mxu0 %v4409
        %4548 = vmatprep.subr.mxu0 %v4408
        %4549 = vmatpush1.msra.mxu0 %v4407
        %4550 = vmatprep.subr.mxu0 %v4406
        %4551 = vmatpush1.msra.mxu0 %v4405
        %4552 = vmatprep.subr.mxu0 %v4404
        %4553 = vmatpush1.msra.mxu0 %v4403
        %4554 = vmatprep.subr.mxu0 %v4402
        %4555 = vmatpush1.msra.mxu0 %v4401
        %4556 = vmatprep.subr.mxu0 0.0
        %4557 = vmatpush2.msra.mxu0 0.0
        %4558 = vmatprep.subr.mxu0 0.0
        %4559 = vmatpush2.msra.mxu0 0.0
        %4560 = vmatprep.subr.mxu0 0.0
        %4561 = vmatpush2.msra.mxu0 0.0
        %4562 = vmatprep.subr.mxu0 0.0
        %4563 = vmatpush2.msra.mxu0 0.0
        %4564 = vmatprep.subr.mxu0 0.0
        %4565 = vmatpush2.msra.mxu0 0.0
        %4566 = vmatprep.subr.mxu0 0.0
        %4567 = vmatpush2.msra.mxu0 0.0
        %4568 = vmatprep.subr.mxu0 0.0
        %4569 = vmatpush2.msra.mxu0 0.0
        %4570 = vmatprep.subr.mxu0 0.0
        %4571 = vmatpush2.msra.mxu0 0.0
        %4572 = vmatprep.subr.mxu0 %v4448
        %4573 = vmatpush2.msra.mxu0 %v4447
        %4574 = vmatprep.subr.mxu0 %v4446
        %4575 = vmatpush2.msra.mxu0 %v4445
        %4576 = vmatprep.subr.mxu0 %v4444
        %4577 = vmatpush2.msra.mxu0 %v4443
        %4578 = vmatprep.subr.mxu0 %v4442
        %4579 = vmatpush2.msra.mxu0 %v4441
        %4580 = vmatprep.subr.mxu0 %v4440
        %4581 = vmatpush2.msra.mxu0 %v4439
        %4582 = vmatprep.subr.mxu0 %v4438
        %4583 = vmatpush2.msra.mxu0 %v4437
        %4584 = vmatprep.subr.mxu0 %v4436
        %4585 = vmatpush2.msra.mxu0 %v4435
        %4586 = vmatprep.subr.mxu0 %v4434
        %4587 = vmatpush2.msra.mxu0 %v4433
        %4588 = vmatprep.mubr.f32.mxu0 %v4451
        %4589 = vmatmul.mubr.f32.gmra.mxu0 1.0
        %v4590 = vpop.f32.mrf.mxu0
        %v4591 = vadd.f32 0.0, %v4590
        %v4592 = vpop.f32.mrf.mxu0
        %v4593 = vadd.f32 0.0, %v4592
        %4594 = vdwg.mxu0
        %v4595 = vmul.f32 %v4520, 0.0052083335
        %v4596 = vmul.f32 %v4522, 0.0052083335
        %v4597 = vmul.f32 %v4591, 0.0052083335
        %v4598 = vmul.f32 %v4593, 0.0052083335
        %v4599 = vmul.f32 %v4595, %v4595
        %v4600 = vmul.f32 %v4596, %v4596
        %v4601 = vsub.f32 %v4597, %v4599
        %v4602 = vsub.f32 %v4598, %v4600
        %v4603 = vmax.f32 %v4601, 0.0
        %v4604 = vmax.f32 %v4602, 0.0
        %v4605 = vlaneseq
        %v4606 = vshrl.u32 %v4605, 7
        %v4607 = vsub.s32 0, %v4606
        %v4608 = vrot.slane %v4595, %v4607
        %v4609 = vlaneseq
        %v4610 = vshrl.u32 %v4609, 7
        %v4611 = vsub.s32 0, %v4610
        %v4612 = vrot.slane %v4596, %v4611
        %v4613 = vsub.f32 %v4283, %v4608
        %v4614 = vsub.f32 %v4285, %v4612
        %v4615 = vsub.f32 %v4287, %v4608
        %v4616 = vsub.f32 %v4289, %v4612
        %v4617 = vsub.f32 %v4293, %v4608
        %v4618 = vsub.f32 %v4295, %v4612
        %v4619 = vsub.f32 %v4297, %v4608
        %v4620 = vsub.f32 %v4299, %v4612
        %v4621 = vsub.f32 %v4303, %v4608
        %v4622 = vsub.f32 %v4305, %v4612
        %v4623 = vsub.f32 %v4307, %v4608
        %v4624 = vsub.f32 %v4309, %v4612
        %v4625 = vsub.f32 %v4313, %v4608
        %v4626 = vsub.f32 %v4315, %v4612
        %v4627 = vsub.f32 %v4317, %v4608
        %v4628 = vsub.f32 %v4319, %v4612
        %v4629 = vsub.f32 %v4323, %v4608
        %v4630 = vsub.f32 %v4325, %v4612
        %v4631 = vsub.f32 %v4327, %v4608
        %v4632 = vsub.f32 %v4329, %v4612
        %v4633 = vsub.f32 %v4333, %v4608
        %v4634 = vsub.f32 %v4335, %v4612
        %v4635 = vsub.f32 %v4337, %v4608
        %v4636 = vsub.f32 %v4339, %v4612
        %v4637 = vsub.f32 %v4343, %v4608
        %v4638 = vsub.f32 %v4345, %v4612
        %v4639 = vsub.f32 %v4347, %v4608
        %v4640 = vsub.f32 %v4349, %v4612
        %v4641 = vsub.f32 %v4353, %v4608
        %v4642 = vsub.f32 %v4355, %v4612
        %v4643 = vsub.f32 %v4357, %v4608
        %v4644 = vsub.f32 %v4359, %v4612
        %v4645 = vsub.f32 %v4363, %v4608
        %v4646 = vsub.f32 %v4365, %v4612
        %v4647 = vsub.f32 %v4367, %v4608
        %v4648 = vsub.f32 %v4369, %v4612
        %v4649 = vsub.f32 %v4373, %v4608
        %v4650 = vsub.f32 %v4375, %v4612
        %v4651 = vsub.f32 %v4377, %v4608
        %v4652 = vsub.f32 %v4379, %v4612
        %v4653 = vsub.f32 %v4383, %v4608
        %v4654 = vsub.f32 %v4385, %v4612
        %v4655 = vsub.f32 %v4387, %v4608
        %v4656 = vsub.f32 %v4389, %v4612
        %v4657 = vsub.f32 %v4393, %v4608
        %v4658 = vsub.f32 %v4395, %v4612
        %v4659 = vsub.f32 %v4397, %v4608
        %v4660 = vsub.f32 %v4399, %v4612
        %v4661 = vadd.f32 %v4603, 1e-05
        %v4662 = vadd.f32 %v4604, 1e-05
        %v4663 = vrsqrt.pop %v4661
        %v4664 = vrsqrt.pop %v4662
        %v4665 = vlaneseq
        %v4666 = vshrl.u32 %v4665, 7
        %v4667 = vsub.s32 0, %v4666
        %v4668 = vrot.slane %v4663, %v4667
        %v4669 = vlaneseq
        %v4670 = vshrl.u32 %v4669, 7
        %v4671 = vsub.s32 0, %v4670
        %v4672 = vrot.slane %v4664, %v4671
        %v4673 = vmul.f32 %v4613, %v4668
        %v4674 = vmul.f32 %v4614, %v4672
        %v4675 = vmul.f32 %v4615, %v4668
        %v4676 = vmul.f32 %v4616, %v4672
        %v4677 = vmul.f32 %v4617, %v4668
        %v4678 = vmul.f32 %v4618, %v4672
        %v4679 = vmul.f32 %v4619, %v4668
        %v4680 = vmul.f32 %v4620, %v4672
        %v4681 = vmul.f32 %v4621, %v4668
        %v4682 = vmul.f32 %v4622, %v4672
        %v4683 = vmul.f32 %v4623, %v4668
        %v4684 = vmul.f32 %v4624, %v4672
        %v4685 = vmul.f32 %v4625, %v4668
        %v4686 = vmul.f32 %v4626, %v4672
        %v4687 = vmul.f32 %v4627, %v4668
        %v4688 = vmul.f32 %v4628, %v4672
        %v4689 = vmul.f32 %v4629, %v4668
        %v4690 = vmul.f32 %v4630, %v4672
        %v4691 = vmul.f32 %v4631, %v4668
        %v4692 = vmul.f32 %v4632, %v4672
        %v4693 = vmul.f32 %v4633, %v4668
        %v4694 = vmul.f32 %v4634, %v4672
        %v4695 = vmul.f32 %v4635, %v4668
        %v4696 = vmul.f32 %v4636, %v4672
        %v4697 = vmul.f32 %v4637, %v4668
        %v4698 = vmul.f32 %v4638, %v4672
        %v4699 = vmul.f32 %v4639, %v4668
        %v4700 = vmul.f32 %v4640, %v4672
        %v4701 = vmul.f32 %v4641, %v4668
        %v4702 = vmul.f32 %v4642, %v4672
        %v4703 = vmul.f32 %v4643, %v4668
        %v4704 = vmul.f32 %v4644, %v4672
        %v4705 = vmul.f32 %v4645, %v4668
        %v4706 = vmul.f32 %v4646, %v4672
        %v4707 = vmul.f32 %v4647, %v4668
        %v4708 = vmul.f32 %v4648, %v4672
        %v4709 = vmul.f32 %v4649, %v4668
        %v4710 = vmul.f32 %v4650, %v4672
        %v4711 = vmul.f32 %v4651, %v4668
        %v4712 = vmul.f32 %v4652, %v4672
        %v4713 = vmul.f32 %v4653, %v4668
        %v4714 = vmul.f32 %v4654, %v4672
        %v4715 = vmul.f32 %v4655, %v4668
        %v4716 = vmul.f32 %v4656, %v4672
        %v4717 = vmul.f32 %v4657, %v4668
        %v4718 = vmul.f32 %v4658, %v4672
        %v4719 = vmul.f32 %v4659, %v4668
        %v4720 = vmul.f32 %v4660, %v4672
        %v4721 = vmax.f32 %v4673, 0.0
        %v4722 = vmax.f32 %v4674, 0.0
        %v4723 = vmax.f32 %v4675, 0.0
        %v4724 = vmax.f32 %v4676, 0.0
        %v4725 = vmax.f32 %v4677, 0.0
        %v4726 = vmax.f32 %v4678, 0.0
        %v4727 = vmax.f32 %v4679, 0.0
        %v4728 = vmax.f32 %v4680, 0.0
        %v4729 = vmax.f32 %v4681, 0.0
        %v4730 = vmax.f32 %v4682, 0.0
        %v4731 = vmax.f32 %v4683, 0.0
        %v4732 = vmax.f32 %v4684, 0.0
        %v4733 = vmax.f32 %v4685, 0.0
        %v4734 = vmax.f32 %v4686, 0.0
        %v4735 = vmax.f32 %v4687, 0.0
        %v4736 = vmax.f32 %v4688, 0.0
        %v4737 = vmax.f32 %v4689, 0.0
        %v4738 = vmax.f32 %v4690, 0.0
        %v4739 = vmax.f32 %v4691, 0.0
        %v4740 = vmax.f32 %v4692, 0.0
        %v4741 = vmax.f32 %v4693, 0.0
        %v4742 = vmax.f32 %v4694, 0.0
        %v4743 = vmax.f32 %v4695, 0.0
        %v4744 = vmax.f32 %v4696, 0.0
        %v4745 = vmax.f32 %v4697, 0.0
        %v4746 = vmax.f32 %v4698, 0.0
        %v4747 = vmax.f32 %v4699, 0.0
        %v4748 = vmax.f32 %v4700, 0.0
        %v4749 = vmax.f32 %v4701, 0.0
        %v4750 = vmax.f32 %v4702, 0.0
        %v4751 = vmax.f32 %v4703, 0.0
        %v4752 = vmax.f32 %v4704, 0.0
        %v4753 = vmax.f32 %v4705, 0.0
        %v4754 = vmax.f32 %v4706, 0.0
        %v4755 = vmax.f32 %v4707, 0.0
        %v4756 = vmax.f32 %v4708, 0.0
        %v4757 = vmax.f32 %v4709, 0.0
        %v4758 = vmax.f32 %v4710, 0.0
        %v4759 = vmax.f32 %v4711, 0.0
        %v4760 = vmax.f32 %v4712, 0.0
        %v4761 = vmax.f32 %v4713, 0.0
        %v4762 = vmax.f32 %v4714, 0.0
        %v4763 = vmax.f32 %v4715, 0.0
        %v4764 = vmax.f32 %v4716, 0.0
        %v4765 = vmax.f32 %v4717, 0.0
        %v4766 = vmax.f32 %v4718, 0.0
        %v4767 = vmax.f32 %v4719, 0.0
        %v4768 = vmax.f32 %v4720, 0.0
        %v4769 = vpack.c.bf16 %v4723, %v4721
        %v4770 = vpack.c.bf16 %v4724, %v4722
        %v4771 = vpack.c.bf16 %v4727, %v4725
        %v4772 = vpack.c.bf16 %v4728, %v4726
        %v4773 = vpack.c.bf16 %v4731, %v4729
        %v4774 = vpack.c.bf16 %v4732, %v4730
        %v4775 = vpack.c.bf16 %v4735, %v4733
        %v4776 = vpack.c.bf16 %v4736, %v4734
        %v4777 = vpack.c.bf16 %v4739, %v4737
        %v4778 = vpack.c.bf16 %v4740, %v4738
        %v4779 = vpack.c.bf16 %v4743, %v4741
        %v4780 = vpack.c.bf16 %v4744, %v4742
        %v4781 = vpack.c.bf16 %v4747, %v4745
        %v4782 = vpack.c.bf16 %v4748, %v4746
        %v4783 = vpack.c.bf16 %v4751, %v4749
        %v4784 = vpack.c.bf16 %v4752, %v4750
        %v4785 = vpack.c.bf16 %v4755, %v4753
        %v4786 = vpack.c.bf16 %v4756, %v4754
        %v4787 = vpack.c.bf16 %v4759, %v4757
        %v4788 = vpack.c.bf16 %v4760, %v4758
        %v4789 = vpack.c.bf16 %v4763, %v4761
        %v4790 = vpack.c.bf16 %v4764, %v4762
        %v4791 = vpack.c.bf16 %v4767, %v4765
        %v4792 = vpack.c.bf16 %v4768, %v4766
        %v4817 = vunpack.c.l.b16 %v4769
        %v4818 = vunpack.c.l.b16 %v4770
        %v4819 = vunpack.c.h.b16 %v4769
        %v4820 = vunpack.c.h.b16 %v4770
        %v4821 = vunpack.c.l.b16 %v4771
        %v4822 = vunpack.c.l.b16 %v4772
        %v4823 = vunpack.c.h.b16 %v4771
        %v4824 = vunpack.c.h.b16 %v4772
        %v4825 = vunpack.c.l.b16 %v4773
        %v4826 = vunpack.c.l.b16 %v4774
        %v4827 = vunpack.c.h.b16 %v4773
        %v4828 = vunpack.c.h.b16 %v4774
        %v4829 = vunpack.c.l.b16 %v4775
        %v4830 = vunpack.c.l.b16 %v4776
        %v4831 = vunpack.c.h.b16 %v4775
        %v4832 = vunpack.c.h.b16 %v4776
        %v4833 = vunpack.c.l.b16 %v4777
        %v4834 = vunpack.c.l.b16 %v4778
        %v4835 = vunpack.c.h.b16 %v4777
        %v4836 = vunpack.c.h.b16 %v4778
        %v4837 = vunpack.c.l.b16 %v4779
        %v4838 = vunpack.c.l.b16 %v4780
        %v4839 = vunpack.c.h.b16 %v4779
        %v4840 = vunpack.c.h.b16 %v4780
        %v4841 = vunpack.c.l.b16 %v4781
        %v4842 = vunpack.c.l.b16 %v4782
        %v4843 = vunpack.c.h.b16 %v4781
        %v4844 = vunpack.c.h.b16 %v4782
        %v4845 = vunpack.c.l.b16 %v4783
        %v4846 = vunpack.c.l.b16 %v4784
        %v4847 = vunpack.c.h.b16 %v4783
        %v4848 = vunpack.c.h.b16 %v4784
        %v4849 = vunpack.c.l.b16 %v4785
        %v4850 = vunpack.c.l.b16 %v4786
        %v4851 = vunpack.c.h.b16 %v4785
        %v4852 = vunpack.c.h.b16 %v4786
        %v4853 = vunpack.c.l.b16 %v4787
        %v4854 = vunpack.c.l.b16 %v4788
        %v4855 = vunpack.c.h.b16 %v4787
        %v4856 = vunpack.c.h.b16 %v4788
        %v4857 = vunpack.c.l.b16 %v4789
        %v4858 = vunpack.c.l.b16 %v4790
        %v4859 = vunpack.c.h.b16 %v4789
        %v4860 = vunpack.c.h.b16 %v4790
        %v4861 = vunpack.c.l.b16 %v4791
        %v4862 = vunpack.c.l.b16 %v4792
        %v4863 = vunpack.c.h.b16 %v4791
        %v4864 = vunpack.c.h.b16 %v4792
        %v4865 = vpack.c.b16 %v4818, %v4817
        %v4866 = vpack.c.b16 %v4820, %v4819
        %v4867 = vpack.c.b16 %v4822, %v4821
        %v4868 = vpack.c.b16 %v4824, %v4823
        %v4869 = vpack.c.b16 %v4826, %v4825
        %v4870 = vpack.c.b16 %v4828, %v4827
        %v4871 = vpack.c.b16 %v4830, %v4829
        %v4872 = vpack.c.b16 %v4832, %v4831
        %v4873 = vpack.c.b16 %v4834, %v4833
        %v4874 = vpack.c.b16 %v4836, %v4835
        %v4875 = vpack.c.b16 %v4838, %v4837
        %v4876 = vpack.c.b16 %v4840, %v4839
        %v4877 = vpack.c.b16 %v4842, %v4841
        %v4878 = vpack.c.b16 %v4844, %v4843
        %v4879 = vpack.c.b16 %v4846, %v4845
        %v4880 = vpack.c.b16 %v4848, %v4847
        %v4881 = vpack.c.b16 %v4850, %v4849
        %v4882 = vpack.c.b16 %v4852, %v4851
        %v4883 = vpack.c.b16 %v4854, %v4853
        %v4884 = vpack.c.b16 %v4856, %v4855
        %v4885 = vpack.c.b16 %v4858, %v4857
        %v4886 = vpack.c.b16 %v4860, %v4859
        %v4887 = vpack.c.b16 %v4862, %v4861
        %v4888 = vpack.c.b16 %v4864, %v4863
        %4913 = vst [vmem:[#allocation3 + $0x10] sm:$0xff] %v4865
        %4914 = vst [vmem:[#allocation3 + $0x18] sm:$0xff] %v4866
        %4915 = vst [vmem:[#allocation3 + $0x20] sm:$0xff] %v4867
        %4916 = vst [vmem:[#allocation3 + $0x28] sm:$0xff] %v4868
        %4917 = vst [vmem:[#allocation3 + $0x30] sm:$0xff] %v4869
        %4918 = vst [vmem:[#allocation3 + $0x38] sm:$0xff] %v4870
        %4919 = vst [vmem:[#allocation3 + $0x40] sm:$0xff] %v4871
        %4920 = vst [vmem:[#allocation3 + $0x48] sm:$0xff] %v4872
        %4921 = vst [vmem:[#allocation3 + $0x50] sm:$0xff] %v4873
        %4922 = vst [vmem:[#allocation3 + $0x58] sm:$0xff] %v4874
        %4923 = vst [vmem:[#allocation3 + $0x60] sm:$0xff] %v4875
        %4924 = vst [vmem:[#allocation3 + $0x68] sm:$0xff] %v4876
        %4925 = vst [vmem:[#allocation3 + $0x90] sm:$0xff] %v4877
        %4926 = vst [vmem:[#allocation3 + $0x98] sm:$0xff] %v4878
        %4927 = vst [vmem:[#allocation3 + $0xa0] sm:$0xff] %v4879
        %4928 = vst [vmem:[#allocation3 + $0xa8] sm:$0xff] %v4880
        %4929 = vst [vmem:[#allocation3 + $0xb0] sm:$0xff] %v4881
        %4930 = vst [vmem:[#allocation3 + $0xb8] sm:$0xff] %v4882
        %4931 = vst [vmem:[#allocation3 + $0xc0] sm:$0xff] %v4883
        %4932 = vst [vmem:[#allocation3 + $0xc8] sm:$0xff] %v4884
        %4933 = vst [vmem:[#allocation3 + $0xd0] sm:$0xff] %v4885
        %4934 = vst [vmem:[#allocation3 + $0xd8] sm:$0xff] %v4886
        %4935 = vst [vmem:[#allocation3 + $0xe0] sm:$0xff] %v4887
        %4936 = vst [vmem:[#allocation3 + $0xe8] sm:$0xff] %v4888
        %v4937 = vld [vmem:[#allocation3 + $0x8] sm:$0x88]
        %v4938 = vld [vmem:[#allocation3 + $0x10] sm:$0xff]
        %v4939 = vld [vmem:[#allocation3 + $0x18] sm:$0xff]
        %v4940 = vld [vmem:[#allocation3 + $0x20] sm:$0xff]
        %v4941 = vld [vmem:[#allocation3 + $0x28] sm:$0xff]
        %v4942 = vld [vmem:[#allocation3 + $0x30] sm:$0xff]
        %v4943 = vld [vmem:[#allocation3 + $0x38] sm:$0xff]
        %v4944 = vld [vmem:[#allocation3 + $0x40] sm:$0xff]
        %v4945 = vld [vmem:[#allocation3 + $0x48] sm:$0xff]
        %v4946 = vld [vmem:[#allocation3 + $0x50] sm:$0xff]
        %v4947 = vld [vmem:[#allocation3 + $0x58] sm:$0xff]
        %v4948 = vld [vmem:[#allocation3 + $0x60] sm:$0xff]
        %v4949 = vld [vmem:[#allocation3 + $0x68] sm:$0xff]
        %v4950 = vld [vmem:[#allocation3 + $0x70] sm:$0x11]
        %v4951 = vld [vmem:[#allocation3 + $0x88] sm:$0x88]
        %v4952 = vld [vmem:[#allocation3 + $0x90] sm:$0xff]
        %v4953 = vld [vmem:[#allocation3 + $0x98] sm:$0xff]
        %v4954 = vld [vmem:[#allocation3 + $0xa0] sm:$0xff]
        %v4955 = vld [vmem:[#allocation3 + $0xa8] sm:$0xff]
        %v4956 = vld [vmem:[#allocation3 + $0xb0] sm:$0xff]
        %v4957 = vld [vmem:[#allocation3 + $0xb8] sm:$0xff]
        %v4958 = vld [vmem:[#allocation3 + $0xc0] sm:$0xff]
        %v4959 = vld [vmem:[#allocation3 + $0xc8] sm:$0xff]
        %v4960 = vld [vmem:[#allocation3 + $0xd0] sm:$0xff]
        %v4961 = vld [vmem:[#allocation3 + $0xd8] sm:$0xff]
        %v4962 = vld [vmem:[#allocation3 + $0xe0] sm:$0xff]
        %v4963 = vld [vmem:[#allocation3 + $0xe8] sm:$0xff]
        %v4964 = vld [vmem:[#allocation3 + $0xf0] sm:$0x11]
        %v4991 = vunpack.c.l.b16 %v4937
        %v4992 = vunpack.c.h.b16 %v4937
        %v4993 = vunpack.c.l.b16 %v4938
        %v4994 = vunpack.c.h.b16 %v4938
        %v4995 = vunpack.c.l.b16 %v4939
        %v4996 = vunpack.c.h.b16 %v4939
        %v4997 = vunpack.c.l.b16 %v4940
        %v4998 = vunpack.c.h.b16 %v4940
        %v4999 = vunpack.c.l.b16 %v4941
        %v5000 = vunpack.c.h.b16 %v4941
        %v5001 = vunpack.c.l.b16 %v4942
        %v5002 = vunpack.c.h.b16 %v4942
        %v5003 = vunpack.c.l.b16 %v4943
        %v5004 = vunpack.c.h.b16 %v4943
        %v5005 = vunpack.c.l.b16 %v4944
        %v5006 = vunpack.c.h.b16 %v4944
        %v5007 = vunpack.c.l.b16 %v4945
        %v5008 = vunpack.c.h.b16 %v4945
        %v5009 = vunpack.c.l.b16 %v4946
        %v5010 = vunpack.c.h.b16 %v4946
        %v5011 = vunpack.c.l.b16 %v4947
        %v5012 = vunpack.c.h.b16 %v4947
        %v5013 = vunpack.c.l.b16 %v4948
        %v5014 = vunpack.c.h.b16 %v4948
        %v5015 = vunpack.c.l.b16 %v4949
        %v5016 = vunpack.c.h.b16 %v4949
        %v5017 = vunpack.c.l.b16 %v4951
        %v5018 = vunpack.c.h.b16 %v4951
        %v5019 = vunpack.c.l.b16 %v4952
        %v5020 = vunpack.c.h.b16 %v4952
        %v5021 = vunpack.c.l.b16 %v4953
        %v5022 = vunpack.c.h.b16 %v4953
        %v5023 = vunpack.c.l.b16 %v4954
        %v5024 = vunpack.c.h.b16 %v4954
        %v5025 = vunpack.c.l.b16 %v4955
        %v5026 = vunpack.c.h.b16 %v4955
        %v5027 = vunpack.c.l.b16 %v4956
        %v5028 = vunpack.c.h.b16 %v4956
        %v5029 = vunpack.c.l.b16 %v4957
        %v5030 = vunpack.c.h.b16 %v4957
        %v5031 = vunpack.c.l.b16 %v4958
        %v5032 = vunpack.c.h.b16 %v4958
        %v5033 = vunpack.c.l.b16 %v4959
        %v5034 = vunpack.c.h.b16 %v4959
        %v5035 = vunpack.c.l.b16 %v4960
        %v5036 = vunpack.c.h.b16 %v4960
        %v5037 = vunpack.c.l.b16 %v4961
        %v5038 = vunpack.c.h.b16 %v4961
        %v5039 = vunpack.c.l.b16 %v4962
        %v5040 = vunpack.c.h.b16 %v4962
        %v5041 = vunpack.c.l.b16 %v4963
        %v5042 = vunpack.c.h.b16 %v4963
        %v5043 = vpack.c.b16 %v4993, %v4991
        %v5044 = vpack.c.b16 %v4994, %v4992
        %v5045 = vpack.c.b16 %v4997, %v4995
        %v5046 = vpack.c.b16 %v4998, %v4996
        %v5047 = vpack.c.b16 %v5001, %v4999
        %v5048 = vpack.c.b16 %v5002, %v5000
        %v5049 = vpack.c.b16 %v5005, %v5003
        %v5050 = vpack.c.b16 %v5006, %v5004
        %v5051 = vpack.c.b16 %v5009, %v5007
        %v5052 = vpack.c.b16 %v5010, %v5008
        %v5053 = vpack.c.b16 %v5013, %v5011
        %v5054 = vpack.c.b16 %v5014, %v5012
        %v5055 = vpack.c.b16 %v5015, %v5015
        %v5056 = vpack.c.b16 %v5016, %v5016
        %v5057 = vpack.c.b16 %v5019, %v5017
        %v5058 = vpack.c.b16 %v5020, %v5018
        %v5059 = vpack.c.b16 %v5023, %v5021
        %v5060 = vpack.c.b16 %v5024, %v5022
        %v5061 = vpack.c.b16 %v5027, %v5025
        %v5062 = vpack.c.b16 %v5028, %v5026
        %v5063 = vpack.c.b16 %v5031, %v5029
        %v5064 = vpack.c.b16 %v5032, %v5030
        %v5065 = vpack.c.b16 %v5035, %v5033
        %v5066 = vpack.c.b16 %v5036, %v5034
        %v5067 = vpack.c.b16 %v5039, %v5037
        %v5068 = vpack.c.b16 %v5040, %v5038
        %v5069 = vpack.c.b16 %v5041, %v5041
        %v5070 = vpack.c.b16 %v5042, %v5042
        %v5072 = vshrl.u32 %v5043, 16
        %v5074 = vshll.u32 %v5043, 16
        %v5076 = vrot.slane %v5074, 1
        %v5077 = vor.u32 %v5072, %v5076
        %v5079 = vshll.u32 %v5045, 16
        %v5081 = vrot.slane %v5079, 1
        %v5082 = vsel %vm2832, %v5077, %v5081
        %v5084 = vshrl.u32 %v5044, 16
        %v5086 = vshll.u32 %v5044, 16
        %v5088 = vrot.slane %v5086, 1
        %v5089 = vor.u32 %v5084, %v5088
        %v5091 = vshll.u32 %v5046, 16
        %v5093 = vrot.slane %v5091, 1
        %v5094 = vsel %vm2832, %v5089, %v5093
        %v5095 = vshrl.u32 %v5045, 16
        %v5097 = vor.u32 %v5095, %v5081
        %v5099 = vshll.u32 %v5047, 16
        %v5101 = vrot.slane %v5099, 1
        %v5102 = vsel %vm2832, %v5097, %v5101
        %v5103 = vshrl.u32 %v5046, 16
        %v5105 = vor.u32 %v5103, %v5093
        %v5107 = vshll.u32 %v5048, 16
        %v5109 = vrot.slane %v5107, 1
        %v5110 = vsel %vm2832, %v5105, %v5109
        %v5111 = vshrl.u32 %v5047, 16
        %v5113 = vor.u32 %v5111, %v5101
        %v5115 = vshll.u32 %v5049, 16
        %v5117 = vrot.slane %v5115, 1
        %v5118 = vsel %vm2832, %v5113, %v5117
        %v5119 = vshrl.u32 %v5048, 16
        %v5121 = vor.u32 %v5119, %v5109
        %v5123 = vshll.u32 %v5050, 16
        %v5125 = vrot.slane %v5123, 1
        %v5126 = vsel %vm2832, %v5121, %v5125
        %v5127 = vshrl.u32 %v5049, 16
        %v5129 = vor.u32 %v5127, %v5117
        %v5131 = vshll.u32 %v5051, 16
        %v5133 = vrot.slane %v5131, 1
        %v5134 = vsel %vm2832, %v5129, %v5133
        %v5135 = vshrl.u32 %v5050, 16
        %v5137 = vor.u32 %v5135, %v5125
        %v5139 = vshll.u32 %v5052, 16
        %v5141 = vrot.slane %v5139, 1
        %v5142 = vsel %vm2832, %v5137, %v5141
        %v5143 = vshrl.u32 %v5051, 16
        %v5145 = vor.u32 %v5143, %v5133
        %v5147 = vshll.u32 %v5053, 16
        %v5149 = vrot.slane %v5147, 1
        %v5150 = vsel %vm2832, %v5145, %v5149
        %v5151 = vshrl.u32 %v5052, 16
        %v5153 = vor.u32 %v5151, %v5141
        %v5155 = vshll.u32 %v5054, 16
        %v5157 = vrot.slane %v5155, 1
        %v5158 = vsel %vm2832, %v5153, %v5157
        %v5159 = vshrl.u32 %v5053, 16
        %v5161 = vor.u32 %v5159, %v5149
        %v5163 = vshll.u32 %v5055, 16
        %v5165 = vrot.slane %v5163, 1
        %v5166 = vsel %vm2832, %v5161, %v5165
        %v5167 = vshrl.u32 %v5054, 16
        %v5169 = vor.u32 %v5167, %v5157
        %v5171 = vshll.u32 %v5056, 16
        %v5173 = vrot.slane %v5171, 1
        %v5174 = vsel %vm2832, %v5169, %v5173
        %v5175 = vshrl.u32 %v5055, 16
        %v5177 = vor.u32 %v5175, %v5165
        %v5178 = vshrl.u32 %v5056, 16
        %v5180 = vor.u32 %v5178, %v5173
        %v5182 = vshrl.u32 %v5057, 16
        %v5184 = vshll.u32 %v5057, 16
        %v5186 = vrot.slane %v5184, 1
        %v5187 = vor.u32 %v5182, %v5186
        %v5189 = vshll.u32 %v5059, 16
        %v5191 = vrot.slane %v5189, 1
        %v5192 = vsel %vm2832, %v5187, %v5191
        %v5194 = vshrl.u32 %v5058, 16
        %v5196 = vshll.u32 %v5058, 16
        %v5198 = vrot.slane %v5196, 1
        %v5199 = vor.u32 %v5194, %v5198
        %v5201 = vshll.u32 %v5060, 16
        %v5203 = vrot.slane %v5201, 1
        %v5204 = vsel %vm2832, %v5199, %v5203
        %v5205 = vshrl.u32 %v5059, 16
        %v5207 = vor.u32 %v5205, %v5191
        %v5209 = vshll.u32 %v5061, 16
        %v5211 = vrot.slane %v5209, 1
        %v5212 = vsel %vm2832, %v5207, %v5211
        %v5213 = vshrl.u32 %v5060, 16
        %v5215 = vor.u32 %v5213, %v5203
        %v5217 = vshll.u32 %v5062, 16
        %v5219 = vrot.slane %v5217, 1
        %v5220 = vsel %vm2832, %v5215, %v5219
        %v5221 = vshrl.u32 %v5061, 16
        %v5223 = vor.u32 %v5221, %v5211
        %v5225 = vshll.u32 %v5063, 16
        %v5227 = vrot.slane %v5225, 1
        %v5228 = vsel %vm2832, %v5223, %v5227
        %v5229 = vshrl.u32 %v5062, 16
        %v5231 = vor.u32 %v5229, %v5219
        %v5233 = vshll.u32 %v5064, 16
        %v5235 = vrot.slane %v5233, 1
        %v5236 = vsel %vm2832, %v5231, %v5235
        %v5237 = vshrl.u32 %v5063, 16
        %v5239 = vor.u32 %v5237, %v5227
        %v5241 = vshll.u32 %v5065, 16
        %v5243 = vrot.slane %v5241, 1
        %v5244 = vsel %vm2832, %v5239, %v5243
        %v5245 = vshrl.u32 %v5064, 16
        %v5247 = vor.u32 %v5245, %v5235
        %v5249 = vshll.u32 %v5066, 16
        %v5251 = vrot.slane %v5249, 1
        %v5252 = vsel %vm2832, %v5247, %v5251
        %v5253 = vshrl.u32 %v5065, 16
        %v5255 = vor.u32 %v5253, %v5243
        %v5257 = vshll.u32 %v5067, 16
        %v5259 = vrot.slane %v5257, 1
        %v5260 = vsel %vm2832, %v5255, %v5259
        %v5261 = vshrl.u32 %v5066, 16
        %v5263 = vor.u32 %v5261, %v5251
        %v5265 = vshll.u32 %v5068, 16
        %v5267 = vrot.slane %v5265, 1
        %v5268 = vsel %vm2832, %v5263, %v5267
        %v5269 = vshrl.u32 %v5067, 16
        %v5271 = vor.u32 %v5269, %v5259
        %v5273 = vshll.u32 %v5069, 16
        %v5275 = vrot.slane %v5273, 1
        %v5276 = vsel %vm2832, %v5271, %v5275
        %v5277 = vshrl.u32 %v5068, 16
        %v5279 = vor.u32 %v5277, %v5267
        %v5281 = vshll.u32 %v5070, 16
        %v5283 = vrot.slane %v5281, 1
        %v5284 = vsel %vm2832, %v5279, %v5283
        %v5285 = vshrl.u32 %v5069, 16
        %v5287 = vor.u32 %v5285, %v5275
        %v5288 = vshrl.u32 %v5070, 16
        %v5290 = vor.u32 %v5288, %v5283
        %v5291 = vpack.c.b16 %v4995, %v4993
        %v5292 = vpack.c.b16 %v4996, %v4994
        %v5293 = vpack.c.b16 %v4999, %v4997
        %v5294 = vpack.c.b16 %v5000, %v4998
        %v5295 = vpack.c.b16 %v5003, %v5001
        %v5296 = vpack.c.b16 %v5004, %v5002
        %v5297 = vpack.c.b16 %v5007, %v5005
        %v5298 = vpack.c.b16 %v5008, %v5006
        %v5299 = vpack.c.b16 %v5011, %v5009
        %v5300 = vpack.c.b16 %v5012, %v5010
        %v5301 = vpack.c.b16 %v5015, %v5013
        %v5302 = vpack.c.b16 %v5016, %v5014
        %v5303 = vpack.c.b16 %v5021, %v5019
        %v5304 = vpack.c.b16 %v5022, %v5020
        %v5305 = vpack.c.b16 %v5025, %v5023
        %v5306 = vpack.c.b16 %v5026, %v5024
        %v5307 = vpack.c.b16 %v5029, %v5027
        %v5308 = vpack.c.b16 %v5030, %v5028
        %v5309 = vpack.c.b16 %v5033, %v5031
        %v5310 = vpack.c.b16 %v5034, %v5032
        %v5311 = vpack.c.b16 %v5037, %v5035
        %v5312 = vpack.c.b16 %v5038, %v5036
        %v5313 = vpack.c.b16 %v5041, %v5039
        %v5314 = vpack.c.b16 %v5042, %v5040
        %vm5315 = vcmask 1042432
        %v5316 = vrot.slane %v5291, 5
        %v5317 = vrot.slane %v5292, 5
        %v5318 = vrot.slane %v5293, 5
        %v5319 = vsel %vm5315, %v5316, %v5318
        %v5320 = vrot.slane %v5294, 5
        %v5321 = vsel %vm5315, %v5317, %v5320
        %v5322 = vrot.slane %v5295, 5
        %v5323 = vsel %vm5315, %v5318, %v5322
        %v5324 = vrot.slane %v5296, 5
        %v5325 = vsel %vm5315, %v5320, %v5324
        %v5326 = vrot.slane %v5297, 5
        %v5327 = vsel %vm5315, %v5322, %v5326
        %v5328 = vrot.slane %v5298, 5
        %v5329 = vsel %vm5315, %v5324, %v5328
        %v5330 = vrot.slane %v5299, 5
        %v5331 = vsel %vm5315, %v5326, %v5330
        %v5332 = vrot.slane %v5300, 5
        %v5333 = vsel %vm5315, %v5328, %v5332
        %v5334 = vrot.slane %v5301, 5
        %v5335 = vsel %vm5315, %v5330, %v5334
        %v5336 = vrot.slane %v5302, 5
        %v5337 = vsel %vm5315, %v5332, %v5336
        %v5338 = vrot.slane %v5303, 5
        %v5339 = vrot.slane %v5304, 5
        %v5340 = vrot.slane %v5305, 5
        %v5341 = vsel %vm5315, %v5338, %v5340
        %v5342 = vrot.slane %v5306, 5
        %v5343 = vsel %vm5315, %v5339, %v5342
        %v5344 = vrot.slane %v5307, 5
        %v5345 = vsel %vm5315, %v5340, %v5344
        %v5346 = vrot.slane %v5308, 5
        %v5347 = vsel %vm5315, %v5342, %v5346
        %v5348 = vrot.slane %v5309, 5
        %v5349 = vsel %vm5315, %v5344, %v5348
        %v5350 = vrot.slane %v5310, 5
        %v5351 = vsel %vm5315, %v5346, %v5350
        %v5352 = vrot.slane %v5311, 5
        %v5353 = vsel %vm5315, %v5348, %v5352
        %v5354 = vrot.slane %v5312, 5
        %v5355 = vsel %vm5315, %v5350, %v5354
        %v5356 = vrot.slane %v5313, 5
        %v5357 = vsel %vm5315, %v5352, %v5356
        %v5358 = vrot.slane %v5314, 5
        %v5359 = vsel %vm5315, %v5354, %v5358
        %v5362 = vunpack.c.l.b16 %v4950
        %v5363 = vunpack.c.h.b16 %v4950
        %v5364 = vunpack.c.l.b16 %v4964
        %v5365 = vunpack.c.h.b16 %v4964
        %v5366 = vpack.c.b16 %v5362, %v5362
        %v5367 = vpack.c.b16 %v5363, %v5363
        %v5368 = vpack.c.b16 %v5364, %v5364
        %v5369 = vpack.c.b16 %v5365, %v5365
        %vm5370 = vsmask.f32 2304
        %v5372 = vshrl.u32 %v5291, 16
        %v5374 = vrot.slane %v5372, 5
        %v5375 = vshll.u32 %v5291, 16
        %v5377 = vrot.slane %v5375, 6
        %v5378 = vor.u32 %v5374, %v5377
        %v5380 = vshrl.u32 %v5292, 16
        %v5382 = vrot.slane %v5380, 5
        %v5383 = vshll.u32 %v5292, 16
        %v5385 = vrot.slane %v5383, 6
        %v5386 = vor.u32 %v5382, %v5385
        %v5388 = vshrl.u32 %v5293, 16
        %v5390 = vrot.slane %v5388, 5
        %v5391 = vshll.u32 %v5293, 16
        %v5393 = vrot.slane %v5391, 6
        %v5394 = vor.u32 %v5390, %v5393
        %v5395 = vsel %vm5370, %v5378, %v5394
        %v5397 = vshrl.u32 %v5294, 16
        %v5399 = vrot.slane %v5397, 5
        %v5400 = vshll.u32 %v5294, 16
        %v5402 = vrot.slane %v5400, 6
        %v5403 = vor.u32 %v5399, %v5402
        %v5404 = vsel %vm5370, %v5386, %v5403
        %v5406 = vshrl.u32 %v5295, 16
        %v5408 = vrot.slane %v5406, 5
        %v5409 = vshll.u32 %v5295, 16
        %v5411 = vrot.slane %v5409, 6
        %v5412 = vor.u32 %v5408, %v5411
        %v5413 = vsel %vm5370, %v5394, %v5412
        %v5415 = vshrl.u32 %v5296, 16
        %v5417 = vrot.slane %v5415, 5
        %v5418 = vshll.u32 %v5296, 16
        %v5420 = vrot.slane %v5418, 6
        %v5421 = vor.u32 %v5417, %v5420
        %v5422 = vsel %vm5370, %v5403, %v5421
        %v5424 = vshrl.u32 %v5297, 16
        %v5426 = vrot.slane %v5424, 5
        %v5427 = vshll.u32 %v5297, 16
        %v5429 = vrot.slane %v5427, 6
        %v5430 = vor.u32 %v5426, %v5429
        %v5431 = vsel %vm5370, %v5412, %v5430
        %v5433 = vshrl.u32 %v5298, 16
        %v5435 = vrot.slane %v5433, 5
        %v5436 = vshll.u32 %v5298, 16
        %v5438 = vrot.slane %v5436, 6
        %v5439 = vor.u32 %v5435, %v5438
        %v5440 = vsel %vm5370, %v5421, %v5439
        %v5442 = vshrl.u32 %v5299, 16
        %v5444 = vrot.slane %v5442, 5
        %v5445 = vshll.u32 %v5299, 16
        %v5447 = vrot.slane %v5445, 6
        %v5448 = vor.u32 %v5444, %v5447
        %v5449 = vsel %vm5370, %v5430, %v5448
        %v5451 = vshrl.u32 %v5300, 16
        %v5453 = vrot.slane %v5451, 5
        %v5454 = vshll.u32 %v5300, 16
        %v5456 = vrot.slane %v5454, 6
        %v5457 = vor.u32 %v5453, %v5456
        %v5458 = vsel %vm5370, %v5439, %v5457
        %v5460 = vshrl.u32 %v5301, 16
        %v5462 = vrot.slane %v5460, 5
        %v5463 = vshll.u32 %v5301, 16
        %v5465 = vrot.slane %v5463, 6
        %v5466 = vor.u32 %v5462, %v5465
        %v5467 = vsel %vm5370, %v5448, %v5466
        %v5469 = vshrl.u32 %v5302, 16
        %v5471 = vrot.slane %v5469, 5
        %v5472 = vshll.u32 %v5302, 16
        %v5474 = vrot.slane %v5472, 6
        %v5475 = vor.u32 %v5471, %v5474
        %v5476 = vsel %vm5370, %v5457, %v5475
        %v5478 = vshll.u32 %v5366, 16
        %v5480 = vrot.slane %v5478, 6
        %v5481 = vsel %vm5370, %v5466, %v5480
        %v5483 = vshll.u32 %v5367, 16
        %v5485 = vrot.slane %v5483, 6
        %v5486 = vsel %vm5370, %v5475, %v5485
        %v5488 = vshrl.u32 %v5303, 16
        %v5490 = vrot.slane %v5488, 5
        %v5491 = vshll.u32 %v5303, 16
        %v5493 = vrot.slane %v5491, 6
        %v5494 = vor.u32 %v5490, %v5493
        %v5496 = vshrl.u32 %v5304, 16
        %v5498 = vrot.slane %v5496, 5
        %v5499 = vshll.u32 %v5304, 16
        %v5501 = vrot.slane %v5499, 6
        %v5502 = vor.u32 %v5498, %v5501
        %v5504 = vshrl.u32 %v5305, 16
        %v5506 = vrot.slane %v5504, 5
        %v5507 = vshll.u32 %v5305, 16
        %v5509 = vrot.slane %v5507, 6
        %v5510 = vor.u32 %v5506, %v5509
        %v5511 = vsel %vm5370, %v5494, %v5510
        %v5513 = vshrl.u32 %v5306, 16
        %v5515 = vrot.slane %v5513, 5
        %v5516 = vshll.u32 %v5306, 16
        %v5518 = vrot.slane %v5516, 6
        %v5519 = vor.u32 %v5515, %v5518
        %v5520 = vsel %vm5370, %v5502, %v5519
        %v5522 = vshrl.u32 %v5307, 16
        %v5524 = vrot.slane %v5522, 5
        %v5525 = vshll.u32 %v5307, 16
        %v5527 = vrot.slane %v5525, 6
        %v5528 = vor.u32 %v5524, %v5527
        %v5529 = vsel %vm5370, %v5510, %v5528
        %v5531 = vshrl.u32 %v5308, 16
        %v5533 = vrot.slane %v5531, 5
        %v5534 = vshll.u32 %v5308, 16
        %v5536 = vrot.slane %v5534, 6
        %v5537 = vor.u32 %v5533, %v5536
        %v5538 = vsel %vm5370, %v5519, %v5537
        %v5540 = vshrl.u32 %v5309, 16
        %v5542 = vrot.slane %v5540, 5
        %v5543 = vshll.u32 %v5309, 16
        %v5545 = vrot.slane %v5543, 6
        %v5546 = vor.u32 %v5542, %v5545
        %v5547 = vsel %vm5370, %v5528, %v5546
        %v5549 = vshrl.u32 %v5310, 16
        %v5551 = vrot.slane %v5549, 5
        %v5552 = vshll.u32 %v5310, 16
        %v5554 = vrot.slane %v5552, 6
        %v5555 = vor.u32 %v5551, %v5554
        %v5556 = vsel %vm5370, %v5537, %v5555
        %v5558 = vshrl.u32 %v5311, 16
        %v5560 = vrot.slane %v5558, 5
        %v5561 = vshll.u32 %v5311, 16
        %v5563 = vrot.slane %v5561, 6
        %v5564 = vor.u32 %v5560, %v5563
        %v5565 = vsel %vm5370, %v5546, %v5564
        %v5567 = vshrl.u32 %v5312, 16
        %v5569 = vrot.slane %v5567, 5
        %v5570 = vshll.u32 %v5312, 16
        %v5572 = vrot.slane %v5570, 6
        %v5573 = vor.u32 %v5569, %v5572
        %v5574 = vsel %vm5370, %v5555, %v5573
        %v5576 = vshrl.u32 %v5313, 16
        %v5578 = vrot.slane %v5576, 5
        %v5579 = vshll.u32 %v5313, 16
        %v5581 = vrot.slane %v5579, 6
        %v5582 = vor.u32 %v5578, %v5581
        %v5583 = vsel %vm5370, %v5564, %v5582
        %v5585 = vshrl.u32 %v5314, 16
        %v5587 = vrot.slane %v5585, 5
        %v5588 = vshll.u32 %v5314, 16
        %v5590 = vrot.slane %v5588, 6
        %v5591 = vor.u32 %v5587, %v5590
        %v5592 = vsel %vm5370, %v5573, %v5591
        %v5594 = vshll.u32 %v5368, 16
        %v5596 = vrot.slane %v5594, 6
        %v5597 = vsel %vm5370, %v5582, %v5596
        %v5599 = vshll.u32 %v5369, 16
        %v5601 = vrot.slane %v5599, 6
        %v5602 = vsel %vm5370, %v5591, %v5601
        %vm5603 = vcmask 1041408
        %v5604 = vrot.slane %v5291, 6
        %v5605 = vrot.slane %v5292, 6
        %v5606 = vrot.slane %v5293, 6
        %v5607 = vsel %vm5603, %v5604, %v5606
        %v5608 = vrot.slane %v5294, 6
        %v5609 = vsel %vm5603, %v5605, %v5608
        %v5610 = vrot.slane %v5295, 6
        %v5611 = vsel %vm5603, %v5606, %v5610
        %v5612 = vrot.slane %v5296, 6
        %v5613 = vsel %vm5603, %v5608, %v5612
        %v5614 = vrot.slane %v5297, 6
        %v5615 = vsel %vm5603, %v5610, %v5614
        %v5616 = vrot.slane %v5298, 6
        %v5617 = vsel %vm5603, %v5612, %v5616
        %v5618 = vrot.slane %v5299, 6
        %v5619 = vsel %vm5603, %v5614, %v5618
        %v5620 = vrot.slane %v5300, 6
        %v5621 = vsel %vm5603, %v5616, %v5620
        %v5622 = vrot.slane %v5301, 6
        %v5623 = vsel %vm5603, %v5618, %v5622
        %v5624 = vrot.slane %v5302, 6
        %v5625 = vsel %vm5603, %v5620, %v5624
        %v5626 = vrot.slane %v5366, 6
        %v5627 = vsel %vm5603, %v5622, %v5626
        %v5628 = vrot.slane %v5367, 6
        %v5629 = vsel %vm5603, %v5624, %v5628
        %v5630 = vrot.slane %v5303, 6
        %v5631 = vrot.slane %v5304, 6
        %v5632 = vrot.slane %v5305, 6
        %v5633 = vsel %vm5603, %v5630, %v5632
        %v5634 = vrot.slane %v5306, 6
        %v5635 = vsel %vm5603, %v5631, %v5634
        %v5636 = vrot.slane %v5307, 6
        %v5637 = vsel %vm5603, %v5632, %v5636
        %v5638 = vrot.slane %v5308, 6
        %v5639 = vsel %vm5603, %v5634, %v5638
        %v5640 = vrot.slane %v5309, 6
        %v5641 = vsel %vm5603, %v5636, %v5640
        %v5642 = vrot.slane %v5310, 6
        %v5643 = vsel %vm5603, %v5638, %v5642
        %v5644 = vrot.slane %v5311, 6
        %v5645 = vsel %vm5603, %v5640, %v5644
        %v5646 = vrot.slane %v5312, 6
        %v5647 = vsel %vm5603, %v5642, %v5646
        %v5648 = vrot.slane %v5313, 6
        %v5649 = vsel %vm5603, %v5644, %v5648
        %v5650 = vrot.slane %v5314, 6
        %v5651 = vsel %vm5603, %v5646, %v5650
        %v5652 = vrot.slane %v5368, 6
        %v5653 = vsel %vm5603, %v5648, %v5652
        %v5654 = vrot.slane %v5369, 6
        %v5655 = vsel %vm5603, %v5650, %v5654
        %v5656 = vrot.slane %v5043, 3
        %v5657 = vrot.slane %v5045, 3
        %v5658 = vsel %vm3179, %v5656, %v5657
        %v5659 = vrot.slane %v5044, 3
        %v5660 = vrot.slane %v5046, 3
        %v5661 = vsel %vm3179, %v5659, %v5660
        %v5662 = vrot.slane %v5082, 3
        %v5663 = vrot.slane %v5102, 3
        %v5664 = vsel %vm3179, %v5662, %v5663
        %v5665 = vrot.slane %v5094, 3
        %v5666 = vrot.slane %v5110, 3
        %v5667 = vsel %vm3179, %v5665, %v5666
        %v5668 = vrot.slane %v5316, 3
        %v5669 = vrot.slane %v5319, 3
        %v5670 = vsel %vm3179, %v5668, %v5669
        %v5671 = vrot.slane %v5317, 3
        %v5672 = vrot.slane %v5321, 3
        %v5673 = vsel %vm3179, %v5671, %v5672
        %v5674 = vrot.slane %v5378, 3
        %v5675 = vrot.slane %v5395, 3
        %v5676 = vsel %vm3179, %v5674, %v5675
        %v5677 = vrot.slane %v5386, 3
        %v5678 = vrot.slane %v5404, 3
        %v5679 = vsel %vm3179, %v5677, %v5678
        %v5680 = vrot.slane %v5604, 3
        %v5681 = vrot.slane %v5607, 3
        %v5682 = vsel %vm3179, %v5680, %v5681
        %v5683 = vrot.slane %v5605, 3
        %v5684 = vrot.slane %v5609, 3
        %v5685 = vsel %vm3179, %v5683, %v5684
        %v5686 = vrot.slane %v5047, 3
        %v5687 = vsel %vm3179, %v5657, %v5686
        %v5688 = vrot.slane %v5048, 3
        %v5689 = vsel %vm3179, %v5660, %v5688
        %v5690 = vrot.slane %v5118, 3
        %v5691 = vsel %vm3179, %v5663, %v5690
        %v5692 = vrot.slane %v5126, 3
        %v5693 = vsel %vm3179, %v5666, %v5692
        %v5694 = vrot.slane %v5323, 3
        %v5695 = vsel %vm3179, %v5669, %v5694
        %v5696 = vrot.slane %v5325, 3
        %v5697 = vsel %vm3179, %v5672, %v5696
        %v5698 = vrot.slane %v5413, 3
        %v5699 = vsel %vm3179, %v5675, %v5698
        %v5700 = vrot.slane %v5422, 3
        %v5701 = vsel %vm3179, %v5678, %v5700
        %v5702 = vrot.slane %v5611, 3
        %v5703 = vsel %vm3179, %v5681, %v5702
        %v5704 = vrot.slane %v5613, 3
        %v5705 = vsel %vm3179, %v5684, %v5704
        %v5706 = vrot.slane %v5049, 3
        %v5707 = vsel %vm3179, %v5686, %v5706
        %v5708 = vrot.slane %v5050, 3
        %v5709 = vsel %vm3179, %v5688, %v5708
        %v5710 = vrot.slane %v5134, 3
        %v5711 = vsel %vm3179, %v5690, %v5710
        %v5712 = vrot.slane %v5142, 3
        %v5713 = vsel %vm3179, %v5692, %v5712
        %v5714 = vrot.slane %v5327, 3
        %v5715 = vsel %vm3179, %v5694, %v5714
        %v5716 = vrot.slane %v5329, 3
        %v5717 = vsel %vm3179, %v5696, %v5716
        %v5718 = vrot.slane %v5431, 3
        %v5719 = vsel %vm3179, %v5698, %v5718
        %v5720 = vrot.slane %v5440, 3
        %v5721 = vsel %vm3179, %v5700, %v5720
        %v5722 = vrot.slane %v5615, 3
        %v5723 = vsel %vm3179, %v5702, %v5722
        %v5724 = vrot.slane %v5617, 3
        %v5725 = vsel %vm3179, %v5704, %v5724
        %v5726 = vrot.slane %v5051, 3
        %v5727 = vsel %vm3179, %v5706, %v5726
        %v5728 = vrot.slane %v5052, 3
        %v5729 = vsel %vm3179, %v5708, %v5728
        %v5730 = vrot.slane %v5150, 3
        %v5731 = vsel %vm3179, %v5710, %v5730
        %v5732 = vrot.slane %v5158, 3
        %v5733 = vsel %vm3179, %v5712, %v5732
        %v5734 = vrot.slane %v5331, 3
        %v5735 = vsel %vm3179, %v5714, %v5734
        %v5736 = vrot.slane %v5333, 3
        %v5737 = vsel %vm3179, %v5716, %v5736
        %v5738 = vrot.slane %v5449, 3
        %v5739 = vsel %vm3179, %v5718, %v5738
        %v5740 = vrot.slane %v5458, 3
        %v5741 = vsel %vm3179, %v5720, %v5740
        %v5742 = vrot.slane %v5619, 3
        %v5743 = vsel %vm3179, %v5722, %v5742
        %v5744 = vrot.slane %v5621, 3
        %v5745 = vsel %vm3179, %v5724, %v5744
        %v5746 = vrot.slane %v5053, 3
        %v5747 = vsel %vm3179, %v5726, %v5746
        %v5748 = vrot.slane %v5054, 3
        %v5749 = vsel %vm3179, %v5728, %v5748
        %v5750 = vrot.slane %v5166, 3
        %v5751 = vsel %vm3179, %v5730, %v5750
        %v5752 = vrot.slane %v5174, 3
        %v5753 = vsel %vm3179, %v5732, %v5752
        %v5754 = vrot.slane %v5335, 3
        %v5755 = vsel %vm3179, %v5734, %v5754
        %v5756 = vrot.slane %v5337, 3
        %v5757 = vsel %vm3179, %v5736, %v5756
        %v5758 = vrot.slane %v5467, 3
        %v5759 = vsel %vm3179, %v5738, %v5758
        %v5760 = vrot.slane %v5476, 3
        %v5761 = vsel %vm3179, %v5740, %v5760
        %v5762 = vrot.slane %v5623, 3
        %v5763 = vsel %vm3179, %v5742, %v5762
        %v5764 = vrot.slane %v5625, 3
        %v5765 = vsel %vm3179, %v5744, %v5764
        %v5766 = vrot.slane %v5055, 3
        %v5767 = vsel %vm3179, %v5746, %v5766
        %v5768 = vrot.slane %v5056, 3
        %v5769 = vsel %vm3179, %v5748, %v5768
        %v5770 = vrot.slane %v5177, 3
        %v5771 = vsel %vm3179, %v5750, %v5770
        %v5772 = vrot.slane %v5180, 3
        %v5773 = vsel %vm3179, %v5752, %v5772
        %v5774 = vrot.slane %v5334, 3
        %v5775 = vsel %vm3179, %v5754, %v5774
        %v5776 = vrot.slane %v5336, 3
        %v5777 = vsel %vm3179, %v5756, %v5776
        %v5778 = vrot.slane %v5481, 3
        %v5779 = vsel %vm3179, %v5758, %v5778
        %v5780 = vrot.slane %v5486, 3
        %v5781 = vsel %vm3179, %v5760, %v5780
        %v5782 = vrot.slane %v5627, 3
        %v5783 = vsel %vm3179, %v5762, %v5782
        %v5784 = vrot.slane %v5629, 3
        %v5785 = vsel %vm3179, %v5764, %v5784
        %v5786 = vrot.slane %v5057, 3
        %v5787 = vrot.slane %v5059, 3
        %v5788 = vsel %vm3179, %v5786, %v5787
        %v5789 = vrot.slane %v5058, 3
        %v5790 = vrot.slane %v5060, 3
        %v5791 = vsel %vm3179, %v5789, %v5790
        %v5792 = vrot.slane %v5192, 3
        %v5793 = vrot.slane %v5212, 3
        %v5794 = vsel %vm3179, %v5792, %v5793
        %v5795 = vrot.slane %v5204, 3
        %v5796 = vrot.slane %v5220, 3
        %v5797 = vsel %vm3179, %v5795, %v5796
        %v5798 = vrot.slane %v5338, 3
        %v5799 = vrot.slane %v5341, 3
        %v5800 = vsel %vm3179, %v5798, %v5799
        %v5801 = vrot.slane %v5339, 3
        %v5802 = vrot.slane %v5343, 3
        %v5803 = vsel %vm3179, %v5801, %v5802
        %v5804 = vrot.slane %v5494, 3
        %v5805 = vrot.slane %v5511, 3
        %v5806 = vsel %vm3179, %v5804, %v5805
        %v5807 = vrot.slane %v5502, 3
        %v5808 = vrot.slane %v5520, 3
        %v5809 = vsel %vm3179, %v5807, %v5808
        %v5810 = vrot.slane %v5630, 3
        %v5811 = vrot.slane %v5633, 3
        %v5812 = vsel %vm3179, %v5810, %v5811
        %v5813 = vrot.slane %v5631, 3
        %v5814 = vrot.slane %v5635, 3
        %v5815 = vsel %vm3179, %v5813, %v5814
        %v5816 = vrot.slane %v5061, 3
        %v5817 = vsel %vm3179, %v5787, %v5816
        %v5818 = vrot.slane %v5062, 3
        %v5819 = vsel %vm3179, %v5790, %v5818
        %v5820 = vrot.slane %v5228, 3
        %v5821 = vsel %vm3179, %v5793, %v5820
        %v5822 = vrot.slane %v5236, 3
        %v5823 = vsel %vm3179, %v5796, %v5822
        %v5824 = vrot.slane %v5345, 3
        %v5825 = vsel %vm3179, %v5799, %v5824
        %v5826 = vrot.slane %v5347, 3
        %v5827 = vsel %vm3179, %v5802, %v5826
        %v5828 = vrot.slane %v5529, 3
        %v5829 = vsel %vm3179, %v5805, %v5828
        %v5830 = vrot.slane %v5538, 3
        %v5831 = vsel %vm3179, %v5808, %v5830
        %v5832 = vrot.slane %v5637, 3
        %v5833 = vsel %vm3179, %v5811, %v5832
        %v5834 = vrot.slane %v5639, 3
        %v5835 = vsel %vm3179, %v5814, %v5834
        %v5836 = vrot.slane %v5063, 3
        %v5837 = vsel %vm3179, %v5816, %v5836
        %v5838 = vrot.slane %v5064, 3
        %v5839 = vsel %vm3179, %v5818, %v5838
        %v5840 = vrot.slane %v5244, 3
        %v5841 = vsel %vm3179, %v5820, %v5840
        %v5842 = vrot.slane %v5252, 3
        %v5843 = vsel %vm3179, %v5822, %v5842
        %v5844 = vrot.slane %v5349, 3
        %v5845 = vsel %vm3179, %v5824, %v5844
        %v5846 = vrot.slane %v5351, 3
        %v5847 = vsel %vm3179, %v5826, %v5846
        %v5848 = vrot.slane %v5547, 3
        %v5849 = vsel %vm3179, %v5828, %v5848
        %v5850 = vrot.slane %v5556, 3
        %v5851 = vsel %vm3179, %v5830, %v5850
        %v5852 = vrot.slane %v5641, 3
        %v5853 = vsel %vm3179, %v5832, %v5852
        %v5854 = vrot.slane %v5643, 3
        %v5855 = vsel %vm3179, %v5834, %v5854
        %v5856 = vrot.slane %v5065, 3
        %v5857 = vsel %vm3179, %v5836, %v5856
        %v5858 = vrot.slane %v5066, 3
        %v5859 = vsel %vm3179, %v5838, %v5858
        %v5860 = vrot.slane %v5260, 3
        %v5861 = vsel %vm3179, %v5840, %v5860
        %v5862 = vrot.slane %v5268, 3
        %v5863 = vsel %vm3179, %v5842, %v5862
        %v5864 = vrot.slane %v5353, 3
        %v5865 = vsel %vm3179, %v5844, %v5864
        %v5866 = vrot.slane %v5355, 3
        %v5867 = vsel %vm3179, %v5846, %v5866
        %v5868 = vrot.slane %v5565, 3
        %v5869 = vsel %vm3179, %v5848, %v5868
        %v5870 = vrot.slane %v5574, 3
        %v5871 = vsel %vm3179, %v5850, %v5870
        %v5872 = vrot.slane %v5645, 3
        %v5873 = vsel %vm3179, %v5852, %v5872
        %v5874 = vrot.slane %v5647, 3
        %v5875 = vsel %vm3179, %v5854, %v5874
        %v5876 = vrot.slane %v5067, 3
        %v5877 = vsel %vm3179, %v5856, %v5876
        %v5878 = vrot.slane %v5068, 3
        %v5879 = vsel %vm3179, %v5858, %v5878
        %v5880 = vrot.slane %v5276, 3
        %v5881 = vsel %vm3179, %v5860, %v5880
        %v5882 = vrot.slane %v5284, 3
        %v5883 = vsel %vm3179, %v5862, %v5882
        %v5884 = vrot.slane %v5357, 3
        %v5885 = vsel %vm3179, %v5864, %v5884
        %v5886 = vrot.slane %v5359, 3
        %v5887 = vsel %vm3179, %v5866, %v5886
        %v5888 = vrot.slane %v5583, 3
        %v5889 = vsel %vm3179, %v5868, %v5888
        %v5890 = vrot.slane %v5592, 3
        %v5891 = vsel %vm3179, %v5870, %v5890
        %v5892 = vrot.slane %v5649, 3
        %v5893 = vsel %vm3179, %v5872, %v5892
        %v5894 = vrot.slane %v5651, 3
        %v5895 = vsel %vm3179, %v5874, %v5894
        %v5896 = vrot.slane %v5069, 3
        %v5897 = vsel %vm3179, %v5876, %v5896
        %v5898 = vrot.slane %v5070, 3
        %v5899 = vsel %vm3179, %v5878, %v5898
        %v5900 = vrot.slane %v5287, 3
        %v5901 = vsel %vm3179, %v5880, %v5900
        %v5902 = vrot.slane %v5290, 3
        %v5903 = vsel %vm3179, %v5882, %v5902
        %v5904 = vrot.slane %v5356, 3
        %v5905 = vsel %vm3179, %v5884, %v5904
        %v5906 = vrot.slane %v5358, 3
        %v5907 = vsel %vm3179, %v5886, %v5906
        %v5908 = vrot.slane %v5597, 3
        %v5909 = vsel %vm3179, %v5888, %v5908
        %v5910 = vrot.slane %v5602, 3
        %v5911 = vsel %vm3179, %v5890, %v5910
        %v5912 = vrot.slane %v5653, 3
        %v5913 = vsel %vm3179, %v5892, %v5912
        %v5914 = vrot.slane %v5655, 3
        %v5915 = vsel %vm3179, %v5894, %v5914
        %v6037 = vlaneseq
        %v6038 = vshrl.u32 %v6037, 7
        %v6039 = vsub.s32 0, %v6038
        %v6040 = vrot.slane %v2694, %v6039
        %v6041 = vlaneseq
        %v6042 = vshrl.u32 %v6041, 7
        %v6043 = vsub.s32 1, %v6042
        %v6044 = vrot.slane %v2694, %v6043
        %v6207 = vunpack.c.l.b16 %v2532
        %v6208 = vunpack.c.h.b16 %v2532
        %v6209 = vunpack.c.l.b16 %v2533
        %v6210 = vunpack.c.h.b16 %v2533
        %v6211 = vunpack.c.l.b16 %v2534
        %v6212 = vunpack.c.h.b16 %v2534
        %v6213 = vunpack.c.l.b16 %v2535
        %v6214 = vunpack.c.h.b16 %v2535
        %v6215 = vunpack.c.l.b16 %v2536
        %v6216 = vunpack.c.h.b16 %v2536
        %v6217 = vunpack.c.l.b16 %v2537
        %v6218 = vunpack.c.h.b16 %v2537
        %v6219 = vunpack.c.l.b16 %v2538
        %v6220 = vunpack.c.h.b16 %v2538
        %v6221 = vunpack.c.l.b16 %v2539
        %v6222 = vunpack.c.h.b16 %v2539
        %v6223 = vunpack.c.l.b16 %v2540
        %v6224 = vunpack.c.h.b16 %v2540
        %v6225 = vunpack.c.l.b16 %v2541
        %v6226 = vunpack.c.h.b16 %v2541
        %v6227 = vunpack.c.l.b16 %v2542
        %v6228 = vunpack.c.h.b16 %v2542
        %v6229 = vunpack.c.l.b16 %v2543
        %v6230 = vunpack.c.h.b16 %v2543
        %v6231 = vunpack.c.l.b16 %v2544
        %v6232 = vunpack.c.h.b16 %v2544
        %v6233 = vunpack.c.l.b16 %v2545
        %v6234 = vunpack.c.h.b16 %v2545
        %v6235 = vunpack.c.l.b16 %v2546
        %v6236 = vunpack.c.h.b16 %v2546
        %v6237 = vunpack.c.l.b16 %v2547
        %v6238 = vunpack.c.h.b16 %v2547
        %v6239 = vunpack.c.l.b16 %v2548
        %v6240 = vunpack.c.h.b16 %v2548
        %v6241 = vunpack.c.l.b16 %v2549
        %v6242 = vunpack.c.h.b16 %v2549
        %v6243 = vunpack.c.l.b16 %v2550
        %v6244 = vunpack.c.h.b16 %v2550
        %v6245 = vunpack.c.l.b16 %v2551
        %v6246 = vunpack.c.h.b16 %v2551
        %v6247 = vunpack.c.l.b16 %v2552
        %v6248 = vunpack.c.h.b16 %v2552
        %v6249 = vunpack.c.l.b16 %v2553
        %v6250 = vunpack.c.h.b16 %v2553
        %v6251 = vunpack.c.l.b16 %v2554
        %v6252 = vunpack.c.h.b16 %v2554
        %v6253 = vunpack.c.l.b16 %v2555
        %v6254 = vunpack.c.h.b16 %v2555
        %v6255 = vunpack.c.l.b16 %v2556
        %v6256 = vunpack.c.h.b16 %v2556
        %v6257 = vunpack.c.l.b16 %v2557
        %v6258 = vunpack.c.h.b16 %v2557
        %v6259 = vunpack.c.l.b16 %v2558
        %v6260 = vunpack.c.h.b16 %v2558
        %v6261 = vunpack.c.l.b16 %v2559
        %v6262 = vunpack.c.h.b16 %v2559
        %v6263 = vunpack.c.l.b16 %v2560
        %v6264 = vunpack.c.h.b16 %v2560
        %v6265 = vunpack.c.l.b16 %v2561
        %v6266 = vunpack.c.h.b16 %v2561
        %v6267 = vunpack.c.l.b16 %v2562
        %v6268 = vunpack.c.h.b16 %v2562
        %v6269 = vunpack.c.l.b16 %v2563
        %v6270 = vunpack.c.h.b16 %v2563
        %v6271 = vunpack.c.l.b16 %v2564
        %v6272 = vunpack.c.h.b16 %v2564
        %v6273 = vunpack.c.l.b16 %v2565
        %v6274 = vunpack.c.h.b16 %v2565
        %v6275 = vunpack.c.l.b16 %v2566
        %v6276 = vunpack.c.h.b16 %v2566
        %v6277 = vunpack.c.l.b16 %v2567
        %v6278 = vunpack.c.h.b16 %v2567
        %v6279 = vunpack.c.l.b16 %v2568
        %v6280 = vunpack.c.h.b16 %v2568
        %v6281 = vunpack.c.l.b16 %v2569
        %v6282 = vunpack.c.h.b16 %v2569
        %v6283 = vunpack.c.l.b16 %v2570
        %v6284 = vunpack.c.h.b16 %v2570
        %v6285 = vunpack.c.l.b16 %v2571
        %v6286 = vunpack.c.h.b16 %v2571
        %v6287 = vunpack.c.l.b16 %v2572
        %v6288 = vunpack.c.h.b16 %v2572
        %v6289 = vunpack.c.l.b16 %v2573
        %v6290 = vunpack.c.h.b16 %v2573
        %v6291 = vunpack.c.l.b16 %v2574
        %v6292 = vunpack.c.h.b16 %v2574
        %v6293 = vunpack.c.l.b16 %v2575
        %v6294 = vunpack.c.h.b16 %v2575
        %v6295 = vunpack.c.l.b16 %v2576
        %v6296 = vunpack.c.h.b16 %v2576
        %v6297 = vunpack.c.l.b16 %v2577
        %v6298 = vunpack.c.h.b16 %v2577
        %v6299 = vunpack.c.l.b16 %v2578
        %v6300 = vunpack.c.h.b16 %v2578
        %v6301 = vunpack.c.l.b16 %v2579
        %v6302 = vunpack.c.h.b16 %v2579
        %v6303 = vunpack.c.l.b16 %v2580
        %v6304 = vunpack.c.h.b16 %v2580
        %v6305 = vunpack.c.l.b16 %v2581
        %v6306 = vunpack.c.h.b16 %v2581
        %v6307 = vunpack.c.l.b16 %v2582
        %v6308 = vunpack.c.h.b16 %v2582
        %v6309 = vunpack.c.l.b16 %v2583
        %v6310 = vunpack.c.h.b16 %v2583
        %v6311 = vunpack.c.l.b16 %v2584
        %v6312 = vunpack.c.h.b16 %v2584
        %v6313 = vunpack.c.l.b16 %v2585
        %v6314 = vunpack.c.h.b16 %v2585
        %v6315 = vunpack.c.l.b16 %v2586
        %v6316 = vunpack.c.h.b16 %v2586
        %v6317 = vunpack.c.l.b16 %v2587
        %v6318 = vunpack.c.h.b16 %v2587
        %v6319 = vunpack.c.l.b16 %v2588
        %v6320 = vunpack.c.h.b16 %v2588
        %v6321 = vunpack.c.l.b16 %v2589
        %v6322 = vunpack.c.h.b16 %v2589
        %v6323 = vunpack.c.l.b16 %v2590
        %v6324 = vunpack.c.h.b16 %v2590
        %v6325 = vunpack.c.l.b16 %v2591
        %v6326 = vunpack.c.h.b16 %v2591
        %v6327 = vunpack.c.l.b16 %v2592
        %v6328 = vunpack.c.h.b16 %v2592
        %v6329 = vunpack.c.l.b16 %v2593
        %v6330 = vunpack.c.h.b16 %v2593
        %v6331 = vunpack.c.l.b16 %v2594
        %v6332 = vunpack.c.h.b16 %v2594
        %v6333 = vunpack.c.l.b16 %v2595
        %v6334 = vunpack.c.h.b16 %v2595
        %v6335 = vunpack.c.l.b16 %v2596
        %v6336 = vunpack.c.h.b16 %v2596
        %v6337 = vunpack.c.l.b16 %v2597
        %v6338 = vunpack.c.h.b16 %v2597
        %v6339 = vunpack.c.l.b16 %v2598
        %v6340 = vunpack.c.h.b16 %v2598
        %v6341 = vunpack.c.l.b16 %v2599
        %v6342 = vunpack.c.h.b16 %v2599
        %v6343 = vunpack.c.l.b16 %v2600
        %v6344 = vunpack.c.h.b16 %v2600
        %v6345 = vunpack.c.l.b16 %v2601
        %v6346 = vunpack.c.h.b16 %v2601
        %v6347 = vunpack.c.l.b16 %v2602
        %v6348 = vunpack.c.h.b16 %v2602
        %v6349 = vunpack.c.l.b16 %v2603
        %v6350 = vunpack.c.h.b16 %v2603
        %v6351 = vunpack.c.l.b16 %v2604
        %v6352 = vunpack.c.h.b16 %v2604
        %v6353 = vunpack.c.l.b16 %v2605
        %v6354 = vunpack.c.h.b16 %v2605
        %v6355 = vunpack.c.l.b16 %v2606
        %v6356 = vunpack.c.h.b16 %v2606
        %v6357 = vunpack.c.l.b16 %v2607
        %v6358 = vunpack.c.h.b16 %v2607
        %v6359 = vunpack.c.l.b16 %v2608
        %v6360 = vunpack.c.h.b16 %v2608
        %v6361 = vunpack.c.l.b16 %v2609
        %v6362 = vunpack.c.h.b16 %v2609
        %v6363 = vunpack.c.l.b16 %v2610
        %v6364 = vunpack.c.h.b16 %v2610
        %v6365 = vunpack.c.l.b16 %v2611
        %v6366 = vunpack.c.h.b16 %v2611
        %v6367 = vunpack.c.l.b16 %v2612
        %v6368 = vunpack.c.h.b16 %v2612
        %v6369 = vunpack.c.l.b16 %v2613
        %v6370 = vunpack.c.h.b16 %v2613
        %v6371 = vunpack.c.l.b16 %v2614
        %v6372 = vunpack.c.h.b16 %v2614
        %v6373 = vunpack.c.l.b16 %v2615
        %v6374 = vunpack.c.h.b16 %v2615
        %v6375 = vunpack.c.l.b16 %v2616
        %v6376 = vunpack.c.h.b16 %v2616
        %v6377 = vunpack.c.l.b16 %v2617
        %v6378 = vunpack.c.h.b16 %v2617
        %v6379 = vunpack.c.l.b16 %v2618
        %v6380 = vunpack.c.h.b16 %v2618
        %v6381 = vunpack.c.l.b16 %v2619
        %v6382 = vunpack.c.h.b16 %v2619
        %v6383 = vunpack.c.l.b16 %v2620
        %v6384 = vunpack.c.h.b16 %v2620
        %v6385 = vunpack.c.l.b16 %v2621
        %v6386 = vunpack.c.h.b16 %v2621
        %v6387 = vunpack.c.l.b16 %v2622
        %v6388 = vunpack.c.h.b16 %v2622
        %v6389 = vunpack.c.l.b16 %v2623
        %v6390 = vunpack.c.h.b16 %v2623
        %v6391 = vunpack.c.l.b16 %v2624
        %v6392 = vunpack.c.h.b16 %v2624
        %v6393 = vunpack.c.l.b16 %v2625
        %v6394 = vunpack.c.h.b16 %v2625
        %v6395 = vunpack.c.l.b16 %v2626
        %v6396 = vunpack.c.h.b16 %v2626
        %v6397 = vunpack.c.l.b16 %v2627
        %v6398 = vunpack.c.h.b16 %v2627
        %v6399 = vunpack.c.l.b16 %v2628
        %v6400 = vunpack.c.h.b16 %v2628
        %v6401 = vunpack.c.l.b16 %v2629
        %v6402 = vunpack.c.h.b16 %v2629
        %v6403 = vunpack.c.l.b16 %v2630
        %v6404 = vunpack.c.h.b16 %v2630
        %v6405 = vunpack.c.l.b16 %v2631
        %v6406 = vunpack.c.h.b16 %v2631
        %v6407 = vunpack.c.l.b16 %v2632
        %v6408 = vunpack.c.h.b16 %v2632
        %v6409 = vunpack.c.l.b16 %v2633
        %v6410 = vunpack.c.h.b16 %v2633
        %v6411 = vunpack.c.l.b16 %v2634
        %v6412 = vunpack.c.h.b16 %v2634
        %v6413 = vunpack.c.l.b16 %v2635
        %v6414 = vunpack.c.h.b16 %v2635
        %v6415 = vunpack.c.l.b16 %v2636
        %v6416 = vunpack.c.h.b16 %v2636
        %v6417 = vunpack.c.l.b16 %v2637
        %v6418 = vunpack.c.h.b16 %v2637
        %v6419 = vunpack.c.l.b16 %v2638
        %v6420 = vunpack.c.h.b16 %v2638
        %v6421 = vunpack.c.l.b16 %v2639
        %v6422 = vunpack.c.h.b16 %v2639
        %v6423 = vunpack.c.l.b16 %v2640
        %v6424 = vunpack.c.h.b16 %v2640
        %v6425 = vunpack.c.l.b16 %v2641
        %v6426 = vunpack.c.h.b16 %v2641
        %v6427 = vunpack.c.l.b16 %v2642
        %v6428 = vunpack.c.h.b16 %v2642
        %v6429 = vunpack.c.l.b16 %v2643
        %v6430 = vunpack.c.h.b16 %v2643
        %v6431 = vunpack.c.l.b16 %v2644
        %v6432 = vunpack.c.h.b16 %v2644
        %v6433 = vunpack.c.l.b16 %v2645
        %v6434 = vunpack.c.h.b16 %v2645
        %v6435 = vunpack.c.l.b16 %v2646
        %v6436 = vunpack.c.h.b16 %v2646
        %v6437 = vunpack.c.l.b16 %v2647
        %v6438 = vunpack.c.h.b16 %v2647
        %v6439 = vunpack.c.l.b16 %v2648
        %v6440 = vunpack.c.h.b16 %v2648
        %v6441 = vunpack.c.l.b16 %v2649
        %v6442 = vunpack.c.h.b16 %v2649
        %v6443 = vunpack.c.l.b16 %v2650
        %v6444 = vunpack.c.h.b16 %v2650
        %v6445 = vunpack.c.l.b16 %v2651
        %v6446 = vunpack.c.h.b16 %v2651
        %v6447 = vunpack.c.l.b16 %v2652
        %v6448 = vunpack.c.h.b16 %v2652
        %v6449 = vunpack.c.l.b16 %v2653
        %v6450 = vunpack.c.h.b16 %v2653
        %v6451 = vunpack.c.l.b16 %v2654
        %v6452 = vunpack.c.h.b16 %v2654
        %v6453 = vunpack.c.l.b16 %v2655
        %v6454 = vunpack.c.h.b16 %v2655
        %v6455 = vunpack.c.l.b16 %v2656
        %v6456 = vunpack.c.h.b16 %v2656
        %v6457 = vunpack.c.l.b16 %v2657
        %v6458 = vunpack.c.h.b16 %v2657
        %v6459 = vunpack.c.l.b16 %v2658
        %v6460 = vunpack.c.h.b16 %v2658
        %v6461 = vunpack.c.l.b16 %v2659
        %v6462 = vunpack.c.h.b16 %v2659
        %v6463 = vunpack.c.l.b16 %v2660
        %v6464 = vunpack.c.h.b16 %v2660
        %v6465 = vunpack.c.l.b16 %v2661
        %v6466 = vunpack.c.h.b16 %v2661
        %v6467 = vunpack.c.l.b16 %v2662
        %v6468 = vunpack.c.h.b16 %v2662
        %v6469 = vunpack.c.l.b16 %v2663
        %v6470 = vunpack.c.h.b16 %v2663
        %v6471 = vunpack.c.l.b16 %v2664
        %v6472 = vunpack.c.h.b16 %v2664
        %v6473 = vunpack.c.l.b16 %v2665
        %v6474 = vunpack.c.h.b16 %v2665
        %v6475 = vunpack.c.l.b16 %v2666
        %v6476 = vunpack.c.h.b16 %v2666
        %v6477 = vunpack.c.l.b16 %v2667
        %v6478 = vunpack.c.h.b16 %v2667
        %v6479 = vunpack.c.l.b16 %v2668
        %v6480 = vunpack.c.h.b16 %v2668
        %v6481 = vunpack.c.l.b16 %v2669
        %v6482 = vunpack.c.h.b16 %v2669
        %v6483 = vunpack.c.l.b16 %v2670
        %v6484 = vunpack.c.h.b16 %v2670
        %v6485 = vunpack.c.l.b16 %v2671
        %v6486 = vunpack.c.h.b16 %v2671
        %v6487 = vunpack.c.l.b16 %v2672
        %v6488 = vunpack.c.h.b16 %v2672
        %v6489 = vunpack.c.l.b16 %v2673
        %v6490 = vunpack.c.h.b16 %v2673
        %v6491 = vunpack.c.l.b16 %v2674
        %v6492 = vunpack.c.h.b16 %v2674
        %v6493 = vunpack.c.l.b16 %v2675
        %v6494 = vunpack.c.h.b16 %v2675
        %v6495 = vunpack.c.l.b16 %v2676
        %v6496 = vunpack.c.h.b16 %v2676
        %v6497 = vunpack.c.l.b16 %v2677
        %v6498 = vunpack.c.h.b16 %v2677
        %v6499 = vunpack.c.l.b16 %v2678
        %v6500 = vunpack.c.h.b16 %v2678
        %v6501 = vunpack.c.l.b16 %v2679
        %v6502 = vunpack.c.h.b16 %v2679
        %v6503 = vunpack.c.l.b16 %v2680
        %v6504 = vunpack.c.h.b16 %v2680
        %v6505 = vunpack.c.l.b16 %v2681
        %v6506 = vunpack.c.h.b16 %v2681
        %v6507 = vunpack.c.l.b16 %v2682
        %v6508 = vunpack.c.h.b16 %v2682
        %v6509 = vunpack.c.l.b16 %v2683
        %v6510 = vunpack.c.h.b16 %v2683
        %v6511 = vunpack.c.l.b16 %v2684
        %v6512 = vunpack.c.h.b16 %v2684
        %v6513 = vunpack.c.l.b16 %v2685
        %v6514 = vunpack.c.h.b16 %v2685
        %v6515 = vunpack.c.l.b16 %v2686
        %v6516 = vunpack.c.h.b16 %v2686
        %v6517 = vunpack.c.l.b16 %v2687
        %v6518 = vunpack.c.h.b16 %v2687
        %v6519 = vunpack.c.l.b16 %v2688
        %v6520 = vunpack.c.h.b16 %v2688
        %v6521 = vunpack.c.l.b16 %v2689
        %v6522 = vunpack.c.h.b16 %v2689
        %v6523 = vunpack.c.l.b16 %v2690
        %v6524 = vunpack.c.h.b16 %v2690
        %v6525 = vunpack.c.l.b16 %v2691
        %v6526 = vunpack.c.h.b16 %v2691
        %v6527 = vpack.c.b16 %v6209, %v6207
        %v6528 = vpack.c.b16 %v6210, %v6208
        %v6529 = vpack.c.b16 %v6213, %v6211
        %v6530 = vpack.c.b16 %v6214, %v6212
        %v6531 = vpack.c.b16 %v6217, %v6215
        %v6532 = vpack.c.b16 %v6218, %v6216
        %v6533 = vpack.c.b16 %v6221, %v6219
        %v6534 = vpack.c.b16 %v6222, %v6220
        %v6535 = vpack.c.b16 %v6225, %v6223
        %v6536 = vpack.c.b16 %v6226, %v6224
        %v6537 = vpack.c.b16 %v6229, %v6227
        %v6538 = vpack.c.b16 %v6230, %v6228
        %v6539 = vpack.c.b16 %v6233, %v6231
        %v6540 = vpack.c.b16 %v6234, %v6232
        %v6541 = vpack.c.b16 %v6237, %v6235
        %v6542 = vpack.c.b16 %v6238, %v6236
        %v6543 = vpack.c.b16 %v6241, %v6239
        %v6544 = vpack.c.b16 %v6242, %v6240
        %v6545 = vpack.c.b16 %v6245, %v6243
        %v6546 = vpack.c.b16 %v6246, %v6244
        %v6547 = vpack.c.b16 %v6249, %v6247
        %v6548 = vpack.c.b16 %v6250, %v6248
        %v6549 = vpack.c.b16 %v6253, %v6251
        %v6550 = vpack.c.b16 %v6254, %v6252
        %v6551 = vpack.c.b16 %v6257, %v6255
        %v6552 = vpack.c.b16 %v6258, %v6256
        %v6553 = vpack.c.b16 %v6261, %v6259
        %v6554 = vpack.c.b16 %v6262, %v6260
        %v6555 = vpack.c.b16 %v6265, %v6263
        %v6556 = vpack.c.b16 %v6266, %v6264
        %v6557 = vpack.c.b16 %v6269, %v6267
        %v6558 = vpack.c.b16 %v6270, %v6268
        %v6559 = vpack.c.b16 %v6273, %v6271
        %v6560 = vpack.c.b16 %v6274, %v6272
        %v6561 = vpack.c.b16 %v6277, %v6275
        %v6562 = vpack.c.b16 %v6278, %v6276
        %v6563 = vpack.c.b16 %v6281, %v6279
        %v6564 = vpack.c.b16 %v6282, %v6280
        %v6565 = vpack.c.b16 %v6285, %v6283
        %v6566 = vpack.c.b16 %v6286, %v6284
        %v6567 = vpack.c.b16 %v6289, %v6287
        %v6568 = vpack.c.b16 %v6290, %v6288
        %v6569 = vpack.c.b16 %v6293, %v6291
        %v6570 = vpack.c.b16 %v6294, %v6292
        %v6571 = vpack.c.b16 %v6297, %v6295
        %v6572 = vpack.c.b16 %v6298, %v6296
        %v6573 = vpack.c.b16 %v6301, %v6299
        %v6574 = vpack.c.b16 %v6302, %v6300
        %v6575 = vpack.c.b16 %v6305, %v6303
        %v6576 = vpack.c.b16 %v6306, %v6304
        %v6577 = vpack.c.b16 %v6309, %v6307
        %v6578 = vpack.c.b16 %v6310, %v6308
        %v6579 = vpack.c.b16 %v6313, %v6311
        %v6580 = vpack.c.b16 %v6314, %v6312
        %v6581 = vpack.c.b16 %v6317, %v6315
        %v6582 = vpack.c.b16 %v6318, %v6316
        %v6583 = vpack.c.b16 %v6321, %v6319
        %v6584 = vpack.c.b16 %v6322, %v6320
        %v6585 = vpack.c.b16 %v6325, %v6323
        %v6586 = vpack.c.b16 %v6326, %v6324
        %v6587 = vpack.c.b16 %v6329, %v6327
        %v6588 = vpack.c.b16 %v6330, %v6328
        %v6589 = vpack.c.b16 %v6333, %v6331
        %v6590 = vpack.c.b16 %v6334, %v6332
        %v6591 = vpack.c.b16 %v6337, %v6335
        %v6592 = vpack.c.b16 %v6338, %v6336
        %v6593 = vpack.c.b16 %v6341, %v6339
        %v6594 = vpack.c.b16 %v6342, %v6340
        %v6595 = vpack.c.b16 %v6345, %v6343
        %v6596 = vpack.c.b16 %v6346, %v6344
        %v6597 = vpack.c.b16 %v6349, %v6347
        %v6598 = vpack.c.b16 %v6350, %v6348
        %v6599 = vpack.c.b16 %v6353, %v6351
        %v6600 = vpack.c.b16 %v6354, %v6352
        %v6601 = vpack.c.b16 %v6357, %v6355
        %v6602 = vpack.c.b16 %v6358, %v6356
        %v6603 = vpack.c.b16 %v6361, %v6359
        %v6604 = vpack.c.b16 %v6362, %v6360
        %v6605 = vpack.c.b16 %v6365, %v6363
        %v6606 = vpack.c.b16 %v6366, %v6364
        %v6607 = vpack.c.b16 %v6369, %v6367
        %v6608 = vpack.c.b16 %v6370, %v6368
        %v6609 = vpack.c.b16 %v6373, %v6371
        %v6610 = vpack.c.b16 %v6374, %v6372
        %v6611 = vpack.c.b16 %v6377, %v6375
        %v6612 = vpack.c.b16 %v6378, %v6376
        %v6613 = vpack.c.b16 %v6381, %v6379
        %v6614 = vpack.c.b16 %v6382, %v6380
        %v6615 = vpack.c.b16 %v6385, %v6383
        %v6616 = vpack.c.b16 %v6386, %v6384
        %v6617 = vpack.c.b16 %v6389, %v6387
        %v6618 = vpack.c.b16 %v6390, %v6388
        %v6619 = vpack.c.b16 %v6393, %v6391
        %v6620 = vpack.c.b16 %v6394, %v6392
        %v6621 = vpack.c.b16 %v6397, %v6395
        %v6622 = vpack.c.b16 %v6398, %v6396
        %v6623 = vpack.c.b16 %v6401, %v6399
        %v6624 = vpack.c.b16 %v6402, %v6400
        %v6625 = vpack.c.b16 %v6405, %v6403
        %v6626 = vpack.c.b16 %v6406, %v6404
        %v6627 = vpack.c.b16 %v6409, %v6407
        %v6628 = vpack.c.b16 %v6410, %v6408
        %v6629 = vpack.c.b16 %v6413, %v6411
        %v6630 = vpack.c.b16 %v6414, %v6412
        %v6631 = vpack.c.b16 %v6417, %v6415
        %v6632 = vpack.c.b16 %v6418, %v6416
        %v6633 = vpack.c.b16 %v6421, %v6419
        %v6634 = vpack.c.b16 %v6422, %v6420
        %v6635 = vpack.c.b16 %v6425, %v6423
        %v6636 = vpack.c.b16 %v6426, %v6424
        %v6637 = vpack.c.b16 %v6429, %v6427
        %v6638 = vpack.c.b16 %v6430, %v6428
        %v6639 = vpack.c.b16 %v6433, %v6431
        %v6640 = vpack.c.b16 %v6434, %v6432
        %v6641 = vpack.c.b16 %v6437, %v6435
        %v6642 = vpack.c.b16 %v6438, %v6436
        %v6643 = vpack.c.b16 %v6441, %v6439
        %v6644 = vpack.c.b16 %v6442, %v6440
        %v6645 = vpack.c.b16 %v6445, %v6443
        %v6646 = vpack.c.b16 %v6446, %v6444
        %v6647 = vpack.c.b16 %v6449, %v6447
        %v6648 = vpack.c.b16 %v6450, %v6448
        %v6649 = vpack.c.b16 %v6453, %v6451
        %v6650 = vpack.c.b16 %v6454, %v6452
        %v6651 = vpack.c.b16 %v6457, %v6455
        %v6652 = vpack.c.b16 %v6458, %v6456
        %v6653 = vpack.c.b16 %v6461, %v6459
        %v6654 = vpack.c.b16 %v6462, %v6460
        %v6655 = vpack.c.b16 %v6465, %v6463
        %v6656 = vpack.c.b16 %v6466, %v6464
        %v6657 = vpack.c.b16 %v6469, %v6467
        %v6658 = vpack.c.b16 %v6470, %v6468
        %v6659 = vpack.c.b16 %v6473, %v6471
        %v6660 = vpack.c.b16 %v6474, %v6472
        %v6661 = vpack.c.b16 %v6477, %v6475
        %v6662 = vpack.c.b16 %v6478, %v6476
        %v6663 = vpack.c.b16 %v6481, %v6479
        %v6664 = vpack.c.b16 %v6482, %v6480
        %v6665 = vpack.c.b16 %v6485, %v6483
        %v6666 = vpack.c.b16 %v6486, %v6484
        %v6667 = vpack.c.b16 %v6489, %v6487
        %v6668 = vpack.c.b16 %v6490, %v6488
        %v6669 = vpack.c.b16 %v6493, %v6491
        %v6670 = vpack.c.b16 %v6494, %v6492
        %v6671 = vpack.c.b16 %v6497, %v6495
        %v6672 = vpack.c.b16 %v6498, %v6496
        %v6673 = vpack.c.b16 %v6501, %v6499
        %v6674 = vpack.c.b16 %v6502, %v6500
        %v6675 = vpack.c.b16 %v6505, %v6503
        %v6676 = vpack.c.b16 %v6506, %v6504
        %v6677 = vpack.c.b16 %v6509, %v6507
        %v6678 = vpack.c.b16 %v6510, %v6508
        %v6679 = vpack.c.b16 %v6513, %v6511
        %v6680 = vpack.c.b16 %v6514, %v6512
        %v6681 = vpack.c.b16 %v6517, %v6515
        %v6682 = vpack.c.b16 %v6518, %v6516
        %v6683 = vpack.c.b16 %v6521, %v6519
        %v6684 = vpack.c.b16 %v6522, %v6520
        %v6685 = vpack.c.b16 %v6525, %v6523
        %v6686 = vpack.c.b16 %v6526, %v6524
        %6847 = vmatprep.subr.bf16.mxu0 %v6542
        %6848 = vmatpush1.bf16.msra.mxu0 %v6541
        %6849 = vmatprep.subr.bf16.mxu0 %v6540
        %6850 = vmatpush1.bf16.msra.mxu0 %v6539
        %6851 = vmatprep.subr.bf16.mxu0 %v6538
        %6852 = vmatpush1.bf16.msra.mxu0 %v6537
        %6853 = vmatprep.subr.bf16.mxu0 %v6536
        %6854 = vmatpush1.bf16.msra.mxu0 %v6535
        %6855 = vmatprep.subr.bf16.mxu0 %v6534
        %6856 = vmatpush1.bf16.msra.mxu0 %v6533
        %6857 = vmatprep.subr.bf16.mxu0 %v6532
        %6858 = vmatpush1.bf16.msra.mxu0 %v6531
        %6859 = vmatprep.subr.bf16.mxu0 %v6530
        %6860 = vmatpush1.bf16.msra.mxu0 %v6529
        %6861 = vmatprep.subr.bf16.mxu0 %v6528
        %6862 = vmatpush1.bf16.msra.mxu0 %v6527
        %6863 = vmatprep.subr.bf16.mxu0 %v6558
        %6864 = vmatpush2.bf16.msra.mxu0 %v6557
        %6865 = vmatprep.subr.bf16.mxu0 %v6556
        %6866 = vmatpush2.bf16.msra.mxu0 %v6555
        %6867 = vmatprep.subr.bf16.mxu0 %v6554
        %6868 = vmatpush2.bf16.msra.mxu0 %v6553
        %6869 = vmatprep.subr.bf16.mxu0 %v6552
        %6870 = vmatpush2.bf16.msra.mxu0 %v6551
        %6871 = vmatprep.subr.bf16.mxu0 %v6550
        %6872 = vmatpush2.bf16.msra.mxu0 %v6549
        %6873 = vmatprep.subr.bf16.mxu0 %v6548
        %6874 = vmatpush2.bf16.msra.mxu0 %v6547
        %6875 = vmatprep.subr.bf16.mxu0 %v6546
        %6876 = vmatpush2.bf16.msra.mxu0 %v6545
        %6877 = vmatprep.subr.bf16.mxu0 %v6544
        %6878 = vmatpush2.bf16.msra.mxu0 %v6543
        %6879 = vmatprep.mubr.bf16.mxu0 %v5661
        %6880 = vmatmul.mubr.bf16.gmra.mxu0 %v5658
        %v6881 = vpop.f32.mrf.mxu0
        %v6882 = vadd.f32 %v6040, %v6881
        %v6883 = vpop.f32.mrf.mxu0
        %v6884 = vadd.f32 %v6044, %v6883
        %v6885 = vpop.f32.mrf.mxu0
        %v6886 = vadd.f32 %v6040, %v6885
        %v6887 = vpop.f32.mrf.mxu0
        %v6888 = vadd.f32 %v6044, %v6887
        %6889 = vmatprep.mubr.bf16.mxu0 %v5689
        %6890 = vmatmul.mubr.bf16.gmra.mxu0 %v5687
        %v6891 = vpop.f32.mrf.mxu0
        %v6892 = vadd.f32 %v6040, %v6891
        %v6893 = vpop.f32.mrf.mxu0
        %v6894 = vadd.f32 %v6044, %v6893
        %v6895 = vpop.f32.mrf.mxu0
        %v6896 = vadd.f32 %v6040, %v6895
        %v6897 = vpop.f32.mrf.mxu0
        %v6898 = vadd.f32 %v6044, %v6897
        %6899 = vmatprep.mubr.bf16.mxu0 %v5709
        %6900 = vmatmul.mubr.bf16.gmra.mxu0 %v5707
        %v6901 = vpop.f32.mrf.mxu0
        %v6902 = vadd.f32 %v6040, %v6901
        %v6903 = vpop.f32.mrf.mxu0
        %v6904 = vadd.f32 %v6044, %v6903
        %v6905 = vpop.f32.mrf.mxu0
        %v6906 = vadd.f32 %v6040, %v6905
        %v6907 = vpop.f32.mrf.mxu0
        %v6908 = vadd.f32 %v6044, %v6907
        %6909 = vmatprep.mubr.bf16.mxu0 %v5729
        %6910 = vmatmul.mubr.bf16.gmra.mxu0 %v5727
        %v6911 = vpop.f32.mrf.mxu0
        %v6912 = vadd.f32 %v6040, %v6911
        %v6913 = vpop.f32.mrf.mxu0
        %v6914 = vadd.f32 %v6044, %v6913
        %v6915 = vpop.f32.mrf.mxu0
        %v6916 = vadd.f32 %v6040, %v6915
        %v6917 = vpop.f32.mrf.mxu0
        %v6918 = vadd.f32 %v6044, %v6917
        %6919 = vmatprep.mubr.bf16.mxu0 %v5749
        %6920 = vmatmul.mubr.bf16.gmra.mxu0 %v5747
        %v6921 = vpop.f32.mrf.mxu0
        %v6922 = vadd.f32 %v6040, %v6921
        %v6923 = vpop.f32.mrf.mxu0
        %v6924 = vadd.f32 %v6044, %v6923
        %v6925 = vpop.f32.mrf.mxu0
        %v6926 = vadd.f32 %v6040, %v6925
        %v6927 = vpop.f32.mrf.mxu0
        %v6928 = vadd.f32 %v6044, %v6927
        %6929 = vmatprep.mubr.bf16.mxu0 %v5769
        %6930 = vmatmul.mubr.bf16.gmra.mxu0 %v5767
        %v6931 = vpop.f32.mrf.mxu0
        %v6932 = vadd.f32 %v6040, %v6931
        %v6933 = vpop.f32.mrf.mxu0
        %v6934 = vadd.f32 %v6044, %v6933
        %v6935 = vpop.f32.mrf.mxu0
        %v6936 = vadd.f32 %v6040, %v6935
        %v6937 = vpop.f32.mrf.mxu0
        %v6938 = vadd.f32 %v6044, %v6937
        %6939 = vmatprep.mubr.bf16.mxu0 %v5791
        %6940 = vmatmul.mubr.bf16.gmra.mxu0 %v5788
        %v6941 = vpop.f32.mrf.mxu0
        %v6942 = vadd.f32 %v6040, %v6941
        %v6943 = vpop.f32.mrf.mxu0
        %v6944 = vadd.f32 %v6044, %v6943
        %v6945 = vpop.f32.mrf.mxu0
        %v6946 = vadd.f32 %v6040, %v6945
        %v6947 = vpop.f32.mrf.mxu0
        %v6948 = vadd.f32 %v6044, %v6947
        %6949 = vmatprep.mubr.bf16.mxu0 %v5819
        %6950 = vmatmul.mubr.bf16.gmra.mxu0 %v5817
        %v6951 = vpop.f32.mrf.mxu0
        %v6952 = vadd.f32 %v6040, %v6951
        %v6953 = vpop.f32.mrf.mxu0
        %v6954 = vadd.f32 %v6044, %v6953
        %v6955 = vpop.f32.mrf.mxu0
        %v6956 = vadd.f32 %v6040, %v6955
        %v6957 = vpop.f32.mrf.mxu0
        %v6958 = vadd.f32 %v6044, %v6957
        %6959 = vmatprep.mubr.bf16.mxu0 %v5839
        %6960 = vmatmul.mubr.bf16.gmra.mxu0 %v5837
        %v6961 = vpop.f32.mrf.mxu0
        %v6962 = vadd.f32 %v6040, %v6961
        %v6963 = vpop.f32.mrf.mxu0
        %v6964 = vadd.f32 %v6044, %v6963
        %v6965 = vpop.f32.mrf.mxu0
        %v6966 = vadd.f32 %v6040, %v6965
        %v6967 = vpop.f32.mrf.mxu0
        %v6968 = vadd.f32 %v6044, %v6967
        %6969 = vmatprep.mubr.bf16.mxu0 %v5859
        %6970 = vmatmul.mubr.bf16.gmra.mxu0 %v5857
        %v6971 = vpop.f32.mrf.mxu0
        %v6972 = vadd.f32 %v6040, %v6971
        %v6973 = vpop.f32.mrf.mxu0
        %v6974 = vadd.f32 %v6044, %v6973
        %v6975 = vpop.f32.mrf.mxu0
        %v6976 = vadd.f32 %v6040, %v6975
        %v6977 = vpop.f32.mrf.mxu0
        %v6978 = vadd.f32 %v6044, %v6977
        %6979 = vmatprep.mubr.bf16.mxu0 %v5879
        %6980 = vmatmul.mubr.bf16.gmra.mxu0 %v5877
        %v6981 = vpop.f32.mrf.mxu0
        %v6982 = vadd.f32 %v6040, %v6981
        %v6983 = vpop.f32.mrf.mxu0
        %v6984 = vadd.f32 %v6044, %v6983
        %v6985 = vpop.f32.mrf.mxu0
        %v6986 = vadd.f32 %v6040, %v6985
        %v6987 = vpop.f32.mrf.mxu0
        %v6988 = vadd.f32 %v6044, %v6987
        %6989 = vmatprep.mubr.bf16.mxu0 %v5899
        %6990 = vmatmul.mubr.bf16.gmra.mxu0 %v5897
        %v6991 = vpop.f32.mrf.mxu0
        %v6992 = vadd.f32 %v6040, %v6991
        %v6993 = vpop.f32.mrf.mxu0
        %v6994 = vadd.f32 %v6044, %v6993
        %v6995 = vpop.f32.mrf.mxu0
        %v6996 = vadd.f32 %v6040, %v6995
        %v6997 = vpop.f32.mrf.mxu0
        %v6998 = vadd.f32 %v6044, %v6997
        %6999 = vdwg.mxu0
        %7000 = vmatprep.subr.bf16.mxu0 %v6574
        %7001 = vmatpush1.bf16.msra.mxu0 %v6573
        %7002 = vmatprep.subr.bf16.mxu0 %v6572
        %7003 = vmatpush1.bf16.msra.mxu0 %v6571
        %7004 = vmatprep.subr.bf16.mxu0 %v6570
        %7005 = vmatpush1.bf16.msra.mxu0 %v6569
        %7006 = vmatprep.subr.bf16.mxu0 %v6568
        %7007 = vmatpush1.bf16.msra.mxu0 %v6567
        %7008 = vmatprep.subr.bf16.mxu0 %v6566
        %7009 = vmatpush1.bf16.msra.mxu0 %v6565
        %7010 = vmatprep.subr.bf16.mxu0 %v6564
        %7011 = vmatpush1.bf16.msra.mxu0 %v6563
        %7012 = vmatprep.subr.bf16.mxu0 %v6562
        %7013 = vmatpush1.bf16.msra.mxu0 %v6561
        %7014 = vmatprep.subr.bf16.mxu0 %v6560
        %7015 = vmatpush1.bf16.msra.mxu0 %v6559
        %7016 = vmatprep.subr.bf16.mxu0 %v6590
        %7017 = vmatpush2.bf16.msra.mxu0 %v6589
        %7018 = vmatprep.subr.bf16.mxu0 %v6588
        %7019 = vmatpush2.bf16.msra.mxu0 %v6587
        %7020 = vmatprep.subr.bf16.mxu0 %v6586
        %7021 = vmatpush2.bf16.msra.mxu0 %v6585
        %7022 = vmatprep.subr.bf16.mxu0 %v6584
        %7023 = vmatpush2.bf16.msra.mxu0 %v6583
        %7024 = vmatprep.subr.bf16.mxu0 %v6582
        %7025 = vmatpush2.bf16.msra.mxu0 %v6581
        %7026 = vmatprep.subr.bf16.mxu0 %v6580
        %7027 = vmatpush2.bf16.msra.mxu0 %v6579
        %7028 = vmatprep.subr.bf16.mxu0 %v6578
        %7029 = vmatpush2.bf16.msra.mxu0 %v6577
        %7030 = vmatprep.subr.bf16.mxu0 %v6576
        %7031 = vmatpush2.bf16.msra.mxu0 %v6575
        %7032 = vmatprep.mubr.bf16.mxu0 %v5667
        %7033 = vmatmul.mubr.bf16.gmra.mxu0 %v5664
        %v7034 = vpop.f32.mrf.mxu0
        %v7035 = vadd.f32 %v6882, %v7034
        %v7036 = vpop.f32.mrf.mxu0
        %v7037 = vadd.f32 %v6884, %v7036
        %v7038 = vpop.f32.mrf.mxu0
        %v7039 = vadd.f32 %v6886, %v7038
        %v7040 = vpop.f32.mrf.mxu0
        %v7041 = vadd.f32 %v6888, %v7040
        %7042 = vmatprep.mubr.bf16.mxu0 %v5693
        %7043 = vmatmul.mubr.bf16.gmra.mxu0 %v5691
        %v7044 = vpop.f32.mrf.mxu0
        %v7045 = vadd.f32 %v6892, %v7044
        %v7046 = vpop.f32.mrf.mxu0
        %v7047 = vadd.f32 %v6894, %v7046
        %v7048 = vpop.f32.mrf.mxu0
        %v7049 = vadd.f32 %v6896, %v7048
        %v7050 = vpop.f32.mrf.mxu0
        %v7051 = vadd.f32 %v6898, %v7050
        %7052 = vmatprep.mubr.bf16.mxu0 %v5713
        %7053 = vmatmul.mubr.bf16.gmra.mxu0 %v5711
        %v7054 = vpop.f32.mrf.mxu0
        %v7055 = vadd.f32 %v6902, %v7054
        %v7056 = vpop.f32.mrf.mxu0
        %v7057 = vadd.f32 %v6904, %v7056
        %v7058 = vpop.f32.mrf.mxu0
        %v7059 = vadd.f32 %v6906, %v7058
        %v7060 = vpop.f32.mrf.mxu0
        %v7061 = vadd.f32 %v6908, %v7060
        %7062 = vmatprep.mubr.bf16.mxu0 %v5733
        %7063 = vmatmul.mubr.bf16.gmra.mxu0 %v5731
        %v7064 = vpop.f32.mrf.mxu0
        %v7065 = vadd.f32 %v6912, %v7064
        %v7066 = vpop.f32.mrf.mxu0
        %v7067 = vadd.f32 %v6914, %v7066
        %v7068 = vpop.f32.mrf.mxu0
        %v7069 = vadd.f32 %v6916, %v7068
        %v7070 = vpop.f32.mrf.mxu0
        %v7071 = vadd.f32 %v6918, %v7070
        %7072 = vmatprep.mubr.bf16.mxu0 %v5753
        %7073 = vmatmul.mubr.bf16.gmra.mxu0 %v5751
        %v7074 = vpop.f32.mrf.mxu0
        %v7075 = vadd.f32 %v6922, %v7074
        %v7076 = vpop.f32.mrf.mxu0
        %v7077 = vadd.f32 %v6924, %v7076
        %v7078 = vpop.f32.mrf.mxu0
        %v7079 = vadd.f32 %v6926, %v7078
        %v7080 = vpop.f32.mrf.mxu0
        %v7081 = vadd.f32 %v6928, %v7080
        %7082 = vmatprep.mubr.bf16.mxu0 %v5773
        %7083 = vmatmul.mubr.bf16.gmra.mxu0 %v5771
        %v7084 = vpop.f32.mrf.mxu0
        %v7085 = vadd.f32 %v6932, %v7084
        %v7086 = vpop.f32.mrf.mxu0
        %v7087 = vadd.f32 %v6934, %v7086
        %v7088 = vpop.f32.mrf.mxu0
        %v7089 = vadd.f32 %v6936, %v7088
        %v7090 = vpop.f32.mrf.mxu0
        %v7091 = vadd.f32 %v6938, %v7090
        %7092 = vmatprep.mubr.bf16.mxu0 %v5797
        %7093 = vmatmul.mubr.bf16.gmra.mxu0 %v5794
        %v7094 = vpop.f32.mrf.mxu0
        %v7095 = vadd.f32 %v6942, %v7094
        %v7096 = vpop.f32.mrf.mxu0
        %v7097 = vadd.f32 %v6944, %v7096
        %v7098 = vpop.f32.mrf.mxu0
        %v7099 = vadd.f32 %v6946, %v7098
        %v7100 = vpop.f32.mrf.mxu0
        %v7101 = vadd.f32 %v6948, %v7100
        %7102 = vmatprep.mubr.bf16.mxu0 %v5823
        %7103 = vmatmul.mubr.bf16.gmra.mxu0 %v5821
        %v7104 = vpop.f32.mrf.mxu0
        %v7105 = vadd.f32 %v6952, %v7104
        %v7106 = vpop.f32.mrf.mxu0
        %v7107 = vadd.f32 %v6954, %v7106
        %v7108 = vpop.f32.mrf.mxu0
        %v7109 = vadd.f32 %v6956, %v7108
        %v7110 = vpop.f32.mrf.mxu0
        %v7111 = vadd.f32 %v6958, %v7110
        %7112 = vmatprep.mubr.bf16.mxu0 %v5843
        %7113 = vmatmul.mubr.bf16.gmra.mxu0 %v5841
        %v7114 = vpop.f32.mrf.mxu0
        %v7115 = vadd.f32 %v6962, %v7114
        %v7116 = vpop.f32.mrf.mxu0
        %v7117 = vadd.f32 %v6964, %v7116
        %v7118 = vpop.f32.mrf.mxu0
        %v7119 = vadd.f32 %v6966, %v7118
        %v7120 = vpop.f32.mrf.mxu0
        %v7121 = vadd.f32 %v6968, %v7120
        %7122 = vmatprep.mubr.bf16.mxu0 %v5863
        %7123 = vmatmul.mubr.bf16.gmra.mxu0 %v5861
        %v7124 = vpop.f32.mrf.mxu0
        %v7125 = vadd.f32 %v6972, %v7124
        %v7126 = vpop.f32.mrf.mxu0
        %v7127 = vadd.f32 %v6974, %v7126
        %v7128 = vpop.f32.mrf.mxu0
        %v7129 = vadd.f32 %v6976, %v7128
        %v7130 = vpop.f32.mrf.mxu0
        %v7131 = vadd.f32 %v6978, %v7130
        %7132 = vmatprep.mubr.bf16.mxu0 %v5883
        %7133 = vmatmul.mubr.bf16.gmra.mxu0 %v5881
        %v7134 = vpop.f32.mrf.mxu0
        %v7135 = vadd.f32 %v6982, %v7134
        %v7136 = vpop.f32.mrf.mxu0
        %v7137 = vadd.f32 %v6984, %v7136
        %v7138 = vpop.f32.mrf.mxu0
        %v7139 = vadd.f32 %v6986, %v7138
        %v7140 = vpop.f32.mrf.mxu0
        %v7141 = vadd.f32 %v6988, %v7140
        %7142 = vmatprep.mubr.bf16.mxu0 %v5903
        %7143 = vmatmul.mubr.bf16.gmra.mxu0 %v5901
        %v7144 = vpop.f32.mrf.mxu0
        %v7145 = vadd.f32 %v6992, %v7144
        %v7146 = vpop.f32.mrf.mxu0
        %v7147 = vadd.f32 %v6994, %v7146
        %v7148 = vpop.f32.mrf.mxu0
        %v7149 = vadd.f32 %v6996, %v7148
        %v7150 = vpop.f32.mrf.mxu0
        %v7151 = vadd.f32 %v6998, %v7150
        %7152 = vdwg.mxu0
        %7153 = vmatprep.subr.bf16.mxu0 %v6606
        %7154 = vmatpush1.bf16.msra.mxu0 %v6605
        %7155 = vmatprep.subr.bf16.mxu0 %v6604
        %7156 = vmatpush1.bf16.msra.mxu0 %v6603
        %7157 = vmatprep.subr.bf16.mxu0 %v6602
        %7158 = vmatpush1.bf16.msra.mxu0 %v6601
        %7159 = vmatprep.subr.bf16.mxu0 %v6600
        %7160 = vmatpush1.bf16.msra.mxu0 %v6599
        %7161 = vmatprep.subr.bf16.mxu0 %v6598
        %7162 = vmatpush1.bf16.msra.mxu0 %v6597
        %7163 = vmatprep.subr.bf16.mxu0 %v6596
        %7164 = vmatpush1.bf16.msra.mxu0 %v6595
        %7165 = vmatprep.subr.bf16.mxu0 %v6594
        %7166 = vmatpush1.bf16.msra.mxu0 %v6593
        %7167 = vmatprep.subr.bf16.mxu0 %v6592
        %7168 = vmatpush1.bf16.msra.mxu0 %v6591
        %7169 = vmatprep.subr.bf16.mxu0 %v6622
        %7170 = vmatpush2.bf16.msra.mxu0 %v6621
        %7171 = vmatprep.subr.bf16.mxu0 %v6620
        %7172 = vmatpush2.bf16.msra.mxu0 %v6619
        %7173 = vmatprep.subr.bf16.mxu0 %v6618
        %7174 = vmatpush2.bf16.msra.mxu0 %v6617
        %7175 = vmatprep.subr.bf16.mxu0 %v6616
        %7176 = vmatpush2.bf16.msra.mxu0 %v6615
        %7177 = vmatprep.subr.bf16.mxu0 %v6614
        %7178 = vmatpush2.bf16.msra.mxu0 %v6613
        %7179 = vmatprep.subr.bf16.mxu0 %v6612
        %7180 = vmatpush2.bf16.msra.mxu0 %v6611
        %7181 = vmatprep.subr.bf16.mxu0 %v6610
        %7182 = vmatpush2.bf16.msra.mxu0 %v6609
        %7183 = vmatprep.subr.bf16.mxu0 %v6608
        %7184 = vmatpush2.bf16.msra.mxu0 %v6607
        %7185 = vmatprep.mubr.bf16.mxu0 %v5673
        %7186 = vmatmul.mubr.bf16.gmra.mxu0 %v5670
        %v7187 = vpop.f32.mrf.mxu0
        %v7188 = vadd.f32 %v7035, %v7187
        %v7189 = vpop.f32.mrf.mxu0
        %v7190 = vadd.f32 %v7037, %v7189
        %v7191 = vpop.f32.mrf.mxu0
        %v7192 = vadd.f32 %v7039, %v7191
        %v7193 = vpop.f32.mrf.mxu0
        %v7194 = vadd.f32 %v7041, %v7193
        %7195 = vmatprep.mubr.bf16.mxu0 %v5697
        %7196 = vmatmul.mubr.bf16.gmra.mxu0 %v5695
        %v7197 = vpop.f32.mrf.mxu0
        %v7198 = vadd.f32 %v7045, %v7197
        %v7199 = vpop.f32.mrf.mxu0
        %v7200 = vadd.f32 %v7047, %v7199
        %v7201 = vpop.f32.mrf.mxu0
        %v7202 = vadd.f32 %v7049, %v7201
        %v7203 = vpop.f32.mrf.mxu0
        %v7204 = vadd.f32 %v7051, %v7203
        %7205 = vmatprep.mubr.bf16.mxu0 %v5717
        %7206 = vmatmul.mubr.bf16.gmra.mxu0 %v5715
        %v7207 = vpop.f32.mrf.mxu0
        %v7208 = vadd.f32 %v7055, %v7207
        %v7209 = vpop.f32.mrf.mxu0
        %v7210 = vadd.f32 %v7057, %v7209
        %v7211 = vpop.f32.mrf.mxu0
        %v7212 = vadd.f32 %v7059, %v7211
        %v7213 = vpop.f32.mrf.mxu0
        %v7214 = vadd.f32 %v7061, %v7213
        %7215 = vmatprep.mubr.bf16.mxu0 %v5737
        %7216 = vmatmul.mubr.bf16.gmra.mxu0 %v5735
        %v7217 = vpop.f32.mrf.mxu0
        %v7218 = vadd.f32 %v7065, %v7217
        %v7219 = vpop.f32.mrf.mxu0
        %v7220 = vadd.f32 %v7067, %v7219
        %v7221 = vpop.f32.mrf.mxu0
        %v7222 = vadd.f32 %v7069, %v7221
        %v7223 = vpop.f32.mrf.mxu0
        %v7224 = vadd.f32 %v7071, %v7223
        %7225 = vmatprep.mubr.bf16.mxu0 %v5757
        %7226 = vmatmul.mubr.bf16.gmra.mxu0 %v5755
        %v7227 = vpop.f32.mrf.mxu0
        %v7228 = vadd.f32 %v7075, %v7227
        %v7229 = vpop.f32.mrf.mxu0
        %v7230 = vadd.f32 %v7077, %v7229
        %v7231 = vpop.f32.mrf.mxu0
        %v7232 = vadd.f32 %v7079, %v7231
        %v7233 = vpop.f32.mrf.mxu0
        %v7234 = vadd.f32 %v7081, %v7233
        %7235 = vmatprep.mubr.bf16.mxu0 %v5777
        %7236 = vmatmul.mubr.bf16.gmra.mxu0 %v5775
        %v7237 = vpop.f32.mrf.mxu0
        %v7238 = vadd.f32 %v7085, %v7237
        %v7239 = vpop.f32.mrf.mxu0
        %v7240 = vadd.f32 %v7087, %v7239
        %v7241 = vpop.f32.mrf.mxu0
        %v7242 = vadd.f32 %v7089, %v7241
        %v7243 = vpop.f32.mrf.mxu0
        %v7244 = vadd.f32 %v7091, %v7243
        %7245 = vmatprep.mubr.bf16.mxu0 %v5803
        %7246 = vmatmul.mubr.bf16.gmra.mxu0 %v5800
        %v7247 = vpop.f32.mrf.mxu0
        %v7248 = vadd.f32 %v7095, %v7247
        %v7249 = vpop.f32.mrf.mxu0
        %v7250 = vadd.f32 %v7097, %v7249
        %v7251 = vpop.f32.mrf.mxu0
        %v7252 = vadd.f32 %v7099, %v7251
        %v7253 = vpop.f32.mrf.mxu0
        %v7254 = vadd.f32 %v7101, %v7253
        %7255 = vmatprep.mubr.bf16.mxu0 %v5827
        %7256 = vmatmul.mubr.bf16.gmra.mxu0 %v5825
        %v7257 = vpop.f32.mrf.mxu0
        %v7258 = vadd.f32 %v7105, %v7257
        %v7259 = vpop.f32.mrf.mxu0
        %v7260 = vadd.f32 %v7107, %v7259
        %v7261 = vpop.f32.mrf.mxu0
        %v7262 = vadd.f32 %v7109, %v7261
        %v7263 = vpop.f32.mrf.mxu0
        %v7264 = vadd.f32 %v7111, %v7263
        %7265 = vmatprep.mubr.bf16.mxu0 %v5847
        %7266 = vmatmul.mubr.bf16.gmra.mxu0 %v5845
        %v7267 = vpop.f32.mrf.mxu0
        %v7268 = vadd.f32 %v7115, %v7267
        %v7269 = vpop.f32.mrf.mxu0
        %v7270 = vadd.f32 %v7117, %v7269
        %v7271 = vpop.f32.mrf.mxu0
        %v7272 = vadd.f32 %v7119, %v7271
        %v7273 = vpop.f32.mrf.mxu0
        %v7274 = vadd.f32 %v7121, %v7273
        %7275 = vmatprep.mubr.bf16.mxu0 %v5867
        %7276 = vmatmul.mubr.bf16.gmra.mxu0 %v5865
        %v7277 = vpop.f32.mrf.mxu0
        %v7278 = vadd.f32 %v7125, %v7277
        %v7279 = vpop.f32.mrf.mxu0
        %v7280 = vadd.f32 %v7127, %v7279
        %v7281 = vpop.f32.mrf.mxu0
        %v7282 = vadd.f32 %v7129, %v7281
        %v7283 = vpop.f32.mrf.mxu0
        %v7284 = vadd.f32 %v7131, %v7283
        %7285 = vmatprep.mubr.bf16.mxu0 %v5887
        %7286 = vmatmul.mubr.bf16.gmra.mxu0 %v5885
        %v7287 = vpop.f32.mrf.mxu0
        %v7288 = vadd.f32 %v7135, %v7287
        %v7289 = vpop.f32.mrf.mxu0
        %v7290 = vadd.f32 %v7137, %v7289
        %v7291 = vpop.f32.mrf.mxu0
        %v7292 = vadd.f32 %v7139, %v7291
        %v7293 = vpop.f32.mrf.mxu0
        %v7294 = vadd.f32 %v7141, %v7293
        %7295 = vmatprep.mubr.bf16.mxu0 %v5907
        %7296 = vmatmul.mubr.bf16.gmra.mxu0 %v5905
        %v7297 = vpop.f32.mrf.mxu0
        %v7298 = vadd.f32 %v7145, %v7297
        %v7299 = vpop.f32.mrf.mxu0
        %v7300 = vadd.f32 %v7147, %v7299
        %v7301 = vpop.f32.mrf.mxu0
        %v7302 = vadd.f32 %v7149, %v7301
        %v7303 = vpop.f32.mrf.mxu0
        %v7304 = vadd.f32 %v7151, %v7303
        %7305 = vdwg.mxu0
        %7306 = vmatprep.subr.bf16.mxu0 %v6638
        %7307 = vmatpush1.bf16.msra.mxu0 %v6637
        %7308 = vmatprep.subr.bf16.mxu0 %v6636
        %7309 = vmatpush1.bf16.msra.mxu0 %v6635
        %7310 = vmatprep.subr.bf16.mxu0 %v6634
        %7311 = vmatpush1.bf16.msra.mxu0 %v6633
        %7312 = vmatprep.subr.bf16.mxu0 %v6632
        %7313 = vmatpush1.bf16.msra.mxu0 %v6631
        %7314 = vmatprep.subr.bf16.mxu0 %v6630
        %7315 = vmatpush1.bf16.msra.mxu0 %v6629
        %7316 = vmatprep.subr.bf16.mxu0 %v6628
        %7317 = vmatpush1.bf16.msra.mxu0 %v6627
        %7318 = vmatprep.subr.bf16.mxu0 %v6626
        %7319 = vmatpush1.bf16.msra.mxu0 %v6625
        %7320 = vmatprep.subr.bf16.mxu0 %v6624
        %7321 = vmatpush1.bf16.msra.mxu0 %v6623
        %7322 = vmatprep.subr.bf16.mxu0 %v6654
        %7323 = vmatpush2.bf16.msra.mxu0 %v6653
        %7324 = vmatprep.subr.bf16.mxu0 %v6652
        %7325 = vmatpush2.bf16.msra.mxu0 %v6651
        %7326 = vmatprep.subr.bf16.mxu0 %v6650
        %7327 = vmatpush2.bf16.msra.mxu0 %v6649
        %7328 = vmatprep.subr.bf16.mxu0 %v6648
        %7329 = vmatpush2.bf16.msra.mxu0 %v6647
        %7330 = vmatprep.subr.bf16.mxu0 %v6646
        %7331 = vmatpush2.bf16.msra.mxu0 %v6645
        %7332 = vmatprep.subr.bf16.mxu0 %v6644
        %7333 = vmatpush2.bf16.msra.mxu0 %v6643
        %7334 = vmatprep.subr.bf16.mxu0 %v6642
        %7335 = vmatpush2.bf16.msra.mxu0 %v6641
        %7336 = vmatprep.subr.bf16.mxu0 %v6640
        %7337 = vmatpush2.bf16.msra.mxu0 %v6639
        %7338 = vmatprep.mubr.bf16.mxu0 %v5679
        %7339 = vmatmul.mubr.bf16.gmra.mxu0 %v5676
        %v7340 = vpop.f32.mrf.mxu0
        %v7341 = vadd.f32 %v7188, %v7340
        %v7342 = vpop.f32.mrf.mxu0
        %v7343 = vadd.f32 %v7190, %v7342
        %v7344 = vpop.f32.mrf.mxu0
        %v7345 = vadd.f32 %v7192, %v7344
        %v7346 = vpop.f32.mrf.mxu0
        %v7347 = vadd.f32 %v7194, %v7346
        %7348 = vmatprep.mubr.bf16.mxu0 %v5701
        %7349 = vmatmul.mubr.bf16.gmra.mxu0 %v5699
        %v7350 = vpop.f32.mrf.mxu0
        %v7351 = vadd.f32 %v7198, %v7350
        %v7352 = vpop.f32.mrf.mxu0
        %v7353 = vadd.f32 %v7200, %v7352
        %v7354 = vpop.f32.mrf.mxu0
        %v7355 = vadd.f32 %v7202, %v7354
        %v7356 = vpop.f32.mrf.mxu0
        %v7357 = vadd.f32 %v7204, %v7356
        %7358 = vmatprep.mubr.bf16.mxu0 %v5721
        %7359 = vmatmul.mubr.bf16.gmra.mxu0 %v5719
        %v7360 = vpop.f32.mrf.mxu0
        %v7361 = vadd.f32 %v7208, %v7360
        %v7362 = vpop.f32.mrf.mxu0
        %v7363 = vadd.f32 %v7210, %v7362
        %v7364 = vpop.f32.mrf.mxu0
        %v7365 = vadd.f32 %v7212, %v7364
        %v7366 = vpop.f32.mrf.mxu0
        %v7367 = vadd.f32 %v7214, %v7366
        %7368 = vmatprep.mubr.bf16.mxu0 %v5741
        %7369 = vmatmul.mubr.bf16.gmra.mxu0 %v5739
        %v7370 = vpop.f32.mrf.mxu0
        %v7371 = vadd.f32 %v7218, %v7370
        %v7372 = vpop.f32.mrf.mxu0
        %v7373 = vadd.f32 %v7220, %v7372
        %v7374 = vpop.f32.mrf.mxu0
        %v7375 = vadd.f32 %v7222, %v7374
        %v7376 = vpop.f32.mrf.mxu0
        %v7377 = vadd.f32 %v7224, %v7376
        %7378 = vmatprep.mubr.bf16.mxu0 %v5761
        %7379 = vmatmul.mubr.bf16.gmra.mxu0 %v5759
        %v7380 = vpop.f32.mrf.mxu0
        %v7381 = vadd.f32 %v7228, %v7380
        %v7382 = vpop.f32.mrf.mxu0
        %v7383 = vadd.f32 %v7230, %v7382
        %v7384 = vpop.f32.mrf.mxu0
        %v7385 = vadd.f32 %v7232, %v7384
        %v7386 = vpop.f32.mrf.mxu0
        %v7387 = vadd.f32 %v7234, %v7386
        %7388 = vmatprep.mubr.bf16.mxu0 %v5781
        %7389 = vmatmul.mubr.bf16.gmra.mxu0 %v5779
        %v7390 = vpop.f32.mrf.mxu0
        %v7391 = vadd.f32 %v7238, %v7390
        %v7392 = vpop.f32.mrf.mxu0
        %v7393 = vadd.f32 %v7240, %v7392
        %v7394 = vpop.f32.mrf.mxu0
        %v7395 = vadd.f32 %v7242, %v7394
        %v7396 = vpop.f32.mrf.mxu0
        %v7397 = vadd.f32 %v7244, %v7396
        %7398 = vmatprep.mubr.bf16.mxu0 %v5809
        %7399 = vmatmul.mubr.bf16.gmra.mxu0 %v5806
        %v7400 = vpop.f32.mrf.mxu0
        %v7401 = vadd.f32 %v7248, %v7400
        %v7402 = vpop.f32.mrf.mxu0
        %v7403 = vadd.f32 %v7250, %v7402
        %v7404 = vpop.f32.mrf.mxu0
        %v7405 = vadd.f32 %v7252, %v7404
        %v7406 = vpop.f32.mrf.mxu0
        %v7407 = vadd.f32 %v7254, %v7406
        %7408 = vmatprep.mubr.bf16.mxu0 %v5831
        %7409 = vmatmul.mubr.bf16.gmra.mxu0 %v5829
        %v7410 = vpop.f32.mrf.mxu0
        %v7411 = vadd.f32 %v7258, %v7410
        %v7412 = vpop.f32.mrf.mxu0
        %v7413 = vadd.f32 %v7260, %v7412
        %v7414 = vpop.f32.mrf.mxu0
        %v7415 = vadd.f32 %v7262, %v7414
        %v7416 = vpop.f32.mrf.mxu0
        %v7417 = vadd.f32 %v7264, %v7416
        %7418 = vmatprep.mubr.bf16.mxu0 %v5851
        %7419 = vmatmul.mubr.bf16.gmra.mxu0 %v5849
        %v7420 = vpop.f32.mrf.mxu0
        %v7421 = vadd.f32 %v7268, %v7420
        %v7422 = vpop.f32.mrf.mxu0
        %v7423 = vadd.f32 %v7270, %v7422
        %v7424 = vpop.f32.mrf.mxu0
        %v7425 = vadd.f32 %v7272, %v7424
        %v7426 = vpop.f32.mrf.mxu0
        %v7427 = vadd.f32 %v7274, %v7426
        %7428 = vmatprep.mubr.bf16.mxu0 %v5871
        %7429 = vmatmul.mubr.bf16.gmra.mxu0 %v5869
        %v7430 = vpop.f32.mrf.mxu0
        %v7431 = vadd.f32 %v7278, %v7430
        %v7432 = vpop.f32.mrf.mxu0
        %v7433 = vadd.f32 %v7280, %v7432
        %v7434 = vpop.f32.mrf.mxu0
        %v7435 = vadd.f32 %v7282, %v7434
        %v7436 = vpop.f32.mrf.mxu0
        %v7437 = vadd.f32 %v7284, %v7436
        %7438 = vmatprep.mubr.bf16.mxu0 %v5891
        %7439 = vmatmul.mubr.bf16.gmra.mxu0 %v5889
        %v7440 = vpop.f32.mrf.mxu0
        %v7441 = vadd.f32 %v7288, %v7440
        %v7442 = vpop.f32.mrf.mxu0
        %v7443 = vadd.f32 %v7290, %v7442
        %v7444 = vpop.f32.mrf.mxu0
        %v7445 = vadd.f32 %v7292, %v7444
        %v7446 = vpop.f32.mrf.mxu0
        %v7447 = vadd.f32 %v7294, %v7446
        %7448 = vmatprep.mubr.bf16.mxu0 %v5911
        %7449 = vmatmul.mubr.bf16.gmra.mxu0 %v5909
        %v7450 = vpop.f32.mrf.mxu0
        %v7451 = vadd.f32 %v7298, %v7450
        %v7452 = vpop.f32.mrf.mxu0
        %v7453 = vadd.f32 %v7300, %v7452
        %v7454 = vpop.f32.mrf.mxu0
        %v7455 = vadd.f32 %v7302, %v7454
        %v7456 = vpop.f32.mrf.mxu0
        %v7457 = vadd.f32 %v7304, %v7456
        %7458 = vdwg.mxu0
        %7459 = vmatprep.subr.bf16.mxu0 %v6670
        %7460 = vmatpush1.bf16.msra.mxu0 %v6669
        %7461 = vmatprep.subr.bf16.mxu0 %v6668
        %7462 = vmatpush1.bf16.msra.mxu0 %v6667
        %7463 = vmatprep.subr.bf16.mxu0 %v6666
        %7464 = vmatpush1.bf16.msra.mxu0 %v6665
        %7465 = vmatprep.subr.bf16.mxu0 %v6664
        %7466 = vmatpush1.bf16.msra.mxu0 %v6663
        %7467 = vmatprep.subr.bf16.mxu0 %v6662
        %7468 = vmatpush1.bf16.msra.mxu0 %v6661
        %7469 = vmatprep.subr.bf16.mxu0 %v6660
        %7470 = vmatpush1.bf16.msra.mxu0 %v6659
        %7471 = vmatprep.subr.bf16.mxu0 %v6658
        %7472 = vmatpush1.bf16.msra.mxu0 %v6657
        %7473 = vmatprep.subr.bf16.mxu0 %v6656
        %7474 = vmatpush1.bf16.msra.mxu0 %v6655
        %7475 = vmatprep.subr.bf16.mxu0 %v6686
        %7476 = vmatpush2.bf16.msra.mxu0 %v6685
        %7477 = vmatprep.subr.bf16.mxu0 %v6684
        %7478 = vmatpush2.bf16.msra.mxu0 %v6683
        %7479 = vmatprep.subr.bf16.mxu0 %v6682
        %7480 = vmatpush2.bf16.msra.mxu0 %v6681
        %7481 = vmatprep.subr.bf16.mxu0 %v6680
        %7482 = vmatpush2.bf16.msra.mxu0 %v6679
        %7483 = vmatprep.subr.bf16.mxu0 %v6678
        %7484 = vmatpush2.bf16.msra.mxu0 %v6677
        %7485 = vmatprep.subr.bf16.mxu0 %v6676
        %7486 = vmatpush2.bf16.msra.mxu0 %v6675
        %7487 = vmatprep.subr.bf16.mxu0 %v6674
        %7488 = vmatpush2.bf16.msra.mxu0 %v6673
        %7489 = vmatprep.subr.bf16.mxu0 %v6672
        %7490 = vmatpush2.bf16.msra.mxu0 %v6671
        %7491 = vmatprep.mubr.bf16.mxu0 %v5685
        %7492 = vmatmul.mubr.bf16.gmra.mxu0 %v5682
        %v7493 = vpop.f32.mrf.mxu0
        %v7494 = vadd.f32 %v7341, %v7493
        %v7495 = vpop.f32.mrf.mxu0
        %v7496 = vadd.f32 %v7343, %v7495
        %v7497 = vpop.f32.mrf.mxu0
        %v7498 = vadd.f32 %v7345, %v7497
        %v7499 = vpop.f32.mrf.mxu0
        %v7500 = vadd.f32 %v7347, %v7499
        %7501 = vmatprep.mubr.bf16.mxu0 %v5705
        %7502 = vmatmul.mubr.bf16.gmra.mxu0 %v5703
        %v7503 = vpop.f32.mrf.mxu0
        %v7504 = vadd.f32 %v7351, %v7503
        %v7505 = vpop.f32.mrf.mxu0
        %v7506 = vadd.f32 %v7353, %v7505
        %v7507 = vpop.f32.mrf.mxu0
        %v7508 = vadd.f32 %v7355, %v7507
        %v7509 = vpop.f32.mrf.mxu0
        %v7510 = vadd.f32 %v7357, %v7509
        %7511 = vmatprep.mubr.bf16.mxu0 %v5725
        %7512 = vmatmul.mubr.bf16.gmra.mxu0 %v5723
        %v7513 = vpop.f32.mrf.mxu0
        %v7514 = vadd.f32 %v7361, %v7513
        %v7515 = vpop.f32.mrf.mxu0
        %v7516 = vadd.f32 %v7363, %v7515
        %v7517 = vpop.f32.mrf.mxu0
        %v7518 = vadd.f32 %v7365, %v7517
        %v7519 = vpop.f32.mrf.mxu0
        %v7520 = vadd.f32 %v7367, %v7519
        %7521 = vmatprep.mubr.bf16.mxu0 %v5745
        %7522 = vmatmul.mubr.bf16.gmra.mxu0 %v5743
        %v7523 = vpop.f32.mrf.mxu0
        %v7524 = vadd.f32 %v7371, %v7523
        %v7525 = vpop.f32.mrf.mxu0
        %v7526 = vadd.f32 %v7373, %v7525
        %v7527 = vpop.f32.mrf.mxu0
        %v7528 = vadd.f32 %v7375, %v7527
        %v7529 = vpop.f32.mrf.mxu0
        %v7530 = vadd.f32 %v7377, %v7529
        %7531 = vmatprep.mubr.bf16.mxu0 %v5765
        %7532 = vmatmul.mubr.bf16.gmra.mxu0 %v5763
        %v7533 = vpop.f32.mrf.mxu0
        %v7534 = vadd.f32 %v7381, %v7533
        %v7535 = vpop.f32.mrf.mxu0
        %v7536 = vadd.f32 %v7383, %v7535
        %v7537 = vpop.f32.mrf.mxu0
        %v7538 = vadd.f32 %v7385, %v7537
        %v7539 = vpop.f32.mrf.mxu0
        %v7540 = vadd.f32 %v7387, %v7539
        %7541 = vmatprep.mubr.bf16.mxu0 %v5785
        %7542 = vmatmul.mubr.bf16.gmra.mxu0 %v5783
        %v7543 = vpop.f32.mrf.mxu0
        %v7544 = vadd.f32 %v7391, %v7543
        %v7545 = vpop.f32.mrf.mxu0
        %v7546 = vadd.f32 %v7393, %v7545
        %v7547 = vpop.f32.mrf.mxu0
        %v7548 = vadd.f32 %v7395, %v7547
        %v7549 = vpop.f32.mrf.mxu0
        %v7550 = vadd.f32 %v7397, %v7549
        %7551 = vmatprep.mubr.bf16.mxu0 %v5815
        %7552 = vmatmul.mubr.bf16.gmra.mxu0 %v5812
        %v7553 = vpop.f32.mrf.mxu0
        %v7554 = vadd.f32 %v7401, %v7553
        %v7555 = vpop.f32.mrf.mxu0
        %v7556 = vadd.f32 %v7403, %v7555
        %v7557 = vpop.f32.mrf.mxu0
        %v7558 = vadd.f32 %v7405, %v7557
        %v7559 = vpop.f32.mrf.mxu0
        %v7560 = vadd.f32 %v7407, %v7559
        %7561 = vmatprep.mubr.bf16.mxu0 %v5835
        %7562 = vmatmul.mubr.bf16.gmra.mxu0 %v5833
        %v7563 = vpop.f32.mrf.mxu0
        %v7564 = vadd.f32 %v7411, %v7563
        %v7565 = vpop.f32.mrf.mxu0
        %v7566 = vadd.f32 %v7413, %v7565
        %v7567 = vpop.f32.mrf.mxu0
        %v7568 = vadd.f32 %v7415, %v7567
        %v7569 = vpop.f32.mrf.mxu0
        %v7570 = vadd.f32 %v7417, %v7569
        %7571 = vmatprep.mubr.bf16.mxu0 %v5855
        %7572 = vmatmul.mubr.bf16.gmra.mxu0 %v5853
        %v7573 = vpop.f32.mrf.mxu0
        %v7574 = vadd.f32 %v7421, %v7573
        %v7575 = vpop.f32.mrf.mxu0
        %v7576 = vadd.f32 %v7423, %v7575
        %v7577 = vpop.f32.mrf.mxu0
        %v7578 = vadd.f32 %v7425, %v7577
        %v7579 = vpop.f32.mrf.mxu0
        %v7580 = vadd.f32 %v7427, %v7579
        %7581 = vmatprep.mubr.bf16.mxu0 %v5875
        %7582 = vmatmul.mubr.bf16.gmra.mxu0 %v5873
        %v7583 = vpop.f32.mrf.mxu0
        %v7584 = vadd.f32 %v7431, %v7583
        %v7585 = vpop.f32.mrf.mxu0
        %v7586 = vadd.f32 %v7433, %v7585
        %v7587 = vpop.f32.mrf.mxu0
        %v7588 = vadd.f32 %v7435, %v7587
        %v7589 = vpop.f32.mrf.mxu0
        %v7590 = vadd.f32 %v7437, %v7589
        %7591 = vmatprep.mubr.bf16.mxu0 %v5895
        %7592 = vmatmul.mubr.bf16.gmra.mxu0 %v5893
        %v7593 = vpop.f32.mrf.mxu0
        %v7594 = vadd.f32 %v7441, %v7593
        %v7595 = vpop.f32.mrf.mxu0
        %v7596 = vadd.f32 %v7443, %v7595
        %v7597 = vpop.f32.mrf.mxu0
        %v7598 = vadd.f32 %v7445, %v7597
        %v7599 = vpop.f32.mrf.mxu0
        %v7600 = vadd.f32 %v7447, %v7599
        %7601 = vmatprep.mubr.bf16.mxu0 %v5915
        %7602 = vmatmul.mubr.bf16.gmra.mxu0 %v5913
        %v7603 = vpop.f32.mrf.mxu0
        %v7604 = vadd.f32 %v7451, %v7603
        %v7605 = vpop.f32.mrf.mxu0
        %v7606 = vadd.f32 %v7453, %v7605
        %v7607 = vpop.f32.mrf.mxu0
        %v7608 = vadd.f32 %v7455, %v7607
        %v7609 = vpop.f32.mrf.mxu0
        %v7610 = vadd.f32 %v7457, %v7609
        %7611 = vdwg.mxu0
        %v7612 = vmul.f32 %v7494, %v7494
        %v7613 = vmul.f32 %v7496, %v7496
        %v7614 = vmul.f32 %v7498, %v7498
        %v7615 = vmul.f32 %v7500, %v7500
        %v7616 = vmul.f32 %v7504, %v7504
        %v7617 = vmul.f32 %v7506, %v7506
        %v7618 = vmul.f32 %v7508, %v7508
        %v7619 = vmul.f32 %v7510, %v7510
        %v7620 = vmul.f32 %v7514, %v7514
        %v7621 = vmul.f32 %v7516, %v7516
        %v7622 = vmul.f32 %v7518, %v7518
        %v7623 = vmul.f32 %v7520, %v7520
        %v7624 = vmul.f32 %v7524, %v7524
        %v7625 = vmul.f32 %v7526, %v7526
        %v7626 = vmul.f32 %v7528, %v7528
        %v7627 = vmul.f32 %v7530, %v7530
        %v7628 = vmul.f32 %v7534, %v7534
        %v7629 = vmul.f32 %v7536, %v7536
        %v7630 = vmul.f32 %v7538, %v7538
        %v7631 = vmul.f32 %v7540, %v7540
        %v7632 = vmul.f32 %v7544, %v7544
        %v7633 = vmul.f32 %v7546, %v7546
        %v7634 = vmul.f32 %v7548, %v7548
        %v7635 = vmul.f32 %v7550, %v7550
        %v7636 = vmul.f32 %v7554, %v7554
        %v7637 = vmul.f32 %v7556, %v7556
        %v7638 = vmul.f32 %v7558, %v7558
        %v7639 = vmul.f32 %v7560, %v7560
        %v7640 = vmul.f32 %v7564, %v7564
        %v7641 = vmul.f32 %v7566, %v7566
        %v7642 = vmul.f32 %v7568, %v7568
        %v7643 = vmul.f32 %v7570, %v7570
        %v7644 = vmul.f32 %v7574, %v7574
        %v7645 = vmul.f32 %v7576, %v7576
        %v7646 = vmul.f32 %v7578, %v7578
        %v7647 = vmul.f32 %v7580, %v7580
        %v7648 = vmul.f32 %v7584, %v7584
        %v7649 = vmul.f32 %v7586, %v7586
        %v7650 = vmul.f32 %v7588, %v7588
        %v7651 = vmul.f32 %v7590, %v7590
        %v7652 = vmul.f32 %v7594, %v7594
        %v7653 = vmul.f32 %v7596, %v7596
        %v7654 = vmul.f32 %v7598, %v7598
        %v7655 = vmul.f32 %v7600, %v7600
        %v7656 = vmul.f32 %v7604, %v7604
        %v7657 = vmul.f32 %v7606, %v7606
        %v7658 = vmul.f32 %v7608, %v7608
        %v7659 = vmul.f32 %v7610, %v7610
        %7660 = vmatprep.subr.mxu0 %v7570
        %7661 = vmatpush1.msra.mxu0 %v7568
        %7662 = vmatprep.subr.mxu0 %v7566
        %7663 = vmatpush1.msra.mxu0 %v7564
        %7664 = vmatprep.subr.mxu0 %v7560
        %7665 = vmatpush1.msra.mxu0 %v7558
        %7666 = vmatprep.subr.mxu0 %v7556
        %7667 = vmatpush1.msra.mxu0 %v7554
        %7668 = vmatprep.subr.mxu0 %v7550
        %7669 = vmatpush1.msra.mxu0 %v7548
        %7670 = vmatprep.subr.mxu0 %v7546
        %7671 = vmatpush1.msra.mxu0 %v7544
        %7672 = vmatprep.subr.mxu0 %v7540
        %7673 = vmatpush1.msra.mxu0 %v7538
        %7674 = vmatprep.subr.mxu0 %v7536
        %7675 = vmatpush1.msra.mxu0 %v7534
        %7676 = vmatprep.subr.mxu0 %v7530
        %7677 = vmatpush1.msra.mxu0 %v7528
        %7678 = vmatprep.subr.mxu0 %v7526
        %7679 = vmatpush1.msra.mxu0 %v7524
        %7680 = vmatprep.subr.mxu0 %v7520
        %7681 = vmatpush1.msra.mxu0 %v7518
        %7682 = vmatprep.subr.mxu0 %v7516
        %7683 = vmatpush1.msra.mxu0 %v7514
        %7684 = vmatprep.subr.mxu0 %v7510
        %7685 = vmatpush1.msra.mxu0 %v7508
        %7686 = vmatprep.subr.mxu0 %v7506
        %7687 = vmatpush1.msra.mxu0 %v7504
        %7688 = vmatprep.subr.mxu0 %v7500
        %7689 = vmatpush1.msra.mxu0 %v7498
        %7690 = vmatprep.subr.mxu0 %v7496
        %7691 = vmatpush1.msra.mxu0 %v7494
        %7692 = vmatprep.subr.mxu0 0.0
        %7693 = vmatpush2.msra.mxu0 0.0
        %7694 = vmatprep.subr.mxu0 0.0
        %7695 = vmatpush2.msra.mxu0 0.0
        %7696 = vmatprep.subr.mxu0 0.0
        %7697 = vmatpush2.msra.mxu0 0.0
        %7698 = vmatprep.subr.mxu0 0.0
        %7699 = vmatpush2.msra.mxu0 0.0
        %7700 = vmatprep.subr.mxu0 0.0
        %7701 = vmatpush2.msra.mxu0 0.0
        %7702 = vmatprep.subr.mxu0 0.0
        %7703 = vmatpush2.msra.mxu0 0.0
        %7704 = vmatprep.subr.mxu0 0.0
        %7705 = vmatpush2.msra.mxu0 0.0
        %7706 = vmatprep.subr.mxu0 0.0
        %7707 = vmatpush2.msra.mxu0 0.0
        %7708 = vmatprep.subr.mxu0 %v7610
        %7709 = vmatpush2.msra.mxu0 %v7608
        %7710 = vmatprep.subr.mxu0 %v7606
        %7711 = vmatpush2.msra.mxu0 %v7604
        %7712 = vmatprep.subr.mxu0 %v7600
        %7713 = vmatpush2.msra.mxu0 %v7598
        %7714 = vmatprep.subr.mxu0 %v7596
        %7715 = vmatpush2.msra.mxu0 %v7594
        %7716 = vmatprep.subr.mxu0 %v7590
        %7717 = vmatpush2.msra.mxu0 %v7588
        %7718 = vmatprep.subr.mxu0 %v7586
        %7719 = vmatpush2.msra.mxu0 %v7584
        %7720 = vmatprep.subr.mxu0 %v7580
        %7721 = vmatpush2.msra.mxu0 %v7578
        %7722 = vmatprep.subr.mxu0 %v7576
        %7723 = vmatpush2.msra.mxu0 %v7574
        %7724 = vmatprep.mubr.f32.mxu0 %v4451
        %7725 = vmatmul.mubr.f32.gmra.mxu0 1.0
        %v7726 = vpop.f32.mrf.mxu0
        %v7727 = vadd.f32 0.0, %v7726
        %v7728 = vpop.f32.mrf.mxu0
        %v7729 = vadd.f32 0.0, %v7728
        %7730 = vdwg.mxu0
        %7731 = vmatprep.subr.mxu0 %v7643
        %7732 = vmatpush1.msra.mxu0 %v7642
        %7733 = vmatprep.subr.mxu0 %v7641
        %7734 = vmatpush1.msra.mxu0 %v7640
        %7735 = vmatprep.subr.mxu0 %v7639
        %7736 = vmatpush1.msra.mxu0 %v7638
        %7737 = vmatprep.subr.mxu0 %v7637
        %7738 = vmatpush1.msra.mxu0 %v7636
        %7739 = vmatprep.subr.mxu0 %v7635
        %7740 = vmatpush1.msra.mxu0 %v7634
        %7741 = vmatprep.subr.mxu0 %v7633
        %7742 = vmatpush1.msra.mxu0 %v7632
        %7743 = vmatprep.subr.mxu0 %v7631
        %7744 = vmatpush1.msra.mxu0 %v7630
        %7745 = vmatprep.subr.mxu0 %v7629
        %7746 = vmatpush1.msra.mxu0 %v7628
        %7747 = vmatprep.subr.mxu0 %v7627
        %7748 = vmatpush1.msra.mxu0 %v7626
        %7749 = vmatprep.subr.mxu0 %v7625
        %7750 = vmatpush1.msra.mxu0 %v7624
        %7751 = vmatprep.subr.mxu0 %v7623
        %7752 = vmatpush1.msra.mxu0 %v7622
        %7753 = vmatprep.subr.mxu0 %v7621
        %7754 = vmatpush1.msra.mxu0 %v7620
        %7755 = vmatprep.subr.mxu0 %v7619
        %7756 = vmatpush1.msra.mxu0 %v7618
        %7757 = vmatprep.subr.mxu0 %v7617
        %7758 = vmatpush1.msra.mxu0 %v7616
        %7759 = vmatprep.subr.mxu0 %v7615
        %7760 = vmatpush1.msra.mxu0 %v7614
        %7761 = vmatprep.subr.mxu0 %v7613
        %7762 = vmatpush1.msra.mxu0 %v7612
        %7763 = vmatprep.subr.mxu0 0.0
        %7764 = vmatpush2.msra.mxu0 0.0
        %7765 = vmatprep.subr.mxu0 0.0
        %7766 = vmatpush2.msra.mxu0 0.0
        %7767 = vmatprep.subr.mxu0 0.0
        %7768 = vmatpush2.msra.mxu0 0.0
        %7769 = vmatprep.subr.mxu0 0.0
        %7770 = vmatpush2.msra.mxu0 0.0
        %7771 = vmatprep.subr.mxu0 0.0
        %7772 = vmatpush2.msra.mxu0 0.0
        %7773 = vmatprep.subr.mxu0 0.0
        %7774 = vmatpush2.msra.mxu0 0.0
        %7775 = vmatprep.subr.mxu0 0.0
        %7776 = vmatpush2.msra.mxu0 0.0
        %7777 = vmatprep.subr.mxu0 0.0
        %7778 = vmatpush2.msra.mxu0 0.0
        %7779 = vmatprep.subr.mxu0 %v7659
        %7780 = vmatpush2.msra.mxu0 %v7658
        %7781 = vmatprep.subr.mxu0 %v7657
        %7782 = vmatpush2.msra.mxu0 %v7656
        %7783 = vmatprep.subr.mxu0 %v7655
        %7784 = vmatpush2.msra.mxu0 %v7654
        %7785 = vmatprep.subr.mxu0 %v7653
        %7786 = vmatpush2.msra.mxu0 %v7652
        %7787 = vmatprep.subr.mxu0 %v7651
        %7788 = vmatpush2.msra.mxu0 %v7650
        %7789 = vmatprep.subr.mxu0 %v7649
        %7790 = vmatpush2.msra.mxu0 %v7648
        %7791 = vmatprep.subr.mxu0 %v7647
        %7792 = vmatpush2.msra.mxu0 %v7646
        %7793 = vmatprep.subr.mxu0 %v7645
        %7794 = vmatpush2.msra.mxu0 %v7644
        %7795 = vmatprep.mubr.f32.mxu0 %v4451
        %7796 = vmatmul.mubr.f32.gmra.mxu0 1.0
        %v7797 = vpop.f32.mrf.mxu0
        %v7798 = vadd.f32 0.0, %v7797
        %v7799 = vpop.f32.mrf.mxu0
        %v7800 = vadd.f32 0.0, %v7799
        %7801 = vdwg.mxu0
        %v7802 = vmul.f32 %v7727, 0.0052083335
        %v7803 = vmul.f32 %v7729, 0.0052083335
        %v7804 = vmul.f32 %v7798, 0.0052083335
        %v7805 = vmul.f32 %v7800, 0.0052083335
        %v7806 = vmul.f32 %v7802, %v7802
        %v7807 = vmul.f32 %v7803, %v7803
        %v7808 = vsub.f32 %v7804, %v7806
        %v7809 = vsub.f32 %v7805, %v7807
        %v7810 = vmax.f32 %v7808, 0.0
        %v7811 = vmax.f32 %v7809, 0.0
        %v7812 = vlaneseq
        %v7813 = vshrl.u32 %v7812, 7
        %v7814 = vsub.s32 0, %v7813
        %v7815 = vrot.slane %v7802, %v7814
        %v7816 = vlaneseq
        %v7817 = vshrl.u32 %v7816, 7
        %v7818 = vsub.s32 0, %v7817
        %v7819 = vrot.slane %v7803, %v7818
        %v7820 = vsub.f32 %v7494, %v7815
        %v7821 = vsub.f32 %v7496, %v7819
        %v7822 = vsub.f32 %v7498, %v7815
        %v7823 = vsub.f32 %v7500, %v7819
        %v7824 = vsub.f32 %v7504, %v7815
        %v7825 = vsub.f32 %v7506, %v7819
        %v7826 = vsub.f32 %v7508, %v7815
        %v7827 = vsub.f32 %v7510, %v7819
        %v7828 = vsub.f32 %v7514, %v7815
        %v7829 = vsub.f32 %v7516, %v7819
        %v7830 = vsub.f32 %v7518, %v7815
        %v7831 = vsub.f32 %v7520, %v7819
        %v7832 = vsub.f32 %v7524, %v7815
        %v7833 = vsub.f32 %v7526, %v7819
        %v7834 = vsub.f32 %v7528, %v7815
        %v7835 = vsub.f32 %v7530, %v7819
        %v7836 = vsub.f32 %v7534, %v7815
        %v7837 = vsub.f32 %v7536, %v7819
        %v7838 = vsub.f32 %v7538, %v7815
        %v7839 = vsub.f32 %v7540, %v7819
        %v7840 = vsub.f32 %v7544, %v7815
        %v7841 = vsub.f32 %v7546, %v7819
        %v7842 = vsub.f32 %v7548, %v7815
        %v7843 = vsub.f32 %v7550, %v7819
        %v7844 = vsub.f32 %v7554, %v7815
        %v7845 = vsub.f32 %v7556, %v7819
        %v7846 = vsub.f32 %v7558, %v7815
        %v7847 = vsub.f32 %v7560, %v7819
        %v7848 = vsub.f32 %v7564, %v7815
        %v7849 = vsub.f32 %v7566, %v7819
        %v7850 = vsub.f32 %v7568, %v7815
        %v7851 = vsub.f32 %v7570, %v7819
        %v7852 = vsub.f32 %v7574, %v7815
        %v7853 = vsub.f32 %v7576, %v7819
        %v7854 = vsub.f32 %v7578, %v7815
        %v7855 = vsub.f32 %v7580, %v7819
        %v7856 = vsub.f32 %v7584, %v7815
        %v7857 = vsub.f32 %v7586, %v7819
        %v7858 = vsub.f32 %v7588, %v7815
        %v7859 = vsub.f32 %v7590, %v7819
        %v7860 = vsub.f32 %v7594, %v7815
        %v7861 = vsub.f32 %v7596, %v7819
        %v7862 = vsub.f32 %v7598, %v7815
        %v7863 = vsub.f32 %v7600, %v7819
        %v7864 = vsub.f32 %v7604, %v7815
        %v7865 = vsub.f32 %v7606, %v7819
        %v7866 = vsub.f32 %v7608, %v7815
        %v7867 = vsub.f32 %v7610, %v7819
        %v7868 = vadd.f32 %v7810, 1e-05
        %v7869 = vadd.f32 %v7811, 1e-05
        %v7870 = vrsqrt.pop %v7868
        %v7871 = vrsqrt.pop %v7869
        %v7872 = vlaneseq
        %v7873 = vshrl.u32 %v7872, 7
        %v7874 = vsub.s32 0, %v7873
        %v7875 = vrot.slane %v7870, %v7874
        %v7876 = vlaneseq
        %v7877 = vshrl.u32 %v7876, 7
        %v7878 = vsub.s32 0, %v7877
        %v7879 = vrot.slane %v7871, %v7878
        %v7880 = vmul.f32 %v7820, %v7875
        %v7881 = vmul.f32 %v7821, %v7879
        %v7882 = vmul.f32 %v7822, %v7875
        %v7883 = vmul.f32 %v7823, %v7879
        %v7884 = vmul.f32 %v7824, %v7875
        %v7885 = vmul.f32 %v7825, %v7879
        %v7886 = vmul.f32 %v7826, %v7875
        %v7887 = vmul.f32 %v7827, %v7879
        %v7888 = vmul.f32 %v7828, %v7875
        %v7889 = vmul.f32 %v7829, %v7879
        %v7890 = vmul.f32 %v7830, %v7875
        %v7891 = vmul.f32 %v7831, %v7879
        %v7892 = vmul.f32 %v7832, %v7875
        %v7893 = vmul.f32 %v7833, %v7879
        %v7894 = vmul.f32 %v7834, %v7875
        %v7895 = vmul.f32 %v7835, %v7879
        %v7896 = vmul.f32 %v7836, %v7875
        %v7897 = vmul.f32 %v7837, %v7879
        %v7898 = vmul.f32 %v7838, %v7875
        %v7899 = vmul.f32 %v7839, %v7879
        %v7900 = vmul.f32 %v7840, %v7875
        %v7901 = vmul.f32 %v7841, %v7879
        %v7902 = vmul.f32 %v7842, %v7875
        %v7903 = vmul.f32 %v7843, %v7879
        %v7904 = vmul.f32 %v7844, %v7875
        %v7905 = vmul.f32 %v7845, %v7879
        %v7906 = vmul.f32 %v7846, %v7875
        %v7907 = vmul.f32 %v7847, %v7879
        %v7908 = vmul.f32 %v7848, %v7875
        %v7909 = vmul.f32 %v7849, %v7879
        %v7910 = vmul.f32 %v7850, %v7875
        %v7911 = vmul.f32 %v7851, %v7879
        %v7912 = vmul.f32 %v7852, %v7875
        %v7913 = vmul.f32 %v7853, %v7879
        %v7914 = vmul.f32 %v7854, %v7875
        %v7915 = vmul.f32 %v7855, %v7879
        %v7916 = vmul.f32 %v7856, %v7875
        %v7917 = vmul.f32 %v7857, %v7879
        %v7918 = vmul.f32 %v7858, %v7875
        %v7919 = vmul.f32 %v7859, %v7879
        %v7920 = vmul.f32 %v7860, %v7875
        %v7921 = vmul.f32 %v7861, %v7879
        %v7922 = vmul.f32 %v7862, %v7875
        %v7923 = vmul.f32 %v7863, %v7879
        %v7924 = vmul.f32 %v7864, %v7875
        %v7925 = vmul.f32 %v7865, %v7879
        %v7926 = vmul.f32 %v7866, %v7875
        %v7927 = vmul.f32 %v7867, %v7879
        %v7928 = vmax.f32 %v7880, 0.0
        %v7929 = vmax.f32 %v7881, 0.0
        %v7930 = vmax.f32 %v7882, 0.0
        %v7931 = vmax.f32 %v7883, 0.0
        %v7932 = vmax.f32 %v7884, 0.0
        %v7933 = vmax.f32 %v7885, 0.0
        %v7934 = vmax.f32 %v7886, 0.0
        %v7935 = vmax.f32 %v7887, 0.0
        %v7936 = vmax.f32 %v7888, 0.0
        %v7937 = vmax.f32 %v7889, 0.0
        %v7938 = vmax.f32 %v7890, 0.0
        %v7939 = vmax.f32 %v7891, 0.0
        %v7940 = vmax.f32 %v7892, 0.0
        %v7941 = vmax.f32 %v7893, 0.0
        %v7942 = vmax.f32 %v7894, 0.0
        %v7943 = vmax.f32 %v7895, 0.0
        %v7944 = vmax.f32 %v7896, 0.0
        %v7945 = vmax.f32 %v7897, 0.0
        %v7946 = vmax.f32 %v7898, 0.0
        %v7947 = vmax.f32 %v7899, 0.0
        %v7948 = vmax.f32 %v7900, 0.0
        %v7949 = vmax.f32 %v7901, 0.0
        %v7950 = vmax.f32 %v7902, 0.0
        %v7951 = vmax.f32 %v7903, 0.0
        %v7952 = vmax.f32 %v7904, 0.0
        %v7953 = vmax.f32 %v7905, 0.0
        %v7954 = vmax.f32 %v7906, 0.0
        %v7955 = vmax.f32 %v7907, 0.0
        %v7956 = vmax.f32 %v7908, 0.0
        %v7957 = vmax.f32 %v7909, 0.0
        %v7958 = vmax.f32 %v7910, 0.0
        %v7959 = vmax.f32 %v7911, 0.0
        %v7960 = vmax.f32 %v7912, 0.0
        %v7961 = vmax.f32 %v7913, 0.0
        %v7962 = vmax.f32 %v7914, 0.0
        %v7963 = vmax.f32 %v7915, 0.0
        %v7964 = vmax.f32 %v7916, 0.0
        %v7965 = vmax.f32 %v7917, 0.0
        %v7966 = vmax.f32 %v7918, 0.0
        %v7967 = vmax.f32 %v7919, 0.0
        %v7968 = vmax.f32 %v7920, 0.0
        %v7969 = vmax.f32 %v7921, 0.0
        %v7970 = vmax.f32 %v7922, 0.0
        %v7971 = vmax.f32 %v7923, 0.0
        %v7972 = vmax.f32 %v7924, 0.0
        %v7973 = vmax.f32 %v7925, 0.0
        %v7974 = vmax.f32 %v7926, 0.0
        %v7975 = vmax.f32 %v7927, 0.0
        %v7976 = vpack.c.bf16 %v7930, %v7928
        %v7977 = vpack.c.bf16 %v7931, %v7929
        %v7978 = vpack.c.bf16 %v7934, %v7932
        %v7979 = vpack.c.bf16 %v7935, %v7933
        %v7980 = vpack.c.bf16 %v7938, %v7936
        %v7981 = vpack.c.bf16 %v7939, %v7937
        %v7982 = vpack.c.bf16 %v7942, %v7940
        %v7983 = vpack.c.bf16 %v7943, %v7941
        %v7984 = vpack.c.bf16 %v7946, %v7944
        %v7985 = vpack.c.bf16 %v7947, %v7945
        %v7986 = vpack.c.bf16 %v7950, %v7948
        %v7987 = vpack.c.bf16 %v7951, %v7949
        %v7988 = vpack.c.bf16 %v7954, %v7952
        %v7989 = vpack.c.bf16 %v7955, %v7953
        %v7990 = vpack.c.bf16 %v7958, %v7956
        %v7991 = vpack.c.bf16 %v7959, %v7957
        %v7992 = vpack.c.bf16 %v7962, %v7960
        %v7993 = vpack.c.bf16 %v7963, %v7961
        %v7994 = vpack.c.bf16 %v7966, %v7964
        %v7995 = vpack.c.bf16 %v7967, %v7965
        %v7996 = vpack.c.bf16 %v7970, %v7968
        %v7997 = vpack.c.bf16 %v7971, %v7969
        %v7998 = vpack.c.bf16 %v7974, %v7972
        %v7999 = vpack.c.bf16 %v7975, %v7973
        %v8024 = vunpack.c.l.b16 %v7976
        %v8025 = vunpack.c.l.b16 %v7977
        %v8026 = vunpack.c.h.b16 %v7976
        %v8027 = vunpack.c.h.b16 %v7977
        %v8028 = vunpack.c.l.b16 %v7978
        %v8029 = vunpack.c.l.b16 %v7979
        %v8030 = vunpack.c.h.b16 %v7978
        %v8031 = vunpack.c.h.b16 %v7979
        %v8032 = vunpack.c.l.b16 %v7980
        %v8033 = vunpack.c.l.b16 %v7981
        %v8034 = vunpack.c.h.b16 %v7980
        %v8035 = vunpack.c.h.b16 %v7981
        %v8036 = vunpack.c.l.b16 %v7982
        %v8037 = vunpack.c.l.b16 %v7983
        %v8038 = vunpack.c.h.b16 %v7982
        %v8039 = vunpack.c.h.b16 %v7983
        %v8040 = vunpack.c.l.b16 %v7984
        %v8041 = vunpack.c.l.b16 %v7985
        %v8042 = vunpack.c.h.b16 %v7984
        %v8043 = vunpack.c.h.b16 %v7985
        %v8044 = vunpack.c.l.b16 %v7986
        %v8045 = vunpack.c.l.b16 %v7987
        %v8046 = vunpack.c.h.b16 %v7986
        %v8047 = vunpack.c.h.b16 %v7987
        %v8048 = vunpack.c.l.b16 %v7988
        %v8049 = vunpack.c.l.b16 %v7989
        %v8050 = vunpack.c.h.b16 %v7988
        %v8051 = vunpack.c.h.b16 %v7989
        %v8052 = vunpack.c.l.b16 %v7990
        %v8053 = vunpack.c.l.b16 %v7991
        %v8054 = vunpack.c.h.b16 %v7990
        %v8055 = vunpack.c.h.b16 %v7991
        %v8056 = vunpack.c.l.b16 %v7992
        %v8057 = vunpack.c.l.b16 %v7993
        %v8058 = vunpack.c.h.b16 %v7992
        %v8059 = vunpack.c.h.b16 %v7993
        %v8060 = vunpack.c.l.b16 %v7994
        %v8061 = vunpack.c.l.b16 %v7995
        %v8062 = vunpack.c.h.b16 %v7994
        %v8063 = vunpack.c.h.b16 %v7995
        %v8064 = vunpack.c.l.b16 %v7996
        %v8065 = vunpack.c.l.b16 %v7997
        %v8066 = vunpack.c.h.b16 %v7996
        %v8067 = vunpack.c.h.b16 %v7997
        %v8068 = vunpack.c.l.b16 %v7998
        %v8069 = vunpack.c.l.b16 %v7999
        %v8070 = vunpack.c.h.b16 %v7998
        %v8071 = vunpack.c.h.b16 %v7999
        %v8072 = vpack.c.b16 %v8025, %v8024
        %v8073 = vpack.c.b16 %v8027, %v8026
        %v8074 = vpack.c.b16 %v8029, %v8028
        %v8075 = vpack.c.b16 %v8031, %v8030
        %v8076 = vpack.c.b16 %v8033, %v8032
        %v8077 = vpack.c.b16 %v8035, %v8034
        %v8078 = vpack.c.b16 %v8037, %v8036
        %v8079 = vpack.c.b16 %v8039, %v8038
        %v8080 = vpack.c.b16 %v8041, %v8040
        %v8081 = vpack.c.b16 %v8043, %v8042
        %v8082 = vpack.c.b16 %v8045, %v8044
        %v8083 = vpack.c.b16 %v8047, %v8046
        %v8084 = vpack.c.b16 %v8049, %v8048
        %v8085 = vpack.c.b16 %v8051, %v8050
        %v8086 = vpack.c.b16 %v8053, %v8052
        %v8087 = vpack.c.b16 %v8055, %v8054
        %v8088 = vpack.c.b16 %v8057, %v8056
        %v8089 = vpack.c.b16 %v8059, %v8058
        %v8090 = vpack.c.b16 %v8061, %v8060
        %v8091 = vpack.c.b16 %v8063, %v8062
        %v8092 = vpack.c.b16 %v8065, %v8064
        %v8093 = vpack.c.b16 %v8067, %v8066
        %v8094 = vpack.c.b16 %v8069, %v8068
        %v8095 = vpack.c.b16 %v8071, %v8070
        %8120 = vst [vmem:[#allocation4 + $0x10] sm:$0xff] %v8072
        %8121 = vst [vmem:[#allocation4 + $0x18] sm:$0xff] %v8073
        %8122 = vst [vmem:[#allocation4 + $0x20] sm:$0xff] %v8074
        %8123 = vst [vmem:[#allocation4 + $0x28] sm:$0xff] %v8075
        %8124 = vst [vmem:[#allocation4 + $0x30] sm:$0xff] %v8076
        %8125 = vst [vmem:[#allocation4 + $0x38] sm:$0xff] %v8077
        %8126 = vst [vmem:[#allocation4 + $0x40] sm:$0xff] %v8078
        %8127 = vst [vmem:[#allocation4 + $0x48] sm:$0xff] %v8079
        %8128 = vst [vmem:[#allocation4 + $0x50] sm:$0xff] %v8080
        %8129 = vst [vmem:[#allocation4 + $0x58] sm:$0xff] %v8081
        %8130 = vst [vmem:[#allocation4 + $0x60] sm:$0xff] %v8082
        %8131 = vst [vmem:[#allocation4 + $0x68] sm:$0xff] %v8083
        %8132 = vst [vmem:[#allocation4 + $0x90] sm:$0xff] %v8084
        %8133 = vst [vmem:[#allocation4 + $0x98] sm:$0xff] %v8085
        %8134 = vst [vmem:[#allocation4 + $0xa0] sm:$0xff] %v8086
        %8135 = vst [vmem:[#allocation4 + $0xa8] sm:$0xff] %v8087
        %8136 = vst [vmem:[#allocation4 + $0xb0] sm:$0xff] %v8088
        %8137 = vst [vmem:[#allocation4 + $0xb8] sm:$0xff] %v8089
        %8138 = vst [vmem:[#allocation4 + $0xc0] sm:$0xff] %v8090
        %8139 = vst [vmem:[#allocation4 + $0xc8] sm:$0xff] %v8091
        %8140 = vst [vmem:[#allocation4 + $0xd0] sm:$0xff] %v8092
        %8141 = vst [vmem:[#allocation4 + $0xd8] sm:$0xff] %v8093
        %8142 = vst [vmem:[#allocation4 + $0xe0] sm:$0xff] %v8094
        %8143 = vst [vmem:[#allocation4 + $0xe8] sm:$0xff] %v8095
        %v8144 = vld [vmem:[#allocation4 + $0x8] sm:$0x88]
        %v8145 = vld [vmem:[#allocation4 + $0x10] sm:$0xff]
        %v8146 = vld [vmem:[#allocation4 + $0x18] sm:$0xff]
        %v8147 = vld [vmem:[#allocation4 + $0x20] sm:$0xff]
        %v8148 = vld [vmem:[#allocation4 + $0x28] sm:$0xff]
        %v8149 = vld [vmem:[#allocation4 + $0x30] sm:$0xff]
        %v8150 = vld [vmem:[#allocation4 + $0x38] sm:$0xff]
        %v8151 = vld [vmem:[#allocation4 + $0x40] sm:$0xff]
        %v8152 = vld [vmem:[#allocation4 + $0x48] sm:$0xff]
        %v8153 = vld [vmem:[#allocation4 + $0x50] sm:$0xff]
        %v8154 = vld [vmem:[#allocation4 + $0x58] sm:$0xff]
        %v8155 = vld [vmem:[#allocation4 + $0x60] sm:$0xff]
        %v8156 = vld [vmem:[#allocation4 + $0x68] sm:$0xff]
        %v8157 = vld [vmem:[#allocation4 + $0x70] sm:$0x11]
        %v8158 = vld [vmem:[#allocation4 + $0x88] sm:$0x88]
        %v8159 = vld [vmem:[#allocation4 + $0x90] sm:$0xff]
        %v8160 = vld [vmem:[#allocation4 + $0x98] sm:$0xff]
        %v8161 = vld [vmem:[#allocation4 + $0xa0] sm:$0xff]
        %v8162 = vld [vmem:[#allocation4 + $0xa8] sm:$0xff]
        %v8163 = vld [vmem:[#allocation4 + $0xb0] sm:$0xff]
        %v8164 = vld [vmem:[#allocation4 + $0xb8] sm:$0xff]
        %v8165 = vld [vmem:[#allocation4 + $0xc0] sm:$0xff]
        %v8166 = vld [vmem:[#allocation4 + $0xc8] sm:$0xff]
        %v8167 = vld [vmem:[#allocation4 + $0xd0] sm:$0xff]
        %v8168 = vld [vmem:[#allocation4 + $0xd8] sm:$0xff]
        %v8169 = vld [vmem:[#allocation4 + $0xe0] sm:$0xff]
        %v8170 = vld [vmem:[#allocation4 + $0xe8] sm:$0xff]
        %v8171 = vld [vmem:[#allocation4 + $0xf0] sm:$0x11]
        %v8198 = vunpack.c.l.b16 %v8144
        %v8199 = vunpack.c.h.b16 %v8144
        %v8200 = vunpack.c.l.b16 %v8145
        %v8201 = vunpack.c.h.b16 %v8145
        %v8202 = vunpack.c.l.b16 %v8146
        %v8203 = vunpack.c.h.b16 %v8146
        %v8204 = vunpack.c.l.b16 %v8147
        %v8205 = vunpack.c.h.b16 %v8147
        %v8206 = vunpack.c.l.b16 %v8148
        %v8207 = vunpack.c.h.b16 %v8148
        %v8208 = vunpack.c.l.b16 %v8149
        %v8209 = vunpack.c.h.b16 %v8149
        %v8210 = vunpack.c.l.b16 %v8150
        %v8211 = vunpack.c.h.b16 %v8150
        %v8212 = vunpack.c.l.b16 %v8151
        %v8213 = vunpack.c.h.b16 %v8151
        %v8214 = vunpack.c.l.b16 %v8152
        %v8215 = vunpack.c.h.b16 %v8152
        %v8216 = vunpack.c.l.b16 %v8153
        %v8217 = vunpack.c.h.b16 %v8153
        %v8218 = vunpack.c.l.b16 %v8154
        %v8219 = vunpack.c.h.b16 %v8154
        %v8220 = vunpack.c.l.b16 %v8155
        %v8221 = vunpack.c.h.b16 %v8155
        %v8222 = vunpack.c.l.b16 %v8156
        %v8223 = vunpack.c.h.b16 %v8156
        %v8224 = vunpack.c.l.b16 %v8158
        %v8225 = vunpack.c.h.b16 %v8158
        %v8226 = vunpack.c.l.b16 %v8159
        %v8227 = vunpack.c.h.b16 %v8159
        %v8228 = vunpack.c.l.b16 %v8160
        %v8229 = vunpack.c.h.b16 %v8160
        %v8230 = vunpack.c.l.b16 %v8161
        %v8231 = vunpack.c.h.b16 %v8161
        %v8232 = vunpack.c.l.b16 %v8162
        %v8233 = vunpack.c.h.b16 %v8162
        %v8234 = vunpack.c.l.b16 %v8163
        %v8235 = vunpack.c.h.b16 %v8163
        %v8236 = vunpack.c.l.b16 %v8164
        %v8237 = vunpack.c.h.b16 %v8164
        %v8238 = vunpack.c.l.b16 %v8165
        %v8239 = vunpack.c.h.b16 %v8165
        %v8240 = vunpack.c.l.b16 %v8166
        %v8241 = vunpack.c.h.b16 %v8166
        %v8242 = vunpack.c.l.b16 %v8167
        %v8243 = vunpack.c.h.b16 %v8167
        %v8244 = vunpack.c.l.b16 %v8168
        %v8245 = vunpack.c.h.b16 %v8168
        %v8246 = vunpack.c.l.b16 %v8169
        %v8247 = vunpack.c.h.b16 %v8169
        %v8248 = vunpack.c.l.b16 %v8170
        %v8249 = vunpack.c.h.b16 %v8170
        %v8250 = vpack.c.b16 %v8200, %v8198
        %v8251 = vpack.c.b16 %v8201, %v8199
        %v8252 = vpack.c.b16 %v8204, %v8202
        %v8253 = vpack.c.b16 %v8205, %v8203
        %v8254 = vpack.c.b16 %v8208, %v8206
        %v8255 = vpack.c.b16 %v8209, %v8207
        %v8256 = vpack.c.b16 %v8212, %v8210
        %v8257 = vpack.c.b16 %v8213, %v8211
        %v8258 = vpack.c.b16 %v8216, %v8214
        %v8259 = vpack.c.b16 %v8217, %v8215
        %v8260 = vpack.c.b16 %v8220, %v8218
        %v8261 = vpack.c.b16 %v8221, %v8219
        %v8262 = vpack.c.b16 %v8222, %v8222
        %v8263 = vpack.c.b16 %v8223, %v8223
        %v8264 = vpack.c.b16 %v8226, %v8224
        %v8265 = vpack.c.b16 %v8227, %v8225
        %v8266 = vpack.c.b16 %v8230, %v8228
        %v8267 = vpack.c.b16 %v8231, %v8229
        %v8268 = vpack.c.b16 %v8234, %v8232
        %v8269 = vpack.c.b16 %v8235, %v8233
        %v8270 = vpack.c.b16 %v8238, %v8236
        %v8271 = vpack.c.b16 %v8239, %v8237
        %v8272 = vpack.c.b16 %v8242, %v8240
        %v8273 = vpack.c.b16 %v8243, %v8241
        %v8274 = vpack.c.b16 %v8246, %v8244
        %v8275 = vpack.c.b16 %v8247, %v8245
        %v8276 = vpack.c.b16 %v8248, %v8248
        %v8277 = vpack.c.b16 %v8249, %v8249
        %v8278 = vpack.c.b16 %v8202, %v8200
        %v8279 = vpack.c.b16 %v8203, %v8201
        %v8280 = vpack.c.b16 %v8206, %v8204
        %v8281 = vpack.c.b16 %v8207, %v8205
        %v8282 = vpack.c.b16 %v8210, %v8208
        %v8283 = vpack.c.b16 %v8211, %v8209
        %v8284 = vpack.c.b16 %v8214, %v8212
        %v8285 = vpack.c.b16 %v8215, %v8213
        %v8286 = vpack.c.b16 %v8218, %v8216
        %v8287 = vpack.c.b16 %v8219, %v8217
        %v8288 = vpack.c.b16 %v8222, %v8220
        %v8289 = vpack.c.b16 %v8223, %v8221
        %v8290 = vpack.c.b16 %v8228, %v8226
        %v8291 = vpack.c.b16 %v8229, %v8227
        %v8292 = vpack.c.b16 %v8232, %v8230
        %v8293 = vpack.c.b16 %v8233, %v8231
        %v8294 = vpack.c.b16 %v8236, %v8234
        %v8295 = vpack.c.b16 %v8237, %v8235
        %v8296 = vpack.c.b16 %v8240, %v8238
        %v8297 = vpack.c.b16 %v8241, %v8239
        %v8298 = vpack.c.b16 %v8244, %v8242
        %v8299 = vpack.c.b16 %v8245, %v8243
        %v8300 = vpack.c.b16 %v8248, %v8246
        %v8301 = vpack.c.b16 %v8249, %v8247
        %vm8302 = vsmask.f32 3328
        %v8304 = vshrl.u32 %v8278, 16
        %v8306 = vrot.slane %v8304, 4
        %v8307 = vshll.u32 %v8278, 16
        %v8309 = vrot.slane %v8307, 5
        %v8310 = vor.u32 %v8306, %v8309
        %v8312 = vshrl.u32 %v8279, 16
        %v8314 = vrot.slane %v8312, 4
        %v8315 = vshll.u32 %v8279, 16
        %v8317 = vrot.slane %v8315, 5
        %v8318 = vor.u32 %v8314, %v8317
        %v8320 = vshrl.u32 %v8280, 16
        %v8322 = vrot.slane %v8320, 4
        %v8323 = vshll.u32 %v8280, 16
        %v8325 = vrot.slane %v8323, 5
        %v8326 = vor.u32 %v8322, %v8325
        %v8327 = vsel %vm8302, %v8310, %v8326
        %v8329 = vshrl.u32 %v8281, 16
        %v8331 = vrot.slane %v8329, 4
        %v8332 = vshll.u32 %v8281, 16
        %v8334 = vrot.slane %v8332, 5
        %v8335 = vor.u32 %v8331, %v8334
        %v8336 = vsel %vm8302, %v8318, %v8335
        %v8338 = vshrl.u32 %v8282, 16
        %v8340 = vrot.slane %v8338, 4
        %v8341 = vshll.u32 %v8282, 16
        %v8343 = vrot.slane %v8341, 5
        %v8344 = vor.u32 %v8340, %v8343
        %v8345 = vsel %vm8302, %v8326, %v8344
        %v8347 = vshrl.u32 %v8283, 16
        %v8349 = vrot.slane %v8347, 4
        %v8350 = vshll.u32 %v8283, 16
        %v8352 = vrot.slane %v8350, 5
        %v8353 = vor.u32 %v8349, %v8352
        %v8354 = vsel %vm8302, %v8335, %v8353
        %v8356 = vshrl.u32 %v8284, 16
        %v8358 = vrot.slane %v8356, 4
        %v8359 = vshll.u32 %v8284, 16
        %v8361 = vrot.slane %v8359, 5
        %v8362 = vor.u32 %v8358, %v8361
        %v8363 = vsel %vm8302, %v8344, %v8362
        %v8365 = vshrl.u32 %v8285, 16
        %v8367 = vrot.slane %v8365, 4
        %v8368 = vshll.u32 %v8285, 16
        %v8370 = vrot.slane %v8368, 5
        %v8371 = vor.u32 %v8367, %v8370
        %v8372 = vsel %vm8302, %v8353, %v8371
        %v8374 = vshrl.u32 %v8286, 16
        %v8376 = vrot.slane %v8374, 4
        %v8377 = vshll.u32 %v8286, 16
        %v8379 = vrot.slane %v8377, 5
        %v8380 = vor.u32 %v8376, %v8379
        %v8381 = vsel %vm8302, %v8362, %v8380
        %v8383 = vshrl.u32 %v8287, 16
        %v8385 = vrot.slane %v8383, 4
        %v8386 = vshll.u32 %v8287, 16
        %v8388 = vrot.slane %v8386, 5
        %v8389 = vor.u32 %v8385, %v8388
        %v8390 = vsel %vm8302, %v8371, %v8389
        %v8392 = vshrl.u32 %v8288, 16
        %v8394 = vrot.slane %v8392, 4
        %v8395 = vshll.u32 %v8288, 16
        %v8397 = vrot.slane %v8395, 5
        %v8398 = vor.u32 %v8394, %v8397
        %v8399 = vsel %vm8302, %v8380, %v8398
        %v8401 = vshrl.u32 %v8289, 16
        %v8403 = vrot.slane %v8401, 4
        %v8404 = vshll.u32 %v8289, 16
        %v8406 = vrot.slane %v8404, 5
        %v8407 = vor.u32 %v8403, %v8406
        %v8408 = vsel %vm8302, %v8389, %v8407
        %v8410 = vshrl.u32 %v8290, 16
        %v8412 = vrot.slane %v8410, 4
        %v8413 = vshll.u32 %v8290, 16
        %v8415 = vrot.slane %v8413, 5
        %v8416 = vor.u32 %v8412, %v8415
        %v8418 = vshrl.u32 %v8291, 16
        %v8420 = vrot.slane %v8418, 4
        %v8421 = vshll.u32 %v8291, 16
        %v8423 = vrot.slane %v8421, 5
        %v8424 = vor.u32 %v8420, %v8423
        %v8426 = vshrl.u32 %v8292, 16
        %v8428 = vrot.slane %v8426, 4
        %v8429 = vshll.u32 %v8292, 16
        %v8431 = vrot.slane %v8429, 5
        %v8432 = vor.u32 %v8428, %v8431
        %v8433 = vsel %vm8302, %v8416, %v8432
        %v8435 = vshrl.u32 %v8293, 16
        %v8437 = vrot.slane %v8435, 4
        %v8438 = vshll.u32 %v8293, 16
        %v8440 = vrot.slane %v8438, 5
        %v8441 = vor.u32 %v8437, %v8440
        %v8442 = vsel %vm8302, %v8424, %v8441
        %v8444 = vshrl.u32 %v8294, 16
        %v8446 = vrot.slane %v8444, 4
        %v8447 = vshll.u32 %v8294, 16
        %v8449 = vrot.slane %v8447, 5
        %v8450 = vor.u32 %v8446, %v8449
        %v8451 = vsel %vm8302, %v8432, %v8450
        %v8453 = vshrl.u32 %v8295, 16
        %v8455 = vrot.slane %v8453, 4
        %v8456 = vshll.u32 %v8295, 16
        %v8458 = vrot.slane %v8456, 5
        %v8459 = vor.u32 %v8455, %v8458
        %v8460 = vsel %vm8302, %v8441, %v8459
        %v8462 = vshrl.u32 %v8296, 16
        %v8464 = vrot.slane %v8462, 4
        %v8465 = vshll.u32 %v8296, 16
        %v8467 = vrot.slane %v8465, 5
        %v8468 = vor.u32 %v8464, %v8467
        %v8469 = vsel %vm8302, %v8450, %v8468
        %v8471 = vshrl.u32 %v8297, 16
        %v8473 = vrot.slane %v8471, 4
        %v8474 = vshll.u32 %v8297, 16
        %v8476 = vrot.slane %v8474, 5
        %v8477 = vor.u32 %v8473, %v8476
        %v8478 = vsel %vm8302, %v8459, %v8477
        %v8480 = vshrl.u32 %v8298, 16
        %v8482 = vrot.slane %v8480, 4
        %v8483 = vshll.u32 %v8298, 16
        %v8485 = vrot.slane %v8483, 5
        %v8486 = vor.u32 %v8482, %v8485
        %v8487 = vsel %vm8302, %v8468, %v8486
        %v8489 = vshrl.u32 %v8299, 16
        %v8491 = vrot.slane %v8489, 4
        %v8492 = vshll.u32 %v8299, 16
        %v8494 = vrot.slane %v8492, 5
        %v8495 = vor.u32 %v8491, %v8494
        %v8496 = vsel %vm8302, %v8477, %v8495
        %v8498 = vshrl.u32 %v8300, 16
        %v8500 = vrot.slane %v8498, 4
        %v8501 = vshll.u32 %v8300, 16
        %v8503 = vrot.slane %v8501, 5
        %v8504 = vor.u32 %v8500, %v8503
        %v8505 = vsel %vm8302, %v8486, %v8504
        %v8507 = vshrl.u32 %v8301, 16
        %v8509 = vrot.slane %v8507, 4
        %v8510 = vshll.u32 %v8301, 16
        %v8512 = vrot.slane %v8510, 5
        %v8513 = vor.u32 %v8509, %v8512
        %v8514 = vsel %vm8302, %v8495, %v8513
        %v8517 = vunpack.c.l.b16 %v8157
        %v8518 = vunpack.c.h.b16 %v8157
        %v8519 = vunpack.c.l.b16 %v8171
        %v8520 = vunpack.c.h.b16 %v8171
        %v8521 = vpack.c.b16 %v8517, %v8517
        %v8522 = vpack.c.b16 %v8518, %v8518
        %v8523 = vpack.c.b16 %v8519, %v8519
        %v8524 = vpack.c.b16 %v8520, %v8520
        %v8525 = vrot.slane %v8278, 5
        %v8526 = vrot.slane %v8279, 5
        %v8527 = vrot.slane %v8280, 5
        %v8528 = vsel %vm5315, %v8525, %v8527
        %v8529 = vrot.slane %v8281, 5
        %v8530 = vsel %vm5315, %v8526, %v8529
        %v8531 = vrot.slane %v8282, 5
        %v8532 = vsel %vm5315, %v8527, %v8531
        %v8533 = vrot.slane %v8283, 5
        %v8534 = vsel %vm5315, %v8529, %v8533
        %v8535 = vrot.slane %v8284, 5
        %v8536 = vsel %vm5315, %v8531, %v8535
        %v8537 = vrot.slane %v8285, 5
        %v8538 = vsel %vm5315, %v8533, %v8537
        %v8539 = vrot.slane %v8286, 5
        %v8540 = vsel %vm5315, %v8535, %v8539
        %v8541 = vrot.slane %v8287, 5
        %v8542 = vsel %vm5315, %v8537, %v8541
        %v8543 = vrot.slane %v8288, 5
        %v8544 = vsel %vm5315, %v8539, %v8543
        %v8545 = vrot.slane %v8289, 5
        %v8546 = vsel %vm5315, %v8541, %v8545
        %v8547 = vrot.slane %v8521, 5
        %v8548 = vsel %vm5315, %v8543, %v8547
        %v8549 = vrot.slane %v8522, 5
        %v8550 = vsel %vm5315, %v8545, %v8549
        %v8551 = vrot.slane %v8290, 5
        %v8552 = vrot.slane %v8291, 5
        %v8553 = vrot.slane %v8292, 5
        %v8554 = vsel %vm5315, %v8551, %v8553
        %v8555 = vrot.slane %v8293, 5
        %v8556 = vsel %vm5315, %v8552, %v8555
        %v8557 = vrot.slane %v8294, 5
        %v8558 = vsel %vm5315, %v8553, %v8557
        %v8559 = vrot.slane %v8295, 5
        %v8560 = vsel %vm5315, %v8555, %v8559
        %v8561 = vrot.slane %v8296, 5
        %v8562 = vsel %vm5315, %v8557, %v8561
        %v8563 = vrot.slane %v8297, 5
        %v8564 = vsel %vm5315, %v8559, %v8563
        %v8565 = vrot.slane %v8298, 5
        %v8566 = vsel %vm5315, %v8561, %v8565
        %v8567 = vrot.slane %v8299, 5
        %v8568 = vsel %vm5315, %v8563, %v8567
        %v8569 = vrot.slane %v8300, 5
        %v8570 = vsel %vm5315, %v8565, %v8569
        %v8571 = vrot.slane %v8301, 5
        %v8572 = vsel %vm5315, %v8567, %v8571
        %v8573 = vrot.slane %v8523, 5
        %v8574 = vsel %vm5315, %v8569, %v8573
        %v8575 = vrot.slane %v8524, 5
        %v8576 = vsel %vm5315, %v8571, %v8575
        %vm8577 = vsmask.f32 4352
        %v8579 = vshrl.u32 %v8250, 16
        %v8581 = vrot.slane %v8579, 3
        %v8582 = vshll.u32 %v8250, 16
        %v8584 = vrot.slane %v8582, 4
        %v8585 = vor.u32 %v8581, %v8584
        %v8587 = vshrl.u32 %v8252, 16
        %v8589 = vrot.slane %v8587, 3
        %v8590 = vshll.u32 %v8252, 16
        %v8592 = vrot.slane %v8590, 4
        %v8593 = vor.u32 %v8589, %v8592
        %v8594 = vsel %vm8577, %v8585, %v8593
        %v8596 = vshrl.u32 %v8251, 16
        %v8598 = vrot.slane %v8596, 3
        %v8599 = vshll.u32 %v8251, 16
        %v8601 = vrot.slane %v8599, 4
        %v8602 = vor.u32 %v8598, %v8601
        %v8604 = vshrl.u32 %v8253, 16
        %v8606 = vrot.slane %v8604, 3
        %v8607 = vshll.u32 %v8253, 16
        %v8609 = vrot.slane %v8607, 4
        %v8610 = vor.u32 %v8606, %v8609
        %v8611 = vsel %vm8577, %v8602, %v8610
        %v8613 = vshrl.u32 %v8310, 16
        %v8615 = vrot.slane %v8613, 3
        %v8616 = vshll.u32 %v8310, 16
        %v8618 = vrot.slane %v8616, 4
        %v8619 = vor.u32 %v8615, %v8618
        %v8621 = vshrl.u32 %v8327, 16
        %v8623 = vrot.slane %v8621, 3
        %v8624 = vshll.u32 %v8327, 16
        %v8626 = vrot.slane %v8624, 4
        %v8627 = vor.u32 %v8623, %v8626
        %v8628 = vsel %vm8577, %v8619, %v8627
        %v8630 = vshrl.u32 %v8318, 16
        %v8632 = vrot.slane %v8630, 3
        %v8633 = vshll.u32 %v8318, 16
        %v8635 = vrot.slane %v8633, 4
        %v8636 = vor.u32 %v8632, %v8635
        %v8638 = vshrl.u32 %v8336, 16
        %v8640 = vrot.slane %v8638, 3
        %v8641 = vshll.u32 %v8336, 16
        %v8643 = vrot.slane %v8641, 4
        %v8644 = vor.u32 %v8640, %v8643
        %v8645 = vsel %vm8577, %v8636, %v8644
        %v8647 = vshrl.u32 %v8525, 16
        %v8649 = vrot.slane %v8647, 3
        %v8650 = vshll.u32 %v8525, 16
        %v8652 = vrot.slane %v8650, 4
        %v8653 = vor.u32 %v8649, %v8652
        %v8655 = vshrl.u32 %v8528, 16
        %v8657 = vrot.slane %v8655, 3
        %v8658 = vshll.u32 %v8528, 16
        %v8660 = vrot.slane %v8658, 4
        %v8661 = vor.u32 %v8657, %v8660
        %v8662 = vsel %vm8577, %v8653, %v8661
        %v8664 = vshrl.u32 %v8526, 16
        %v8666 = vrot.slane %v8664, 3
        %v8667 = vshll.u32 %v8526, 16
        %v8669 = vrot.slane %v8667, 4
        %v8670 = vor.u32 %v8666, %v8669
        %v8672 = vshrl.u32 %v8530, 16
        %v8674 = vrot.slane %v8672, 3
        %v8675 = vshll.u32 %v8530, 16
        %v8677 = vrot.slane %v8675, 4
        %v8678 = vor.u32 %v8674, %v8677
        %v8679 = vsel %vm8577, %v8670, %v8678
        %v8681 = vshrl.u32 %v8254, 16
        %v8683 = vrot.slane %v8681, 3
        %v8684 = vshll.u32 %v8254, 16
        %v8686 = vrot.slane %v8684, 4
        %v8687 = vor.u32 %v8683, %v8686
        %v8688 = vsel %vm8577, %v8593, %v8687
        %v8690 = vshrl.u32 %v8255, 16
        %v8692 = vrot.slane %v8690, 3
        %v8693 = vshll.u32 %v8255, 16
        %v8695 = vrot.slane %v8693, 4
        %v8696 = vor.u32 %v8692, %v8695
        %v8697 = vsel %vm8577, %v8610, %v8696
        %v8699 = vshrl.u32 %v8345, 16
        %v8701 = vrot.slane %v8699, 3
        %v8702 = vshll.u32 %v8345, 16
        %v8704 = vrot.slane %v8702, 4
        %v8705 = vor.u32 %v8701, %v8704
        %v8706 = vsel %vm8577, %v8627, %v8705
        %v8708 = vshrl.u32 %v8354, 16
        %v8710 = vrot.slane %v8708, 3
        %v8711 = vshll.u32 %v8354, 16
        %v8713 = vrot.slane %v8711, 4
        %v8714 = vor.u32 %v8710, %v8713
        %v8715 = vsel %vm8577, %v8644, %v8714
        %v8717 = vshrl.u32 %v8532, 16
        %v8719 = vrot.slane %v8717, 3
        %v8720 = vshll.u32 %v8532, 16
        %v8722 = vrot.slane %v8720, 4
        %v8723 = vor.u32 %v8719, %v8722
        %v8724 = vsel %vm8577, %v8661, %v8723
        %v8726 = vshrl.u32 %v8534, 16
        %v8728 = vrot.slane %v8726, 3
        %v8729 = vshll.u32 %v8534, 16
        %v8731 = vrot.slane %v8729, 4
        %v8732 = vor.u32 %v8728, %v8731
        %v8733 = vsel %vm8577, %v8678, %v8732
        %v8735 = vshrl.u32 %v8256, 16
        %v8737 = vrot.slane %v8735, 3
        %v8738 = vshll.u32 %v8256, 16
        %v8740 = vrot.slane %v8738, 4
        %v8741 = vor.u32 %v8737, %v8740
        %v8742 = vsel %vm8577, %v8687, %v8741
        %v8744 = vshrl.u32 %v8257, 16
        %v8746 = vrot.slane %v8744, 3
        %v8747 = vshll.u32 %v8257, 16
        %v8749 = vrot.slane %v8747, 4
        %v8750 = vor.u32 %v8746, %v8749
        %v8751 = vsel %vm8577, %v8696, %v8750
        %v8753 = vshrl.u32 %v8363, 16
        %v8755 = vrot.slane %v8753, 3
        %v8756 = vshll.u32 %v8363, 16
        %v8758 = vrot.slane %v8756, 4
        %v8759 = vor.u32 %v8755, %v8758
        %v8760 = vsel %vm8577, %v8705, %v8759
        %v8762 = vshrl.u32 %v8372, 16
        %v8764 = vrot.slane %v8762, 3
        %v8765 = vshll.u32 %v8372, 16
        %v8767 = vrot.slane %v8765, 4
        %v8768 = vor.u32 %v8764, %v8767
        %v8769 = vsel %vm8577, %v8714, %v8768
        %v8771 = vshrl.u32 %v8536, 16
        %v8773 = vrot.slane %v8771, 3
        %v8774 = vshll.u32 %v8536, 16
        %v8776 = vrot.slane %v8774, 4
        %v8777 = vor.u32 %v8773, %v8776
        %v8778 = vsel %vm8577, %v8723, %v8777
        %v8780 = vshrl.u32 %v8538, 16
        %v8782 = vrot.slane %v8780, 3
        %v8783 = vshll.u32 %v8538, 16
        %v8785 = vrot.slane %v8783, 4
        %v8786 = vor.u32 %v8782, %v8785
        %v8787 = vsel %vm8577, %v8732, %v8786
        %v8789 = vshrl.u32 %v8258, 16
        %v8791 = vrot.slane %v8789, 3
        %v8792 = vshll.u32 %v8258, 16
        %v8794 = vrot.slane %v8792, 4
        %v8795 = vor.u32 %v8791, %v8794
        %v8796 = vsel %vm8577, %v8741, %v8795
        %v8798 = vshrl.u32 %v8259, 16
        %v8800 = vrot.slane %v8798, 3
        %v8801 = vshll.u32 %v8259, 16
        %v8803 = vrot.slane %v8801, 4
        %v8804 = vor.u32 %v8800, %v8803
        %v8805 = vsel %vm8577, %v8750, %v8804
        %v8807 = vshrl.u32 %v8381, 16
        %v8809 = vrot.slane %v8807, 3
        %v8810 = vshll.u32 %v8381, 16
        %v8812 = vrot.slane %v8810, 4
        %v8813 = vor.u32 %v8809, %v8812
        %v8814 = vsel %vm8577, %v8759, %v8813
        %v8816 = vshrl.u32 %v8390, 16
        %v8818 = vrot.slane %v8816, 3
        %v8819 = vshll.u32 %v8390, 16
        %v8821 = vrot.slane %v8819, 4
        %v8822 = vor.u32 %v8818, %v8821
        %v8823 = vsel %vm8577, %v8768, %v8822
        %v8825 = vshrl.u32 %v8540, 16
        %v8827 = vrot.slane %v8825, 3
        %v8828 = vshll.u32 %v8540, 16
        %v8830 = vrot.slane %v8828, 4
        %v8831 = vor.u32 %v8827, %v8830
        %v8832 = vsel %vm8577, %v8777, %v8831
        %v8834 = vshrl.u32 %v8542, 16
        %v8836 = vrot.slane %v8834, 3
        %v8837 = vshll.u32 %v8542, 16
        %v8839 = vrot.slane %v8837, 4
        %v8840 = vor.u32 %v8836, %v8839
        %v8841 = vsel %vm8577, %v8786, %v8840
        %v8843 = vshrl.u32 %v8260, 16
        %v8845 = vrot.slane %v8843, 3
        %v8846 = vshll.u32 %v8260, 16
        %v8848 = vrot.slane %v8846, 4
        %v8849 = vor.u32 %v8845, %v8848
        %v8850 = vsel %vm8577, %v8795, %v8849
        %v8852 = vshrl.u32 %v8261, 16
        %v8854 = vrot.slane %v8852, 3
        %v8855 = vshll.u32 %v8261, 16
        %v8857 = vrot.slane %v8855, 4
        %v8858 = vor.u32 %v8854, %v8857
        %v8859 = vsel %vm8577, %v8804, %v8858
        %v8861 = vshrl.u32 %v8399, 16
        %v8863 = vrot.slane %v8861, 3
        %v8864 = vshll.u32 %v8399, 16
        %v8866 = vrot.slane %v8864, 4
        %v8867 = vor.u32 %v8863, %v8866
        %v8868 = vsel %vm8577, %v8813, %v8867
        %v8870 = vshrl.u32 %v8408, 16
        %v8872 = vrot.slane %v8870, 3
        %v8873 = vshll.u32 %v8408, 16
        %v8875 = vrot.slane %v8873, 4
        %v8876 = vor.u32 %v8872, %v8875
        %v8877 = vsel %vm8577, %v8822, %v8876
        %v8879 = vshrl.u32 %v8544, 16
        %v8881 = vrot.slane %v8879, 3
        %v8882 = vshll.u32 %v8544, 16
        %v8884 = vrot.slane %v8882, 4
        %v8885 = vor.u32 %v8881, %v8884
        %v8886 = vsel %vm8577, %v8831, %v8885
        %v8888 = vshrl.u32 %v8546, 16
        %v8890 = vrot.slane %v8888, 3
        %v8891 = vshll.u32 %v8546, 16
        %v8893 = vrot.slane %v8891, 4
        %v8894 = vor.u32 %v8890, %v8893
        %v8895 = vsel %vm8577, %v8840, %v8894
        %v8897 = vshrl.u32 %v8262, 16
        %v8899 = vrot.slane %v8897, 3
        %v8900 = vshll.u32 %v8262, 16
        %v8902 = vrot.slane %v8900, 4
        %v8903 = vor.u32 %v8899, %v8902
        %v8904 = vsel %vm8577, %v8849, %v8903
        %v8906 = vshrl.u32 %v8263, 16
        %v8908 = vrot.slane %v8906, 3
        %v8909 = vshll.u32 %v8263, 16
        %v8911 = vrot.slane %v8909, 4
        %v8912 = vor.u32 %v8908, %v8911
        %v8913 = vsel %vm8577, %v8858, %v8912
        %v8915 = vshrl.u32 %v8398, 16
        %v8917 = vrot.slane %v8915, 3
        %v8918 = vshll.u32 %v8398, 16
        %v8920 = vrot.slane %v8918, 4
        %v8921 = vor.u32 %v8917, %v8920
        %v8922 = vsel %vm8577, %v8867, %v8921
        %v8924 = vshrl.u32 %v8407, 16
        %v8926 = vrot.slane %v8924, 3
        %v8927 = vshll.u32 %v8407, 16
        %v8929 = vrot.slane %v8927, 4
        %v8930 = vor.u32 %v8926, %v8929
        %v8931 = vsel %vm8577, %v8876, %v8930
        %v8933 = vshrl.u32 %v8548, 16
        %v8935 = vrot.slane %v8933, 3
        %v8936 = vshll.u32 %v8548, 16
        %v8938 = vrot.slane %v8936, 4
        %v8939 = vor.u32 %v8935, %v8938
        %v8940 = vsel %vm8577, %v8885, %v8939
        %v8942 = vshrl.u32 %v8550, 16
        %v8944 = vrot.slane %v8942, 3
        %v8945 = vshll.u32 %v8550, 16
        %v8947 = vrot.slane %v8945, 4
        %v8948 = vor.u32 %v8944, %v8947
        %v8949 = vsel %vm8577, %v8894, %v8948
        %v8951 = vshrl.u32 %v8264, 16
        %v8953 = vrot.slane %v8951, 3
        %v8954 = vshll.u32 %v8264, 16
        %v8956 = vrot.slane %v8954, 4
        %v8957 = vor.u32 %v8953, %v8956
        %v8959 = vshrl.u32 %v8266, 16
        %v8961 = vrot.slane %v8959, 3
        %v8962 = vshll.u32 %v8266, 16
        %v8964 = vrot.slane %v8962, 4
        %v8965 = vor.u32 %v8961, %v8964
        %v8966 = vsel %vm8577, %v8957, %v8965
        %v8968 = vshrl.u32 %v8265, 16
        %v8970 = vrot.slane %v8968, 3
        %v8971 = vshll.u32 %v8265, 16
        %v8973 = vrot.slane %v8971, 4
        %v8974 = vor.u32 %v8970, %v8973
        %v8976 = vshrl.u32 %v8267, 16
        %v8978 = vrot.slane %v8976, 3
        %v8979 = vshll.u32 %v8267, 16
        %v8981 = vrot.slane %v8979, 4
        %v8982 = vor.u32 %v8978, %v8981
        %v8983 = vsel %vm8577, %v8974, %v8982
        %v8985 = vshrl.u32 %v8416, 16
        %v8987 = vrot.slane %v8985, 3
        %v8988 = vshll.u32 %v8416, 16
        %v8990 = vrot.slane %v8988, 4
        %v8991 = vor.u32 %v8987, %v8990
        %v8993 = vshrl.u32 %v8433, 16
        %v8995 = vrot.slane %v8993, 3
        %v8996 = vshll.u32 %v8433, 16
        %v8998 = vrot.slane %v8996, 4
        %v8999 = vor.u32 %v8995, %v8998
        %v9000 = vsel %vm8577, %v8991, %v8999
        %v9002 = vshrl.u32 %v8424, 16
        %v9004 = vrot.slane %v9002, 3
        %v9005 = vshll.u32 %v8424, 16
        %v9007 = vrot.slane %v9005, 4
        %v9008 = vor.u32 %v9004, %v9007
        %v9010 = vshrl.u32 %v8442, 16
        %v9012 = vrot.slane %v9010, 3
        %v9013 = vshll.u32 %v8442, 16
        %v9015 = vrot.slane %v9013, 4
        %v9016 = vor.u32 %v9012, %v9015
        %v9017 = vsel %vm8577, %v9008, %v9016
        %v9019 = vshrl.u32 %v8551, 16
        %v9021 = vrot.slane %v9019, 3
        %v9022 = vshll.u32 %v8551, 16
        %v9024 = vrot.slane %v9022, 4
        %v9025 = vor.u32 %v9021, %v9024
        %v9027 = vshrl.u32 %v8554, 16
        %v9029 = vrot.slane %v9027, 3
        %v9030 = vshll.u32 %v8554, 16
        %v9032 = vrot.slane %v9030, 4
        %v9033 = vor.u32 %v9029, %v9032
        %v9034 = vsel %vm8577, %v9025, %v9033
        %v9036 = vshrl.u32 %v8552, 16
        %v9038 = vrot.slane %v9036, 3
        %v9039 = vshll.u32 %v8552, 16
        %v9041 = vrot.slane %v9039, 4
        %v9042 = vor.u32 %v9038, %v9041
        %v9044 = vshrl.u32 %v8556, 16
        %v9046 = vrot.slane %v9044, 3
        %v9047 = vshll.u32 %v8556, 16
        %v9049 = vrot.slane %v9047, 4
        %v9050 = vor.u32 %v9046, %v9049
        %v9051 = vsel %vm8577, %v9042, %v9050
        %v9053 = vshrl.u32 %v8268, 16
        %v9055 = vrot.slane %v9053, 3
        %v9056 = vshll.u32 %v8268, 16
        %v9058 = vrot.slane %v9056, 4
        %v9059 = vor.u32 %v9055, %v9058
        %v9060 = vsel %vm8577, %v8965, %v9059
        %v9062 = vshrl.u32 %v8269, 16
        %v9064 = vrot.slane %v9062, 3
        %v9065 = vshll.u32 %v8269, 16
        %v9067 = vrot.slane %v9065, 4
        %v9068 = vor.u32 %v9064, %v9067
        %v9069 = vsel %vm8577, %v8982, %v9068
        %v9071 = vshrl.u32 %v8451, 16
        %v9073 = vrot.slane %v9071, 3
        %v9074 = vshll.u32 %v8451, 16
        %v9076 = vrot.slane %v9074, 4
        %v9077 = vor.u32 %v9073, %v9076
        %v9078 = vsel %vm8577, %v8999, %v9077
        %v9080 = vshrl.u32 %v8460, 16
        %v9082 = vrot.slane %v9080, 3
        %v9083 = vshll.u32 %v8460, 16
        %v9085 = vrot.slane %v9083, 4
        %v9086 = vor.u32 %v9082, %v9085
        %v9087 = vsel %vm8577, %v9016, %v9086
        %v9089 = vshrl.u32 %v8558, 16
        %v9091 = vrot.slane %v9089, 3
        %v9092 = vshll.u32 %v8558, 16
        %v9094 = vrot.slane %v9092, 4
        %v9095 = vor.u32 %v9091, %v9094
        %v9096 = vsel %vm8577, %v9033, %v9095
        %v9098 = vshrl.u32 %v8560, 16
        %v9100 = vrot.slane %v9098, 3
        %v9101 = vshll.u32 %v8560, 16
        %v9103 = vrot.slane %v9101, 4
        %v9104 = vor.u32 %v9100, %v9103
        %v9105 = vsel %vm8577, %v9050, %v9104
        %v9107 = vshrl.u32 %v8270, 16
        %v9109 = vrot.slane %v9107, 3
        %v9110 = vshll.u32 %v8270, 16
        %v9112 = vrot.slane %v9110, 4
        %v9113 = vor.u32 %v9109, %v9112
        %v9114 = vsel %vm8577, %v9059, %v9113
        %v9116 = vshrl.u32 %v8271, 16
        %v9118 = vrot.slane %v9116, 3
        %v9119 = vshll.u32 %v8271, 16
        %v9121 = vrot.slane %v9119, 4
        %v9122 = vor.u32 %v9118, %v9121
        %v9123 = vsel %vm8577, %v9068, %v9122
        %v9125 = vshrl.u32 %v8469, 16
        %v9127 = vrot.slane %v9125, 3
        %v9128 = vshll.u32 %v8469, 16
        %v9130 = vrot.slane %v9128, 4
        %v9131 = vor.u32 %v9127, %v9130
        %v9132 = vsel %vm8577, %v9077, %v9131
        %v9134 = vshrl.u32 %v8478, 16
        %v9136 = vrot.slane %v9134, 3
        %v9137 = vshll.u32 %v8478, 16
        %v9139 = vrot.slane %v9137, 4
        %v9140 = vor.u32 %v9136, %v9139
        %v9141 = vsel %vm8577, %v9086, %v9140
        %v9143 = vshrl.u32 %v8562, 16
        %v9145 = vrot.slane %v9143, 3
        %v9146 = vshll.u32 %v8562, 16
        %v9148 = vrot.slane %v9146, 4
        %v9149 = vor.u32 %v9145, %v9148
        %v9150 = vsel %vm8577, %v9095, %v9149
        %v9152 = vshrl.u32 %v8564, 16
        %v9154 = vrot.slane %v9152, 3
        %v9155 = vshll.u32 %v8564, 16
        %v9157 = vrot.slane %v9155, 4
        %v9158 = vor.u32 %v9154, %v9157
        %v9159 = vsel %vm8577, %v9104, %v9158
        %v9161 = vshrl.u32 %v8272, 16
        %v9163 = vrot.slane %v9161, 3
        %v9164 = vshll.u32 %v8272, 16
        %v9166 = vrot.slane %v9164, 4
        %v9167 = vor.u32 %v9163, %v9166
        %v9168 = vsel %vm8577, %v9113, %v9167
        %v9170 = vshrl.u32 %v8273, 16
        %v9172 = vrot.slane %v9170, 3
        %v9173 = vshll.u32 %v8273, 16
        %v9175 = vrot.slane %v9173, 4
        %v9176 = vor.u32 %v9172, %v9175
        %v9177 = vsel %vm8577, %v9122, %v9176
        %v9179 = vshrl.u32 %v8487, 16
        %v9181 = vrot.slane %v9179, 3
        %v9182 = vshll.u32 %v8487, 16
        %v9184 = vrot.slane %v9182, 4
        %v9185 = vor.u32 %v9181, %v9184
        %v9186 = vsel %vm8577, %v9131, %v9185
        %v9188 = vshrl.u32 %v8496, 16
        %v9190 = vrot.slane %v9188, 3
        %v9191 = vshll.u32 %v8496, 16
        %v9193 = vrot.slane %v9191, 4
        %v9194 = vor.u32 %v9190, %v9193
        %v9195 = vsel %vm8577, %v9140, %v9194
        %v9197 = vshrl.u32 %v8566, 16
        %v9199 = vrot.slane %v9197, 3
        %v9200 = vshll.u32 %v8566, 16
        %v9202 = vrot.slane %v9200, 4
        %v9203 = vor.u32 %v9199, %v9202
        %v9204 = vsel %vm8577, %v9149, %v9203
        %v9206 = vshrl.u32 %v8568, 16
        %v9208 = vrot.slane %v9206, 3
        %v9209 = vshll.u32 %v8568, 16
        %v9211 = vrot.slane %v9209, 4
        %v9212 = vor.u32 %v9208, %v9211
        %v9213 = vsel %vm8577, %v9158, %v9212
        %v9215 = vshrl.u32 %v8274, 16
        %v9217 = vrot.slane %v9215, 3
        %v9218 = vshll.u32 %v8274, 16
        %v9220 = vrot.slane %v9218, 4
        %v9221 = vor.u32 %v9217, %v9220
        %v9222 = vsel %vm8577, %v9167, %v9221
        %v9224 = vshrl.u32 %v8275, 16
        %v9226 = vrot.slane %v9224, 3
        %v9227 = vshll.u32 %v8275, 16
        %v9229 = vrot.slane %v9227, 4
        %v9230 = vor.u32 %v9226, %v9229
        %v9231 = vsel %vm8577, %v9176, %v9230
        %v9233 = vshrl.u32 %v8505, 16
        %v9235 = vrot.slane %v9233, 3
        %v9236 = vshll.u32 %v8505, 16
        %v9238 = vrot.slane %v9236, 4
        %v9239 = vor.u32 %v9235, %v9238
        %v9240 = vsel %vm8577, %v9185, %v9239
        %v9242 = vshrl.u32 %v8514, 16
        %v9244 = vrot.slane %v9242, 3
        %v9245 = vshll.u32 %v8514, 16
        %v9247 = vrot.slane %v9245, 4
        %v9248 = vor.u32 %v9244, %v9247
        %v9249 = vsel %vm8577, %v9194, %v9248
        %v9251 = vshrl.u32 %v8570, 16
        %v9253 = vrot.slane %v9251, 3
        %v9254 = vshll.u32 %v8570, 16
        %v9256 = vrot.slane %v9254, 4
        %v9257 = vor.u32 %v9253, %v9256
        %v9258 = vsel %vm8577, %v9203, %v9257
        %v9260 = vshrl.u32 %v8572, 16
        %v9262 = vrot.slane %v9260, 3
        %v9263 = vshll.u32 %v8572, 16
        %v9265 = vrot.slane %v9263, 4
        %v9266 = vor.u32 %v9262, %v9265
        %v9267 = vsel %vm8577, %v9212, %v9266
        %v9269 = vshrl.u32 %v8276, 16
        %v9271 = vrot.slane %v9269, 3
        %v9272 = vshll.u32 %v8276, 16
        %v9274 = vrot.slane %v9272, 4
        %v9275 = vor.u32 %v9271, %v9274
        %v9276 = vsel %vm8577, %v9221, %v9275
        %v9278 = vshrl.u32 %v8277, 16
        %v9280 = vrot.slane %v9278, 3
        %v9281 = vshll.u32 %v8277, 16
        %v9283 = vrot.slane %v9281, 4
        %v9284 = vor.u32 %v9280, %v9283
        %v9285 = vsel %vm8577, %v9230, %v9284
        %v9287 = vshrl.u32 %v8504, 16
        %v9289 = vrot.slane %v9287, 3
        %v9290 = vshll.u32 %v8504, 16
        %v9292 = vrot.slane %v9290, 4
        %v9293 = vor.u32 %v9289, %v9292
        %v9294 = vsel %vm8577, %v9239, %v9293
        %v9296 = vshrl.u32 %v8513, 16
        %v9298 = vrot.slane %v9296, 3
        %v9299 = vshll.u32 %v8513, 16
        %v9301 = vrot.slane %v9299, 4
        %v9302 = vor.u32 %v9298, %v9301
        %v9303 = vsel %vm8577, %v9248, %v9302
        %v9305 = vshrl.u32 %v8574, 16
        %v9307 = vrot.slane %v9305, 3
        %v9308 = vshll.u32 %v8574, 16
        %v9310 = vrot.slane %v9308, 4
        %v9311 = vor.u32 %v9307, %v9310
        %v9312 = vsel %vm8577, %v9257, %v9311
        %v9314 = vshrl.u32 %v8576, 16
        %v9316 = vrot.slane %v9314, 3
        %v9317 = vshll.u32 %v8576, 16
        %v9319 = vrot.slane %v9317, 4
        %v9320 = vor.u32 %v9316, %v9319
        %v9321 = vsel %vm8577, %v9266, %v9320
        %v9394 = vlaneseq
        %v9395 = vshrl.u32 %v9394, 7
        %v9396 = vsub.s32 0, %v9395
        %v9397 = vrot.slane %v2791, %v9396
        %v9494 = vunpack.c.l.b16 %v2695
        %v9495 = vunpack.c.l.b16 %v2696
        %v9496 = vunpack.c.l.b16 %v2697
        %v9497 = vunpack.c.l.b16 %v2698
        %v9498 = vunpack.c.l.b16 %v2699
        %v9499 = vunpack.c.l.b16 %v2700
        %v9500 = vunpack.c.l.b16 %v2701
        %v9501 = vunpack.c.l.b16 %v2702
        %v9502 = vunpack.c.l.b16 %v2703
        %v9503 = vunpack.c.l.b16 %v2704
        %v9504 = vunpack.c.l.b16 %v2705
        %v9505 = vunpack.c.l.b16 %v2706
        %v9506 = vunpack.c.l.b16 %v2707
        %v9507 = vunpack.c.l.b16 %v2708
        %v9508 = vunpack.c.l.b16 %v2709
        %v9509 = vunpack.c.l.b16 %v2710
        %v9510 = vunpack.c.l.b16 %v2711
        %v9511 = vunpack.c.l.b16 %v2712
        %v9512 = vunpack.c.l.b16 %v2713
        %v9513 = vunpack.c.l.b16 %v2714
        %v9514 = vunpack.c.l.b16 %v2715
        %v9515 = vunpack.c.l.b16 %v2716
        %v9516 = vunpack.c.l.b16 %v2717
        %v9517 = vunpack.c.l.b16 %v2718
        %v9518 = vunpack.c.l.b16 %v2719
        %v9519 = vunpack.c.l.b16 %v2720
        %v9520 = vunpack.c.l.b16 %v2721
        %v9521 = vunpack.c.l.b16 %v2722
        %v9522 = vunpack.c.l.b16 %v2723
        %v9523 = vunpack.c.l.b16 %v2724
        %v9524 = vunpack.c.l.b16 %v2725
        %v9525 = vunpack.c.l.b16 %v2726
        %v9526 = vunpack.c.l.b16 %v2727
        %v9527 = vunpack.c.l.b16 %v2728
        %v9528 = vunpack.c.l.b16 %v2729
        %v9529 = vunpack.c.l.b16 %v2730
        %v9530 = vunpack.c.l.b16 %v2731
        %v9531 = vunpack.c.l.b16 %v2732
        %v9532 = vunpack.c.l.b16 %v2733
        %v9533 = vunpack.c.l.b16 %v2734
        %v9534 = vunpack.c.l.b16 %v2735
        %v9535 = vunpack.c.l.b16 %v2736
        %v9536 = vunpack.c.l.b16 %v2737
        %v9537 = vunpack.c.l.b16 %v2738
        %v9538 = vunpack.c.l.b16 %v2739
        %v9539 = vunpack.c.l.b16 %v2740
        %v9540 = vunpack.c.l.b16 %v2741
        %v9541 = vunpack.c.l.b16 %v2742
        %v9542 = vunpack.c.l.b16 %v2743
        %v9543 = vunpack.c.l.b16 %v2744
        %v9544 = vunpack.c.l.b16 %v2745
        %v9545 = vunpack.c.l.b16 %v2746
        %v9546 = vunpack.c.l.b16 %v2747
        %v9547 = vunpack.c.l.b16 %v2748
        %v9548 = vunpack.c.l.b16 %v2749
        %v9549 = vunpack.c.l.b16 %v2750
        %v9550 = vunpack.c.l.b16 %v2751
        %v9551 = vunpack.c.l.b16 %v2752
        %v9552 = vunpack.c.l.b16 %v2753
        %v9553 = vunpack.c.l.b16 %v2754
        %v9554 = vunpack.c.l.b16 %v2755
        %v9555 = vunpack.c.l.b16 %v2756
        %v9556 = vunpack.c.l.b16 %v2757
        %v9557 = vunpack.c.l.b16 %v2758
        %v9558 = vunpack.c.l.b16 %v2759
        %v9559 = vunpack.c.l.b16 %v2760
        %v9560 = vunpack.c.l.b16 %v2761
        %v9561 = vunpack.c.l.b16 %v2762
        %v9562 = vunpack.c.l.b16 %v2763
        %v9563 = vunpack.c.l.b16 %v2764
        %v9564 = vunpack.c.l.b16 %v2765
        %v9565 = vunpack.c.l.b16 %v2766
        %v9566 = vunpack.c.l.b16 %v2767
        %v9567 = vunpack.c.l.b16 %v2768
        %v9568 = vunpack.c.l.b16 %v2769
        %v9569 = vunpack.c.l.b16 %v2770
        %v9570 = vunpack.c.l.b16 %v2771
        %v9571 = vunpack.c.l.b16 %v2772
        %v9572 = vunpack.c.l.b16 %v2773
        %v9573 = vunpack.c.l.b16 %v2774
        %v9574 = vunpack.c.l.b16 %v2775
        %v9575 = vunpack.c.l.b16 %v2776
        %v9576 = vunpack.c.l.b16 %v2777
        %v9577 = vunpack.c.l.b16 %v2778
        %v9578 = vunpack.c.l.b16 %v2779
        %v9579 = vunpack.c.l.b16 %v2780
        %v9580 = vunpack.c.l.b16 %v2781
        %v9581 = vunpack.c.l.b16 %v2782
        %v9582 = vunpack.c.l.b16 %v2783
        %v9583 = vunpack.c.l.b16 %v2784
        %v9584 = vunpack.c.l.b16 %v2785
        %v9585 = vunpack.c.l.b16 %v2786
        %v9586 = vunpack.c.l.b16 %v2787
        %v9587 = vunpack.c.l.b16 %v2788
        %v9588 = vunpack.c.l.b16 %v2789
        %v9589 = vunpack.c.l.b16 %v2790
        %v9590 = vpack.c.b16 %v9495, %v9494
        %v9591 = vpack.c.b16 %v9497, %v9496
        %v9592 = vpack.c.b16 %v9499, %v9498
        %v9593 = vpack.c.b16 %v9501, %v9500
        %v9594 = vpack.c.b16 %v9503, %v9502
        %v9595 = vpack.c.b16 %v9505, %v9504
        %v9596 = vpack.c.b16 %v9507, %v9506
        %v9597 = vpack.c.b16 %v9509, %v9508
        %v9598 = vpack.c.b16 %v9511, %v9510
        %v9599 = vpack.c.b16 %v9513, %v9512
        %v9600 = vpack.c.b16 %v9515, %v9514
        %v9601 = vpack.c.b16 %v9517, %v9516
        %v9602 = vpack.c.b16 %v9519, %v9518
        %v9603 = vpack.c.b16 %v9521, %v9520
        %v9604 = vpack.c.b16 %v9523, %v9522
        %v9605 = vpack.c.b16 %v9525, %v9524
        %v9606 = vpack.c.b16 %v9527, %v9526
        %v9607 = vpack.c.b16 %v9529, %v9528
        %v9608 = vpack.c.b16 %v9531, %v9530
        %v9609 = vpack.c.b16 %v9533, %v9532
        %v9610 = vpack.c.b16 %v9535, %v9534
        %v9611 = vpack.c.b16 %v9537, %v9536
        %v9612 = vpack.c.b16 %v9539, %v9538
        %v9613 = vpack.c.b16 %v9541, %v9540
        %v9614 = vpack.c.b16 %v9543, %v9542
        %v9615 = vpack.c.b16 %v9545, %v9544
        %v9616 = vpack.c.b16 %v9547, %v9546
        %v9617 = vpack.c.b16 %v9549, %v9548
        %v9618 = vpack.c.b16 %v9551, %v9550
        %v9619 = vpack.c.b16 %v9553, %v9552
        %v9620 = vpack.c.b16 %v9555, %v9554
        %v9621 = vpack.c.b16 %v9557, %v9556
        %v9622 = vpack.c.b16 %v9559, %v9558
        %v9623 = vpack.c.b16 %v9561, %v9560
        %v9624 = vpack.c.b16 %v9563, %v9562
        %v9625 = vpack.c.b16 %v9565, %v9564
        %v9626 = vpack.c.b16 %v9567, %v9566
        %v9627 = vpack.c.b16 %v9569, %v9568
        %v9628 = vpack.c.b16 %v9571, %v9570
        %v9629 = vpack.c.b16 %v9573, %v9572
        %v9630 = vpack.c.b16 %v9575, %v9574
        %v9631 = vpack.c.b16 %v9577, %v9576
        %v9632 = vpack.c.b16 %v9579, %v9578
        %v9633 = vpack.c.b16 %v9581, %v9580
        %v9634 = vpack.c.b16 %v9583, %v9582
        %v9635 = vpack.c.b16 %v9585, %v9584
        %v9636 = vpack.c.b16 %v9587, %v9586
        %v9637 = vpack.c.b16 %v9589, %v9588
        %9686 = vmatprep.subr.bf16.mxu0 0
        %9687 = vmatpush1.bf16.msra.mxu0 %v9597
        %9688 = vmatprep.subr.bf16.mxu0 0
        %9689 = vmatpush1.bf16.msra.mxu0 %v9596
        %9690 = vmatprep.subr.bf16.mxu0 0
        %9691 = vmatpush1.bf16.msra.mxu0 %v9595
        %9692 = vmatprep.subr.bf16.mxu0 0
        %9693 = vmatpush1.bf16.msra.mxu0 %v9594
        %9694 = vmatprep.subr.bf16.mxu0 0
        %9695 = vmatpush1.bf16.msra.mxu0 %v9593
        %9696 = vmatprep.subr.bf16.mxu0 0
        %9697 = vmatpush1.bf16.msra.mxu0 %v9592
        %9698 = vmatprep.subr.bf16.mxu0 0
        %9699 = vmatpush1.bf16.msra.mxu0 %v9591
        %9700 = vmatprep.subr.bf16.mxu0 0
        %9701 = vmatpush1.bf16.msra.mxu0 %v9590
        %9702 = vmatprep.subr.bf16.mxu0 0
        %9703 = vmatpush2.bf16.msra.mxu0 %v9605
        %9704 = vmatprep.subr.bf16.mxu0 0
        %9705 = vmatpush2.bf16.msra.mxu0 %v9604
        %9706 = vmatprep.subr.bf16.mxu0 0
        %9707 = vmatpush2.bf16.msra.mxu0 %v9603
        %9708 = vmatprep.subr.bf16.mxu0 0
        %9709 = vmatpush2.bf16.msra.mxu0 %v9602
        %9710 = vmatprep.subr.bf16.mxu0 0
        %9711 = vmatpush2.bf16.msra.mxu0 %v9601
        %9712 = vmatprep.subr.bf16.mxu0 0
        %9713 = vmatpush2.bf16.msra.mxu0 %v9600
        %9714 = vmatprep.subr.bf16.mxu0 0
        %9715 = vmatpush2.bf16.msra.mxu0 %v9599
        %9716 = vmatprep.subr.bf16.mxu0 0
        %9717 = vmatpush2.bf16.msra.mxu0 %v9598
        %9718 = vmatprep.mubr.bf16.mxu0 %v8611
        %9719 = vmatmul.mubr.bf16.gmra.mxu0 %v8594
        %v9720 = vpop.f32.mrf.mxu0
        %v9721 = vadd.f32 %v9397, %v9720
        %v9722 = vpop.f32.mrf.mxu0
        %v9723 = vpop.f32.mrf.mxu0
        %v9724 = vadd.f32 %v9397, %v9723
        %v9725 = vpop.f32.mrf.mxu0
        %9726 = vmatprep.mubr.bf16.mxu0 %v8697
        %9727 = vmatmul.mubr.bf16.gmra.mxu0 %v8688
        %v9728 = vpop.f32.mrf.mxu0
        %v9729 = vadd.f32 %v9397, %v9728
        %v9730 = vpop.f32.mrf.mxu0
        %v9731 = vpop.f32.mrf.mxu0
        %v9732 = vadd.f32 %v9397, %v9731
        %v9733 = vpop.f32.mrf.mxu0
        %9734 = vmatprep.mubr.bf16.mxu0 %v8751
        %9735 = vmatmul.mubr.bf16.gmra.mxu0 %v8742
        %v9736 = vpop.f32.mrf.mxu0
        %v9737 = vadd.f32 %v9397, %v9736
        %v9738 = vpop.f32.mrf.mxu0
        %v9739 = vpop.f32.mrf.mxu0
        %v9740 = vadd.f32 %v9397, %v9739
        %v9741 = vpop.f32.mrf.mxu0
        %9742 = vmatprep.mubr.bf16.mxu0 %v8805
        %9743 = vmatmul.mubr.bf16.gmra.mxu0 %v8796
        %v9744 = vpop.f32.mrf.mxu0
        %v9745 = vadd.f32 %v9397, %v9744
        %v9746 = vpop.f32.mrf.mxu0
        %v9747 = vpop.f32.mrf.mxu0
        %v9748 = vadd.f32 %v9397, %v9747
        %v9749 = vpop.f32.mrf.mxu0
        %9750 = vmatprep.mubr.bf16.mxu0 %v8859
        %9751 = vmatmul.mubr.bf16.gmra.mxu0 %v8850
        %v9752 = vpop.f32.mrf.mxu0
        %v9753 = vadd.f32 %v9397, %v9752
        %v9754 = vpop.f32.mrf.mxu0
        %v9755 = vpop.f32.mrf.mxu0
        %v9756 = vadd.f32 %v9397, %v9755
        %v9757 = vpop.f32.mrf.mxu0
        %9758 = vmatprep.mubr.bf16.mxu0 %v8913
        %9759 = vmatmul.mubr.bf16.gmra.mxu0 %v8904
        %v9760 = vpop.f32.mrf.mxu0
        %v9761 = vadd.f32 %v9397, %v9760
        %v9762 = vpop.f32.mrf.mxu0
        %v9763 = vpop.f32.mrf.mxu0
        %v9764 = vadd.f32 %v9397, %v9763
        %v9765 = vpop.f32.mrf.mxu0
        %9766 = vmatprep.mubr.bf16.mxu0 %v8983
        %9767 = vmatmul.mubr.bf16.gmra.mxu0 %v8966
        %v9768 = vpop.f32.mrf.mxu0
        %v9769 = vadd.f32 %v9397, %v9768
        %v9770 = vpop.f32.mrf.mxu0
        %v9771 = vpop.f32.mrf.mxu0
        %v9772 = vadd.f32 %v9397, %v9771
        %v9773 = vpop.f32.mrf.mxu0
        %9774 = vmatprep.mubr.bf16.mxu0 %v9069
        %9775 = vmatmul.mubr.bf16.gmra.mxu0 %v9060
        %v9776 = vpop.f32.mrf.mxu0
        %v9777 = vadd.f32 %v9397, %v9776
        %v9778 = vpop.f32.mrf.mxu0
        %v9779 = vpop.f32.mrf.mxu0
        %v9780 = vadd.f32 %v9397, %v9779
        %v9781 = vpop.f32.mrf.mxu0
        %9782 = vmatprep.mubr.bf16.mxu0 %v9123
        %9783 = vmatmul.mubr.bf16.gmra.mxu0 %v9114
        %v9784 = vpop.f32.mrf.mxu0
        %v9785 = vadd.f32 %v9397, %v9784
        %v9786 = vpop.f32.mrf.mxu0
        %v9787 = vpop.f32.mrf.mxu0
        %v9788 = vadd.f32 %v9397, %v9787
        %v9789 = vpop.f32.mrf.mxu0
        %9790 = vmatprep.mubr.bf16.mxu0 %v9177
        %9791 = vmatmul.mubr.bf16.gmra.mxu0 %v9168
        %v9792 = vpop.f32.mrf.mxu0
        %v9793 = vadd.f32 %v9397, %v9792
        %v9794 = vpop.f32.mrf.mxu0
        %v9795 = vpop.f32.mrf.mxu0
        %v9796 = vadd.f32 %v9397, %v9795
        %v9797 = vpop.f32.mrf.mxu0
        %9798 = vmatprep.mubr.bf16.mxu0 %v9231
        %9799 = vmatmul.mubr.bf16.gmra.mxu0 %v9222
        %v9800 = vpop.f32.mrf.mxu0
        %v9801 = vadd.f32 %v9397, %v9800
        %v9802 = vpop.f32.mrf.mxu0
        %v9803 = vpop.f32.mrf.mxu0
        %v9804 = vadd.f32 %v9397, %v9803
        %v9805 = vpop.f32.mrf.mxu0
        %9806 = vmatprep.mubr.bf16.mxu0 %v9285
        %9807 = vmatmul.mubr.bf16.gmra.mxu0 %v9276
        %v9808 = vpop.f32.mrf.mxu0
        %v9809 = vadd.f32 %v9397, %v9808
        %v9810 = vpop.f32.mrf.mxu0
        %v9811 = vpop.f32.mrf.mxu0
        %v9812 = vadd.f32 %v9397, %v9811
        %v9813 = vpop.f32.mrf.mxu0
        %9814 = vdwg.mxu0
        %9815 = vmatprep.subr.bf16.mxu0 0
        %9816 = vmatpush1.bf16.msra.mxu0 %v9613
        %9817 = vmatprep.subr.bf16.mxu0 0
        %9818 = vmatpush1.bf16.msra.mxu0 %v9612
        %9819 = vmatprep.subr.bf16.mxu0 0
        %9820 = vmatpush1.bf16.msra.mxu0 %v9611
        %9821 = vmatprep.subr.bf16.mxu0 0
        %9822 = vmatpush1.bf16.msra.mxu0 %v9610
        %9823 = vmatprep.subr.bf16.mxu0 0
        %9824 = vmatpush1.bf16.msra.mxu0 %v9609
        %9825 = vmatprep.subr.bf16.mxu0 0
        %9826 = vmatpush1.bf16.msra.mxu0 %v9608
        %9827 = vmatprep.subr.bf16.mxu0 0
        %9828 = vmatpush1.bf16.msra.mxu0 %v9607
        %9829 = vmatprep.subr.bf16.mxu0 0
        %9830 = vmatpush1.bf16.msra.mxu0 %v9606
        %9831 = vmatprep.subr.bf16.mxu0 0
        %9832 = vmatpush2.bf16.msra.mxu0 %v9621
        %9833 = vmatprep.subr.bf16.mxu0 0
        %9834 = vmatpush2.bf16.msra.mxu0 %v9620
        %9835 = vmatprep.subr.bf16.mxu0 0
        %9836 = vmatpush2.bf16.msra.mxu0 %v9619
        %9837 = vmatprep.subr.bf16.mxu0 0
        %9838 = vmatpush2.bf16.msra.mxu0 %v9618
        %9839 = vmatprep.subr.bf16.mxu0 0
        %9840 = vmatpush2.bf16.msra.mxu0 %v9617
        %9841 = vmatprep.subr.bf16.mxu0 0
        %9842 = vmatpush2.bf16.msra.mxu0 %v9616
        %9843 = vmatprep.subr.bf16.mxu0 0
        %9844 = vmatpush2.bf16.msra.mxu0 %v9615
        %9845 = vmatprep.subr.bf16.mxu0 0
        %9846 = vmatpush2.bf16.msra.mxu0 %v9614
        %9847 = vmatprep.mubr.bf16.mxu0 %v8645
        %9848 = vmatmul.mubr.bf16.gmra.mxu0 %v8628
        %v9849 = vpop.f32.mrf.mxu0
        %v9850 = vadd.f32 %v9721, %v9849
        %v9851 = vpop.f32.mrf.mxu0
        %v9852 = vpop.f32.mrf.mxu0
        %v9853 = vadd.f32 %v9724, %v9852
        %v9854 = vpop.f32.mrf.mxu0
        %9855 = vmatprep.mubr.bf16.mxu0 %v8715
        %9856 = vmatmul.mubr.bf16.gmra.mxu0 %v8706
        %v9857 = vpop.f32.mrf.mxu0
        %v9858 = vadd.f32 %v9729, %v9857
        %v9859 = vpop.f32.mrf.mxu0
        %v9860 = vpop.f32.mrf.mxu0
        %v9861 = vadd.f32 %v9732, %v9860
        %v9862 = vpop.f32.mrf.mxu0
        %9863 = vmatprep.mubr.bf16.mxu0 %v8769
        %9864 = vmatmul.mubr.bf16.gmra.mxu0 %v8760
        %v9865 = vpop.f32.mrf.mxu0
        %v9866 = vadd.f32 %v9737, %v9865
        %v9867 = vpop.f32.mrf.mxu0
        %v9868 = vpop.f32.mrf.mxu0
        %v9869 = vadd.f32 %v9740, %v9868
        %v9870 = vpop.f32.mrf.mxu0
        %9871 = vmatprep.mubr.bf16.mxu0 %v8823
        %9872 = vmatmul.mubr.bf16.gmra.mxu0 %v8814
        %v9873 = vpop.f32.mrf.mxu0
        %v9874 = vadd.f32 %v9745, %v9873
        %v9875 = vpop.f32.mrf.mxu0
        %v9876 = vpop.f32.mrf.mxu0
        %v9877 = vadd.f32 %v9748, %v9876
        %v9878 = vpop.f32.mrf.mxu0
        %9879 = vmatprep.mubr.bf16.mxu0 %v8877
        %9880 = vmatmul.mubr.bf16.gmra.mxu0 %v8868
        %v9881 = vpop.f32.mrf.mxu0
        %v9882 = vadd.f32 %v9753, %v9881
        %v9883 = vpop.f32.mrf.mxu0
        %v9884 = vpop.f32.mrf.mxu0
        %v9885 = vadd.f32 %v9756, %v9884
        %v9886 = vpop.f32.mrf.mxu0
        %9887 = vmatprep.mubr.bf16.mxu0 %v8931
        %9888 = vmatmul.mubr.bf16.gmra.mxu0 %v8922
        %v9889 = vpop.f32.mrf.mxu0
        %v9890 = vadd.f32 %v9761, %v9889
        %v9891 = vpop.f32.mrf.mxu0
        %v9892 = vpop.f32.mrf.mxu0
        %v9893 = vadd.f32 %v9764, %v9892
        %v9894 = vpop.f32.mrf.mxu0
        %9895 = vmatprep.mubr.bf16.mxu0 %v9017
        %9896 = vmatmul.mubr.bf16.gmra.mxu0 %v9000
        %v9897 = vpop.f32.mrf.mxu0
        %v9898 = vadd.f32 %v9769, %v9897
        %v9899 = vpop.f32.mrf.mxu0
        %v9900 = vpop.f32.mrf.mxu0
        %v9901 = vadd.f32 %v9772, %v9900
        %v9902 = vpop.f32.mrf.mxu0
        %9903 = vmatprep.mubr.bf16.mxu0 %v9087
        %9904 = vmatmul.mubr.bf16.gmra.mxu0 %v9078
        %v9905 = vpop.f32.mrf.mxu0
        %v9906 = vadd.f32 %v9777, %v9905
        %v9907 = vpop.f32.mrf.mxu0
        %v9908 = vpop.f32.mrf.mxu0
        %v9909 = vadd.f32 %v9780, %v9908
        %v9910 = vpop.f32.mrf.mxu0
        %9911 = vmatprep.mubr.bf16.mxu0 %v9141
        %9912 = vmatmul.mubr.bf16.gmra.mxu0 %v9132
        %v9913 = vpop.f32.mrf.mxu0
        %v9914 = vadd.f32 %v9785, %v9913
        %v9915 = vpop.f32.mrf.mxu0
        %v9916 = vpop.f32.mrf.mxu0
        %v9917 = vadd.f32 %v9788, %v9916
        %v9918 = vpop.f32.mrf.mxu0
        %9919 = vmatprep.mubr.bf16.mxu0 %v9195
        %9920 = vmatmul.mubr.bf16.gmra.mxu0 %v9186
        %v9921 = vpop.f32.mrf.mxu0
        %v9922 = vadd.f32 %v9793, %v9921
        %v9923 = vpop.f32.mrf.mxu0
        %v9924 = vpop.f32.mrf.mxu0
        %v9925 = vadd.f32 %v9796, %v9924
        %v9926 = vpop.f32.mrf.mxu0
        %9927 = vmatprep.mubr.bf16.mxu0 %v9249
        %9928 = vmatmul.mubr.bf16.gmra.mxu0 %v9240
        %v9929 = vpop.f32.mrf.mxu0
        %v9930 = vadd.f32 %v9801, %v9929
        %v9931 = vpop.f32.mrf.mxu0
        %v9932 = vpop.f32.mrf.mxu0
        %v9933 = vadd.f32 %v9804, %v9932
        %v9934 = vpop.f32.mrf.mxu0
        %9935 = vmatprep.mubr.bf16.mxu0 %v9303
        %9936 = vmatmul.mubr.bf16.gmra.mxu0 %v9294
        %v9937 = vpop.f32.mrf.mxu0
        %v9938 = vadd.f32 %v9809, %v9937
        %v9939 = vpop.f32.mrf.mxu0
        %v9940 = vpop.f32.mrf.mxu0
        %v9941 = vadd.f32 %v9812, %v9940
        %v9942 = vpop.f32.mrf.mxu0
        %9943 = vdwg.mxu0
        %9944 = vmatprep.subr.bf16.mxu0 0
        %9945 = vmatpush1.bf16.msra.mxu0 %v9629
        %9946 = vmatprep.subr.bf16.mxu0 0
        %9947 = vmatpush1.bf16.msra.mxu0 %v9628
        %9948 = vmatprep.subr.bf16.mxu0 0
        %9949 = vmatpush1.bf16.msra.mxu0 %v9627
        %9950 = vmatprep.subr.bf16.mxu0 0
        %9951 = vmatpush1.bf16.msra.mxu0 %v9626
        %9952 = vmatprep.subr.bf16.mxu0 0
        %9953 = vmatpush1.bf16.msra.mxu0 %v9625
        %9954 = vmatprep.subr.bf16.mxu0 0
        %9955 = vmatpush1.bf16.msra.mxu0 %v9624
        %9956 = vmatprep.subr.bf16.mxu0 0
        %9957 = vmatpush1.bf16.msra.mxu0 %v9623
        %9958 = vmatprep.subr.bf16.mxu0 0
        %9959 = vmatpush1.bf16.msra.mxu0 %v9622
        %9960 = vmatprep.subr.bf16.mxu0 0
        %9961 = vmatpush2.bf16.msra.mxu0 %v9637
        %9962 = vmatprep.subr.bf16.mxu0 0
        %9963 = vmatpush2.bf16.msra.mxu0 %v9636
        %9964 = vmatprep.subr.bf16.mxu0 0
        %9965 = vmatpush2.bf16.msra.mxu0 %v9635
        %9966 = vmatprep.subr.bf16.mxu0 0
        %9967 = vmatpush2.bf16.msra.mxu0 %v9634
        %9968 = vmatprep.subr.bf16.mxu0 0
        %9969 = vmatpush2.bf16.msra.mxu0 %v9633
        %9970 = vmatprep.subr.bf16.mxu0 0
        %9971 = vmatpush2.bf16.msra.mxu0 %v9632
        %9972 = vmatprep.subr.bf16.mxu0 0
        %9973 = vmatpush2.bf16.msra.mxu0 %v9631
        %9974 = vmatprep.subr.bf16.mxu0 0
        %9975 = vmatpush2.bf16.msra.mxu0 %v9630
        %9976 = vmatprep.mubr.bf16.mxu0 %v8679
        %9977 = vmatmul.mubr.bf16.gmra.mxu0 %v8662
        %v9978 = vpop.f32.mrf.mxu0
        %v9979 = vadd.f32 %v9850, %v9978
        %v9980 = vpop.f32.mrf.mxu0
        %v9981 = vpop.f32.mrf.mxu0
        %v9982 = vadd.f32 %v9853, %v9981
        %v9983 = vpop.f32.mrf.mxu0
        %9984 = vmatprep.mubr.bf16.mxu0 %v8733
        %9985 = vmatmul.mubr.bf16.gmra.mxu0 %v8724
        %v9986 = vpop.f32.mrf.mxu0
        %v9987 = vadd.f32 %v9858, %v9986
        %v9988 = vpop.f32.mrf.mxu0
        %v9989 = vpop.f32.mrf.mxu0
        %v9990 = vadd.f32 %v9861, %v9989
        %v9991 = vpop.f32.mrf.mxu0
        %9992 = vmatprep.mubr.bf16.mxu0 %v8787
        %9993 = vmatmul.mubr.bf16.gmra.mxu0 %v8778
        %v9994 = vpop.f32.mrf.mxu0
        %v9995 = vadd.f32 %v9866, %v9994
        %v9996 = vpop.f32.mrf.mxu0
        %v9997 = vpop.f32.mrf.mxu0
        %v9998 = vadd.f32 %v9869, %v9997
        %v9999 = vpop.f32.mrf.mxu0
        %10000 = vmatprep.mubr.bf16.mxu0 %v8841
        %10001 = vmatmul.mubr.bf16.gmra.mxu0 %v8832
        %v10002 = vpop.f32.mrf.mxu0
        %v10003 = vadd.f32 %v9874, %v10002
        %v10004 = vpop.f32.mrf.mxu0
        %v10005 = vpop.f32.mrf.mxu0
        %v10006 = vadd.f32 %v9877, %v10005
        %v10007 = vpop.f32.mrf.mxu0
        %10008 = vmatprep.mubr.bf16.mxu0 %v8895
        %10009 = vmatmul.mubr.bf16.gmra.mxu0 %v8886
        %v10010 = vpop.f32.mrf.mxu0
        %v10011 = vadd.f32 %v9882, %v10010
        %v10012 = vpop.f32.mrf.mxu0
        %v10013 = vpop.f32.mrf.mxu0
        %v10014 = vadd.f32 %v9885, %v10013
        %v10015 = vpop.f32.mrf.mxu0
        %10016 = vmatprep.mubr.bf16.mxu0 %v8949
        %10017 = vmatmul.mubr.bf16.gmra.mxu0 %v8940
        %v10018 = vpop.f32.mrf.mxu0
        %v10019 = vadd.f32 %v9890, %v10018
        %v10020 = vpop.f32.mrf.mxu0
        %v10021 = vpop.f32.mrf.mxu0
        %v10022 = vadd.f32 %v9893, %v10021
        %v10023 = vpop.f32.mrf.mxu0
        %10024 = vmatprep.mubr.bf16.mxu0 %v9051
        %10025 = vmatmul.mubr.bf16.gmra.mxu0 %v9034
        %v10026 = vpop.f32.mrf.mxu0
        %v10027 = vadd.f32 %v9898, %v10026
        %v10028 = vpop.f32.mrf.mxu0
        %v10029 = vpop.f32.mrf.mxu0
        %v10030 = vadd.f32 %v9901, %v10029
        %v10031 = vpop.f32.mrf.mxu0
        %10032 = vmatprep.mubr.bf16.mxu0 %v9105
        %10033 = vmatmul.mubr.bf16.gmra.mxu0 %v9096
        %v10034 = vpop.f32.mrf.mxu0
        %v10035 = vadd.f32 %v9906, %v10034
        %v10036 = vpop.f32.mrf.mxu0
        %v10037 = vpop.f32.mrf.mxu0
        %v10038 = vadd.f32 %v9909, %v10037
        %v10039 = vpop.f32.mrf.mxu0
        %10040 = vmatprep.mubr.bf16.mxu0 %v9159
        %10041 = vmatmul.mubr.bf16.gmra.mxu0 %v9150
        %v10042 = vpop.f32.mrf.mxu0
        %v10043 = vadd.f32 %v9914, %v10042
        %v10044 = vpop.f32.mrf.mxu0
        %v10045 = vpop.f32.mrf.mxu0
        %v10046 = vadd.f32 %v9917, %v10045
        %v10047 = vpop.f32.mrf.mxu0
        %10048 = vmatprep.mubr.bf16.mxu0 %v9213
        %10049 = vmatmul.mubr.bf16.gmra.mxu0 %v9204
        %v10050 = vpop.f32.mrf.mxu0
        %v10051 = vadd.f32 %v9922, %v10050
        %v10052 = vpop.f32.mrf.mxu0
        %v10053 = vpop.f32.mrf.mxu0
        %v10054 = vadd.f32 %v9925, %v10053
        %v10055 = vpop.f32.mrf.mxu0
        %10056 = vmatprep.mubr.bf16.mxu0 %v9267
        %10057 = vmatmul.mubr.bf16.gmra.mxu0 %v9258
        %v10058 = vpop.f32.mrf.mxu0
        %v10059 = vadd.f32 %v9930, %v10058
        %v10060 = vpop.f32.mrf.mxu0
        %v10061 = vpop.f32.mrf.mxu0
        %v10062 = vadd.f32 %v9933, %v10061
        %v10063 = vpop.f32.mrf.mxu0
        %10064 = vmatprep.mubr.bf16.mxu0 %v9321
        %10065 = vmatmul.mubr.bf16.gmra.mxu0 %v9312
        %v10066 = vpop.f32.mrf.mxu0
        %v10067 = vadd.f32 %v9938, %v10066
        %v10068 = vpop.f32.mrf.mxu0
        %v10069 = vpop.f32.mrf.mxu0
        %v10070 = vadd.f32 %v9941, %v10069
        %v10071 = vpop.f32.mrf.mxu0
        %10072 = vdwg.mxu0
        %v10073 = vmul.f32 %v9979, %v9979
        %v10074 = vmul.f32 %v9982, %v9982
        %v10075 = vmul.f32 %v9987, %v9987
        %v10076 = vmul.f32 %v9990, %v9990
        %v10077 = vmul.f32 %v9995, %v9995
        %v10078 = vmul.f32 %v9998, %v9998
        %v10079 = vmul.f32 %v10003, %v10003
        %v10080 = vmul.f32 %v10006, %v10006
        %v10081 = vmul.f32 %v10011, %v10011
        %v10082 = vmul.f32 %v10014, %v10014
        %v10083 = vmul.f32 %v10019, %v10019
        %v10084 = vmul.f32 %v10022, %v10022
        %v10085 = vmul.f32 %v10027, %v10027
        %v10086 = vmul.f32 %v10030, %v10030
        %v10087 = vmul.f32 %v10035, %v10035
        %v10088 = vmul.f32 %v10038, %v10038
        %v10089 = vmul.f32 %v10043, %v10043
        %v10090 = vmul.f32 %v10046, %v10046
        %v10091 = vmul.f32 %v10051, %v10051
        %v10092 = vmul.f32 %v10054, %v10054
        %v10093 = vmul.f32 %v10059, %v10059
        %v10094 = vmul.f32 %v10062, %v10062
        %v10095 = vmul.f32 %v10067, %v10067
        %v10096 = vmul.f32 %v10070, %v10070
        %10097 = vmatprep.subr.mxu0 %v10088
        %10098 = vmatpush1.msra.mxu0 %v10038
        %10099 = vmatprep.subr.mxu0 %v10087
        %10100 = vmatpush1.msra.mxu0 %v10035
        %10101 = vmatprep.subr.mxu0 %v10086
        %10102 = vmatpush1.msra.mxu0 %v10030
        %10103 = vmatprep.subr.mxu0 %v10085
        %10104 = vmatpush1.msra.mxu0 %v10027
        %10105 = vmatprep.subr.mxu0 %v10084
        %10106 = vmatpush1.msra.mxu0 %v10022
        %10107 = vmatprep.subr.mxu0 %v10083
        %10108 = vmatpush1.msra.mxu0 %v10019
        %10109 = vmatprep.subr.mxu0 %v10082
        %10110 = vmatpush1.msra.mxu0 %v10014
        %10111 = vmatprep.subr.mxu0 %v10081
        %10112 = vmatpush1.msra.mxu0 %v10011
        %10113 = vmatprep.subr.mxu0 %v10080
        %10114 = vmatpush1.msra.mxu0 %v10006
        %10115 = vmatprep.subr.mxu0 %v10079
        %10116 = vmatpush1.msra.mxu0 %v10003
        %10117 = vmatprep.subr.mxu0 %v10078
        %10118 = vmatpush1.msra.mxu0 %v9998
        %10119 = vmatprep.subr.mxu0 %v10077
        %10120 = vmatpush1.msra.mxu0 %v9995
        %10121 = vmatprep.subr.mxu0 %v10076
        %10122 = vmatpush1.msra.mxu0 %v9990
        %10123 = vmatprep.subr.mxu0 %v10075
        %10124 = vmatpush1.msra.mxu0 %v9987
        %10125 = vmatprep.subr.mxu0 %v10074
        %10126 = vmatpush1.msra.mxu0 %v9982
        %10127 = vmatprep.subr.mxu0 %v10073
        %10128 = vmatpush1.msra.mxu0 %v9979
        %10129 = vmatprep.subr.mxu0 0.0
        %10130 = vmatpush2.msra.mxu0 0.0
        %10131 = vmatprep.subr.mxu0 0.0
        %10132 = vmatpush2.msra.mxu0 0.0
        %10133 = vmatprep.subr.mxu0 0.0
        %10134 = vmatpush2.msra.mxu0 0.0
        %10135 = vmatprep.subr.mxu0 0.0
        %10136 = vmatpush2.msra.mxu0 0.0
        %10137 = vmatprep.subr.mxu0 0.0
        %10138 = vmatpush2.msra.mxu0 0.0
        %10139 = vmatprep.subr.mxu0 0.0
        %10140 = vmatpush2.msra.mxu0 0.0
        %10141 = vmatprep.subr.mxu0 0.0
        %10142 = vmatpush2.msra.mxu0 0.0
        %10143 = vmatprep.subr.mxu0 0.0
        %10144 = vmatpush2.msra.mxu0 0.0
        %10145 = vmatprep.subr.mxu0 %v10096
        %10146 = vmatpush2.msra.mxu0 %v10070
        %10147 = vmatprep.subr.mxu0 %v10095
        %10148 = vmatpush2.msra.mxu0 %v10067
        %10149 = vmatprep.subr.mxu0 %v10094
        %10150 = vmatpush2.msra.mxu0 %v10062
        %10151 = vmatprep.subr.mxu0 %v10093
        %10152 = vmatpush2.msra.mxu0 %v10059
        %10153 = vmatprep.subr.mxu0 %v10092
        %10154 = vmatpush2.msra.mxu0 %v10054
        %10155 = vmatprep.subr.mxu0 %v10091
        %10156 = vmatpush2.msra.mxu0 %v10051
        %10157 = vmatprep.subr.mxu0 %v10090
        %10158 = vmatpush2.msra.mxu0 %v10046
        %10159 = vmatprep.subr.mxu0 %v10089
        %10160 = vmatpush2.msra.mxu0 %v10043
        %10161 = vmatprep.mubr.f32.mxu0 %v4451
        %10162 = vmatmul.mubr.f32.gmra.mxu0 1.0
        %v10163 = vpop.f32.mrf.mxu0
        %v10164 = vadd.f32 0.0, %v10163
        %v10165 = vpop.f32.mrf.mxu0
        %v10166 = vadd.f32 0.0, %v10165
        %10167 = vdwg.mxu0
        %v10168 = vmul.f32 %v10164, 0.0052083335
        %v10169 = vmul.f32 %v10166, 0.0052083335
        %v10170 = vmul.f32 %v10168, %v10168
        %v10171 = vsub.f32 %v10169, %v10170
        %v10172 = vmax.f32 %v10171, 0.0
        %v10173 = vlaneseq
        %v10174 = vshrl.u32 %v10173, 7
        %v10175 = vsub.s32 0, %v10174
        %v10176 = vrot.slane %v10168, %v10175
        %v10177 = vsub.f32 %v9979, %v10176
        %v10178 = vsub.f32 %v9982, %v10176
        %v10179 = vsub.f32 %v9987, %v10176
        %v10180 = vsub.f32 %v9990, %v10176
        %v10181 = vsub.f32 %v9995, %v10176
        %v10182 = vsub.f32 %v9998, %v10176
        %v10183 = vsub.f32 %v10003, %v10176
        %v10184 = vsub.f32 %v10006, %v10176
        %v10185 = vsub.f32 %v10011, %v10176
        %v10186 = vsub.f32 %v10014, %v10176
        %v10187 = vsub.f32 %v10019, %v10176
        %v10188 = vsub.f32 %v10022, %v10176
        %v10189 = vsub.f32 %v10027, %v10176
        %v10190 = vsub.f32 %v10030, %v10176
        %v10191 = vsub.f32 %v10035, %v10176
        %v10192 = vsub.f32 %v10038, %v10176
        %v10193 = vsub.f32 %v10043, %v10176
        %v10194 = vsub.f32 %v10046, %v10176
        %v10195 = vsub.f32 %v10051, %v10176
        %v10196 = vsub.f32 %v10054, %v10176
        %v10197 = vsub.f32 %v10059, %v10176
        %v10198 = vsub.f32 %v10062, %v10176
        %v10199 = vsub.f32 %v10067, %v10176
        %v10200 = vsub.f32 %v10070, %v10176
        %v10201 = vadd.f32 %v10172, 1e-05
        %v10202 = vrsqrt.pop %v10201
        %v10203 = vlaneseq
        %v10204 = vshrl.u32 %v10203, 7
        %v10205 = vsub.s32 0, %v10204
        %v10206 = vrot.slane %v10202, %v10205
        %v10207 = vmul.f32 %v10177, %v10206
        %v10208 = vmul.f32 %v10178, %v10206
        %v10209 = vmul.f32 %v10179, %v10206
        %v10210 = vmul.f32 %v10180, %v10206
        %v10211 = vmul.f32 %v10181, %v10206
        %v10212 = vmul.f32 %v10182, %v10206
        %v10213 = vmul.f32 %v10183, %v10206
        %v10214 = vmul.f32 %v10184, %v10206
        %v10215 = vmul.f32 %v10185, %v10206
        %v10216 = vmul.f32 %v10186, %v10206
        %v10217 = vmul.f32 %v10187, %v10206
        %v10218 = vmul.f32 %v10188, %v10206
        %v10219 = vmul.f32 %v10189, %v10206
        %v10220 = vmul.f32 %v10190, %v10206
        %v10221 = vmul.f32 %v10191, %v10206
        %v10222 = vmul.f32 %v10192, %v10206
        %v10223 = vmul.f32 %v10193, %v10206
        %v10224 = vmul.f32 %v10194, %v10206
        %v10225 = vmul.f32 %v10195, %v10206
        %v10226 = vmul.f32 %v10196, %v10206
        %v10227 = vmul.f32 %v10197, %v10206
        %v10228 = vmul.f32 %v10198, %v10206
        %v10229 = vmul.f32 %v10199, %v10206
        %v10230 = vmul.f32 %v10200, %v10206
        %v10231 = vld [vmem:[#allocation2 + $0x10] sm:$0xff]
        %v10232 = vld [vmem:[#allocation2 + $0x18] sm:$0xff]
        %v10233 = vld [vmem:[#allocation2 + $0x20] sm:$0xff]
        %v10234 = vld [vmem:[#allocation2 + $0x28] sm:$0xff]
        %v10235 = vld [vmem:[#allocation2 + $0x30] sm:$0xff]
        %v10236 = vld [vmem:[#allocation2 + $0x38] sm:$0xff]
        %v10237 = vld [vmem:[#allocation2 + $0x40] sm:$0xff]
        %v10238 = vld [vmem:[#allocation2 + $0x48] sm:$0xff]
        %v10239 = vld [vmem:[#allocation2 + $0x50] sm:$0xff]
        %v10240 = vld [vmem:[#allocation2 + $0x58] sm:$0xff]
        %v10241 = vld [vmem:[#allocation2 + $0x60] sm:$0xff]
        %v10242 = vld [vmem:[#allocation2 + $0x68] sm:$0xff]
        %v10243 = vld [vmem:[#allocation2 + $0x90] sm:$0xff]
        %v10244 = vld [vmem:[#allocation2 + $0x98] sm:$0xff]
        %v10245 = vld [vmem:[#allocation2 + $0xa0] sm:$0xff]
        %v10246 = vld [vmem:[#allocation2 + $0xa8] sm:$0xff]
        %v10247 = vld [vmem:[#allocation2 + $0xb0] sm:$0xff]
        %v10248 = vld [vmem:[#allocation2 + $0xb8] sm:$0xff]
        %v10249 = vld [vmem:[#allocation2 + $0xc0] sm:$0xff]
        %v10250 = vld [vmem:[#allocation2 + $0xc8] sm:$0xff]
        %v10251 = vld [vmem:[#allocation2 + $0xd0] sm:$0xff]
        %v10252 = vld [vmem:[#allocation2 + $0xd8] sm:$0xff]
        %v10253 = vld [vmem:[#allocation2 + $0xe0] sm:$0xff]
        %v10254 = vld [vmem:[#allocation2 + $0xe8] sm:$0xff]
        %v10255 = vmul.f32 %v10231, 0.2
        %v10256 = vmul.f32 %v10232, 0.2
        %v10257 = vmul.f32 %v10233, 0.2
        %v10258 = vmul.f32 %v10234, 0.2
        %v10259 = vmul.f32 %v10235, 0.2
        %v10260 = vmul.f32 %v10236, 0.2
        %v10261 = vmul.f32 %v10237, 0.2
        %v10262 = vmul.f32 %v10238, 0.2
        %v10263 = vmul.f32 %v10239, 0.2
        %v10264 = vmul.f32 %v10240, 0.2
        %v10265 = vmul.f32 %v10241, 0.2
        %v10266 = vmul.f32 %v10242, 0.2
        %v10267 = vmul.f32 %v10243, 0.2
        %v10268 = vmul.f32 %v10244, 0.2
        %v10269 = vmul.f32 %v10245, 0.2
        %v10270 = vmul.f32 %v10246, 0.2
        %v10271 = vmul.f32 %v10247, 0.2
        %v10272 = vmul.f32 %v10248, 0.2
        %v10273 = vmul.f32 %v10249, 0.2
        %v10274 = vmul.f32 %v10250, 0.2
        %v10275 = vmul.f32 %v10251, 0.2
        %v10276 = vmul.f32 %v10252, 0.2
        %v10277 = vmul.f32 %v10253, 0.2
        %v10278 = vmul.f32 %v10254, 0.2
        %v10279 = vadd.f32 %v10207, %v10255
        %v10280 = vadd.f32 %v10208, %v10256
        %v10281 = vadd.f32 %v10209, %v10257
        %v10282 = vadd.f32 %v10210, %v10258
        %v10283 = vadd.f32 %v10211, %v10259
        %v10284 = vadd.f32 %v10212, %v10260
        %v10285 = vadd.f32 %v10213, %v10261
        %v10286 = vadd.f32 %v10214, %v10262
        %v10287 = vadd.f32 %v10215, %v10263
        %v10288 = vadd.f32 %v10216, %v10264
        %v10289 = vadd.f32 %v10217, %v10265
        %v10290 = vadd.f32 %v10218, %v10266
        %v10291 = vadd.f32 %v10219, %v10267
        %v10292 = vadd.f32 %v10220, %v10268
        %v10293 = vadd.f32 %v10221, %v10269
        %v10294 = vadd.f32 %v10222, %v10270
        %v10295 = vadd.f32 %v10223, %v10271
        %v10296 = vadd.f32 %v10224, %v10272
        %v10297 = vadd.f32 %v10225, %v10273
        %v10298 = vadd.f32 %v10226, %v10274
        %v10299 = vadd.f32 %v10227, %v10275
        %v10300 = vadd.f32 %v10228, %v10276
        %v10301 = vadd.f32 %v10229, %v10277
        %v10302 = vadd.f32 %v10230, %v10278
        %v10303 = vmax.f32 %v10279, 0.0
        %v10304 = vmax.f32 %v10280, 0.0
        %v10305 = vmax.f32 %v10281, 0.0
        %v10306 = vmax.f32 %v10282, 0.0
        %v10307 = vmax.f32 %v10283, 0.0
        %v10308 = vmax.f32 %v10284, 0.0
        %v10309 = vmax.f32 %v10285, 0.0
        %v10310 = vmax.f32 %v10286, 0.0
        %v10311 = vmax.f32 %v10287, 0.0
        %v10312 = vmax.f32 %v10288, 0.0
        %v10313 = vmax.f32 %v10289, 0.0
        %v10314 = vmax.f32 %v10290, 0.0
        %v10315 = vmax.f32 %v10291, 0.0
        %v10316 = vmax.f32 %v10292, 0.0
        %v10317 = vmax.f32 %v10293, 0.0
        %v10318 = vmax.f32 %v10294, 0.0
        %v10319 = vmax.f32 %v10295, 0.0
        %v10320 = vmax.f32 %v10296, 0.0
        %v10321 = vmax.f32 %v10297, 0.0
        %v10322 = vmax.f32 %v10298, 0.0
        %v10323 = vmax.f32 %v10299, 0.0
        %v10324 = vmax.f32 %v10300, 0.0
        %v10325 = vmax.f32 %v10301, 0.0
        %v10326 = vmax.f32 %v10302, 0.0
        %10327 = vst [vmem:[#allocation2 + $0x10] sm:$0xff] %v10303
        %10328 = vst [vmem:[#allocation2 + $0x18] sm:$0xff] %v10304
        %10329 = vst [vmem:[#allocation2 + $0x20] sm:$0xff] %v10305
        %10330 = vst [vmem:[#allocation2 + $0x28] sm:$0xff] %v10306
        %10331 = vst [vmem:[#allocation2 + $0x30] sm:$0xff] %v10307
        %10332 = vst [vmem:[#allocation2 + $0x38] sm:$0xff] %v10308
        %10333 = vst [vmem:[#allocation2 + $0x40] sm:$0xff] %v10309
        %10334 = vst [vmem:[#allocation2 + $0x48] sm:$0xff] %v10310
        %10335 = vst [vmem:[#allocation2 + $0x50] sm:$0xff] %v10311
        %10336 = vst [vmem:[#allocation2 + $0x58] sm:$0xff] %v10312
        %10337 = vst [vmem:[#allocation2 + $0x60] sm:$0xff] %v10313
        %10338 = vst [vmem:[#allocation2 + $0x68] sm:$0xff] %v10314
        %10339 = vst [vmem:[#allocation2 + $0x90] sm:$0xff] %v10315
        %10340 = vst [vmem:[#allocation2 + $0x98] sm:$0xff] %v10316
        %10341 = vst [vmem:[#allocation2 + $0xa0] sm:$0xff] %v10317
        %10342 = vst [vmem:[#allocation2 + $0xa8] sm:$0xff] %v10318
        %10343 = vst [vmem:[#allocation2 + $0xb0] sm:$0xff] %v10319
        %10344 = vst [vmem:[#allocation2 + $0xb8] sm:$0xff] %v10320
        %10345 = vst [vmem:[#allocation2 + $0xc0] sm:$0xff] %v10321
        %10346 = vst [vmem:[#allocation2 + $0xc8] sm:$0xff] %v10322
        %10347 = vst [vmem:[#allocation2 + $0xd0] sm:$0xff] %v10323
        %10348 = vst [vmem:[#allocation2 + $0xd8] sm:$0xff] %v10324
        %10349 = vst [vmem:[#allocation2 + $0xe0] sm:$0xff] %v10325
        %10350 = vst [vmem:[#allocation2 + $0xe8] sm:$0xff] %v10326
        %p10351 = scmp.eq.s32.totalorder %s28, 2
        // Predicated region
        $region117: #{net_forward.1} parent=71 // pred_check
          %p10352 = pneg %p10351
        $region118: #{net_forward.1} parent=71 // pred_check_branch
          %10354 = sbr.rel (%p10352) target = $region120
        $region119: #{net_forward.1} parent=71 // pred_region
          %v10355 = vld [vmem:[#allocation2 + $0x10] sm:$0xff]
          %v10356 = vld [vmem:[#allocation2 + $0x18] sm:$0xff]
          %v10357 = vld [vmem:[#allocation2 + $0x20] sm:$0xff]
          %v10358 = vld [vmem:[#allocation2 + $0x28] sm:$0xff]
          %v10359 = vld [vmem:[#allocation2 + $0x30] sm:$0xff]
          %v10360 = vld [vmem:[#allocation2 + $0x38] sm:$0xff]
          %v10361 = vld [vmem:[#allocation2 + $0x40] sm:$0xff]
          %v10362 = vld [vmem:[#allocation2 + $0x48] sm:$0xff]
          %v10363 = vld [vmem:[#allocation2 + $0x50] sm:$0xff]
          %v10364 = vld [vmem:[#allocation2 + $0x58] sm:$0xff]
          %v10365 = vld [vmem:[#allocation2 + $0x60] sm:$0xff]
          %v10366 = vld [vmem:[#allocation2 + $0x68] sm:$0xff]
          %v10367 = vld [vmem:[#allocation2 + $0x90] sm:$0xff]
          %v10368 = vld [vmem:[#allocation2 + $0x98] sm:$0xff]
          %v10369 = vld [vmem:[#allocation2 + $0xa0] sm:$0xff]
          %v10370 = vld [vmem:[#allocation2 + $0xa8] sm:$0xff]
          %v10371 = vld [vmem:[#allocation2 + $0xb0] sm:$0xff]
          %v10372 = vld [vmem:[#allocation2 + $0xb8] sm:$0xff]
          %v10373 = vld [vmem:[#allocation2 + $0xc0] sm:$0xff]
          %v10374 = vld [vmem:[#allocation2 + $0xc8] sm:$0xff]
          %v10375 = vld [vmem:[#allocation2 + $0xd0] sm:$0xff]
          %v10376 = vld [vmem:[#allocation2 + $0xd8] sm:$0xff]
          %v10377 = vld [vmem:[#allocation2 + $0xe0] sm:$0xff]
          %v10378 = vld [vmem:[#allocation2 + $0xe8] sm:$0xff]
          %v10379 = vlaneseq
          %v10380 = vshrl.u32 %v10379, 7
          %v10381 = vlaneseq
          %v10382 = vand.u32 %v10381, 127
          %v10383 = vadd.s32 %v10382, 128
          %v10384 = vmul.u32 %v10380, 96
          %vm10385 = vcmp.ge.s32.totalorder %v10382, %v10384
          %vm10386 = vcmp.ge.s32.totalorder %v10383, %v10384
          %v10387 = vadd.s32 %v10380, 1
          %v10388 = vmul.u32 %v10387, 96
          %vm10389 = vcmp.lt.s32.totalorder %v10382, %v10388
          %vm10390 = vcmp.lt.s32.totalorder %v10383, %v10388
          %vm10391 = vmand %vm10385, %vm10389
          %vm10392 = vmand %vm10386, %vm10390
          %v10393 = vsel %vm10391, 0.010416667, 0.0
          %v10394 = vsel %vm10392, 0.010416667, 0.0
          %v10396 = vsel %vm4449, %v10394, 0
          %10398 = vmatprep.subr.mxu0 0.0
          %10399 = vmatpush1.msra.mxu0 %v10370
          %10400 = vmatprep.subr.mxu0 0.0
          %10401 = vmatpush1.msra.mxu0 %v10369
          %10402 = vmatprep.subr.mxu0 0.0
          %10403 = vmatpush1.msra.mxu0 %v10368
          %10404 = vmatprep.subr.mxu0 0.0
          %10405 = vmatpush1.msra.mxu0 %v10367
          %10406 = vmatprep.subr.mxu0 0.0
          %10407 = vmatpush1.msra.mxu0 %v10366
          %10408 = vmatprep.subr.mxu0 0.0
          %10409 = vmatpush1.msra.mxu0 %v10365
          %10410 = vmatprep.subr.mxu0 0.0
          %10411 = vmatpush1.msra.mxu0 %v10364
          %10412 = vmatprep.subr.mxu0 0.0
          %10413 = vmatpush1.msra.mxu0 %v10363
          %10414 = vmatprep.subr.mxu0 0.0
          %10415 = vmatpush1.msra.mxu0 %v10362
          %10416 = vmatprep.subr.mxu0 0.0
          %10417 = vmatpush1.msra.mxu0 %v10361
          %10418 = vmatprep.subr.mxu0 0.0
          %10419 = vmatpush1.msra.mxu0 %v10360
          %10420 = vmatprep.subr.mxu0 0.0
          %10421 = vmatpush1.msra.mxu0 %v10359
          %10422 = vmatprep.subr.mxu0 0.0
          %10423 = vmatpush1.msra.mxu0 %v10358
          %10424 = vmatprep.subr.mxu0 0.0
          %10425 = vmatpush1.msra.mxu0 %v10357
          %10426 = vmatprep.subr.mxu0 0.0
          %10427 = vmatpush1.msra.mxu0 %v10356
          %10428 = vmatprep.subr.mxu0 0.0
          %10429 = vmatpush1.msra.mxu0 %v10355
          %10430 = vmatprep.subr.mxu0 0.0
          %10431 = vmatpush2.msra.mxu0 0.0
          %10432 = vmatprep.subr.mxu0 0.0
          %10433 = vmatpush2.msra.mxu0 0.0
          %10434 = vmatprep.subr.mxu0 0.0
          %10435 = vmatpush2.msra.mxu0 0.0
          %10436 = vmatprep.subr.mxu0 0.0
          %10437 = vmatpush2.msra.mxu0 0.0
          %10438 = vmatprep.subr.mxu0 0.0
          %10439 = vmatpush2.msra.mxu0 0.0
          %10440 = vmatprep.subr.mxu0 0.0
          %10441 = vmatpush2.msra.mxu0 0.0
          %10442 = vmatprep.subr.mxu0 0.0
          %10443 = vmatpush2.msra.mxu0 0.0
          %10444 = vmatprep.subr.mxu0 0.0
          %10445 = vmatpush2.msra.mxu0 0.0
          %10446 = vmatprep.subr.mxu0 0.0
          %10447 = vmatpush2.msra.mxu0 %v10378
          %10448 = vmatprep.subr.mxu0 0.0
          %10449 = vmatpush2.msra.mxu0 %v10377
          %10450 = vmatprep.subr.mxu0 0.0
          %10451 = vmatpush2.msra.mxu0 %v10376
          %10452 = vmatprep.subr.mxu0 0.0
          %10453 = vmatpush2.msra.mxu0 %v10375
          %10454 = vmatprep.subr.mxu0 0.0
          %10455 = vmatpush2.msra.mxu0 %v10374
          %10456 = vmatprep.subr.mxu0 0.0
          %10457 = vmatpush2.msra.mxu0 %v10373
          %10458 = vmatprep.subr.mxu0 0.0
          %10459 = vmatpush2.msra.mxu0 %v10372
          %10460 = vmatprep.subr.mxu0 0.0
          %10461 = vmatpush2.msra.mxu0 %v10371
          %10462 = vmatprep.mubr.f32.mxu0 %v10396
          %10463 = vmatmul.mubr.f32.gmra.mxu0 %v10393
          %v10464 = vpop.f32.mrf.mxu0
          %v10465 = vadd.f32 0.0, %v10464
          %v10466 = vpop.f32.mrf.mxu0
          %10467 = vdwg.mxu0
          %v10468 = vld [vmem:[%s9] sm:$0xff]
          %v10469 = vld [vmem:[%s9 + $0x8] sm:$0xff]
          %v10470 = vld [vmem:[%s9 + $0x10] sm:$0xff]
          %v10471 = vld [vmem:[%s9 + $0x18] sm:$0xff]
          %v10472 = vld [vmem:[%s9 + $0x20] sm:$0xff]
          %v10473 = vld [vmem:[%s9 + $0x28] sm:$0xff]
          %v10474 = vld [vmem:[%s9 + $0x30] sm:$0xff]
          %v10475 = vld [vmem:[%s9 + $0x38] sm:$0xff]
          %v10476 = vld [vmem:[%s9 + $0x40] sm:$0xff]
          %v10477 = vld [vmem:[%s9 + $0x48] sm:$0xff]
          %v10478 = vld [vmem:[%s9 + $0x50] sm:$0xff]
          %v10479 = vld [vmem:[%s9 + $0x58] sm:$0xff]
          %v10480 = vld [vmem:[%s9 + $0x60] sm:$0xff]
          %v10481 = vld [vmem:[%s9 + $0x68] sm:$0xff]
          %v10482 = vld [vmem:[%s9 + $0x70] sm:$0xff]
          %v10483 = vld [vmem:[%s9 + $0x78] sm:$0xff]
          %v10484 = vld [vmem:[#allocation17] sm:$0x1]
          %v10486 = vlaneseq
          %v10487 = vshrl.u32 %v10486, 7
          %v10488 = vsub.s32 0, %v10487
          %v10489 = vrot.slane %v10484, %v10488
          %10491 = vmatprep.subr.mxu0 0.0
          %10492 = vmatpush1.msra.mxu0 %v10483
          %10493 = vmatprep.subr.mxu0 0.0
          %10494 = vmatpush1.msra.mxu0 %v10482
          %10495 = vmatprep.subr.mxu0 0.0
          %10496 = vmatpush1.msra.mxu0 %v10481
          %10497 = vmatprep.subr.mxu0 0.0
          %10498 = vmatpush1.msra.mxu0 %v10480
          %10499 = vmatprep.subr.mxu0 0.0
          %10500 = vmatpush1.msra.mxu0 %v10479
          %10501 = vmatprep.subr.mxu0 0.0
          %10502 = vmatpush1.msra.mxu0 %v10478
          %10503 = vmatprep.subr.mxu0 0.0
          %10504 = vmatpush1.msra.mxu0 %v10477
          %10505 = vmatprep.subr.mxu0 0.0
          %10506 = vmatpush1.msra.mxu0 %v10476
          %10507 = vmatprep.subr.mxu0 0.0
          %10508 = vmatpush1.msra.mxu0 %v10475
          %10509 = vmatprep.subr.mxu0 0.0
          %10510 = vmatpush1.msra.mxu0 %v10474
          %10511 = vmatprep.subr.mxu0 0.0
          %10512 = vmatpush1.msra.mxu0 %v10473
          %10513 = vmatprep.subr.mxu0 0.0
          %10514 = vmatpush1.msra.mxu0 %v10472
          %10515 = vmatprep.subr.mxu0 0.0
          %10516 = vmatpush1.msra.mxu0 %v10471
          %10517 = vmatprep.subr.mxu0 0.0
          %10518 = vmatpush1.msra.mxu0 %v10470
          %10519 = vmatprep.subr.mxu0 0.0
          %10520 = vmatpush1.msra.mxu0 %v10469
          %10521 = vmatprep.subr.mxu0 0.0
          %10522 = vmatpush1.msra.mxu0 %v10468
          %10523 = vmatprep.subr.mxu0 0.0
          %10524 = vmatpush2.msra.mxu0 0.0
          %10525 = vmatprep.subr.mxu0 0.0
          %10526 = vmatpush2.msra.mxu0 0.0
          %10527 = vmatprep.subr.mxu0 0.0
          %10528 = vmatpush2.msra.mxu0 0.0
          %10529 = vmatprep.subr.mxu0 0.0
          %10530 = vmatpush2.msra.mxu0 0.0
          %10531 = vmatprep.subr.mxu0 0.0
          %10532 = vmatpush2.msra.mxu0 0.0
          %10533 = vmatprep.subr.mxu0 0.0
          %10534 = vmatpush2.msra.mxu0 0.0
          %10535 = vmatprep.subr.mxu0 0.0
          %10536 = vmatpush2.msra.mxu0 0.0
          %10537 = vmatprep.subr.mxu0 0.0
          %10538 = vmatpush2.msra.mxu0 0.0
          %10539 = vmatprep.subr.mxu0 0.0
          %10540 = vmatpush2.msra.mxu0 0.0
          %10541 = vmatprep.subr.mxu0 0.0
          %10542 = vmatpush2.msra.mxu0 0.0
          %10543 = vmatprep.subr.mxu0 0.0
          %10544 = vmatpush2.msra.mxu0 0.0
          %10545 = vmatprep.subr.mxu0 0.0
          %10546 = vmatpush2.msra.mxu0 0.0
          %10547 = vmatprep.subr.mxu0 0.0
          %10548 = vmatpush2.msra.mxu0 0.0
          %10549 = vmatprep.subr.mxu0 0.0
          %10550 = vmatpush2.msra.mxu0 0.0
          %10551 = vmatprep.subr.mxu0 0.0
          %10552 = vmatpush2.msra.mxu0 0.0
          %10553 = vmatprep.subr.mxu0 0.0
          %10554 = vmatpush2.msra.mxu0 0.0
          %10555 = vmatprep.mubr.f32.mxu0 0.0
          %10556 = vmatmul.mubr.f32.gmra.mxu0 %v10465
          %v10557 = vpop.f32.mrf.mxu0
          %v10558 = vadd.f32 %v10489, %v10557
          %v10559 = vpop.f32.mrf.mxu0
          %10560 = vdwg.mxu0
          %v10561 = vld [vmem:[%s11] sm:$0xff]
          %v10562 = vld [vmem:[%s11 + $0x8] sm:$0xff]
          %v10563 = vld [vmem:[%s11 + $0x10] sm:$0xff]
          %v10564 = vld [vmem:[%s11 + $0x18] sm:$0xff]
          %v10565 = vld [vmem:[%s11 + $0x20] sm:$0xff]
          %v10566 = vld [vmem:[%s11 + $0x28] sm:$0xff]
          %v10567 = vld [vmem:[%s11 + $0x30] sm:$0xff]
          %v10568 = vld [vmem:[%s11 + $0x38] sm:$0xff]
          %v10569 = vld [vmem:[#allocation18] sm:$0x1]
          %v10571 = vlaneseq
          %v10572 = vshrl.u32 %v10571, 7
          %v10573 = vsub.s32 0, %v10572
          %v10574 = vrot.slane %v10569, %v10573
          %v10577 = vsel %vm4449, %v10558, 0
          %10579 = vmatprep.subr.mxu0 0.0
          %10580 = vmatpush1.msra.mxu0 0.0
          %10581 = vmatprep.subr.mxu0 0.0
          %10582 = vmatpush1.msra.mxu0 0.0
          %10583 = vmatprep.subr.mxu0 0.0
          %10584 = vmatpush1.msra.mxu0 0.0
          %10585 = vmatprep.subr.mxu0 0.0
          %10586 = vmatpush1.msra.mxu0 0.0
          %10587 = vmatprep.subr.mxu0 0.0
          %10588 = vmatpush1.msra.mxu0 0.0
          %10589 = vmatprep.subr.mxu0 0.0
          %10590 = vmatpush1.msra.mxu0 0.0
          %10591 = vmatprep.subr.mxu0 0.0
          %10592 = vmatpush1.msra.mxu0 0.0
          %10593 = vmatprep.subr.mxu0 0.0
          %10594 = vmatpush1.msra.mxu0 0.0
          %10595 = vmatprep.subr.mxu0 0.0
          %10596 = vmatpush1.msra.mxu0 %v10568
          %10597 = vmatprep.subr.mxu0 0.0
          %10598 = vmatpush1.msra.mxu0 %v10567
          %10599 = vmatprep.subr.mxu0 0.0
          %10600 = vmatpush1.msra.mxu0 %v10566
          %10601 = vmatprep.subr.mxu0 0.0
          %10602 = vmatpush1.msra.mxu0 %v10565
          %10603 = vmatprep.subr.mxu0 0.0
          %10604 = vmatpush1.msra.mxu0 %v10564
          %10605 = vmatprep.subr.mxu0 0.0
          %10606 = vmatpush1.msra.mxu0 %v10563
          %10607 = vmatprep.subr.mxu0 0.0
          %10608 = vmatpush1.msra.mxu0 %v10562
          %10609 = vmatprep.subr.mxu0 0.0
          %10610 = vmatpush1.msra.mxu0 %v10561
          %10611 = vmatprep.subr.mxu0 0.0
          %10612 = vmatpush2.msra.mxu0 0.0
          %10613 = vmatprep.subr.mxu0 0.0
          %10614 = vmatpush2.msra.mxu0 0.0
          %10615 = vmatprep.subr.mxu0 0.0
          %10616 = vmatpush2.msra.mxu0 0.0
          %10617 = vmatprep.subr.mxu0 0.0
          %10618 = vmatpush2.msra.mxu0 0.0
          %10619 = vmatprep.subr.mxu0 0.0
          %10620 = vmatpush2.msra.mxu0 0.0
          %10621 = vmatprep.subr.mxu0 0.0
          %10622 = vmatpush2.msra.mxu0 0.0
          %10623 = vmatprep.subr.mxu0 0.0
          %10624 = vmatpush2.msra.mxu0 0.0
          %10625 = vmatprep.subr.mxu0 0.0
          %10626 = vmatpush2.msra.mxu0 0.0
          %10627 = vmatprep.subr.mxu0 0.0
          %10628 = vmatpush2.msra.mxu0 0.0
          %10629 = vmatprep.subr.mxu0 0.0
          %10630 = vmatpush2.msra.mxu0 0.0
          %10631 = vmatprep.subr.mxu0 0.0
          %10632 = vmatpush2.msra.mxu0 0.0
          %10633 = vmatprep.subr.mxu0 0.0
          %10634 = vmatpush2.msra.mxu0 0.0
          %10635 = vmatprep.subr.mxu0 0.0
          %10636 = vmatpush2.msra.mxu0 0.0
          %10637 = vmatprep.subr.mxu0 0.0
          %10638 = vmatpush2.msra.mxu0 0.0
          %10639 = vmatprep.subr.mxu0 0.0
          %10640 = vmatpush2.msra.mxu0 0.0
          %10641 = vmatprep.subr.mxu0 0.0
          %10642 = vmatpush2.msra.mxu0 0.0
          %10643 = vmatprep.mubr.f32.mxu0 0.0
          %10644 = vmatmul.mubr.f32.gmra.mxu0 %v10577
          %v10645 = vpop.f32.mrf.mxu0
          %v10646 = vadd.f32 %v10574, %v10645
          %v10647 = vpop.f32.mrf.mxu0
          %10648 = vdwg.mxu0
          %vm10649 = vcmask 50176
          %10650 = vst.msk [vmem:[#allocation19] sm:$0x3] %vm10649, %v10646
        $region120: #{net_forward.1} parent=71 // pred_fallthru
          _
        // Predicated region
        $region121: #{net_forward.1} parent=71 // pred_check
          %p10651 = pneg %p334
        $region122: #{net_forward.1} parent=71 // pred_check_branch
          %10653 = sbr.rel (%p10651) target = $region124
        $region123: #{net_forward.1} parent=71 // pred_region
          %s10655 = ssub.s32 32, 32
          %10656 = vsyncadd [#allocation7], %s10655
          %s10658 = sshll.u32 [#allocation19], 4
          %s10659 = int_to_ptr.vmem [resolvable:$true] %s10658
          %10661 = dma.vmem_to_hbm [thread:$0]  %s10659, 32, %s13, [#allocation7]
        $region124: #{net_forward.1} parent=71 // pred_fallthru
          _
        // Predicated region
        $region125: #{net_forward.1} parent=71 // pred_check
          %p10662 = pneg %p334
        $region126: #{net_forward.1} parent=71 // pred_check_branch
          %10664 = sbr.rel (%p10662) target = $region128
        $region127: #{net_forward.1} parent=71 // pred_region
          %10665 = dma.done [#allocation7], 32
        $region128: #{net_forward.1} parent=71 // pred_fallthru
          _
      $region72: #{net_forward.1} parent=5 // pred_fallthru
        _
      %p10666 = scmp.le.s32.totalorder 2, %s23
      // Predicated region
      $region129: #{net_forward.1} parent=5 // pred_check
        %p10667 = pneg %p10666
      $region130: #{net_forward.1} parent=5 // pred_check_branch
        %10669 = sbr.rel (%p10667) target = $region132
      $region131: #{net_forward.1} parent=5 // pred_region
        %s10670 = ssub.s32 %s23, 2
      $region132: #{net_forward.1} parent=5 // pred_fallthru
        _
    $region6: #{net_forward.1} parent=1 // loop_footer
      %s27 = sadd.s32 1, %s23
    $region7: #{net_forward.1} parent=1 // loop_footer_branch
      %22 = sbr.rel target = $region3
    $region8: #{net_forward.1} parent=1 // loop_exit
      _
    %10671 = vsyncpa [#allocation6], 1
    %s10672 = scalar_lea.sflag [#allocation6], 1
    %10673 = vsyncpa %s10672, 1
    %10674 = vsyncpa [#allocation9], 1
    %10675 = vsyncpa [#allocation12], 1
    %10676 = vsyncpa [#allocation7], 1
    %s10677 = scalar_lea.sflag [#allocation7], 1
    %10678 = vsyncpa %s10677, 1

</llo_original>
